<compile_context>
chip_gen: v6e
topology: v6e:2x2x1
jax: 0.10.0
libtpu: 0.0.40
codegen_flags: <defaults>
</compile_context>

<pallas_src>
import jax
import jax.numpy as jnp
from jax.experimental import pallas as pl
from jax.experimental.pallas import tpu as pltpu

IN_FEATURES = 3 * 128 * 128   # 49152
H1 = 512
H2 = 256
NUM_CLASSES = 10
TK = 12288                    # fc1 K-tile: 49152 / 12288 = 4 grid steps


def mlp_kernel(x_ref, w1_ref, s1_ref, b1_ref, w2_ref, b2_ref, w3_ref, b3_ref,
               out_ref, acc_ref):
    """Fused 3-layer MLP.

    Grid axis 0 is the reduction over fc1's input dim.  fc1 partials (bf16
    activations x dequantized-int8 weights, f32 accumulation) land in a VMEM
    scratch; on the last grid step the per-channel scale + bias + ReLU and the
    small fc2 / fc3 matmuls run entirely in VMEM.
    """
    k = pl.program_id(0)

    @pl.when(k == 0)
    def _():
        acc_ref[...] = jnp.zeros_like(acc_ref)

    # int8 -> bf16 dequant (values are exact small ints, so this is lossless);
    # VPU work that hides completely under the 6 MiB w1 tile DMA.
    w_tile = w1_ref[...].astype(jnp.bfloat16)
    acc_ref[...] += jnp.dot(x_ref[...], w_tile,
                            preferred_element_type=jnp.float32)

    @pl.when(k == pl.num_programs(0) - 1)
    def _():
        # Fold per-output-channel int8 scale into the accumulator, then bias+ReLU.
        h1 = acc_ref[...] * s1_ref[...] + b1_ref[...]
        h1 = jnp.maximum(h1, 0.0).astype(jnp.bfloat16)          # ReLU(fc1)
        h2 = jnp.dot(h1, w2_ref[...],
                     preferred_element_type=jnp.float32) + b2_ref[...]
        h2 = jnp.maximum(h2, 0.0).astype(jnp.bfloat16)          # ReLU(fc2)
        h3 = jnp.dot(h2, w3_ref[...],
                     preferred_element_type=jnp.float32) + b3_ref[...]
        out_ref[...] = h3.astype(out_ref.dtype)                 # fc3 logits


def quantize_per_channel(w):
    """Symmetric int8 quantization of a (in, out) weight with per-output-channel
    f32 scales.  Done once, offline (weight transform, not part of the forward)."""
    amax = jnp.max(jnp.abs(w), axis=0)                 # (out,)
    scale = jnp.maximum(amax, 1e-8) / 127.0
    w_q = jnp.clip(jnp.round(w / scale), -127.0, 127.0).astype(jnp.int8)
    return w_q, scale.astype(jnp.float32)


def mlp_forward(x, w1_q, w1_scale, b1, w2, b2, w3, b3):
    """x: (B, 3, 128, 128).  w1_q: int8 (49152, 512) with per-channel scale
    w1_scale: (512,).  w2/w3 are cast to bf16 for the epilogue matmuls;
    biases stay f32."""
    B = x.shape[0]
    x2d = x.reshape(B, IN_FEATURES).astype(jnp.bfloat16)

    s1r = w1_scale.reshape(1, H1).astype(jnp.float32)
    b1r = b1.reshape(1, H1).astype(jnp.float32)
    w2b = w2.astype(jnp.bfloat16)
    b2r = b2.reshape(1, H2).astype(jnp.float32)
    w3b = w3.astype(jnp.bfloat16)
    b3r = b3.reshape(1, NUM_CLASSES).astype(jnp.float32)

    grid = (IN_FEATURES // TK,)

    flops = 2 * B * (IN_FEATURES * H1 + H1 * H2 + H2 * NUM_CLASSES)
    bytes_accessed = (B * IN_FEATURES * 2             # x (bf16)
                      + IN_FEATURES * H1 * 1          # w1 (int8) -- dominant
                      + H1 * 4 + H1 * 4               # scale + b1
                      + H1 * H2 * 2                   # w2 (bf16)
                      + H2 * 4                        # b2
                      + H2 * NUM_CLASSES * 2          # w3 (bf16)
                      + NUM_CLASSES * 4               # b3
                      + B * NUM_CLASSES * 4)          # out

    return pl.pallas_call(
        mlp_kernel,
        out_shape=jax.ShapeDtypeStruct((B, NUM_CLASSES), jnp.float32),
        grid_spec=pltpu.PrefetchScalarGridSpec(
            num_scalar_prefetch=0,
            grid=grid,
            in_specs=[
                pl.BlockSpec((B, TK), lambda k: (0, k)),             # x K-tile
                pl.BlockSpec((TK, H1), lambda k: (k, 0)),            # w1 tile (int8)
                pl.BlockSpec((1, H1), lambda k: (0, 0)),             # w1 scale
                pl.BlockSpec((1, H1), lambda k: (0, 0)),             # b1
                pl.BlockSpec((H1, H2), lambda k: (0, 0)),            # w2 (bf16)
                pl.BlockSpec((1, H2), lambda k: (0, 0)),             # b2
                pl.BlockSpec((H2, NUM_CLASSES), lambda k: (0, 0)),   # w3 (bf16)
                pl.BlockSpec((1, NUM_CLASSES), lambda k: (0, 0)),    # b3
            ],
            out_specs=pl.BlockSpec((B, NUM_CLASSES), lambda k: (0, 0)),
            scratch_shapes=[pltpu.VMEM((B, H1), jnp.float32)],       # fc1 accumulator
        ),
        compiler_params=pltpu.CompilerParams(
            dimension_semantics=("arbitrary",),
            # 2 x 6 MiB int8 double buffer + ~12 MiB dequant temp + residents
            # ~= 25-30 MiB; 48 MiB leaves headroom yet stays under v7x's 64 MiB.
            vmem_limit_bytes=48 << 20,
        ),
        cost_estimate=pl.CostEstimate(flops=flops, transcendentals=0,
                                      bytes_accessed=bytes_accessed),
    )(x2d, w1_q, s1r, b1r, w2b, b2r, w3b, b3r)


def init_params(key):
    """Deterministic init mimicking nn.Linear's U(-1/sqrt(in), 1/sqrt(in))."""
    ks = jax.random.split(key, 6)

    def linear(kw, kb, fan_in, fan_out):
        bound = 1.0 / jnp.sqrt(fan_in)
        w = jax.random.uniform(kw, (fan_in, fan_out), jnp.float32, -bound, bound)
        b = jax.random.uniform(kb, (fan_out,), jnp.float32, -bound, bound)
        return w, b

    w1, b1 = linear(ks[0], ks[1], IN_FEATURES, H1)
    w2, b2 = linear(ks[2], ks[3], H1, H2)
    w3, b3 = linear(ks[4], ks[5], H2, NUM_CLASSES)
    return w1, b1, w2, b2, w3, b3


if __name__ == "__main__":
    key = jax.random.PRNGKey(0)
    k_x, k_p = jax.random.split(key)

    B = 2
    x = jax.random.normal(k_x, (B, 3, 128, 128), dtype=jnp.float32)  # NCHW
    w1, b1, w2, b2, w3, b3 = init_params(k_p)

    # One-time weight transform (int8 + per-output-channel scales).
    w1_q, w1_scale = quantize_per_channel(w1)

    out = mlp_forward(x, w1_q, w1_scale, b1, w2, b2, w3, b3)
    out = jax.block_until_ready(out)

    # Apples-to-apples reference in plain JAX: same bf16 activations, same
    # int8-dequantized w1, same bf16 fc2/fc3 operands, f32 accumulation.
    x2d = x.reshape(B, IN_FEATURES).astype(jnp.bfloat16)
    w1_dq = w1_q.astype(jnp.bfloat16)                       # exact small ints
    ref = jnp.dot(x2d, w1_dq, preferred_element_type=jnp.float32)
    ref = ref * w1_scale.reshape(1, H1) + b1
    ref = jnp.maximum(ref, 0.0)
    ref = jnp.dot(ref.astype(jnp.bfloat16), w2.astype(jnp.bfloat16),
                  preferred_element_type=jnp.float32) + b2
    ref = jnp.maximum(ref, 0.0)
    ref = jnp.dot(ref.astype(jnp.bfloat16), w3.astype(jnp.bfloat16),
                  preferred_element_type=jnp.float32) + b3

    assert out.shape == (B, NUM_CLASSES)
    assert jnp.allclose(out, ref, atol=1e-2, rtol=1e-2), "mismatch vs reference"

    print("KERNEL_OK")
</pallas_src>

<mosaic_0001>
module attributes {stable_mosaic.version = 11 : i64} {
  func.func @mlp_kernel(%arg0: i32, %arg1: memref<2x12288xbf16, #tpu.memory_space<vmem>>, %arg2: memref<12288x512xi8, #tpu.memory_space<vmem>>, %arg3: memref<1x512xf32, #tpu.memory_space<vmem>>, %arg4: memref<1x512xf32, #tpu.memory_space<vmem>>, %arg5: memref<512x256xbf16, #tpu.memory_space<vmem>>, %arg6: memref<1x256xf32, #tpu.memory_space<vmem>>, %arg7: memref<256x10xbf16, #tpu.memory_space<vmem>>, %arg8: memref<1x10xf32, #tpu.memory_space<vmem>>, %arg9: memref<2x10xf32, #tpu.memory_space<vmem>>, %arg10: memref<2x512xf32, #tpu.memory_space<vmem>>) attributes {dimension_semantics = [#tpu.dimension_semantics<arbitrary>], iteration_bounds = array<i64: 4>, scalar_prefetch = 0 : i64, scratch_operands = 1 : i64, tpu.core_type = #tpu.core_type<tc>, window_params = [{transform_indices = @transform_0, window_bounds = array<i64: 2, 12288>}, {transform_indices = @transform_1, window_bounds = array<i64: 12288, 512>}, {pipeline_mode = #tpu.pipeline_mode<synchronous>, transform_indices = @transform_2, window_bounds = array<i64: 1, 512>}, {pipeline_mode = #tpu.pipeline_mode<synchronous>, transform_indices = @transform_3, window_bounds = array<i64: 1, 512>}, {pipeline_mode = #tpu.pipeline_mode<synchronous>, transform_indices = @transform_4, window_bounds = array<i64: 512, 256>}, {pipeline_mode = #tpu.pipeline_mode<synchronous>, transform_indices = @transform_5, window_bounds = array<i64: 1, 256>}, {pipeline_mode = #tpu.pipeline_mode<synchronous>, transform_indices = @transform_6, window_bounds = array<i64: 256, 10>}, {pipeline_mode = #tpu.pipeline_mode<synchronous>, transform_indices = @transform_7, window_bounds = array<i64: 1, 10>}, {pipeline_mode = #tpu.pipeline_mode<synchronous>, transform_indices = @transform_8, window_bounds = array<i64: 2, 10>}]} {
    %c0_i32 = arith.constant 0 : i32
    %0 = arith.cmpi eq, %arg0, %c0_i32 : i32
    %1 = arith.extui %0 : i1 to i32
    %c0_i32_0 = arith.constant 0 : i32
    %2 = arith.cmpi ne, %1, %c0_i32_0 : i32
    scf.if %2 {
      %cst_9 = arith.constant 0.000000e+00 : f32
      %13 = vector.broadcast %cst_9 : f32 to vector<2x512xf32>
      %c0_10 = arith.constant 0 : index
      %c0_11 = arith.constant 0 : index
      %14 = vector.load %arg10[%c0_10, %c0_11] : memref<2x512xf32, #tpu.memory_space<vmem>>, vector<2x512xf32>
      tpu.vector_store %arg10[%c0_10, %c0_11], %13 {strides = array<i32>} : memref<2x512xf32, #tpu.memory_space<vmem>>, vector<2x512xf32>,
    } else {
    }
    %c0 = arith.constant 0 : index
    %c0_1 = arith.constant 0 : index
    %3 = vector.load %arg2[%c0, %c0_1] : memref<12288x512xi8, #tpu.memory_space<vmem>>, vector<12288x512xi8>
    %4 = arith.sitofp %3 : vector<12288x512xi8> to vector<12288x512xbf16>
    %c0_2 = arith.constant 0 : index
    %c0_3 = arith.constant 0 : index
    %5 = vector.load %arg10[%c0_2, %c0_3] : memref<2x512xf32, #tpu.memory_space<vmem>>, vector<2x512xf32>
    %c0_4 = arith.constant 0 : index
    %c0_5 = arith.constant 0 : index
    %6 = vector.load %arg1[%c0_4, %c0_5] : memref<2x12288xbf16, #tpu.memory_space<vmem>>, vector<2x12288xbf16>
    %cst = arith.constant dense<0.000000e+00> : vector<2x512xf32>
    %7 = tpu.matmul %6, %4, %cst {dimension_numbers = #tpu.dot_dimension_numbers<[1], [0], [0], [1], [0, 0, 1, 1], [], []>} : vector<2x12288xbf16>, vector<12288x512xbf16>, vector<2x512xf32> -> vector<2x512xf32>
    %8 = arith.addf %5, %7 : vector<2x512xf32>
    %c0_6 = arith.constant 0 : index
    %c0_7 = arith.constant 0 : index
    %9 = vector.load %arg10[%c0_6, %c0_7] : memref<2x512xf32, #tpu.memory_space<vmem>>, vector<2x512xf32>
    tpu.vector_store %arg10[%c0_6, %c0_7], %8 {strides = array<i32>} : memref<2x512xf32, #tpu.memory_space<vmem>>, vector<2x512xf32>,
    %c3_i32 = arith.constant 3 : i32
    %10 = arith.cmpi eq, %arg0, %c3_i32 : i32
    %11 = arith.extui %10 : i1 to i32
    %c0_i32_8 = arith.constant 0 : i32
    %12 = arith.cmpi ne, %11, %c0_i32_8 : i32
    scf.if %12 {
      %c0_9 = arith.constant 0 : index
      %c0_10 = arith.constant 0 : index
      %13 = vector.load %arg10[%c0_9, %c0_10] : memref<2x512xf32, #tpu.memory_space<vmem>>, vector<2x512xf32>
      %c0_11 = arith.constant 0 : index
      %c0_12 = arith.constant 0 : index
      %14 = vector.load %arg3[%c0_11, %c0_12] : memref<1x512xf32, #tpu.memory_space<vmem>>, vector<1x512xf32>
      %15 = vector.broadcast %14 : vector<1x512xf32> to vector<2x512xf32>
      %16 = arith.mulf %13, %15 : vector<2x512xf32>
      %c0_13 = arith.constant 0 : index
      %c0_14 = arith.constant 0 : index
      %17 = vector.load %arg4[%c0_13, %c0_14] : memref<1x512xf32, #tpu.memory_space<vmem>>, vector<1x512xf32>
      %18 = vector.broadcast %17 : vector<1x512xf32> to vector<2x512xf32>
      %19 = arith.addf %16, %18 : vector<2x512xf32>
      %cst_15 = arith.constant 0.000000e+00 : f32
      %20 = vector.broadcast %cst_15 : f32 to vector<2x512xf32>
      %21 = arith.maximumf %19, %20 : vector<2x512xf32>
      %22 = arith.truncf %21 : vector<2x512xf32> to vector<2x512xbf16>
      %c0_16 = arith.constant 0 : index
      %c0_17 = arith.constant 0 : index
      %23 = vector.load %arg5[%c0_16, %c0_17] : memref<512x256xbf16, #tpu.memory_space<vmem>>, vector<512x256xbf16>
      %cst_18 = arith.constant dense<0.000000e+00> : vector<2x256xf32>
      %24 = tpu.matmul %22, %23, %cst_18 {dimension_numbers = #tpu.dot_dimension_numbers<[1], [0], [0], [1], [0, 0, 1, 1], [], []>} : vector<2x512xbf16>, vector<512x256xbf16>, vector<2x256xf32> -> vector<2x256xf32>
      %c0_19 = arith.constant 0 : index
      %c0_20 = arith.constant 0 : index
      %25 = vector.load %arg6[%c0_19, %c0_20] : memref<1x256xf32, #tpu.memory_space<vmem>>, vector<1x256xf32>
      %26 = vector.broadcast %25 : vector<1x256xf32> to vector<2x256xf32>
      %27 = arith.addf %24, %26 : vector<2x256xf32>
      %cst_21 = arith.constant 0.000000e+00 : f32
      %28 = vector.broadcast %cst_21 : f32 to vector<2x256xf32>
      %29 = arith.maximumf %27, %28 : vector<2x256xf32>
      %30 = arith.truncf %29 : vector<2x256xf32> to vector<2x256xbf16>
      %c0_22 = arith.constant 0 : index
      %c0_23 = arith.constant 0 : index
      %31 = vector.load %arg7[%c0_22, %c0_23] : memref<256x10xbf16, #tpu.memory_space<vmem>>, vector<256x10xbf16>
      %cst_24 = arith.constant dense<0.000000e+00> : vector<2x10xf32>
      %32 = tpu.matmul %30, %31, %cst_24 {dimension_numbers = #tpu.dot_dimension_numbers<[1], [0], [0], [1], [0, 0, 1, 1], [], []>} : vector<2x256xbf16>, vector<256x10xbf16>, vector<2x10xf32> -> vector<2x10xf32>
      %c0_25 = arith.constant 0 : index
      %c0_26 = arith.constant 0 : index
      %33 = vector.load %arg8[%c0_25, %c0_26] : memref<1x10xf32, #tpu.memory_space<vmem>>, vector<1x10xf32>
      %34 = vector.broadcast %33 : vector<1x10xf32> to vector<2x10xf32>
      %35 = arith.addf %32, %34 : vector<2x10xf32>
      %c0_27 = arith.constant 0 : index
      %c0_28 = arith.constant 0 : index
      %36 = vector.load %arg9[%c0_27, %c0_28] : memref<2x10xf32, #tpu.memory_space<vmem>>, vector<2x10xf32>
      tpu.vector_store %arg9[%c0_27, %c0_28], %35 {strides = array<i32>} : memref<2x10xf32, #tpu.memory_space<vmem>>, vector<2x10xf32>,
    } else {
    }
    return
  }
  func.func @transform_0(%arg0: i32) -> (i32, i32) {
    %c0_i32 = arith.constant 0 : i32
    %c0_i32_0 = arith.constant 0 : i32
    return %c0_i32, %arg0 : i32, i32
  }
  func.func @transform_1(%arg0: i32) -> (i32, i32) {
    %c0_i32 = arith.constant 0 : i32
    %c0_i32_0 = arith.constant 0 : i32
    return %arg0, %c0_i32 : i32, i32
  }
  func.func @transform_2(%arg0: i32) -> (i32, i32) {
    %c0_i32 = arith.constant 0 : i32
    %c0_i32_0 = arith.constant 0 : i32
    %c0_i32_1 = arith.constant 0 : i32
    return %c0_i32, %c0_i32_0 : i32, i32
  }
  func.func @transform_3(%arg0: i32) -> (i32, i32) {
    %c0_i32 = arith.constant 0 : i32
    %c0_i32_0 = arith.constant 0 : i32
    %c0_i32_1 = arith.constant 0 : i32
    return %c0_i32, %c0_i32_0 : i32, i32
  }
  func.func @transform_4(%arg0: i32) -> (i32, i32) {
    %c0_i32 = arith.constant 0 : i32
    %c0_i32_0 = arith.constant 0 : i32
    %c0_i32_1 = arith.constant 0 : i32
    return %c0_i32, %c0_i32_0 : i32, i32
  }
  func.func @transform_5(%arg0: i32) -> (i32, i32) {
    %c0_i32 = arith.constant 0 : i32
    %c0_i32_0 = arith.constant 0 : i32
    %c0_i32_1 = arith.constant 0 : i32
    return %c0_i32, %c0_i32_0 : i32, i32
  }
  func.func @transform_6(%arg0: i32) -> (i32, i32) {
    %c0_i32 = arith.constant 0 : i32
    %c0_i32_0 = arith.constant 0 : i32
    %c0_i32_1 = arith.constant 0 : i32
    return %c0_i32, %c0_i32_0 : i32, i32
  }
  func.func @transform_7(%arg0: i32) -> (i32, i32) {
    %c0_i32 = arith.constant 0 : i32
    %c0_i32_0 = arith.constant 0 : i32
    %c0_i32_1 = arith.constant 0 : i32
    return %c0_i32, %c0_i32_0 : i32, i32
  }
  func.func @transform_8(%arg0: i32) -> (i32, i32) {
    %c0_i32 = arith.constant 0 : i32
    %c0_i32_0 = arith.constant 0 : i32
    %c0_i32_1 = arith.constant 0 : i32
    return %c0_i32, %c0_i32_0 : i32, i32
  }
}

</mosaic_0001>

<llo_original>
// kernel: tpu_custom_call.1
$region0: #{tpu_custom_call.1}
  #allocation0 [shape = 'u32[]', space=smem, size = 0x4, offset = 0x4, fixed_abs, tag = 'smem constant byte address 0x4 - core index']
  #allocation1 [shape = 'u32[144,128]{1,0:T(1,128)}', space=vmem, size = 0x12000, scoped, tag = 'internal scratch']
  #allocation2 [shape = 'f32[2,512]{1,0:T(2,128)}', space=vmem, size = 0x1000, scoped, tag = 'scratch operand']
  %s0 = inlined_call_operand.hbm [shape: bf16[2,49152], index: 0, kind: input, shape index: {}]
  %s1 = inlined_call_operand.hbm [shape: s8[49152,512], index: 1, kind: input, shape index: {}]
  %s2 = inlined_call_operand.hbm [shape: f32[1,512], index: 2, kind: input, shape index: {}]
  %s3 = inlined_call_operand.hbm [shape: f32[1,512], index: 3, kind: input, shape index: {}]
  %s4 = inlined_call_operand.hbm [shape: bf16[512,256], index: 4, kind: input, shape index: {}]
  %s5 = inlined_call_operand.hbm [shape: f32[1,256], index: 5, kind: input, shape index: {}]
  %s6 = inlined_call_operand.vmem [shape: bf16[256,10], index: 6, kind: input, shape index: {}]
  %s7 = inlined_call_operand.hbm [shape: f32[1,10], index: 7, kind: input, shape index: {}]
  %s8 = inlined_call_operand.hbm [shape: f32[2,10], index: 8, kind: output, shape index: {}]
  %s9 = sld [smem:[#allocation0]]
  $region101: #{tpu_custom_call.1} parent=0
    _
  %s11 = ssub.s32 1, %s9
  %s12 = scalar_select 0, %s11, %s9
  $region1: #{tpu_custom_call.1} parent=0
    #allocation3 [shape = 'u8[98304]{0}', space=vmem, size = 0x18000, scoped, tag = 'input window, operand 0']
    #allocation4 [shape = 's32[2]{0}', space=sflag, size = 0x8, scoped, tag = 'scoped memory for tpu_custom_call.1']
    #allocation5 [shape = 's32[2]{0}', space=sflag, size = 0x8, scoped, tag = 'scoped memory for tpu_custom_call.1']
    #allocation6 [shape = 'u8[12582912]{0}', space=vmem, size = 0xc00000, scoped, tag = 'input window, operand 1']
    #allocation7 [shape = 's32[2]{0}', space=sflag, size = 0x8, scoped, tag = 'scoped memory for tpu_custom_call.1']
    #allocation8 [shape = 'u8[2048]{0}', space=vmem, size = 0x800, scoped, tag = 'input window, operand 2, single buffered']
    #allocation9 [shape = 'u8[2048]{0}', space=vmem, size = 0x800, scoped, tag = 'input window, operand 3, single buffered']
    #allocation10 [shape = 's32[1]{0}', space=sflag, size = 0x4, scoped, tag = 'scoped memory for tpu_custom_call.1']
    #allocation11 [shape = 'u8[262144]{0}', space=vmem, size = 0x40000, scoped, tag = 'input window, operand 4, single buffered']
    #allocation12 [shape = 'u8[1024]{0}', space=vmem, size = 0x400, scoped, tag = 'input window, operand 5, single buffered']
    #allocation13 [shape = 's32[1]{0}', space=sflag, size = 0x4, scoped, tag = 'scoped memory for tpu_custom_call.1']
    #allocation14 [shape = 'u8[512]{0}', space=vmem, size = 0x400, scoped, tag = 'input window, operand 7, single buffered']
    #allocation15 [shape = 'u8[1024]{0}', space=vmem, size = 0x400, scoped, tag = 'output window, operand 0, single buffered']
    %13 = vsyncpa [#allocation4], 0
    %s14 = scalar_lea.sflag [#allocation4], 1
    %15 = vsyncpa %s14, 0
    %16 = vsyncpa [#allocation7], 0
    %s17 = scalar_lea.sflag [#allocation7], 1
    %18 = vsyncpa %s17, 0
    %19 = vsyncpa [#allocation10], 0
    %20 = vsyncpa [#allocation13], 0
    %21 = vsyncpa [#allocation5], 0
    loop: start=0, step=1, limit=6
    $region2: #{tpu_custom_call.1} parent=1 // loop_pre_header
      _
    $region3: #{tpu_custom_call.1} parent=1 // loop_header
      %s23 = sphi 0, %s27
      %p24 = scmp.ge.s32.totalorder %s23, 6
      %s33 = sphi 0, %s35
      %s36 = sphi 0, %s33
      %s37 = sphi 0, %s36
      %s53 = sphi 0, %s37
      %s59 = sphi 0, %s61
      %s62 = sphi 0, %s59
      %s63 = sphi 0, %s62
      %s79 = sphi 0, %s63
      %s83 = sphi 0, %s83
      %s85 = sphi 0, %s83
      %s86 = sphi 0, %s85
      %s100 = sphi 0, %s86
      %s104 = sphi 0, %s104
      %s106 = sphi 0, %s104
      %s107 = sphi 0, %s106
      %s121 = sphi 0, %s107
      %s125 = sphi 0, %s125
      %s127 = sphi 0, %s125
      %s128 = sphi 0, %s127
      %s142 = sphi 0, %s128
      %s146 = sphi 0, %s146
      %s148 = sphi 0, %s146
      %s149 = sphi 0, %s148
      %s163 = sphi 0, %s149
      %s167 = sphi 0, %s167
      %s169 = sphi 0, %s167
      %s170 = sphi 0, %s169
      %s184 = sphi 0, %s170
      %s188 = sphi 0, %s188
      %s190 = sphi 0, %s188
      %s191 = sphi 0, %s190
      %s205 = sphi 0, %s191
      %s209 = sphi 0, %s209
      %s211 = sphi 0, %s209
      %s212 = sphi 0, %s211
      %s226 = sphi 0, %s212
    $region4: #{tpu_custom_call.1} parent=1 // loop_header_branch
      %26 = sbr.rel (%p24) target = $region8
    $region5: #{tpu_custom_call.1} parent=1 // loop_body
      %s28 = ssub.s32 %s23, 1
      %s29 = ssub.s32 %s23, 2
      %s30 = sadd.s32 %s23, 1
      %s31 = ssub.s32 %s23, %s30
      %p32 = scmp.eq.s32.totalorder %s31, 0
      %s34 = sadd.s32 %s33, 1
      %s35 = scalar_select %p32, %s33, %s34
      %p38 = pneg %p32
      %p39 = scmp.eq.s32.totalorder %s23, 3
      %p40 = por %p38, %p39
      %p41 = scmp.ne.s32.totalorder %s33, %s36
      %p42 = scmp.eq.s32.totalorder %s23, 0
      %p43 = por %p41, %p42
      %p44 = scmp.ne.s32.totalorder %s33, %s36
      %p45 = scmp.eq.s32.totalorder %s28, 3
      %p46 = por %p44, %p45
      %p47 = scmp.ne.s32.totalorder %s36, %s37
      %p48 = scmp.eq.s32.totalorder %s28, 0
      %p49 = por %p47, %p48
      %p50 = scmp.ne.s32.totalorder %s36, %s37
      %p51 = scmp.eq.s32.totalorder %s29, 3
      %p52 = por %p50, %p51
      %p54 = scmp.ne.s32.totalorder %s37, %s53
      %p55 = scmp.eq.s32.totalorder %s29, 0
      %p56 = por %p54, %p55
      %s57 = ssub.s32 %s23, %s30
      %p58 = scmp.eq.s32.totalorder %s57, 0
      %s60 = sadd.s32 %s59, 1
      %s61 = scalar_select %p58, %s59, %s60
      %p64 = pneg %p58
      %p65 = scmp.eq.s32.totalorder %s23, 3
      %p66 = por %p64, %p65
      %p67 = scmp.ne.s32.totalorder %s59, %s62
      %p68 = scmp.eq.s32.totalorder %s23, 0
      %p69 = por %p67, %p68
      %p70 = scmp.ne.s32.totalorder %s59, %s62
      %p71 = scmp.eq.s32.totalorder %s28, 3
      %p72 = por %p70, %p71
      %p73 = scmp.ne.s32.totalorder %s62, %s63
      %p74 = scmp.eq.s32.totalorder %s28, 0
      %p75 = por %p73, %p74
      %p76 = scmp.ne.s32.totalorder %s62, %s63
      %p77 = scmp.eq.s32.totalorder %s29, 3
      %p78 = por %p76, %p77
      %p80 = scmp.ne.s32.totalorder %s63, %s79
      %p81 = scmp.eq.s32.totalorder %s29, 0
      %p82 = por %p80, %p81
      %s84 = sadd.s32 %s83, 1
      %p87 = scmp.eq.s32.totalorder %s23, 3
      %p88 = scmp.ne.s32.totalorder %s83, %s85
      %p89 = scmp.eq.s32.totalorder %s23, 0
      %p90 = por %p88, %p89
      %p91 = scmp.ne.s32.totalorder %s83, %s85
      %p92 = scmp.eq.s32.totalorder %s28, 3
      %p93 = por %p91, %p92
      %p94 = scmp.ne.s32.totalorder %s85, %s86
      %p95 = scmp.eq.s32.totalorder %s28, 0
      %p96 = por %p94, %p95
      %p97 = scmp.ne.s32.totalorder %s85, %s86
      %p98 = scmp.eq.s32.totalorder %s29, 3
      %p99 = por %p97, %p98
      %p101 = scmp.ne.s32.totalorder %s86, %s100
      %p102 = scmp.eq.s32.totalorder %s29, 0
      %p103 = por %p101, %p102
      %s105 = sadd.s32 %s104, 1
      %p108 = scmp.eq.s32.totalorder %s23, 3
      %p109 = scmp.ne.s32.totalorder %s104, %s106
      %p110 = scmp.eq.s32.totalorder %s23, 0
      %p111 = por %p109, %p110
      %p112 = scmp.ne.s32.totalorder %s104, %s106
      %p113 = scmp.eq.s32.totalorder %s28, 3
      %p114 = por %p112, %p113
      %p115 = scmp.ne.s32.totalorder %s106, %s107
      %p116 = scmp.eq.s32.totalorder %s28, 0
      %p117 = por %p115, %p116
      %p118 = scmp.ne.s32.totalorder %s106, %s107
      %p119 = scmp.eq.s32.totalorder %s29, 3
      %p120 = por %p118, %p119
      %p122 = scmp.ne.s32.totalorder %s107, %s121
      %p123 = scmp.eq.s32.totalorder %s29, 0
      %p124 = por %p122, %p123
      %s126 = sadd.s32 %s125, 1
      %p129 = scmp.eq.s32.totalorder %s23, 3
      %p130 = scmp.ne.s32.totalorder %s125, %s127
      %p131 = scmp.eq.s32.totalorder %s23, 0
      %p132 = por %p130, %p131
      %p133 = scmp.ne.s32.totalorder %s125, %s127
      %p134 = scmp.eq.s32.totalorder %s28, 3
      %p135 = por %p133, %p134
      %p136 = scmp.ne.s32.totalorder %s127, %s128
      %p137 = scmp.eq.s32.totalorder %s28, 0
      %p138 = por %p136, %p137
      %p139 = scmp.ne.s32.totalorder %s127, %s128
      %p140 = scmp.eq.s32.totalorder %s29, 3
      %p141 = por %p139, %p140
      %p143 = scmp.ne.s32.totalorder %s128, %s142
      %p144 = scmp.eq.s32.totalorder %s29, 0
      %p145 = por %p143, %p144
      %s147 = sadd.s32 %s146, 1
      %p150 = scmp.eq.s32.totalorder %s23, 3
      %p151 = scmp.ne.s32.totalorder %s146, %s148
      %p152 = scmp.eq.s32.totalorder %s23, 0
      %p153 = por %p151, %p152
      %p154 = scmp.ne.s32.totalorder %s146, %s148
      %p155 = scmp.eq.s32.totalorder %s28, 3
      %p156 = por %p154, %p155
      %p157 = scmp.ne.s32.totalorder %s148, %s149
      %p158 = scmp.eq.s32.totalorder %s28, 0
      %p159 = por %p157, %p158
      %p160 = scmp.ne.s32.totalorder %s148, %s149
      %p161 = scmp.eq.s32.totalorder %s29, 3
      %p162 = por %p160, %p161
      %p164 = scmp.ne.s32.totalorder %s149, %s163
      %p165 = scmp.eq.s32.totalorder %s29, 0
      %p166 = por %p164, %p165
      %s168 = sadd.s32 %s167, 1
      %p171 = scmp.eq.s32.totalorder %s23, 3
      %p172 = scmp.ne.s32.totalorder %s167, %s169
      %p173 = scmp.eq.s32.totalorder %s23, 0
      %p174 = por %p172, %p173
      %p175 = scmp.ne.s32.totalorder %s167, %s169
      %p176 = scmp.eq.s32.totalorder %s28, 3
      %p177 = por %p175, %p176
      %p178 = scmp.ne.s32.totalorder %s169, %s170
      %p179 = scmp.eq.s32.totalorder %s28, 0
      %p180 = por %p178, %p179
      %p181 = scmp.ne.s32.totalorder %s169, %s170
      %p182 = scmp.eq.s32.totalorder %s29, 3
      %p183 = por %p181, %p182
      %p185 = scmp.ne.s32.totalorder %s170, %s184
      %p186 = scmp.eq.s32.totalorder %s29, 0
      %p187 = por %p185, %p186
      %s189 = sadd.s32 %s188, 1
      %p192 = scmp.eq.s32.totalorder %s23, 3
      %p193 = scmp.ne.s32.totalorder %s188, %s190
      %p194 = scmp.eq.s32.totalorder %s23, 0
      %p195 = por %p193, %p194
      %p196 = scmp.ne.s32.totalorder %s188, %s190
      %p197 = scmp.eq.s32.totalorder %s28, 3
      %p198 = por %p196, %p197
      %p199 = scmp.ne.s32.totalorder %s190, %s191
      %p200 = scmp.eq.s32.totalorder %s28, 0
      %p201 = por %p199, %p200
      %p202 = scmp.ne.s32.totalorder %s190, %s191
      %p203 = scmp.eq.s32.totalorder %s29, 3
      %p204 = por %p202, %p203
      %p206 = scmp.ne.s32.totalorder %s191, %s205
      %p207 = scmp.eq.s32.totalorder %s29, 0
      %p208 = por %p206, %p207
      %s210 = sadd.s32 %s209, 1
      %p213 = scmp.eq.s32.totalorder %s23, 3
      %p214 = scmp.ne.s32.totalorder %s209, %s211
      %p215 = scmp.eq.s32.totalorder %s23, 0
      %p216 = por %p214, %p215
      %p217 = scmp.ne.s32.totalorder %s209, %s211
      %p218 = scmp.eq.s32.totalorder %s28, 3
      %p219 = por %p217, %p218
      %p220 = scmp.ne.s32.totalorder %s211, %s212
      %p221 = scmp.eq.s32.totalorder %s28, 0
      %p222 = por %p220, %p221
      %p223 = scmp.ne.s32.totalorder %s211, %s212
      %p224 = scmp.eq.s32.totalorder %s29, 3
      %p225 = por %p223, %p224
      %p227 = scmp.ne.s32.totalorder %s212, %s226
      %p228 = scmp.eq.s32.totalorder %s29, 0
      %p229 = por %p227, %p228
      %p230 = scmp.le.s32.totalorder 1, %s23
      %p231 = scmp.lt.s32.totalorder %s23, 5
      %p232 = pnand %p230, %p231
      %p233 = pneg %p232
      // Predicated region
      $region9: #{tpu_custom_call.1} parent=5 // pred_check
        _
      $region10: #{tpu_custom_call.1} parent=5 // pred_check_branch
        %235 = sbr.rel (%p232) target = $region12
      $region11: #{tpu_custom_call.1} parent=5 // pred_region
        %s236 = ssub.s32 %s23, 1
        // Predicated region
        $region13: #{tpu_custom_call.1} parent=11 // pred_check
          %p237 = pneg %p96
        $region14: #{tpu_custom_call.1} parent=11 // pred_check_branch
          %239 = sbr.rel (%p237) target = $region16
        $region15: #{tpu_custom_call.1} parent=11 // pred_region
          %s241 = ssub.s32 64, 64
          %242 = vsyncadd [#allocation7], %s241
          %s244 = sshll.u32 [#allocation8], 4
          %s245 = int_to_ptr.vmem [resolvable:$true] %s244
          %247 = dma.hbm_to_vmem [thread:$0]  %s2, 64, %s245, [#allocation7]
        $region16: #{tpu_custom_call.1} parent=11 // pred_fallthru
          _
        // Predicated region
        $region17: #{tpu_custom_call.1} parent=11 // pred_check
          %p248 = pneg %p117
        $region18: #{tpu_custom_call.1} parent=11 // pred_check_branch
          %250 = sbr.rel (%p248) target = $region20
        $region19: #{tpu_custom_call.1} parent=11 // pred_region
          %s252 = ssub.s32 64, 64
          %253 = vsyncadd [#allocation10], %s252
          %s255 = sshll.u32 [#allocation9], 4
          %s256 = int_to_ptr.vmem [resolvable:$true] %s255
          %258 = dma.hbm_to_vmem [thread:$0]  %s3, 64, %s256, [#allocation10]
        $region20: #{tpu_custom_call.1} parent=11 // pred_fallthru
          _
        // Predicated region
        $region21: #{tpu_custom_call.1} parent=11 // pred_check
          %p259 = pneg %p138
        $region22: #{tpu_custom_call.1} parent=11 // pred_check_branch
          %261 = sbr.rel (%p259) target = $region24
        $region23: #{tpu_custom_call.1} parent=11 // pred_region
          %s263 = ssub.s32 8192, 8192
          %264 = vsyncadd [#allocation10], %s263
          %s265 = sshll.u32 [#allocation11], 4
          %s266 = int_to_ptr.vmem [resolvable:$true] %s265
          %271 = dma.hbm_to_vmem [thread:$0]  %s4, 8192, %s266, [#allocation10], 128, 128, 8
        $region24: #{tpu_custom_call.1} parent=11 // pred_fallthru
          _
        // Predicated region
        $region25: #{tpu_custom_call.1} parent=11 // pred_check
          %p272 = pneg %p159
        $region26: #{tpu_custom_call.1} parent=11 // pred_check_branch
          %274 = sbr.rel (%p272) target = $region28
        $region27: #{tpu_custom_call.1} parent=11 // pred_region
          %s276 = ssub.s32 32, 32
          %277 = vsyncadd [#allocation13], %s276
          %s279 = sshll.u32 [#allocation12], 4
          %s280 = int_to_ptr.vmem [resolvable:$true] %s279
          %282 = dma.hbm_to_vmem [thread:$0]  %s5, 32, %s280, [#allocation13]
        $region28: #{tpu_custom_call.1} parent=11 // pred_fallthru
          _
        // Predicated region
        $region29: #{tpu_custom_call.1} parent=11 // pred_check
          %p283 = pneg %p180
        $region30: #{tpu_custom_call.1} parent=11 // pred_check_branch
          %285 = sbr.rel (%p283) target = $region32
        $region31: #{tpu_custom_call.1} parent=11 // pred_region
          _
        $region32: #{tpu_custom_call.1} parent=11 // pred_fallthru
          _
        // Predicated region
        $region33: #{tpu_custom_call.1} parent=11 // pred_check
          %p286 = pneg %p201
        $region34: #{tpu_custom_call.1} parent=11 // pred_check_branch
          %288 = sbr.rel (%p286) target = $region36
        $region35: #{tpu_custom_call.1} parent=11 // pred_region
          %s290 = ssub.s32 16, 16
          %291 = vsyncadd [#allocation13], %s290
          %s293 = sshll.u32 [#allocation14], 4
          %s294 = int_to_ptr.vmem [resolvable:$true] %s293
          %296 = dma.hbm_to_vmem [thread:$0]  %s7, 16, %s294, [#allocation13]
        $region36: #{tpu_custom_call.1} parent=11 // pred_fallthru
          _
      $region12: #{tpu_custom_call.1} parent=5 // pred_fallthru
        _
      %p297 = scmp.lt.s32.totalorder %s23, 4
      // Predicated region
      $region37: #{tpu_custom_call.1} parent=5 // pred_check
        %p298 = pneg %p297
      $region38: #{tpu_custom_call.1} parent=5 // pred_check_branch
        %300 = sbr.rel (%p298) target = $region40
      $region39: #{tpu_custom_call.1} parent=5 // pred_region
        // Predicated region
        $region41: #{tpu_custom_call.1} parent=39 // pred_check
          %p301 = pneg %p43
        $region42: #{tpu_custom_call.1} parent=39 // pred_check_branch
          %303 = sbr.rel (%p301) target = $region44
        $region43: #{tpu_custom_call.1} parent=39 // pred_region
          %s304 = sand.u32 %s33, 1
          %s305 = scalar_lea.sflag [#allocation4], %s304
          %s306 = sand.u32 %s33, 1
          %s307 = smul.addr %s306, 96
          %s308 = scalar_lea.vmem [#allocation3], %s307
          %s309 = smul.u32 96, %s23
          %s311 = ssub.s32 1536, 1536
          %312 = vsyncadd %s305, %s311
          %s313 = smul.addr %s309, 16
          %s314 = scalar_lea.hbm %s0, %s313
          %s316 = sshll.u32 %s308, 4
          %s317 = int_to_ptr.vmem [resolvable:$true] %s316
          %319 = dma.hbm_to_vmem [thread:$0]  %s314, 1536, %s317, %s305
        $region44: #{tpu_custom_call.1} parent=39 // pred_fallthru
          _
        // Predicated region
        $region45: #{tpu_custom_call.1} parent=39 // pred_check
          %p320 = pneg %p69
        $region46: #{tpu_custom_call.1} parent=39 // pred_check_branch
          %322 = sbr.rel (%p320) target = $region48
        $region47: #{tpu_custom_call.1} parent=39 // pred_region
          %s323 = sand.u32 %s23, 1
          %s324 = scalar_lea.sflag [#allocation7], %s323
          %s325 = sand.u32 %s59, 1
          %s326 = smul.addr %s325, 12288
          %s327 = scalar_lea.vmem [#allocation6], %s326
          %s328 = smul.u32 384, %s23
          %s330 = ssub.s32 196608, 196608
          %331 = vsyncadd %s324, %s330
          %s332 = smul.addr %s328, 4
          %s333 = smul.addr %s332, 128
          %s334 = scalar_lea.hbm %s1, %s333
          %s335 = sshll.u32 %s327, 4
          %s336 = int_to_ptr.vmem [resolvable:$true] %s335
          %341 = dma.hbm_to_vmem [thread:$0]  %s334, 196608, %s336, %s324, 512, 512, 32
        $region48: #{tpu_custom_call.1} parent=39 // pred_fallthru
          _
      $region40: #{tpu_custom_call.1} parent=5 // pred_fallthru
        _
      %p342 = scmp.le.s32.totalorder 1, %s23
      %p343 = scmp.lt.s32.totalorder %s23, 5
      %p344 = pnand %p342, %p343
      %p345 = pneg %p344
      // Predicated region
      $region49: #{tpu_custom_call.1} parent=5 // pred_check
        _
      $region50: #{tpu_custom_call.1} parent=5 // pred_check_branch
        %347 = sbr.rel (%p344) target = $region52
      $region51: #{tpu_custom_call.1} parent=5 // pred_region
        %s348 = ssub.s32 %s23, 1
        %s349 = sand.u32 %s36, 1
        %s350 = scalar_lea.sflag [#allocation4], %s349
        %s351 = sand.u32 %s36, 1
        %s352 = smul.addr %s351, 96
        %s353 = scalar_lea.vmem [#allocation3], %s352
        // Predicated region
        $region53: #{tpu_custom_call.1} parent=51 // pred_check
          %p354 = pneg %p49
        $region54: #{tpu_custom_call.1} parent=51 // pred_check_branch
          %356 = sbr.rel (%p354) target = $region56
        $region55: #{tpu_custom_call.1} parent=51 // pred_region
          %357 = dma.done %s350, 1536
        $region56: #{tpu_custom_call.1} parent=51 // pred_fallthru
          _
        %s358 = sand.u32 %s28, 1
        %s359 = scalar_lea.sflag [#allocation7], %s358
        %s360 = sand.u32 %s62, 1
        %s361 = smul.addr %s360, 12288
        %s362 = scalar_lea.vmem [#allocation6], %s361
        // Predicated region
        $region57: #{tpu_custom_call.1} parent=51 // pred_check
          %p363 = pneg %p75
        $region58: #{tpu_custom_call.1} parent=51 // pred_check_branch
          %365 = sbr.rel (%p363) target = $region60
        $region59: #{tpu_custom_call.1} parent=51 // pred_region
          %366 = dma.done %s359, 196608
        $region60: #{tpu_custom_call.1} parent=51 // pred_fallthru
          _
        // Predicated region
        $region61: #{tpu_custom_call.1} parent=51 // pred_check
          %p367 = pneg %p96
        $region62: #{tpu_custom_call.1} parent=51 // pred_check_branch
          %369 = sbr.rel (%p367) target = $region64
        $region63: #{tpu_custom_call.1} parent=51 // pred_region
          %370 = dma.done [#allocation7], 64
        $region64: #{tpu_custom_call.1} parent=51 // pred_fallthru
          _
        // Predicated region
        $region65: #{tpu_custom_call.1} parent=51 // pred_check
          %p371 = pneg %p117
        $region66: #{tpu_custom_call.1} parent=51 // pred_check_branch
          %373 = sbr.rel (%p371) target = $region68
        $region67: #{tpu_custom_call.1} parent=51 // pred_region
          %374 = dma.done [#allocation10], 64
        $region68: #{tpu_custom_call.1} parent=51 // pred_fallthru
          _
        // Predicated region
        $region69: #{tpu_custom_call.1} parent=51 // pred_check
          %p375 = pneg %p138
        $region70: #{tpu_custom_call.1} parent=51 // pred_check_branch
          %377 = sbr.rel (%p375) target = $region72
        $region71: #{tpu_custom_call.1} parent=51 // pred_region
          %378 = dma.done [#allocation10], 8192
        $region72: #{tpu_custom_call.1} parent=51 // pred_fallthru
          _
        // Predicated region
        $region73: #{tpu_custom_call.1} parent=51 // pred_check
          %p379 = pneg %p159
        $region74: #{tpu_custom_call.1} parent=51 // pred_check_branch
          %381 = sbr.rel (%p379) target = $region76
        $region75: #{tpu_custom_call.1} parent=51 // pred_region
          %382 = dma.done [#allocation13], 32
        $region76: #{tpu_custom_call.1} parent=51 // pred_fallthru
          _
        // Predicated region
        $region77: #{tpu_custom_call.1} parent=51 // pred_check
          %p383 = pneg %p201
        $region78: #{tpu_custom_call.1} parent=51 // pred_check_branch
          %385 = sbr.rel (%p383) target = $region80
        $region79: #{tpu_custom_call.1} parent=51 // pred_region
          %386 = dma.done [#allocation13], 16
        $region80: #{tpu_custom_call.1} parent=51 // pred_fallthru
          _
        %s387 = sand.u32 %s36, 1
        %s388 = scalar_lea.sflag [#allocation4], %s387
        %s389 = sand.u32 %s36, 1
        %s390 = smul.addr %s389, 96
        %s391 = scalar_lea.vmem [#allocation3], %s390
        %p392 = pneg %p49
        %p393 = pneg %p46
        %s394 = sand.u32 %s28, 1
        %s395 = scalar_lea.sflag [#allocation7], %s394
        %s396 = sand.u32 %s62, 1
        %s397 = smul.addr %s396, 12288
        %s398 = scalar_lea.vmem [#allocation6], %s397
        %p399 = pneg %p75
        %p400 = pneg %p72
        %p401 = pneg %p96
        %p402 = pneg %p93
        %p403 = pneg %p117
        %p404 = pneg %p114
        %p405 = pneg %p138
        %p406 = pneg %p135
        %p407 = pneg %p159
        %p408 = pneg %p156
        %p409 = pneg %p180
        %p410 = pneg %p177
        %p411 = pneg %p201
        %p412 = pneg %p198
        %p413 = pneg %p222
        %p414 = pneg %p219
        %s415 = smul.u32 96, %s28
        %s416 = smul.u32 384, %s28
        %p418 = scmp.eq.s32.totalorder %s28, 0
        // Predicated region
        $region81: #{tpu_custom_call.1} parent=51 // pred_check
          %p419 = pneg %p418
        $region82: #{tpu_custom_call.1} parent=51 // pred_check_branch
          %421 = sbr.rel (%p419) target = $region84
        $region83: #{tpu_custom_call.1} parent=51 // pred_region
          %422 = vst [vmem:[#allocation2] sm:$0xff] 0.0
        $region84: #{tpu_custom_call.1} parent=51 // pred_fallthru
          _
        %v423 = vld [vmem:[%s362] sm:$0xff]
        %v424 = vld [vmem:[%s362 + $0x8] sm:$0xff]
        %v425 = vld [vmem:[%s362 + $0x10] sm:$0xff]
        %v426 = vld [vmem:[%s362 + $0x18] sm:$0xff]
        %v427 = vld [vmem:[%s362 + $0x20] sm:$0xff]
        %v428 = vld [vmem:[%s362 + $0x28] sm:$0xff]
        %v429 = vld [vmem:[%s362 + $0x30] sm:$0xff]
        %v430 = vld [vmem:[%s362 + $0x38] sm:$0xff]
        %v431 = vld [vmem:[%s362 + $0x40] sm:$0xff]
        %v432 = vld [vmem:[%s362 + $0x48] sm:$0xff]
        %v433 = vld [vmem:[%s362 + $0x50] sm:$0xff]
        %v434 = vld [vmem:[%s362 + $0x58] sm:$0xff]
        %v435 = vld [vmem:[%s362 + $0x60] sm:$0xff]
        %v436 = vld [vmem:[%s362 + $0x68] sm:$0xff]
        %v437 = vld [vmem:[%s362 + $0x70] sm:$0xff]
        %v438 = vld [vmem:[%s362 + $0x78] sm:$0xff]
        %v439 = vld [vmem:[%s362 + $0x80] sm:$0xff]
        %v440 = vld [vmem:[%s362 + $0x88] sm:$0xff]
        %v441 = vld [vmem:[%s362 + $0x90] sm:$0xff]
        %v442 = vld [vmem:[%s362 + $0x98] sm:$0xff]
        %v443 = vld [vmem:[%s362 + $0xa0] sm:$0xff]
        %v444 = vld [vmem:[%s362 + $0xa8] sm:$0xff]
        %v445 = vld [vmem:[%s362 + $0xb0] sm:$0xff]
        %v446 = vld [vmem:[%s362 + $0xb8] sm:$0xff]
        %v447 = vld [vmem:[%s362 + $0xc0] sm:$0xff]
        %v448 = vld [vmem:[%s362 + $0xc8] sm:$0xff]
        %v449 = vld [vmem:[%s362 + $0xd0] sm:$0xff]
        %v450 = vld [vmem:[%s362 + $0xd8] sm:$0xff]
        %v451 = vld [vmem:[%s362 + $0xe0] sm:$0xff]
        %v452 = vld [vmem:[%s362 + $0xe8] sm:$0xff]
        %v453 = vld [vmem:[%s362 + $0xf0] sm:$0xff]
        %v454 = vld [vmem:[%s362 + $0xf8] sm:$0xff]
        %v455 = vld [vmem:[%s362 + $0x100] sm:$0xff]
        %v456 = vld [vmem:[%s362 + $0x108] sm:$0xff]
        %v457 = vld [vmem:[%s362 + $0x110] sm:$0xff]
        %v458 = vld [vmem:[%s362 + $0x118] sm:$0xff]
        %v459 = vld [vmem:[%s362 + $0x120] sm:$0xff]
        %v460 = vld [vmem:[%s362 + $0x128] sm:$0xff]
        %v461 = vld [vmem:[%s362 + $0x130] sm:$0xff]
        %v462 = vld [vmem:[%s362 + $0x138] sm:$0xff]
        %v463 = vld [vmem:[%s362 + $0x140] sm:$0xff]
        %v464 = vld [vmem:[%s362 + $0x148] sm:$0xff]
        %v465 = vld [vmem:[%s362 + $0x150] sm:$0xff]
        %v466 = vld [vmem:[%s362 + $0x158] sm:$0xff]
        %v467 = vld [vmem:[%s362 + $0x160] sm:$0xff]
        %v468 = vld [vmem:[%s362 + $0x168] sm:$0xff]
        %v469 = vld [vmem:[%s362 + $0x170] sm:$0xff]
        %v470 = vld [vmem:[%s362 + $0x178] sm:$0xff]
        %v471 = vld [vmem:[%s362 + $0x180] sm:$0xff]
        %v472 = vld [vmem:[%s362 + $0x188] sm:$0xff]
        %v473 = vld [vmem:[%s362 + $0x190] sm:$0xff]
        %v474 = vld [vmem:[%s362 + $0x198] sm:$0xff]
        %v475 = vld [vmem:[%s362 + $0x1a0] sm:$0xff]
        %v476 = vld [vmem:[%s362 + $0x1a8] sm:$0xff]
        %v477 = vld [vmem:[%s362 + $0x1b0] sm:$0xff]
        %v478 = vld [vmem:[%s362 + $0x1b8] sm:$0xff]
        %v479 = vld [vmem:[%s362 + $0x1c0] sm:$0xff]
        %v480 = vld [vmem:[%s362 + $0x1c8] sm:$0xff]
        %v481 = vld [vmem:[%s362 + $0x1d0] sm:$0xff]
        %v482 = vld [vmem:[%s362 + $0x1d8] sm:$0xff]
        %v483 = vld [vmem:[%s362 + $0x1e0] sm:$0xff]
        %v484 = vld [vmem:[%s362 + $0x1e8] sm:$0xff]
        %v485 = vld [vmem:[%s362 + $0x1f0] sm:$0xff]
        %v486 = vld [vmem:[%s362 + $0x1f8] sm:$0xff]
        %v487 = vld [vmem:[%s362 + $0x200] sm:$0xff]
        %v488 = vld [vmem:[%s362 + $0x208] sm:$0xff]
        %v489 = vld [vmem:[%s362 + $0x210] sm:$0xff]
        %v490 = vld [vmem:[%s362 + $0x218] sm:$0xff]
        %v491 = vld [vmem:[%s362 + $0x220] sm:$0xff]
        %v492 = vld [vmem:[%s362 + $0x228] sm:$0xff]
        %v493 = vld [vmem:[%s362 + $0x230] sm:$0xff]
        %v494 = vld [vmem:[%s362 + $0x238] sm:$0xff]
        %v495 = vld [vmem:[%s362 + $0x240] sm:$0xff]
        %v496 = vld [vmem:[%s362 + $0x248] sm:$0xff]
        %v497 = vld [vmem:[%s362 + $0x250] sm:$0xff]
        %v498 = vld [vmem:[%s362 + $0x258] sm:$0xff]
        %v499 = vld [vmem:[%s362 + $0x260] sm:$0xff]
        %v500 = vld [vmem:[%s362 + $0x268] sm:$0xff]
        %v501 = vld [vmem:[%s362 + $0x270] sm:$0xff]
        %v502 = vld [vmem:[%s362 + $0x278] sm:$0xff]
        %v503 = vld [vmem:[%s362 + $0x280] sm:$0xff]
        %v504 = vld [vmem:[%s362 + $0x288] sm:$0xff]
        %v505 = vld [vmem:[%s362 + $0x290] sm:$0xff]
        %v506 = vld [vmem:[%s362 + $0x298] sm:$0xff]
        %v507 = vld [vmem:[%s362 + $0x2a0] sm:$0xff]
        %v508 = vld [vmem:[%s362 + $0x2a8] sm:$0xff]
        %v509 = vld [vmem:[%s362 + $0x2b0] sm:$0xff]
        %v510 = vld [vmem:[%s362 + $0x2b8] sm:$0xff]
        %v511 = vld [vmem:[%s362 + $0x2c0] sm:$0xff]
        %v512 = vld [vmem:[%s362 + $0x2c8] sm:$0xff]
        %v513 = vld [vmem:[%s362 + $0x2d0] sm:$0xff]
        %v514 = vld [vmem:[%s362 + $0x2d8] sm:$0xff]
        %v515 = vld [vmem:[%s362 + $0x2e0] sm:$0xff]
        %v516 = vld [vmem:[%s362 + $0x2e8] sm:$0xff]
        %v517 = vld [vmem:[%s362 + $0x2f0] sm:$0xff]
        %v518 = vld [vmem:[%s362 + $0x2f8] sm:$0xff]
        %v519 = vld [vmem:[%s362 + $0x300] sm:$0xff]
        %v520 = vld [vmem:[%s362 + $0x308] sm:$0xff]
        %v521 = vld [vmem:[%s362 + $0x310] sm:$0xff]
        %v522 = vld [vmem:[%s362 + $0x318] sm:$0xff]
        %v523 = vld [vmem:[%s362 + $0x320] sm:$0xff]
        %v524 = vld [vmem:[%s362 + $0x328] sm:$0xff]
        %v525 = vld [vmem:[%s362 + $0x330] sm:$0xff]
        %v526 = vld [vmem:[%s362 + $0x338] sm:$0xff]
        %v527 = vld [vmem:[%s362 + $0x340] sm:$0xff]
        %v528 = vld [vmem:[%s362 + $0x348] sm:$0xff]
        %v529 = vld [vmem:[%s362 + $0x350] sm:$0xff]
        %v530 = vld [vmem:[%s362 + $0x358] sm:$0xff]
        %v531 = vld [vmem:[%s362 + $0x360] sm:$0xff]
        %v532 = vld [vmem:[%s362 + $0x368] sm:$0xff]
        %v533 = vld [vmem:[%s362 + $0x370] sm:$0xff]
        %v534 = vld [vmem:[%s362 + $0x378] sm:$0xff]
        %v535 = vld [vmem:[%s362 + $0x380] sm:$0xff]
        %v536 = vld [vmem:[%s362 + $0x388] sm:$0xff]
        %v537 = vld [vmem:[%s362 + $0x390] sm:$0xff]
        %v538 = vld [vmem:[%s362 + $0x398] sm:$0xff]
        %v539 = vld [vmem:[%s362 + $0x3a0] sm:$0xff]
        %v540 = vld [vmem:[%s362 + $0x3a8] sm:$0xff]
        %v541 = vld [vmem:[%s362 + $0x3b0] sm:$0xff]
        %v542 = vld [vmem:[%s362 + $0x3b8] sm:$0xff]
        %v543 = vld [vmem:[%s362 + $0x3c0] sm:$0xff]
        %v544 = vld [vmem:[%s362 + $0x3c8] sm:$0xff]
        %v545 = vld [vmem:[%s362 + $0x3d0] sm:$0xff]
        %v546 = vld [vmem:[%s362 + $0x3d8] sm:$0xff]
        %v547 = vld [vmem:[%s362 + $0x3e0] sm:$0xff]
        %v548 = vld [vmem:[%s362 + $0x3e8] sm:$0xff]
        %v549 = vld [vmem:[%s362 + $0x3f0] sm:$0xff]
        %v550 = vld [vmem:[%s362 + $0x3f8] sm:$0xff]
        %v551 = vld [vmem:[%s362 + $0x400] sm:$0xff]
        %v552 = vld [vmem:[%s362 + $0x408] sm:$0xff]
        %v553 = vld [vmem:[%s362 + $0x410] sm:$0xff]
        %v554 = vld [vmem:[%s362 + $0x418] sm:$0xff]
        %v555 = vld [vmem:[%s362 + $0x420] sm:$0xff]
        %v556 = vld [vmem:[%s362 + $0x428] sm:$0xff]
        %v557 = vld [vmem:[%s362 + $0x430] sm:$0xff]
        %v558 = vld [vmem:[%s362 + $0x438] sm:$0xff]
        %v559 = vld [vmem:[%s362 + $0x440] sm:$0xff]
        %v560 = vld [vmem:[%s362 + $0x448] sm:$0xff]
        %v561 = vld [vmem:[%s362 + $0x450] sm:$0xff]
        %v562 = vld [vmem:[%s362 + $0x458] sm:$0xff]
        %v563 = vld [vmem:[%s362 + $0x460] sm:$0xff]
        %v564 = vld [vmem:[%s362 + $0x468] sm:$0xff]
        %v565 = vld [vmem:[%s362 + $0x470] sm:$0xff]
        %v566 = vld [vmem:[%s362 + $0x478] sm:$0xff]
        %v567 = vld [vmem:[%s362 + $0x480] sm:$0xff]
        %v568 = vld [vmem:[%s362 + $0x488] sm:$0xff]
        %v569 = vld [vmem:[%s362 + $0x490] sm:$0xff]
        %v570 = vld [vmem:[%s362 + $0x498] sm:$0xff]
        %v571 = vld [vmem:[%s362 + $0x4a0] sm:$0xff]
        %v572 = vld [vmem:[%s362 + $0x4a8] sm:$0xff]
        %v573 = vld [vmem:[%s362 + $0x4b0] sm:$0xff]
        %v574 = vld [vmem:[%s362 + $0x4b8] sm:$0xff]
        %v575 = vld [vmem:[%s362 + $0x4c0] sm:$0xff]
        %v576 = vld [vmem:[%s362 + $0x4c8] sm:$0xff]
        %v577 = vld [vmem:[%s362 + $0x4d0] sm:$0xff]
        %v578 = vld [vmem:[%s362 + $0x4d8] sm:$0xff]
        %v579 = vld [vmem:[%s362 + $0x4e0] sm:$0xff]
        %v580 = vld [vmem:[%s362 + $0x4e8] sm:$0xff]
        %v581 = vld [vmem:[%s362 + $0x4f0] sm:$0xff]
        %v582 = vld [vmem:[%s362 + $0x4f8] sm:$0xff]
        %v583 = vld [vmem:[%s362 + $0x500] sm:$0xff]
        %v584 = vld [vmem:[%s362 + $0x508] sm:$0xff]
        %v585 = vld [vmem:[%s362 + $0x510] sm:$0xff]
        %v586 = vld [vmem:[%s362 + $0x518] sm:$0xff]
        %v587 = vld [vmem:[%s362 + $0x520] sm:$0xff]
        %v588 = vld [vmem:[%s362 + $0x528] sm:$0xff]
        %v589 = vld [vmem:[%s362 + $0x530] sm:$0xff]
        %v590 = vld [vmem:[%s362 + $0x538] sm:$0xff]
        %v591 = vld [vmem:[%s362 + $0x540] sm:$0xff]
        %v592 = vld [vmem:[%s362 + $0x548] sm:$0xff]
        %v593 = vld [vmem:[%s362 + $0x550] sm:$0xff]
        %v594 = vld [vmem:[%s362 + $0x558] sm:$0xff]
        %v595 = vld [vmem:[%s362 + $0x560] sm:$0xff]
        %v596 = vld [vmem:[%s362 + $0x568] sm:$0xff]
        %v597 = vld [vmem:[%s362 + $0x570] sm:$0xff]
        %v598 = vld [vmem:[%s362 + $0x578] sm:$0xff]
        %v599 = vld [vmem:[%s362 + $0x580] sm:$0xff]
        %v600 = vld [vmem:[%s362 + $0x588] sm:$0xff]
        %v601 = vld [vmem:[%s362 + $0x590] sm:$0xff]
        %v602 = vld [vmem:[%s362 + $0x598] sm:$0xff]
        %v603 = vld [vmem:[%s362 + $0x5a0] sm:$0xff]
        %v604 = vld [vmem:[%s362 + $0x5a8] sm:$0xff]
        %v605 = vld [vmem:[%s362 + $0x5b0] sm:$0xff]
        %v606 = vld [vmem:[%s362 + $0x5b8] sm:$0xff]
        %v607 = vld [vmem:[%s362 + $0x5c0] sm:$0xff]
        %v608 = vld [vmem:[%s362 + $0x5c8] sm:$0xff]
        %v609 = vld [vmem:[%s362 + $0x5d0] sm:$0xff]
        %v610 = vld [vmem:[%s362 + $0x5d8] sm:$0xff]
        %v611 = vld [vmem:[%s362 + $0x5e0] sm:$0xff]
        %v612 = vld [vmem:[%s362 + $0x5e8] sm:$0xff]
        %v613 = vld [vmem:[%s362 + $0x5f0] sm:$0xff]
        %v614 = vld [vmem:[%s362 + $0x5f8] sm:$0xff]
        %v615 = vld [vmem:[%s362 + $0x600] sm:$0xff]
        %v616 = vld [vmem:[%s362 + $0x608] sm:$0xff]
        %v617 = vld [vmem:[%s362 + $0x610] sm:$0xff]
        %v618 = vld [vmem:[%s362 + $0x618] sm:$0xff]
        %v619 = vld [vmem:[%s362 + $0x620] sm:$0xff]
        %v620 = vld [vmem:[%s362 + $0x628] sm:$0xff]
        %v621 = vld [vmem:[%s362 + $0x630] sm:$0xff]
        %v622 = vld [vmem:[%s362 + $0x638] sm:$0xff]
        %v623 = vld [vmem:[%s362 + $0x640] sm:$0xff]
        %v624 = vld [vmem:[%s362 + $0x648] sm:$0xff]
        %v625 = vld [vmem:[%s362 + $0x650] sm:$0xff]
        %v626 = vld [vmem:[%s362 + $0x658] sm:$0xff]
        %v627 = vld [vmem:[%s362 + $0x660] sm:$0xff]
        %v628 = vld [vmem:[%s362 + $0x668] sm:$0xff]
        %v629 = vld [vmem:[%s362 + $0x670] sm:$0xff]
        %v630 = vld [vmem:[%s362 + $0x678] sm:$0xff]
        %v631 = vld [vmem:[%s362 + $0x680] sm:$0xff]
        %v632 = vld [vmem:[%s362 + $0x688] sm:$0xff]
        %v633 = vld [vmem:[%s362 + $0x690] sm:$0xff]
        %v634 = vld [vmem:[%s362 + $0x698] sm:$0xff]
        %v635 = vld [vmem:[%s362 + $0x6a0] sm:$0xff]
        %v636 = vld [vmem:[%s362 + $0x6a8] sm:$0xff]
        %v637 = vld [vmem:[%s362 + $0x6b0] sm:$0xff]
        %v638 = vld [vmem:[%s362 + $0x6b8] sm:$0xff]
        %v639 = vld [vmem:[%s362 + $0x6c0] sm:$0xff]
        %v640 = vld [vmem:[%s362 + $0x6c8] sm:$0xff]
        %v641 = vld [vmem:[%s362 + $0x6d0] sm:$0xff]
        %v642 = vld [vmem:[%s362 + $0x6d8] sm:$0xff]
        %v643 = vld [vmem:[%s362 + $0x6e0] sm:$0xff]
        %v644 = vld [vmem:[%s362 + $0x6e8] sm:$0xff]
        %v645 = vld [vmem:[%s362 + $0x6f0] sm:$0xff]
        %v646 = vld [vmem:[%s362 + $0x6f8] sm:$0xff]
        %v647 = vld [vmem:[%s362 + $0x700] sm:$0xff]
        %v648 = vld [vmem:[%s362 + $0x708] sm:$0xff]
        %v649 = vld [vmem:[%s362 + $0x710] sm:$0xff]
        %v650 = vld [vmem:[%s362 + $0x718] sm:$0xff]
        %v651 = vld [vmem:[%s362 + $0x720] sm:$0xff]
        %v652 = vld [vmem:[%s362 + $0x728] sm:$0xff]
        %v653 = vld [vmem:[%s362 + $0x730] sm:$0xff]
        %v654 = vld [vmem:[%s362 + $0x738] sm:$0xff]
        %v655 = vld [vmem:[%s362 + $0x740] sm:$0xff]
        %v656 = vld [vmem:[%s362 + $0x748] sm:$0xff]
        %v657 = vld [vmem:[%s362 + $0x750] sm:$0xff]
        %v658 = vld [vmem:[%s362 + $0x758] sm:$0xff]
        %v659 = vld [vmem:[%s362 + $0x760] sm:$0xff]
        %v660 = vld [vmem:[%s362 + $0x768] sm:$0xff]
        %v661 = vld [vmem:[%s362 + $0x770] sm:$0xff]
        %v662 = vld [vmem:[%s362 + $0x778] sm:$0xff]
        %v663 = vld [vmem:[%s362 + $0x780] sm:$0xff]
        %v664 = vld [vmem:[%s362 + $0x788] sm:$0xff]
        %v665 = vld [vmem:[%s362 + $0x790] sm:$0xff]
        %v666 = vld [vmem:[%s362 + $0x798] sm:$0xff]
        %v667 = vld [vmem:[%s362 + $0x7a0] sm:$0xff]
        %v668 = vld [vmem:[%s362 + $0x7a8] sm:$0xff]
        %v669 = vld [vmem:[%s362 + $0x7b0] sm:$0xff]
        %v670 = vld [vmem:[%s362 + $0x7b8] sm:$0xff]
        %v671 = vld [vmem:[%s362 + $0x7c0] sm:$0xff]
        %v672 = vld [vmem:[%s362 + $0x7c8] sm:$0xff]
        %v673 = vld [vmem:[%s362 + $0x7d0] sm:$0xff]
        %v674 = vld [vmem:[%s362 + $0x7d8] sm:$0xff]
        %v675 = vld [vmem:[%s362 + $0x7e0] sm:$0xff]
        %v676 = vld [vmem:[%s362 + $0x7e8] sm:$0xff]
        %v677 = vld [vmem:[%s362 + $0x7f0] sm:$0xff]
        %v678 = vld [vmem:[%s362 + $0x7f8] sm:$0xff]
        %v679 = vld [vmem:[%s362 + $0x800] sm:$0xff]
        %v680 = vld [vmem:[%s362 + $0x808] sm:$0xff]
        %v681 = vld [vmem:[%s362 + $0x810] sm:$0xff]
        %v682 = vld [vmem:[%s362 + $0x818] sm:$0xff]
        %v683 = vld [vmem:[%s362 + $0x820] sm:$0xff]
        %v684 = vld [vmem:[%s362 + $0x828] sm:$0xff]
        %v685 = vld [vmem:[%s362 + $0x830] sm:$0xff]
        %v686 = vld [vmem:[%s362 + $0x838] sm:$0xff]
        %v687 = vld [vmem:[%s362 + $0x840] sm:$0xff]
        %v688 = vld [vmem:[%s362 + $0x848] sm:$0xff]
        %v689 = vld [vmem:[%s362 + $0x850] sm:$0xff]
        %v690 = vld [vmem:[%s362 + $0x858] sm:$0xff]
        %v691 = vld [vmem:[%s362 + $0x860] sm:$0xff]
        %v692 = vld [vmem:[%s362 + $0x868] sm:$0xff]
        %v693 = vld [vmem:[%s362 + $0x870] sm:$0xff]
        %v694 = vld [vmem:[%s362 + $0x878] sm:$0xff]
        %v695 = vld [vmem:[%s362 + $0x880] sm:$0xff]
        %v696 = vld [vmem:[%s362 + $0x888] sm:$0xff]
        %v697 = vld [vmem:[%s362 + $0x890] sm:$0xff]
        %v698 = vld [vmem:[%s362 + $0x898] sm:$0xff]
        %v699 = vld [vmem:[%s362 + $0x8a0] sm:$0xff]
        %v700 = vld [vmem:[%s362 + $0x8a8] sm:$0xff]
        %v701 = vld [vmem:[%s362 + $0x8b0] sm:$0xff]
        %v702 = vld [vmem:[%s362 + $0x8b8] sm:$0xff]
        %v703 = vld [vmem:[%s362 + $0x8c0] sm:$0xff]
        %v704 = vld [vmem:[%s362 + $0x8c8] sm:$0xff]
        %v705 = vld [vmem:[%s362 + $0x8d0] sm:$0xff]
        %v706 = vld [vmem:[%s362 + $0x8d8] sm:$0xff]
        %v707 = vld [vmem:[%s362 + $0x8e0] sm:$0xff]
        %v708 = vld [vmem:[%s362 + $0x8e8] sm:$0xff]
        %v709 = vld [vmem:[%s362 + $0x8f0] sm:$0xff]
        %v710 = vld [vmem:[%s362 + $0x8f8] sm:$0xff]
        %v711 = vld [vmem:[%s362 + $0x900] sm:$0xff]
        %v712 = vld [vmem:[%s362 + $0x908] sm:$0xff]
        %v713 = vld [vmem:[%s362 + $0x910] sm:$0xff]
        %v714 = vld [vmem:[%s362 + $0x918] sm:$0xff]
        %v715 = vld [vmem:[%s362 + $0x920] sm:$0xff]
        %v716 = vld [vmem:[%s362 + $0x928] sm:$0xff]
        %v717 = vld [vmem:[%s362 + $0x930] sm:$0xff]
        %v718 = vld [vmem:[%s362 + $0x938] sm:$0xff]
        %v719 = vld [vmem:[%s362 + $0x940] sm:$0xff]
        %v720 = vld [vmem:[%s362 + $0x948] sm:$0xff]
        %v721 = vld [vmem:[%s362 + $0x950] sm:$0xff]
        %v722 = vld [vmem:[%s362 + $0x958] sm:$0xff]
        %v723 = vld [vmem:[%s362 + $0x960] sm:$0xff]
        %v724 = vld [vmem:[%s362 + $0x968] sm:$0xff]
        %v725 = vld [vmem:[%s362 + $0x970] sm:$0xff]
        %v726 = vld [vmem:[%s362 + $0x978] sm:$0xff]
        %v727 = vld [vmem:[%s362 + $0x980] sm:$0xff]
        %v728 = vld [vmem:[%s362 + $0x988] sm:$0xff]
        %v729 = vld [vmem:[%s362 + $0x990] sm:$0xff]
        %v730 = vld [vmem:[%s362 + $0x998] sm:$0xff]
        %v731 = vld [vmem:[%s362 + $0x9a0] sm:$0xff]
        %v732 = vld [vmem:[%s362 + $0x9a8] sm:$0xff]
        %v733 = vld [vmem:[%s362 + $0x9b0] sm:$0xff]
        %v734 = vld [vmem:[%s362 + $0x9b8] sm:$0xff]
        %v735 = vld [vmem:[%s362 + $0x9c0] sm:$0xff]
        %v736 = vld [vmem:[%s362 + $0x9c8] sm:$0xff]
        %v737 = vld [vmem:[%s362 + $0x9d0] sm:$0xff]
        %v738 = vld [vmem:[%s362 + $0x9d8] sm:$0xff]
        %v739 = vld [vmem:[%s362 + $0x9e0] sm:$0xff]
        %v740 = vld [vmem:[%s362 + $0x9e8] sm:$0xff]
        %v741 = vld [vmem:[%s362 + $0x9f0] sm:$0xff]
        %v742 = vld [vmem:[%s362 + $0x9f8] sm:$0xff]
        %v743 = vld [vmem:[%s362 + $0xa00] sm:$0xff]
        %v744 = vld [vmem:[%s362 + $0xa08] sm:$0xff]
        %v745 = vld [vmem:[%s362 + $0xa10] sm:$0xff]
        %v746 = vld [vmem:[%s362 + $0xa18] sm:$0xff]
        %v747 = vld [vmem:[%s362 + $0xa20] sm:$0xff]
        %v748 = vld [vmem:[%s362 + $0xa28] sm:$0xff]
        %v749 = vld [vmem:[%s362 + $0xa30] sm:$0xff]
        %v750 = vld [vmem:[%s362 + $0xa38] sm:$0xff]
        %v751 = vld [vmem:[%s362 + $0xa40] sm:$0xff]
        %v752 = vld [vmem:[%s362 + $0xa48] sm:$0xff]
        %v753 = vld [vmem:[%s362 + $0xa50] sm:$0xff]
        %v754 = vld [vmem:[%s362 + $0xa58] sm:$0xff]
        %v755 = vld [vmem:[%s362 + $0xa60] sm:$0xff]
        %v756 = vld [vmem:[%s362 + $0xa68] sm:$0xff]
        %v757 = vld [vmem:[%s362 + $0xa70] sm:$0xff]
        %v758 = vld [vmem:[%s362 + $0xa78] sm:$0xff]
        %v759 = vld [vmem:[%s362 + $0xa80] sm:$0xff]
        %v760 = vld [vmem:[%s362 + $0xa88] sm:$0xff]
        %v761 = vld [vmem:[%s362 + $0xa90] sm:$0xff]
        %v762 = vld [vmem:[%s362 + $0xa98] sm:$0xff]
        %v763 = vld [vmem:[%s362 + $0xaa0] sm:$0xff]
        %v764 = vld [vmem:[%s362 + $0xaa8] sm:$0xff]
        %v765 = vld [vmem:[%s362 + $0xab0] sm:$0xff]
        %v766 = vld [vmem:[%s362 + $0xab8] sm:$0xff]
        %v767 = vld [vmem:[%s362 + $0xac0] sm:$0xff]
        %v768 = vld [vmem:[%s362 + $0xac8] sm:$0xff]
        %v769 = vld [vmem:[%s362 + $0xad0] sm:$0xff]
        %v770 = vld [vmem:[%s362 + $0xad8] sm:$0xff]
        %v771 = vld [vmem:[%s362 + $0xae0] sm:$0xff]
        %v772 = vld [vmem:[%s362 + $0xae8] sm:$0xff]
        %v773 = vld [vmem:[%s362 + $0xaf0] sm:$0xff]
        %v774 = vld [vmem:[%s362 + $0xaf8] sm:$0xff]
        %v775 = vld [vmem:[%s362 + $0xb00] sm:$0xff]
        %v776 = vld [vmem:[%s362 + $0xb08] sm:$0xff]
        %v777 = vld [vmem:[%s362 + $0xb10] sm:$0xff]
        %v778 = vld [vmem:[%s362 + $0xb18] sm:$0xff]
        %v779 = vld [vmem:[%s362 + $0xb20] sm:$0xff]
        %v780 = vld [vmem:[%s362 + $0xb28] sm:$0xff]
        %v781 = vld [vmem:[%s362 + $0xb30] sm:$0xff]
        %v782 = vld [vmem:[%s362 + $0xb38] sm:$0xff]
        %v783 = vld [vmem:[%s362 + $0xb40] sm:$0xff]
        %v784 = vld [vmem:[%s362 + $0xb48] sm:$0xff]
        %v785 = vld [vmem:[%s362 + $0xb50] sm:$0xff]
        %v786 = vld [vmem:[%s362 + $0xb58] sm:$0xff]
        %v787 = vld [vmem:[%s362 + $0xb60] sm:$0xff]
        %v788 = vld [vmem:[%s362 + $0xb68] sm:$0xff]
        %v789 = vld [vmem:[%s362 + $0xb70] sm:$0xff]
        %v790 = vld [vmem:[%s362 + $0xb78] sm:$0xff]
        %v791 = vld [vmem:[%s362 + $0xb80] sm:$0xff]
        %v792 = vld [vmem:[%s362 + $0xb88] sm:$0xff]
        %v793 = vld [vmem:[%s362 + $0xb90] sm:$0xff]
        %v794 = vld [vmem:[%s362 + $0xb98] sm:$0xff]
        %v795 = vld [vmem:[%s362 + $0xba0] sm:$0xff]
        %v796 = vld [vmem:[%s362 + $0xba8] sm:$0xff]
        %v797 = vld [vmem:[%s362 + $0xbb0] sm:$0xff]
        %v798 = vld [vmem:[%s362 + $0xbb8] sm:$0xff]
        %v799 = vld [vmem:[%s362 + $0xbc0] sm:$0xff]
        %v800 = vld [vmem:[%s362 + $0xbc8] sm:$0xff]
        %v801 = vld [vmem:[%s362 + $0xbd0] sm:$0xff]
        %v802 = vld [vmem:[%s362 + $0xbd8] sm:$0xff]
        %v803 = vld [vmem:[%s362 + $0xbe0] sm:$0xff]
        %v804 = vld [vmem:[%s362 + $0xbe8] sm:$0xff]
        %v805 = vld [vmem:[%s362 + $0xbf0] sm:$0xff]
        %v806 = vld [vmem:[%s362 + $0xbf8] sm:$0xff]
        %v807 = vld [vmem:[%s362 + $0xc00] sm:$0xff]
        %v808 = vld [vmem:[%s362 + $0xc08] sm:$0xff]
        %v809 = vld [vmem:[%s362 + $0xc10] sm:$0xff]
        %v810 = vld [vmem:[%s362 + $0xc18] sm:$0xff]
        %v811 = vld [vmem:[%s362 + $0xc20] sm:$0xff]
        %v812 = vld [vmem:[%s362 + $0xc28] sm:$0xff]
        %v813 = vld [vmem:[%s362 + $0xc30] sm:$0xff]
        %v814 = vld [vmem:[%s362 + $0xc38] sm:$0xff]
        %v815 = vld [vmem:[%s362 + $0xc40] sm:$0xff]
        %v816 = vld [vmem:[%s362 + $0xc48] sm:$0xff]
        %v817 = vld [vmem:[%s362 + $0xc50] sm:$0xff]
        %v818 = vld [vmem:[%s362 + $0xc58] sm:$0xff]
        %v819 = vld [vmem:[%s362 + $0xc60] sm:$0xff]
        %v820 = vld [vmem:[%s362 + $0xc68] sm:$0xff]
        %v821 = vld [vmem:[%s362 + $0xc70] sm:$0xff]
        %v822 = vld [vmem:[%s362 + $0xc78] sm:$0xff]
        %v823 = vld [vmem:[%s362 + $0xc80] sm:$0xff]
        %v824 = vld [vmem:[%s362 + $0xc88] sm:$0xff]
        %v825 = vld [vmem:[%s362 + $0xc90] sm:$0xff]
        %v826 = vld [vmem:[%s362 + $0xc98] sm:$0xff]
        %v827 = vld [vmem:[%s362 + $0xca0] sm:$0xff]
        %v828 = vld [vmem:[%s362 + $0xca8] sm:$0xff]
        %v829 = vld [vmem:[%s362 + $0xcb0] sm:$0xff]
        %v830 = vld [vmem:[%s362 + $0xcb8] sm:$0xff]
        %v831 = vld [vmem:[%s362 + $0xcc0] sm:$0xff]
        %v832 = vld [vmem:[%s362 + $0xcc8] sm:$0xff]
        %v833 = vld [vmem:[%s362 + $0xcd0] sm:$0xff]
        %v834 = vld [vmem:[%s362 + $0xcd8] sm:$0xff]
        %v835 = vld [vmem:[%s362 + $0xce0] sm:$0xff]
        %v836 = vld [vmem:[%s362 + $0xce8] sm:$0xff]
        %v837 = vld [vmem:[%s362 + $0xcf0] sm:$0xff]
        %v838 = vld [vmem:[%s362 + $0xcf8] sm:$0xff]
        %v839 = vld [vmem:[%s362 + $0xd00] sm:$0xff]
        %v840 = vld [vmem:[%s362 + $0xd08] sm:$0xff]
        %v841 = vld [vmem:[%s362 + $0xd10] sm:$0xff]
        %v842 = vld [vmem:[%s362 + $0xd18] sm:$0xff]
        %v843 = vld [vmem:[%s362 + $0xd20] sm:$0xff]
        %v844 = vld [vmem:[%s362 + $0xd28] sm:$0xff]
        %v845 = vld [vmem:[%s362 + $0xd30] sm:$0xff]
        %v846 = vld [vmem:[%s362 + $0xd38] sm:$0xff]
        %v847 = vld [vmem:[%s362 + $0xd40] sm:$0xff]
        %v848 = vld [vmem:[%s362 + $0xd48] sm:$0xff]
        %v849 = vld [vmem:[%s362 + $0xd50] sm:$0xff]
        %v850 = vld [vmem:[%s362 + $0xd58] sm:$0xff]
        %v851 = vld [vmem:[%s362 + $0xd60] sm:$0xff]
        %v852 = vld [vmem:[%s362 + $0xd68] sm:$0xff]
        %v853 = vld [vmem:[%s362 + $0xd70] sm:$0xff]
        %v854 = vld [vmem:[%s362 + $0xd78] sm:$0xff]
        %v855 = vld [vmem:[%s362 + $0xd80] sm:$0xff]
        %v856 = vld [vmem:[%s362 + $0xd88] sm:$0xff]
        %v857 = vld [vmem:[%s362 + $0xd90] sm:$0xff]
        %v858 = vld [vmem:[%s362 + $0xd98] sm:$0xff]
        %v859 = vld [vmem:[%s362 + $0xda0] sm:$0xff]
        %v860 = vld [vmem:[%s362 + $0xda8] sm:$0xff]
        %v861 = vld [vmem:[%s362 + $0xdb0] sm:$0xff]
        %v862 = vld [vmem:[%s362 + $0xdb8] sm:$0xff]
        %v863 = vld [vmem:[%s362 + $0xdc0] sm:$0xff]
        %v864 = vld [vmem:[%s362 + $0xdc8] sm:$0xff]
        %v865 = vld [vmem:[%s362 + $0xdd0] sm:$0xff]
        %v866 = vld [vmem:[%s362 + $0xdd8] sm:$0xff]
        %v867 = vld [vmem:[%s362 + $0xde0] sm:$0xff]
        %v868 = vld [vmem:[%s362 + $0xde8] sm:$0xff]
        %v869 = vld [vmem:[%s362 + $0xdf0] sm:$0xff]
        %v870 = vld [vmem:[%s362 + $0xdf8] sm:$0xff]
        %v871 = vld [vmem:[%s362 + $0xe00] sm:$0xff]
        %v872 = vld [vmem:[%s362 + $0xe08] sm:$0xff]
        %v873 = vld [vmem:[%s362 + $0xe10] sm:$0xff]
        %v874 = vld [vmem:[%s362 + $0xe18] sm:$0xff]
        %v875 = vld [vmem:[%s362 + $0xe20] sm:$0xff]
        %v876 = vld [vmem:[%s362 + $0xe28] sm:$0xff]
        %v877 = vld [vmem:[%s362 + $0xe30] sm:$0xff]
        %v878 = vld [vmem:[%s362 + $0xe38] sm:$0xff]
        %v879 = vld [vmem:[%s362 + $0xe40] sm:$0xff]
        %v880 = vld [vmem:[%s362 + $0xe48] sm:$0xff]
        %v881 = vld [vmem:[%s362 + $0xe50] sm:$0xff]
        %v882 = vld [vmem:[%s362 + $0xe58] sm:$0xff]
        %v883 = vld [vmem:[%s362 + $0xe60] sm:$0xff]
        %v884 = vld [vmem:[%s362 + $0xe68] sm:$0xff]
        %v885 = vld [vmem:[%s362 + $0xe70] sm:$0xff]
        %v886 = vld [vmem:[%s362 + $0xe78] sm:$0xff]
        %v887 = vld [vmem:[%s362 + $0xe80] sm:$0xff]
        %v888 = vld [vmem:[%s362 + $0xe88] sm:$0xff]
        %v889 = vld [vmem:[%s362 + $0xe90] sm:$0xff]
        %v890 = vld [vmem:[%s362 + $0xe98] sm:$0xff]
        %v891 = vld [vmem:[%s362 + $0xea0] sm:$0xff]
        %v892 = vld [vmem:[%s362 + $0xea8] sm:$0xff]
        %v893 = vld [vmem:[%s362 + $0xeb0] sm:$0xff]
        %v894 = vld [vmem:[%s362 + $0xeb8] sm:$0xff]
        %v895 = vld [vmem:[%s362 + $0xec0] sm:$0xff]
        %v896 = vld [vmem:[%s362 + $0xec8] sm:$0xff]
        %v897 = vld [vmem:[%s362 + $0xed0] sm:$0xff]
        %v898 = vld [vmem:[%s362 + $0xed8] sm:$0xff]
        %v899 = vld [vmem:[%s362 + $0xee0] sm:$0xff]
        %v900 = vld [vmem:[%s362 + $0xee8] sm:$0xff]
        %v901 = vld [vmem:[%s362 + $0xef0] sm:$0xff]
        %v902 = vld [vmem:[%s362 + $0xef8] sm:$0xff]
        %v903 = vld [vmem:[%s362 + $0xf00] sm:$0xff]
        %v904 = vld [vmem:[%s362 + $0xf08] sm:$0xff]
        %v905 = vld [vmem:[%s362 + $0xf10] sm:$0xff]
        %v906 = vld [vmem:[%s362 + $0xf18] sm:$0xff]
        %v907 = vld [vmem:[%s362 + $0xf20] sm:$0xff]
        %v908 = vld [vmem:[%s362 + $0xf28] sm:$0xff]
        %v909 = vld [vmem:[%s362 + $0xf30] sm:$0xff]
        %v910 = vld [vmem:[%s362 + $0xf38] sm:$0xff]
        %v911 = vld [vmem:[%s362 + $0xf40] sm:$0xff]
        %v912 = vld [vmem:[%s362 + $0xf48] sm:$0xff]
        %v913 = vld [vmem:[%s362 + $0xf50] sm:$0xff]
        %v914 = vld [vmem:[%s362 + $0xf58] sm:$0xff]
        %v915 = vld [vmem:[%s362 + $0xf60] sm:$0xff]
        %v916 = vld [vmem:[%s362 + $0xf68] sm:$0xff]
        %v917 = vld [vmem:[%s362 + $0xf70] sm:$0xff]
        %v918 = vld [vmem:[%s362 + $0xf78] sm:$0xff]
        %v919 = vld [vmem:[%s362 + $0xf80] sm:$0xff]
        %v920 = vld [vmem:[%s362 + $0xf88] sm:$0xff]
        %v921 = vld [vmem:[%s362 + $0xf90] sm:$0xff]
        %v922 = vld [vmem:[%s362 + $0xf98] sm:$0xff]
        %v923 = vld [vmem:[%s362 + $0xfa0] sm:$0xff]
        %v924 = vld [vmem:[%s362 + $0xfa8] sm:$0xff]
        %v925 = vld [vmem:[%s362 + $0xfb0] sm:$0xff]
        %v926 = vld [vmem:[%s362 + $0xfb8] sm:$0xff]
        %v927 = vld [vmem:[%s362 + $0xfc0] sm:$0xff]
        %v928 = vld [vmem:[%s362 + $0xfc8] sm:$0xff]
        %v929 = vld [vmem:[%s362 + $0xfd0] sm:$0xff]
        %v930 = vld [vmem:[%s362 + $0xfd8] sm:$0xff]
        %v931 = vld [vmem:[%s362 + $0xfe0] sm:$0xff]
        %v932 = vld [vmem:[%s362 + $0xfe8] sm:$0xff]
        %v933 = vld [vmem:[%s362 + $0xff0] sm:$0xff]
        %v934 = vld [vmem:[%s362 + $0xff8] sm:$0xff]
        %v935 = vld [vmem:[%s362 + $0x1000] sm:$0xff]
        %v936 = vld [vmem:[%s362 + $0x1008] sm:$0xff]
        %v937 = vld [vmem:[%s362 + $0x1010] sm:$0xff]
        %v938 = vld [vmem:[%s362 + $0x1018] sm:$0xff]
        %v939 = vld [vmem:[%s362 + $0x1020] sm:$0xff]
        %v940 = vld [vmem:[%s362 + $0x1028] sm:$0xff]
        %v941 = vld [vmem:[%s362 + $0x1030] sm:$0xff]
        %v942 = vld [vmem:[%s362 + $0x1038] sm:$0xff]
        %v943 = vld [vmem:[%s362 + $0x1040] sm:$0xff]
        %v944 = vld [vmem:[%s362 + $0x1048] sm:$0xff]
        %v945 = vld [vmem:[%s362 + $0x1050] sm:$0xff]
        %v946 = vld [vmem:[%s362 + $0x1058] sm:$0xff]
        %v947 = vld [vmem:[%s362 + $0x1060] sm:$0xff]
        %v948 = vld [vmem:[%s362 + $0x1068] sm:$0xff]
        %v949 = vld [vmem:[%s362 + $0x1070] sm:$0xff]
        %v950 = vld [vmem:[%s362 + $0x1078] sm:$0xff]
        %v951 = vld [vmem:[%s362 + $0x1080] sm:$0xff]
        %v952 = vld [vmem:[%s362 + $0x1088] sm:$0xff]
        %v953 = vld [vmem:[%s362 + $0x1090] sm:$0xff]
        %v954 = vld [vmem:[%s362 + $0x1098] sm:$0xff]
        %v955 = vld [vmem:[%s362 + $0x10a0] sm:$0xff]
        %v956 = vld [vmem:[%s362 + $0x10a8] sm:$0xff]
        %v957 = vld [vmem:[%s362 + $0x10b0] sm:$0xff]
        %v958 = vld [vmem:[%s362 + $0x10b8] sm:$0xff]
        %v959 = vld [vmem:[%s362 + $0x10c0] sm:$0xff]
        %v960 = vld [vmem:[%s362 + $0x10c8] sm:$0xff]
        %v961 = vld [vmem:[%s362 + $0x10d0] sm:$0xff]
        %v962 = vld [vmem:[%s362 + $0x10d8] sm:$0xff]
        %v963 = vld [vmem:[%s362 + $0x10e0] sm:$0xff]
        %v964 = vld [vmem:[%s362 + $0x10e8] sm:$0xff]
        %v965 = vld [vmem:[%s362 + $0x10f0] sm:$0xff]
        %v966 = vld [vmem:[%s362 + $0x10f8] sm:$0xff]
        %v967 = vld [vmem:[%s362 + $0x1100] sm:$0xff]
        %v968 = vld [vmem:[%s362 + $0x1108] sm:$0xff]
        %v969 = vld [vmem:[%s362 + $0x1110] sm:$0xff]
        %v970 = vld [vmem:[%s362 + $0x1118] sm:$0xff]
        %v971 = vld [vmem:[%s362 + $0x1120] sm:$0xff]
        %v972 = vld [vmem:[%s362 + $0x1128] sm:$0xff]
        %v973 = vld [vmem:[%s362 + $0x1130] sm:$0xff]
        %v974 = vld [vmem:[%s362 + $0x1138] sm:$0xff]
        %v975 = vld [vmem:[%s362 + $0x1140] sm:$0xff]
        %v976 = vld [vmem:[%s362 + $0x1148] sm:$0xff]
        %v977 = vld [vmem:[%s362 + $0x1150] sm:$0xff]
        %v978 = vld [vmem:[%s362 + $0x1158] sm:$0xff]
        %v979 = vld [vmem:[%s362 + $0x1160] sm:$0xff]
        %v980 = vld [vmem:[%s362 + $0x1168] sm:$0xff]
        %v981 = vld [vmem:[%s362 + $0x1170] sm:$0xff]
        %v982 = vld [vmem:[%s362 + $0x1178] sm:$0xff]
        %v983 = vld [vmem:[%s362 + $0x1180] sm:$0xff]
        %v984 = vld [vmem:[%s362 + $0x1188] sm:$0xff]
        %v985 = vld [vmem:[%s362 + $0x1190] sm:$0xff]
        %v986 = vld [vmem:[%s362 + $0x1198] sm:$0xff]
        %v987 = vld [vmem:[%s362 + $0x11a0] sm:$0xff]
        %v988 = vld [vmem:[%s362 + $0x11a8] sm:$0xff]
        %v989 = vld [vmem:[%s362 + $0x11b0] sm:$0xff]
        %v990 = vld [vmem:[%s362 + $0x11b8] sm:$0xff]
        %v991 = vld [vmem:[%s362 + $0x11c0] sm:$0xff]
        %v992 = vld [vmem:[%s362 + $0x11c8] sm:$0xff]
        %v993 = vld [vmem:[%s362 + $0x11d0] sm:$0xff]
        %v994 = vld [vmem:[%s362 + $0x11d8] sm:$0xff]
        %v995 = vld [vmem:[%s362 + $0x11e0] sm:$0xff]
        %v996 = vld [vmem:[%s362 + $0x11e8] sm:$0xff]
        %v997 = vld [vmem:[%s362 + $0x11f0] sm:$0xff]
        %v998 = vld [vmem:[%s362 + $0x11f8] sm:$0xff]
        %v999 = vld [vmem:[%s362 + $0x1200] sm:$0xff]
        %v1000 = vld [vmem:[%s362 + $0x1208] sm:$0xff]
        %v1001 = vld [vmem:[%s362 + $0x1210] sm:$0xff]
        %v1002 = vld [vmem:[%s362 + $0x1218] sm:$0xff]
        %v1003 = vld [vmem:[%s362 + $0x1220] sm:$0xff]
        %v1004 = vld [vmem:[%s362 + $0x1228] sm:$0xff]
        %v1005 = vld [vmem:[%s362 + $0x1230] sm:$0xff]
        %v1006 = vld [vmem:[%s362 + $0x1238] sm:$0xff]
        %v1007 = vld [vmem:[%s362 + $0x1240] sm:$0xff]
        %v1008 = vld [vmem:[%s362 + $0x1248] sm:$0xff]
        %v1009 = vld [vmem:[%s362 + $0x1250] sm:$0xff]
        %v1010 = vld [vmem:[%s362 + $0x1258] sm:$0xff]
        %v1011 = vld [vmem:[%s362 + $0x1260] sm:$0xff]
        %v1012 = vld [vmem:[%s362 + $0x1268] sm:$0xff]
        %v1013 = vld [vmem:[%s362 + $0x1270] sm:$0xff]
        %v1014 = vld [vmem:[%s362 + $0x1278] sm:$0xff]
        %v1015 = vld [vmem:[%s362 + $0x1280] sm:$0xff]
        %v1016 = vld [vmem:[%s362 + $0x1288] sm:$0xff]
        %v1017 = vld [vmem:[%s362 + $0x1290] sm:$0xff]
        %v1018 = vld [vmem:[%s362 + $0x1298] sm:$0xff]
        %v1019 = vld [vmem:[%s362 + $0x12a0] sm:$0xff]
        %v1020 = vld [vmem:[%s362 + $0x12a8] sm:$0xff]
        %v1021 = vld [vmem:[%s362 + $0x12b0] sm:$0xff]
        %v1022 = vld [vmem:[%s362 + $0x12b8] sm:$0xff]
        %v1023 = vld [vmem:[%s362 + $0x12c0] sm:$0xff]
        %v1024 = vld [vmem:[%s362 + $0x12c8] sm:$0xff]
        %v1025 = vld [vmem:[%s362 + $0x12d0] sm:$0xff]
        %v1026 = vld [vmem:[%s362 + $0x12d8] sm:$0xff]
        %v1027 = vld [vmem:[%s362 + $0x12e0] sm:$0xff]
        %v1028 = vld [vmem:[%s362 + $0x12e8] sm:$0xff]
        %v1029 = vld [vmem:[%s362 + $0x12f0] sm:$0xff]
        %v1030 = vld [vmem:[%s362 + $0x12f8] sm:$0xff]
        %v1031 = vld [vmem:[%s362 + $0x1300] sm:$0xff]
        %v1032 = vld [vmem:[%s362 + $0x1308] sm:$0xff]
        %v1033 = vld [vmem:[%s362 + $0x1310] sm:$0xff]
        %v1034 = vld [vmem:[%s362 + $0x1318] sm:$0xff]
        %v1035 = vld [vmem:[%s362 + $0x1320] sm:$0xff]
        %v1036 = vld [vmem:[%s362 + $0x1328] sm:$0xff]
        %v1037 = vld [vmem:[%s362 + $0x1330] sm:$0xff]
        %v1038 = vld [vmem:[%s362 + $0x1338] sm:$0xff]
        %v1039 = vld [vmem:[%s362 + $0x1340] sm:$0xff]
        %v1040 = vld [vmem:[%s362 + $0x1348] sm:$0xff]
        %v1041 = vld [vmem:[%s362 + $0x1350] sm:$0xff]
        %v1042 = vld [vmem:[%s362 + $0x1358] sm:$0xff]
        %v1043 = vld [vmem:[%s362 + $0x1360] sm:$0xff]
        %v1044 = vld [vmem:[%s362 + $0x1368] sm:$0xff]
        %v1045 = vld [vmem:[%s362 + $0x1370] sm:$0xff]
        %v1046 = vld [vmem:[%s362 + $0x1378] sm:$0xff]
        %v1047 = vld [vmem:[%s362 + $0x1380] sm:$0xff]
        %v1048 = vld [vmem:[%s362 + $0x1388] sm:$0xff]
        %v1049 = vld [vmem:[%s362 + $0x1390] sm:$0xff]
        %v1050 = vld [vmem:[%s362 + $0x1398] sm:$0xff]
        %v1051 = vld [vmem:[%s362 + $0x13a0] sm:$0xff]
        %v1052 = vld [vmem:[%s362 + $0x13a8] sm:$0xff]
        %v1053 = vld [vmem:[%s362 + $0x13b0] sm:$0xff]
        %v1054 = vld [vmem:[%s362 + $0x13b8] sm:$0xff]
        %v1055 = vld [vmem:[%s362 + $0x13c0] sm:$0xff]
        %v1056 = vld [vmem:[%s362 + $0x13c8] sm:$0xff]
        %v1057 = vld [vmem:[%s362 + $0x13d0] sm:$0xff]
        %v1058 = vld [vmem:[%s362 + $0x13d8] sm:$0xff]
        %v1059 = vld [vmem:[%s362 + $0x13e0] sm:$0xff]
        %v1060 = vld [vmem:[%s362 + $0x13e8] sm:$0xff]
        %v1061 = vld [vmem:[%s362 + $0x13f0] sm:$0xff]
        %v1062 = vld [vmem:[%s362 + $0x13f8] sm:$0xff]
        %v1063 = vld [vmem:[%s362 + $0x1400] sm:$0xff]
        %v1064 = vld [vmem:[%s362 + $0x1408] sm:$0xff]
        %v1065 = vld [vmem:[%s362 + $0x1410] sm:$0xff]
        %v1066 = vld [vmem:[%s362 + $0x1418] sm:$0xff]
        %v1067 = vld [vmem:[%s362 + $0x1420] sm:$0xff]
        %v1068 = vld [vmem:[%s362 + $0x1428] sm:$0xff]
        %v1069 = vld [vmem:[%s362 + $0x1430] sm:$0xff]
        %v1070 = vld [vmem:[%s362 + $0x1438] sm:$0xff]
        %v1071 = vld [vmem:[%s362 + $0x1440] sm:$0xff]
        %v1072 = vld [vmem:[%s362 + $0x1448] sm:$0xff]
        %v1073 = vld [vmem:[%s362 + $0x1450] sm:$0xff]
        %v1074 = vld [vmem:[%s362 + $0x1458] sm:$0xff]
        %v1075 = vld [vmem:[%s362 + $0x1460] sm:$0xff]
        %v1076 = vld [vmem:[%s362 + $0x1468] sm:$0xff]
        %v1077 = vld [vmem:[%s362 + $0x1470] sm:$0xff]
        %v1078 = vld [vmem:[%s362 + $0x1478] sm:$0xff]
        %v1079 = vld [vmem:[%s362 + $0x1480] sm:$0xff]
        %v1080 = vld [vmem:[%s362 + $0x1488] sm:$0xff]
        %v1081 = vld [vmem:[%s362 + $0x1490] sm:$0xff]
        %v1082 = vld [vmem:[%s362 + $0x1498] sm:$0xff]
        %v1083 = vld [vmem:[%s362 + $0x14a0] sm:$0xff]
        %v1084 = vld [vmem:[%s362 + $0x14a8] sm:$0xff]
        %v1085 = vld [vmem:[%s362 + $0x14b0] sm:$0xff]
        %v1086 = vld [vmem:[%s362 + $0x14b8] sm:$0xff]
        %v1087 = vld [vmem:[%s362 + $0x14c0] sm:$0xff]
        %v1088 = vld [vmem:[%s362 + $0x14c8] sm:$0xff]
        %v1089 = vld [vmem:[%s362 + $0x14d0] sm:$0xff]
        %v1090 = vld [vmem:[%s362 + $0x14d8] sm:$0xff]
        %v1091 = vld [vmem:[%s362 + $0x14e0] sm:$0xff]
        %v1092 = vld [vmem:[%s362 + $0x14e8] sm:$0xff]
        %v1093 = vld [vmem:[%s362 + $0x14f0] sm:$0xff]
        %v1094 = vld [vmem:[%s362 + $0x14f8] sm:$0xff]
        %v1095 = vld [vmem:[%s362 + $0x1500] sm:$0xff]
        %v1096 = vld [vmem:[%s362 + $0x1508] sm:$0xff]
        %v1097 = vld [vmem:[%s362 + $0x1510] sm:$0xff]
        %v1098 = vld [vmem:[%s362 + $0x1518] sm:$0xff]
        %v1099 = vld [vmem:[%s362 + $0x1520] sm:$0xff]
        %v1100 = vld [vmem:[%s362 + $0x1528] sm:$0xff]
        %v1101 = vld [vmem:[%s362 + $0x1530] sm:$0xff]
        %v1102 = vld [vmem:[%s362 + $0x1538] sm:$0xff]
        %v1103 = vld [vmem:[%s362 + $0x1540] sm:$0xff]
        %v1104 = vld [vmem:[%s362 + $0x1548] sm:$0xff]
        %v1105 = vld [vmem:[%s362 + $0x1550] sm:$0xff]
        %v1106 = vld [vmem:[%s362 + $0x1558] sm:$0xff]
        %v1107 = vld [vmem:[%s362 + $0x1560] sm:$0xff]
        %v1108 = vld [vmem:[%s362 + $0x1568] sm:$0xff]
        %v1109 = vld [vmem:[%s362 + $0x1570] sm:$0xff]
        %v1110 = vld [vmem:[%s362 + $0x1578] sm:$0xff]
        %v1111 = vld [vmem:[%s362 + $0x1580] sm:$0xff]
        %v1112 = vld [vmem:[%s362 + $0x1588] sm:$0xff]
        %v1113 = vld [vmem:[%s362 + $0x1590] sm:$0xff]
        %v1114 = vld [vmem:[%s362 + $0x1598] sm:$0xff]
        %v1115 = vld [vmem:[%s362 + $0x15a0] sm:$0xff]
        %v1116 = vld [vmem:[%s362 + $0x15a8] sm:$0xff]
        %v1117 = vld [vmem:[%s362 + $0x15b0] sm:$0xff]
        %v1118 = vld [vmem:[%s362 + $0x15b8] sm:$0xff]
        %v1119 = vld [vmem:[%s362 + $0x15c0] sm:$0xff]
        %v1120 = vld [vmem:[%s362 + $0x15c8] sm:$0xff]
        %v1121 = vld [vmem:[%s362 + $0x15d0] sm:$0xff]
        %v1122 = vld [vmem:[%s362 + $0x15d8] sm:$0xff]
        %v1123 = vld [vmem:[%s362 + $0x15e0] sm:$0xff]
        %v1124 = vld [vmem:[%s362 + $0x15e8] sm:$0xff]
        %v1125 = vld [vmem:[%s362 + $0x15f0] sm:$0xff]
        %v1126 = vld [vmem:[%s362 + $0x15f8] sm:$0xff]
        %v1127 = vld [vmem:[%s362 + $0x1600] sm:$0xff]
        %v1128 = vld [vmem:[%s362 + $0x1608] sm:$0xff]
        %v1129 = vld [vmem:[%s362 + $0x1610] sm:$0xff]
        %v1130 = vld [vmem:[%s362 + $0x1618] sm:$0xff]
        %v1131 = vld [vmem:[%s362 + $0x1620] sm:$0xff]
        %v1132 = vld [vmem:[%s362 + $0x1628] sm:$0xff]
        %v1133 = vld [vmem:[%s362 + $0x1630] sm:$0xff]
        %v1134 = vld [vmem:[%s362 + $0x1638] sm:$0xff]
        %v1135 = vld [vmem:[%s362 + $0x1640] sm:$0xff]
        %v1136 = vld [vmem:[%s362 + $0x1648] sm:$0xff]
        %v1137 = vld [vmem:[%s362 + $0x1650] sm:$0xff]
        %v1138 = vld [vmem:[%s362 + $0x1658] sm:$0xff]
        %v1139 = vld [vmem:[%s362 + $0x1660] sm:$0xff]
        %v1140 = vld [vmem:[%s362 + $0x1668] sm:$0xff]
        %v1141 = vld [vmem:[%s362 + $0x1670] sm:$0xff]
        %v1142 = vld [vmem:[%s362 + $0x1678] sm:$0xff]
        %v1143 = vld [vmem:[%s362 + $0x1680] sm:$0xff]
        %v1144 = vld [vmem:[%s362 + $0x1688] sm:$0xff]
        %v1145 = vld [vmem:[%s362 + $0x1690] sm:$0xff]
        %v1146 = vld [vmem:[%s362 + $0x1698] sm:$0xff]
        %v1147 = vld [vmem:[%s362 + $0x16a0] sm:$0xff]
        %v1148 = vld [vmem:[%s362 + $0x16a8] sm:$0xff]
        %v1149 = vld [vmem:[%s362 + $0x16b0] sm:$0xff]
        %v1150 = vld [vmem:[%s362 + $0x16b8] sm:$0xff]
        %v1151 = vld [vmem:[%s362 + $0x16c0] sm:$0xff]
        %v1152 = vld [vmem:[%s362 + $0x16c8] sm:$0xff]
        %v1153 = vld [vmem:[%s362 + $0x16d0] sm:$0xff]
        %v1154 = vld [vmem:[%s362 + $0x16d8] sm:$0xff]
        %v1155 = vld [vmem:[%s362 + $0x16e0] sm:$0xff]
        %v1156 = vld [vmem:[%s362 + $0x16e8] sm:$0xff]
        %v1157 = vld [vmem:[%s362 + $0x16f0] sm:$0xff]
        %v1158 = vld [vmem:[%s362 + $0x16f8] sm:$0xff]
        %v1159 = vld [vmem:[%s362 + $0x1700] sm:$0xff]
        %v1160 = vld [vmem:[%s362 + $0x1708] sm:$0xff]
        %v1161 = vld [vmem:[%s362 + $0x1710] sm:$0xff]
        %v1162 = vld [vmem:[%s362 + $0x1718] sm:$0xff]
        %v1163 = vld [vmem:[%s362 + $0x1720] sm:$0xff]
        %v1164 = vld [vmem:[%s362 + $0x1728] sm:$0xff]
        %v1165 = vld [vmem:[%s362 + $0x1730] sm:$0xff]
        %v1166 = vld [vmem:[%s362 + $0x1738] sm:$0xff]
        %v1167 = vld [vmem:[%s362 + $0x1740] sm:$0xff]
        %v1168 = vld [vmem:[%s362 + $0x1748] sm:$0xff]
        %v1169 = vld [vmem:[%s362 + $0x1750] sm:$0xff]
        %v1170 = vld [vmem:[%s362 + $0x1758] sm:$0xff]
        %v1171 = vld [vmem:[%s362 + $0x1760] sm:$0xff]
        %v1172 = vld [vmem:[%s362 + $0x1768] sm:$0xff]
        %v1173 = vld [vmem:[%s362 + $0x1770] sm:$0xff]
        %v1174 = vld [vmem:[%s362 + $0x1778] sm:$0xff]
        %v1175 = vld [vmem:[%s362 + $0x1780] sm:$0xff]
        %v1176 = vld [vmem:[%s362 + $0x1788] sm:$0xff]
        %v1177 = vld [vmem:[%s362 + $0x1790] sm:$0xff]
        %v1178 = vld [vmem:[%s362 + $0x1798] sm:$0xff]
        %v1179 = vld [vmem:[%s362 + $0x17a0] sm:$0xff]
        %v1180 = vld [vmem:[%s362 + $0x17a8] sm:$0xff]
        %v1181 = vld [vmem:[%s362 + $0x17b0] sm:$0xff]
        %v1182 = vld [vmem:[%s362 + $0x17b8] sm:$0xff]
        %v1183 = vld [vmem:[%s362 + $0x17c0] sm:$0xff]
        %v1184 = vld [vmem:[%s362 + $0x17c8] sm:$0xff]
        %v1185 = vld [vmem:[%s362 + $0x17d0] sm:$0xff]
        %v1186 = vld [vmem:[%s362 + $0x17d8] sm:$0xff]
        %v1187 = vld [vmem:[%s362 + $0x17e0] sm:$0xff]
        %v1188 = vld [vmem:[%s362 + $0x17e8] sm:$0xff]
        %v1189 = vld [vmem:[%s362 + $0x17f0] sm:$0xff]
        %v1190 = vld [vmem:[%s362 + $0x17f8] sm:$0xff]
        %v1191 = vld [vmem:[%s362 + $0x1800] sm:$0xff]
        %v1192 = vld [vmem:[%s362 + $0x1808] sm:$0xff]
        %v1193 = vld [vmem:[%s362 + $0x1810] sm:$0xff]
        %v1194 = vld [vmem:[%s362 + $0x1818] sm:$0xff]
        %v1195 = vld [vmem:[%s362 + $0x1820] sm:$0xff]
        %v1196 = vld [vmem:[%s362 + $0x1828] sm:$0xff]
        %v1197 = vld [vmem:[%s362 + $0x1830] sm:$0xff]
        %v1198 = vld [vmem:[%s362 + $0x1838] sm:$0xff]
        %v1199 = vld [vmem:[%s362 + $0x1840] sm:$0xff]
        %v1200 = vld [vmem:[%s362 + $0x1848] sm:$0xff]
        %v1201 = vld [vmem:[%s362 + $0x1850] sm:$0xff]
        %v1202 = vld [vmem:[%s362 + $0x1858] sm:$0xff]
        %v1203 = vld [vmem:[%s362 + $0x1860] sm:$0xff]
        %v1204 = vld [vmem:[%s362 + $0x1868] sm:$0xff]
        %v1205 = vld [vmem:[%s362 + $0x1870] sm:$0xff]
        %v1206 = vld [vmem:[%s362 + $0x1878] sm:$0xff]
        %v1207 = vld [vmem:[%s362 + $0x1880] sm:$0xff]
        %v1208 = vld [vmem:[%s362 + $0x1888] sm:$0xff]
        %v1209 = vld [vmem:[%s362 + $0x1890] sm:$0xff]
        %v1210 = vld [vmem:[%s362 + $0x1898] sm:$0xff]
        %v1211 = vld [vmem:[%s362 + $0x18a0] sm:$0xff]
        %v1212 = vld [vmem:[%s362 + $0x18a8] sm:$0xff]
        %v1213 = vld [vmem:[%s362 + $0x18b0] sm:$0xff]
        %v1214 = vld [vmem:[%s362 + $0x18b8] sm:$0xff]
        %v1215 = vld [vmem:[%s362 + $0x18c0] sm:$0xff]
        %v1216 = vld [vmem:[%s362 + $0x18c8] sm:$0xff]
        %v1217 = vld [vmem:[%s362 + $0x18d0] sm:$0xff]
        %v1218 = vld [vmem:[%s362 + $0x18d8] sm:$0xff]
        %v1219 = vld [vmem:[%s362 + $0x18e0] sm:$0xff]
        %v1220 = vld [vmem:[%s362 + $0x18e8] sm:$0xff]
        %v1221 = vld [vmem:[%s362 + $0x18f0] sm:$0xff]
        %v1222 = vld [vmem:[%s362 + $0x18f8] sm:$0xff]
        %v1223 = vld [vmem:[%s362 + $0x1900] sm:$0xff]
        %v1224 = vld [vmem:[%s362 + $0x1908] sm:$0xff]
        %v1225 = vld [vmem:[%s362 + $0x1910] sm:$0xff]
        %v1226 = vld [vmem:[%s362 + $0x1918] sm:$0xff]
        %v1227 = vld [vmem:[%s362 + $0x1920] sm:$0xff]
        %v1228 = vld [vmem:[%s362 + $0x1928] sm:$0xff]
        %v1229 = vld [vmem:[%s362 + $0x1930] sm:$0xff]
        %v1230 = vld [vmem:[%s362 + $0x1938] sm:$0xff]
        %v1231 = vld [vmem:[%s362 + $0x1940] sm:$0xff]
        %v1232 = vld [vmem:[%s362 + $0x1948] sm:$0xff]
        %v1233 = vld [vmem:[%s362 + $0x1950] sm:$0xff]
        %v1234 = vld [vmem:[%s362 + $0x1958] sm:$0xff]
        %v1235 = vld [vmem:[%s362 + $0x1960] sm:$0xff]
        %v1236 = vld [vmem:[%s362 + $0x1968] sm:$0xff]
        %v1237 = vld [vmem:[%s362 + $0x1970] sm:$0xff]
        %v1238 = vld [vmem:[%s362 + $0x1978] sm:$0xff]
        %v1239 = vld [vmem:[%s362 + $0x1980] sm:$0xff]
        %v1240 = vld [vmem:[%s362 + $0x1988] sm:$0xff]
        %v1241 = vld [vmem:[%s362 + $0x1990] sm:$0xff]
        %v1242 = vld [vmem:[%s362 + $0x1998] sm:$0xff]
        %v1243 = vld [vmem:[%s362 + $0x19a0] sm:$0xff]
        %v1244 = vld [vmem:[%s362 + $0x19a8] sm:$0xff]
        %v1245 = vld [vmem:[%s362 + $0x19b0] sm:$0xff]
        %v1246 = vld [vmem:[%s362 + $0x19b8] sm:$0xff]
        %v1247 = vld [vmem:[%s362 + $0x19c0] sm:$0xff]
        %v1248 = vld [vmem:[%s362 + $0x19c8] sm:$0xff]
        %v1249 = vld [vmem:[%s362 + $0x19d0] sm:$0xff]
        %v1250 = vld [vmem:[%s362 + $0x19d8] sm:$0xff]
        %v1251 = vld [vmem:[%s362 + $0x19e0] sm:$0xff]
        %v1252 = vld [vmem:[%s362 + $0x19e8] sm:$0xff]
        %v1253 = vld [vmem:[%s362 + $0x19f0] sm:$0xff]
        %v1254 = vld [vmem:[%s362 + $0x19f8] sm:$0xff]
        %v1255 = vld [vmem:[%s362 + $0x1a00] sm:$0xff]
        %v1256 = vld [vmem:[%s362 + $0x1a08] sm:$0xff]
        %v1257 = vld [vmem:[%s362 + $0x1a10] sm:$0xff]
        %v1258 = vld [vmem:[%s362 + $0x1a18] sm:$0xff]
        %v1259 = vld [vmem:[%s362 + $0x1a20] sm:$0xff]
        %v1260 = vld [vmem:[%s362 + $0x1a28] sm:$0xff]
        %v1261 = vld [vmem:[%s362 + $0x1a30] sm:$0xff]
        %v1262 = vld [vmem:[%s362 + $0x1a38] sm:$0xff]
        %v1263 = vld [vmem:[%s362 + $0x1a40] sm:$0xff]
        %v1264 = vld [vmem:[%s362 + $0x1a48] sm:$0xff]
        %v1265 = vld [vmem:[%s362 + $0x1a50] sm:$0xff]
        %v1266 = vld [vmem:[%s362 + $0x1a58] sm:$0xff]
        %v1267 = vld [vmem:[%s362 + $0x1a60] sm:$0xff]
        %v1268 = vld [vmem:[%s362 + $0x1a68] sm:$0xff]
        %v1269 = vld [vmem:[%s362 + $0x1a70] sm:$0xff]
        %v1270 = vld [vmem:[%s362 + $0x1a78] sm:$0xff]
        %v1271 = vld [vmem:[%s362 + $0x1a80] sm:$0xff]
        %v1272 = vld [vmem:[%s362 + $0x1a88] sm:$0xff]
        %v1273 = vld [vmem:[%s362 + $0x1a90] sm:$0xff]
        %v1274 = vld [vmem:[%s362 + $0x1a98] sm:$0xff]
        %v1275 = vld [vmem:[%s362 + $0x1aa0] sm:$0xff]
        %v1276 = vld [vmem:[%s362 + $0x1aa8] sm:$0xff]
        %v1277 = vld [vmem:[%s362 + $0x1ab0] sm:$0xff]
        %v1278 = vld [vmem:[%s362 + $0x1ab8] sm:$0xff]
        %v1279 = vld [vmem:[%s362 + $0x1ac0] sm:$0xff]
        %v1280 = vld [vmem:[%s362 + $0x1ac8] sm:$0xff]
        %v1281 = vld [vmem:[%s362 + $0x1ad0] sm:$0xff]
        %v1282 = vld [vmem:[%s362 + $0x1ad8] sm:$0xff]
        %v1283 = vld [vmem:[%s362 + $0x1ae0] sm:$0xff]
        %v1284 = vld [vmem:[%s362 + $0x1ae8] sm:$0xff]
        %v1285 = vld [vmem:[%s362 + $0x1af0] sm:$0xff]
        %v1286 = vld [vmem:[%s362 + $0x1af8] sm:$0xff]
        %v1287 = vld [vmem:[%s362 + $0x1b00] sm:$0xff]
        %v1288 = vld [vmem:[%s362 + $0x1b08] sm:$0xff]
        %v1289 = vld [vmem:[%s362 + $0x1b10] sm:$0xff]
        %v1290 = vld [vmem:[%s362 + $0x1b18] sm:$0xff]
        %v1291 = vld [vmem:[%s362 + $0x1b20] sm:$0xff]
        %v1292 = vld [vmem:[%s362 + $0x1b28] sm:$0xff]
        %v1293 = vld [vmem:[%s362 + $0x1b30] sm:$0xff]
        %v1294 = vld [vmem:[%s362 + $0x1b38] sm:$0xff]
        %v1295 = vld [vmem:[%s362 + $0x1b40] sm:$0xff]
        %v1296 = vld [vmem:[%s362 + $0x1b48] sm:$0xff]
        %v1297 = vld [vmem:[%s362 + $0x1b50] sm:$0xff]
        %v1298 = vld [vmem:[%s362 + $0x1b58] sm:$0xff]
        %v1299 = vld [vmem:[%s362 + $0x1b60] sm:$0xff]
        %v1300 = vld [vmem:[%s362 + $0x1b68] sm:$0xff]
        %v1301 = vld [vmem:[%s362 + $0x1b70] sm:$0xff]
        %v1302 = vld [vmem:[%s362 + $0x1b78] sm:$0xff]
        %v1303 = vld [vmem:[%s362 + $0x1b80] sm:$0xff]
        %v1304 = vld [vmem:[%s362 + $0x1b88] sm:$0xff]
        %v1305 = vld [vmem:[%s362 + $0x1b90] sm:$0xff]
        %v1306 = vld [vmem:[%s362 + $0x1b98] sm:$0xff]
        %v1307 = vld [vmem:[%s362 + $0x1ba0] sm:$0xff]
        %v1308 = vld [vmem:[%s362 + $0x1ba8] sm:$0xff]
        %v1309 = vld [vmem:[%s362 + $0x1bb0] sm:$0xff]
        %v1310 = vld [vmem:[%s362 + $0x1bb8] sm:$0xff]
        %v1311 = vld [vmem:[%s362 + $0x1bc0] sm:$0xff]
        %v1312 = vld [vmem:[%s362 + $0x1bc8] sm:$0xff]
        %v1313 = vld [vmem:[%s362 + $0x1bd0] sm:$0xff]
        %v1314 = vld [vmem:[%s362 + $0x1bd8] sm:$0xff]
        %v1315 = vld [vmem:[%s362 + $0x1be0] sm:$0xff]
        %v1316 = vld [vmem:[%s362 + $0x1be8] sm:$0xff]
        %v1317 = vld [vmem:[%s362 + $0x1bf0] sm:$0xff]
        %v1318 = vld [vmem:[%s362 + $0x1bf8] sm:$0xff]
        %v1319 = vld [vmem:[%s362 + $0x1c00] sm:$0xff]
        %v1320 = vld [vmem:[%s362 + $0x1c08] sm:$0xff]
        %v1321 = vld [vmem:[%s362 + $0x1c10] sm:$0xff]
        %v1322 = vld [vmem:[%s362 + $0x1c18] sm:$0xff]
        %v1323 = vld [vmem:[%s362 + $0x1c20] sm:$0xff]
        %v1324 = vld [vmem:[%s362 + $0x1c28] sm:$0xff]
        %v1325 = vld [vmem:[%s362 + $0x1c30] sm:$0xff]
        %v1326 = vld [vmem:[%s362 + $0x1c38] sm:$0xff]
        %v1327 = vld [vmem:[%s362 + $0x1c40] sm:$0xff]
        %v1328 = vld [vmem:[%s362 + $0x1c48] sm:$0xff]
        %v1329 = vld [vmem:[%s362 + $0x1c50] sm:$0xff]
        %v1330 = vld [vmem:[%s362 + $0x1c58] sm:$0xff]
        %v1331 = vld [vmem:[%s362 + $0x1c60] sm:$0xff]
        %v1332 = vld [vmem:[%s362 + $0x1c68] sm:$0xff]
        %v1333 = vld [vmem:[%s362 + $0x1c70] sm:$0xff]
        %v1334 = vld [vmem:[%s362 + $0x1c78] sm:$0xff]
        %v1335 = vld [vmem:[%s362 + $0x1c80] sm:$0xff]
        %v1336 = vld [vmem:[%s362 + $0x1c88] sm:$0xff]
        %v1337 = vld [vmem:[%s362 + $0x1c90] sm:$0xff]
        %v1338 = vld [vmem:[%s362 + $0x1c98] sm:$0xff]
        %v1339 = vld [vmem:[%s362 + $0x1ca0] sm:$0xff]
        %v1340 = vld [vmem:[%s362 + $0x1ca8] sm:$0xff]
        %v1341 = vld [vmem:[%s362 + $0x1cb0] sm:$0xff]
        %v1342 = vld [vmem:[%s362 + $0x1cb8] sm:$0xff]
        %v1343 = vld [vmem:[%s362 + $0x1cc0] sm:$0xff]
        %v1344 = vld [vmem:[%s362 + $0x1cc8] sm:$0xff]
        %v1345 = vld [vmem:[%s362 + $0x1cd0] sm:$0xff]
        %v1346 = vld [vmem:[%s362 + $0x1cd8] sm:$0xff]
        %v1347 = vld [vmem:[%s362 + $0x1ce0] sm:$0xff]
        %v1348 = vld [vmem:[%s362 + $0x1ce8] sm:$0xff]
        %v1349 = vld [vmem:[%s362 + $0x1cf0] sm:$0xff]
        %v1350 = vld [vmem:[%s362 + $0x1cf8] sm:$0xff]
        %v1351 = vld [vmem:[%s362 + $0x1d00] sm:$0xff]
        %v1352 = vld [vmem:[%s362 + $0x1d08] sm:$0xff]
        %v1353 = vld [vmem:[%s362 + $0x1d10] sm:$0xff]
        %v1354 = vld [vmem:[%s362 + $0x1d18] sm:$0xff]
        %v1355 = vld [vmem:[%s362 + $0x1d20] sm:$0xff]
        %v1356 = vld [vmem:[%s362 + $0x1d28] sm:$0xff]
        %v1357 = vld [vmem:[%s362 + $0x1d30] sm:$0xff]
        %v1358 = vld [vmem:[%s362 + $0x1d38] sm:$0xff]
        %v1359 = vld [vmem:[%s362 + $0x1d40] sm:$0xff]
        %v1360 = vld [vmem:[%s362 + $0x1d48] sm:$0xff]
        %v1361 = vld [vmem:[%s362 + $0x1d50] sm:$0xff]
        %v1362 = vld [vmem:[%s362 + $0x1d58] sm:$0xff]
        %v1363 = vld [vmem:[%s362 + $0x1d60] sm:$0xff]
        %v1364 = vld [vmem:[%s362 + $0x1d68] sm:$0xff]
        %v1365 = vld [vmem:[%s362 + $0x1d70] sm:$0xff]
        %v1366 = vld [vmem:[%s362 + $0x1d78] sm:$0xff]
        %v1367 = vld [vmem:[%s362 + $0x1d80] sm:$0xff]
        %v1368 = vld [vmem:[%s362 + $0x1d88] sm:$0xff]
        %v1369 = vld [vmem:[%s362 + $0x1d90] sm:$0xff]
        %v1370 = vld [vmem:[%s362 + $0x1d98] sm:$0xff]
        %v1371 = vld [vmem:[%s362 + $0x1da0] sm:$0xff]
        %v1372 = vld [vmem:[%s362 + $0x1da8] sm:$0xff]
        %v1373 = vld [vmem:[%s362 + $0x1db0] sm:$0xff]
        %v1374 = vld [vmem:[%s362 + $0x1db8] sm:$0xff]
        %v1375 = vld [vmem:[%s362 + $0x1dc0] sm:$0xff]
        %v1376 = vld [vmem:[%s362 + $0x1dc8] sm:$0xff]
        %v1377 = vld [vmem:[%s362 + $0x1dd0] sm:$0xff]
        %v1378 = vld [vmem:[%s362 + $0x1dd8] sm:$0xff]
        %v1379 = vld [vmem:[%s362 + $0x1de0] sm:$0xff]
        %v1380 = vld [vmem:[%s362 + $0x1de8] sm:$0xff]
        %v1381 = vld [vmem:[%s362 + $0x1df0] sm:$0xff]
        %v1382 = vld [vmem:[%s362 + $0x1df8] sm:$0xff]
        %v1383 = vld [vmem:[%s362 + $0x1e00] sm:$0xff]
        %v1384 = vld [vmem:[%s362 + $0x1e08] sm:$0xff]
        %v1385 = vld [vmem:[%s362 + $0x1e10] sm:$0xff]
        %v1386 = vld [vmem:[%s362 + $0x1e18] sm:$0xff]
        %v1387 = vld [vmem:[%s362 + $0x1e20] sm:$0xff]
        %v1388 = vld [vmem:[%s362 + $0x1e28] sm:$0xff]
        %v1389 = vld [vmem:[%s362 + $0x1e30] sm:$0xff]
        %v1390 = vld [vmem:[%s362 + $0x1e38] sm:$0xff]
        %v1391 = vld [vmem:[%s362 + $0x1e40] sm:$0xff]
        %v1392 = vld [vmem:[%s362 + $0x1e48] sm:$0xff]
        %v1393 = vld [vmem:[%s362 + $0x1e50] sm:$0xff]
        %v1394 = vld [vmem:[%s362 + $0x1e58] sm:$0xff]
        %v1395 = vld [vmem:[%s362 + $0x1e60] sm:$0xff]
        %v1396 = vld [vmem:[%s362 + $0x1e68] sm:$0xff]
        %v1397 = vld [vmem:[%s362 + $0x1e70] sm:$0xff]
        %v1398 = vld [vmem:[%s362 + $0x1e78] sm:$0xff]
        %v1399 = vld [vmem:[%s362 + $0x1e80] sm:$0xff]
        %v1400 = vld [vmem:[%s362 + $0x1e88] sm:$0xff]
        %v1401 = vld [vmem:[%s362 + $0x1e90] sm:$0xff]
        %v1402 = vld [vmem:[%s362 + $0x1e98] sm:$0xff]
        %v1403 = vld [vmem:[%s362 + $0x1ea0] sm:$0xff]
        %v1404 = vld [vmem:[%s362 + $0x1ea8] sm:$0xff]
        %v1405 = vld [vmem:[%s362 + $0x1eb0] sm:$0xff]
        %v1406 = vld [vmem:[%s362 + $0x1eb8] sm:$0xff]
        %v1407 = vld [vmem:[%s362 + $0x1ec0] sm:$0xff]
        %v1408 = vld [vmem:[%s362 + $0x1ec8] sm:$0xff]
        %v1409 = vld [vmem:[%s362 + $0x1ed0] sm:$0xff]
        %v1410 = vld [vmem:[%s362 + $0x1ed8] sm:$0xff]
        %v1411 = vld [vmem:[%s362 + $0x1ee0] sm:$0xff]
        %v1412 = vld [vmem:[%s362 + $0x1ee8] sm:$0xff]
        %v1413 = vld [vmem:[%s362 + $0x1ef0] sm:$0xff]
        %v1414 = vld [vmem:[%s362 + $0x1ef8] sm:$0xff]
        %v1415 = vld [vmem:[%s362 + $0x1f00] sm:$0xff]
        %v1416 = vld [vmem:[%s362 + $0x1f08] sm:$0xff]
        %v1417 = vld [vmem:[%s362 + $0x1f10] sm:$0xff]
        %v1418 = vld [vmem:[%s362 + $0x1f18] sm:$0xff]
        %v1419 = vld [vmem:[%s362 + $0x1f20] sm:$0xff]
        %v1420 = vld [vmem:[%s362 + $0x1f28] sm:$0xff]
        %v1421 = vld [vmem:[%s362 + $0x1f30] sm:$0xff]
        %v1422 = vld [vmem:[%s362 + $0x1f38] sm:$0xff]
        %v1423 = vld [vmem:[%s362 + $0x1f40] sm:$0xff]
        %v1424 = vld [vmem:[%s362 + $0x1f48] sm:$0xff]
        %v1425 = vld [vmem:[%s362 + $0x1f50] sm:$0xff]
        %v1426 = vld [vmem:[%s362 + $0x1f58] sm:$0xff]
        %v1427 = vld [vmem:[%s362 + $0x1f60] sm:$0xff]
        %v1428 = vld [vmem:[%s362 + $0x1f68] sm:$0xff]
        %v1429 = vld [vmem:[%s362 + $0x1f70] sm:$0xff]
        %v1430 = vld [vmem:[%s362 + $0x1f78] sm:$0xff]
        %v1431 = vld [vmem:[%s362 + $0x1f80] sm:$0xff]
        %v1432 = vld [vmem:[%s362 + $0x1f88] sm:$0xff]
        %v1433 = vld [vmem:[%s362 + $0x1f90] sm:$0xff]
        %v1434 = vld [vmem:[%s362 + $0x1f98] sm:$0xff]
        %v1435 = vld [vmem:[%s362 + $0x1fa0] sm:$0xff]
        %v1436 = vld [vmem:[%s362 + $0x1fa8] sm:$0xff]
        %v1437 = vld [vmem:[%s362 + $0x1fb0] sm:$0xff]
        %v1438 = vld [vmem:[%s362 + $0x1fb8] sm:$0xff]
        %v1439 = vld [vmem:[%s362 + $0x1fc0] sm:$0xff]
        %v1440 = vld [vmem:[%s362 + $0x1fc8] sm:$0xff]
        %v1441 = vld [vmem:[%s362 + $0x1fd0] sm:$0xff]
        %v1442 = vld [vmem:[%s362 + $0x1fd8] sm:$0xff]
        %v1443 = vld [vmem:[%s362 + $0x1fe0] sm:$0xff]
        %v1444 = vld [vmem:[%s362 + $0x1fe8] sm:$0xff]
        %v1445 = vld [vmem:[%s362 + $0x1ff0] sm:$0xff]
        %v1446 = vld [vmem:[%s362 + $0x1ff8] sm:$0xff]
        %v1447 = vld [vmem:[%s362 + $0x2000] sm:$0xff]
        %v1448 = vld [vmem:[%s362 + $0x2008] sm:$0xff]
        %v1449 = vld [vmem:[%s362 + $0x2010] sm:$0xff]
        %v1450 = vld [vmem:[%s362 + $0x2018] sm:$0xff]
        %v1451 = vld [vmem:[%s362 + $0x2020] sm:$0xff]
        %v1452 = vld [vmem:[%s362 + $0x2028] sm:$0xff]
        %v1453 = vld [vmem:[%s362 + $0x2030] sm:$0xff]
        %v1454 = vld [vmem:[%s362 + $0x2038] sm:$0xff]
        %v1455 = vld [vmem:[%s362 + $0x2040] sm:$0xff]
        %v1456 = vld [vmem:[%s362 + $0x2048] sm:$0xff]
        %v1457 = vld [vmem:[%s362 + $0x2050] sm:$0xff]
        %v1458 = vld [vmem:[%s362 + $0x2058] sm:$0xff]
        %v1459 = vld [vmem:[%s362 + $0x2060] sm:$0xff]
        %v1460 = vld [vmem:[%s362 + $0x2068] sm:$0xff]
        %v1461 = vld [vmem:[%s362 + $0x2070] sm:$0xff]
        %v1462 = vld [vmem:[%s362 + $0x2078] sm:$0xff]
        %v1463 = vld [vmem:[%s362 + $0x2080] sm:$0xff]
        %v1464 = vld [vmem:[%s362 + $0x2088] sm:$0xff]
        %v1465 = vld [vmem:[%s362 + $0x2090] sm:$0xff]
        %v1466 = vld [vmem:[%s362 + $0x2098] sm:$0xff]
        %v1467 = vld [vmem:[%s362 + $0x20a0] sm:$0xff]
        %v1468 = vld [vmem:[%s362 + $0x20a8] sm:$0xff]
        %v1469 = vld [vmem:[%s362 + $0x20b0] sm:$0xff]
        %v1470 = vld [vmem:[%s362 + $0x20b8] sm:$0xff]
        %v1471 = vld [vmem:[%s362 + $0x20c0] sm:$0xff]
        %v1472 = vld [vmem:[%s362 + $0x20c8] sm:$0xff]
        %v1473 = vld [vmem:[%s362 + $0x20d0] sm:$0xff]
        %v1474 = vld [vmem:[%s362 + $0x20d8] sm:$0xff]
        %v1475 = vld [vmem:[%s362 + $0x20e0] sm:$0xff]
        %v1476 = vld [vmem:[%s362 + $0x20e8] sm:$0xff]
        %v1477 = vld [vmem:[%s362 + $0x20f0] sm:$0xff]
        %v1478 = vld [vmem:[%s362 + $0x20f8] sm:$0xff]
        %v1479 = vld [vmem:[%s362 + $0x2100] sm:$0xff]
        %v1480 = vld [vmem:[%s362 + $0x2108] sm:$0xff]
        %v1481 = vld [vmem:[%s362 + $0x2110] sm:$0xff]
        %v1482 = vld [vmem:[%s362 + $0x2118] sm:$0xff]
        %v1483 = vld [vmem:[%s362 + $0x2120] sm:$0xff]
        %v1484 = vld [vmem:[%s362 + $0x2128] sm:$0xff]
        %v1485 = vld [vmem:[%s362 + $0x2130] sm:$0xff]
        %v1486 = vld [vmem:[%s362 + $0x2138] sm:$0xff]
        %v1487 = vld [vmem:[%s362 + $0x2140] sm:$0xff]
        %v1488 = vld [vmem:[%s362 + $0x2148] sm:$0xff]
        %v1489 = vld [vmem:[%s362 + $0x2150] sm:$0xff]
        %v1490 = vld [vmem:[%s362 + $0x2158] sm:$0xff]
        %v1491 = vld [vmem:[%s362 + $0x2160] sm:$0xff]
        %v1492 = vld [vmem:[%s362 + $0x2168] sm:$0xff]
        %v1493 = vld [vmem:[%s362 + $0x2170] sm:$0xff]
        %v1494 = vld [vmem:[%s362 + $0x2178] sm:$0xff]
        %v1495 = vld [vmem:[%s362 + $0x2180] sm:$0xff]
        %v1496 = vld [vmem:[%s362 + $0x2188] sm:$0xff]
        %v1497 = vld [vmem:[%s362 + $0x2190] sm:$0xff]
        %v1498 = vld [vmem:[%s362 + $0x2198] sm:$0xff]
        %v1499 = vld [vmem:[%s362 + $0x21a0] sm:$0xff]
        %v1500 = vld [vmem:[%s362 + $0x21a8] sm:$0xff]
        %v1501 = vld [vmem:[%s362 + $0x21b0] sm:$0xff]
        %v1502 = vld [vmem:[%s362 + $0x21b8] sm:$0xff]
        %v1503 = vld [vmem:[%s362 + $0x21c0] sm:$0xff]
        %v1504 = vld [vmem:[%s362 + $0x21c8] sm:$0xff]
        %v1505 = vld [vmem:[%s362 + $0x21d0] sm:$0xff]
        %v1506 = vld [vmem:[%s362 + $0x21d8] sm:$0xff]
        %v1507 = vld [vmem:[%s362 + $0x21e0] sm:$0xff]
        %v1508 = vld [vmem:[%s362 + $0x21e8] sm:$0xff]
        %v1509 = vld [vmem:[%s362 + $0x21f0] sm:$0xff]
        %v1510 = vld [vmem:[%s362 + $0x21f8] sm:$0xff]
        %v1511 = vld [vmem:[%s362 + $0x2200] sm:$0xff]
        %v1512 = vld [vmem:[%s362 + $0x2208] sm:$0xff]
        %v1513 = vld [vmem:[%s362 + $0x2210] sm:$0xff]
        %v1514 = vld [vmem:[%s362 + $0x2218] sm:$0xff]
        %v1515 = vld [vmem:[%s362 + $0x2220] sm:$0xff]
        %v1516 = vld [vmem:[%s362 + $0x2228] sm:$0xff]
        %v1517 = vld [vmem:[%s362 + $0x2230] sm:$0xff]
        %v1518 = vld [vmem:[%s362 + $0x2238] sm:$0xff]
        %v1519 = vld [vmem:[%s362 + $0x2240] sm:$0xff]
        %v1520 = vld [vmem:[%s362 + $0x2248] sm:$0xff]
        %v1521 = vld [vmem:[%s362 + $0x2250] sm:$0xff]
        %v1522 = vld [vmem:[%s362 + $0x2258] sm:$0xff]
        %v1523 = vld [vmem:[%s362 + $0x2260] sm:$0xff]
        %v1524 = vld [vmem:[%s362 + $0x2268] sm:$0xff]
        %v1525 = vld [vmem:[%s362 + $0x2270] sm:$0xff]
        %v1526 = vld [vmem:[%s362 + $0x2278] sm:$0xff]
        %v1527 = vld [vmem:[%s362 + $0x2280] sm:$0xff]
        %v1528 = vld [vmem:[%s362 + $0x2288] sm:$0xff]
        %v1529 = vld [vmem:[%s362 + $0x2290] sm:$0xff]
        %v1530 = vld [vmem:[%s362 + $0x2298] sm:$0xff]
        %v1531 = vld [vmem:[%s362 + $0x22a0] sm:$0xff]
        %v1532 = vld [vmem:[%s362 + $0x22a8] sm:$0xff]
        %v1533 = vld [vmem:[%s362 + $0x22b0] sm:$0xff]
        %v1534 = vld [vmem:[%s362 + $0x22b8] sm:$0xff]
        %v1535 = vld [vmem:[%s362 + $0x22c0] sm:$0xff]
        %v1536 = vld [vmem:[%s362 + $0x22c8] sm:$0xff]
        %v1537 = vld [vmem:[%s362 + $0x22d0] sm:$0xff]
        %v1538 = vld [vmem:[%s362 + $0x22d8] sm:$0xff]
        %v1539 = vld [vmem:[%s362 + $0x22e0] sm:$0xff]
        %v1540 = vld [vmem:[%s362 + $0x22e8] sm:$0xff]
        %v1541 = vld [vmem:[%s362 + $0x22f0] sm:$0xff]
        %v1542 = vld [vmem:[%s362 + $0x22f8] sm:$0xff]
        %v1543 = vld [vmem:[%s362 + $0x2300] sm:$0xff]
        %v1544 = vld [vmem:[%s362 + $0x2308] sm:$0xff]
        %v1545 = vld [vmem:[%s362 + $0x2310] sm:$0xff]
        %v1546 = vld [vmem:[%s362 + $0x2318] sm:$0xff]
        %v1547 = vld [vmem:[%s362 + $0x2320] sm:$0xff]
        %v1548 = vld [vmem:[%s362 + $0x2328] sm:$0xff]
        %v1549 = vld [vmem:[%s362 + $0x2330] sm:$0xff]
        %v1550 = vld [vmem:[%s362 + $0x2338] sm:$0xff]
        %v1551 = vld [vmem:[%s362 + $0x2340] sm:$0xff]
        %v1552 = vld [vmem:[%s362 + $0x2348] sm:$0xff]
        %v1553 = vld [vmem:[%s362 + $0x2350] sm:$0xff]
        %v1554 = vld [vmem:[%s362 + $0x2358] sm:$0xff]
        %v1555 = vld [vmem:[%s362 + $0x2360] sm:$0xff]
        %v1556 = vld [vmem:[%s362 + $0x2368] sm:$0xff]
        %v1557 = vld [vmem:[%s362 + $0x2370] sm:$0xff]
        %v1558 = vld [vmem:[%s362 + $0x2378] sm:$0xff]
        %v1559 = vld [vmem:[%s362 + $0x2380] sm:$0xff]
        %v1560 = vld [vmem:[%s362 + $0x2388] sm:$0xff]
        %v1561 = vld [vmem:[%s362 + $0x2390] sm:$0xff]
        %v1562 = vld [vmem:[%s362 + $0x2398] sm:$0xff]
        %v1563 = vld [vmem:[%s362 + $0x23a0] sm:$0xff]
        %v1564 = vld [vmem:[%s362 + $0x23a8] sm:$0xff]
        %v1565 = vld [vmem:[%s362 + $0x23b0] sm:$0xff]
        %v1566 = vld [vmem:[%s362 + $0x23b8] sm:$0xff]
        %v1567 = vld [vmem:[%s362 + $0x23c0] sm:$0xff]
        %v1568 = vld [vmem:[%s362 + $0x23c8] sm:$0xff]
        %v1569 = vld [vmem:[%s362 + $0x23d0] sm:$0xff]
        %v1570 = vld [vmem:[%s362 + $0x23d8] sm:$0xff]
        %v1571 = vld [vmem:[%s362 + $0x23e0] sm:$0xff]
        %v1572 = vld [vmem:[%s362 + $0x23e8] sm:$0xff]
        %v1573 = vld [vmem:[%s362 + $0x23f0] sm:$0xff]
        %v1574 = vld [vmem:[%s362 + $0x23f8] sm:$0xff]
        %v1575 = vld [vmem:[%s362 + $0x2400] sm:$0xff]
        %v1576 = vld [vmem:[%s362 + $0x2408] sm:$0xff]
        %v1577 = vld [vmem:[%s362 + $0x2410] sm:$0xff]
        %v1578 = vld [vmem:[%s362 + $0x2418] sm:$0xff]
        %v1579 = vld [vmem:[%s362 + $0x2420] sm:$0xff]
        %v1580 = vld [vmem:[%s362 + $0x2428] sm:$0xff]
        %v1581 = vld [vmem:[%s362 + $0x2430] sm:$0xff]
        %v1582 = vld [vmem:[%s362 + $0x2438] sm:$0xff]
        %v1583 = vld [vmem:[%s362 + $0x2440] sm:$0xff]
        %v1584 = vld [vmem:[%s362 + $0x2448] sm:$0xff]
        %v1585 = vld [vmem:[%s362 + $0x2450] sm:$0xff]
        %v1586 = vld [vmem:[%s362 + $0x2458] sm:$0xff]
        %v1587 = vld [vmem:[%s362 + $0x2460] sm:$0xff]
        %v1588 = vld [vmem:[%s362 + $0x2468] sm:$0xff]
        %v1589 = vld [vmem:[%s362 + $0x2470] sm:$0xff]
        %v1590 = vld [vmem:[%s362 + $0x2478] sm:$0xff]
        %v1591 = vld [vmem:[%s362 + $0x2480] sm:$0xff]
        %v1592 = vld [vmem:[%s362 + $0x2488] sm:$0xff]
        %v1593 = vld [vmem:[%s362 + $0x2490] sm:$0xff]
        %v1594 = vld [vmem:[%s362 + $0x2498] sm:$0xff]
        %v1595 = vld [vmem:[%s362 + $0x24a0] sm:$0xff]
        %v1596 = vld [vmem:[%s362 + $0x24a8] sm:$0xff]
        %v1597 = vld [vmem:[%s362 + $0x24b0] sm:$0xff]
        %v1598 = vld [vmem:[%s362 + $0x24b8] sm:$0xff]
        %v1599 = vld [vmem:[%s362 + $0x24c0] sm:$0xff]
        %v1600 = vld [vmem:[%s362 + $0x24c8] sm:$0xff]
        %v1601 = vld [vmem:[%s362 + $0x24d0] sm:$0xff]
        %v1602 = vld [vmem:[%s362 + $0x24d8] sm:$0xff]
        %v1603 = vld [vmem:[%s362 + $0x24e0] sm:$0xff]
        %v1604 = vld [vmem:[%s362 + $0x24e8] sm:$0xff]
        %v1605 = vld [vmem:[%s362 + $0x24f0] sm:$0xff]
        %v1606 = vld [vmem:[%s362 + $0x24f8] sm:$0xff]
        %v1607 = vld [vmem:[%s362 + $0x2500] sm:$0xff]
        %v1608 = vld [vmem:[%s362 + $0x2508] sm:$0xff]
        %v1609 = vld [vmem:[%s362 + $0x2510] sm:$0xff]
        %v1610 = vld [vmem:[%s362 + $0x2518] sm:$0xff]
        %v1611 = vld [vmem:[%s362 + $0x2520] sm:$0xff]
        %v1612 = vld [vmem:[%s362 + $0x2528] sm:$0xff]
        %v1613 = vld [vmem:[%s362 + $0x2530] sm:$0xff]
        %v1614 = vld [vmem:[%s362 + $0x2538] sm:$0xff]
        %v1615 = vld [vmem:[%s362 + $0x2540] sm:$0xff]
        %v1616 = vld [vmem:[%s362 + $0x2548] sm:$0xff]
        %v1617 = vld [vmem:[%s362 + $0x2550] sm:$0xff]
        %v1618 = vld [vmem:[%s362 + $0x2558] sm:$0xff]
        %v1619 = vld [vmem:[%s362 + $0x2560] sm:$0xff]
        %v1620 = vld [vmem:[%s362 + $0x2568] sm:$0xff]
        %v1621 = vld [vmem:[%s362 + $0x2570] sm:$0xff]
        %v1622 = vld [vmem:[%s362 + $0x2578] sm:$0xff]
        %v1623 = vld [vmem:[%s362 + $0x2580] sm:$0xff]
        %v1624 = vld [vmem:[%s362 + $0x2588] sm:$0xff]
        %v1625 = vld [vmem:[%s362 + $0x2590] sm:$0xff]
        %v1626 = vld [vmem:[%s362 + $0x2598] sm:$0xff]
        %v1627 = vld [vmem:[%s362 + $0x25a0] sm:$0xff]
        %v1628 = vld [vmem:[%s362 + $0x25a8] sm:$0xff]
        %v1629 = vld [vmem:[%s362 + $0x25b0] sm:$0xff]
        %v1630 = vld [vmem:[%s362 + $0x25b8] sm:$0xff]
        %v1631 = vld [vmem:[%s362 + $0x25c0] sm:$0xff]
        %v1632 = vld [vmem:[%s362 + $0x25c8] sm:$0xff]
        %v1633 = vld [vmem:[%s362 + $0x25d0] sm:$0xff]
        %v1634 = vld [vmem:[%s362 + $0x25d8] sm:$0xff]
        %v1635 = vld [vmem:[%s362 + $0x25e0] sm:$0xff]
        %v1636 = vld [vmem:[%s362 + $0x25e8] sm:$0xff]
        %v1637 = vld [vmem:[%s362 + $0x25f0] sm:$0xff]
        %v1638 = vld [vmem:[%s362 + $0x25f8] sm:$0xff]
        %v1639 = vld [vmem:[%s362 + $0x2600] sm:$0xff]
        %v1640 = vld [vmem:[%s362 + $0x2608] sm:$0xff]
        %v1641 = vld [vmem:[%s362 + $0x2610] sm:$0xff]
        %v1642 = vld [vmem:[%s362 + $0x2618] sm:$0xff]
        %v1643 = vld [vmem:[%s362 + $0x2620] sm:$0xff]
        %v1644 = vld [vmem:[%s362 + $0x2628] sm:$0xff]
        %v1645 = vld [vmem:[%s362 + $0x2630] sm:$0xff]
        %v1646 = vld [vmem:[%s362 + $0x2638] sm:$0xff]
        %v1647 = vld [vmem:[%s362 + $0x2640] sm:$0xff]
        %v1648 = vld [vmem:[%s362 + $0x2648] sm:$0xff]
        %v1649 = vld [vmem:[%s362 + $0x2650] sm:$0xff]
        %v1650 = vld [vmem:[%s362 + $0x2658] sm:$0xff]
        %v1651 = vld [vmem:[%s362 + $0x2660] sm:$0xff]
        %v1652 = vld [vmem:[%s362 + $0x2668] sm:$0xff]
        %v1653 = vld [vmem:[%s362 + $0x2670] sm:$0xff]
        %v1654 = vld [vmem:[%s362 + $0x2678] sm:$0xff]
        %v1655 = vld [vmem:[%s362 + $0x2680] sm:$0xff]
        %v1656 = vld [vmem:[%s362 + $0x2688] sm:$0xff]
        %v1657 = vld [vmem:[%s362 + $0x2690] sm:$0xff]
        %v1658 = vld [vmem:[%s362 + $0x2698] sm:$0xff]
        %v1659 = vld [vmem:[%s362 + $0x26a0] sm:$0xff]
        %v1660 = vld [vmem:[%s362 + $0x26a8] sm:$0xff]
        %v1661 = vld [vmem:[%s362 + $0x26b0] sm:$0xff]
        %v1662 = vld [vmem:[%s362 + $0x26b8] sm:$0xff]
        %v1663 = vld [vmem:[%s362 + $0x26c0] sm:$0xff]
        %v1664 = vld [vmem:[%s362 + $0x26c8] sm:$0xff]
        %v1665 = vld [vmem:[%s362 + $0x26d0] sm:$0xff]
        %v1666 = vld [vmem:[%s362 + $0x26d8] sm:$0xff]
        %v1667 = vld [vmem:[%s362 + $0x26e0] sm:$0xff]
        %v1668 = vld [vmem:[%s362 + $0x26e8] sm:$0xff]
        %v1669 = vld [vmem:[%s362 + $0x26f0] sm:$0xff]
        %v1670 = vld [vmem:[%s362 + $0x26f8] sm:$0xff]
        %v1671 = vld [vmem:[%s362 + $0x2700] sm:$0xff]
        %v1672 = vld [vmem:[%s362 + $0x2708] sm:$0xff]
        %v1673 = vld [vmem:[%s362 + $0x2710] sm:$0xff]
        %v1674 = vld [vmem:[%s362 + $0x2718] sm:$0xff]
        %v1675 = vld [vmem:[%s362 + $0x2720] sm:$0xff]
        %v1676 = vld [vmem:[%s362 + $0x2728] sm:$0xff]
        %v1677 = vld [vmem:[%s362 + $0x2730] sm:$0xff]
        %v1678 = vld [vmem:[%s362 + $0x2738] sm:$0xff]
        %v1679 = vld [vmem:[%s362 + $0x2740] sm:$0xff]
        %v1680 = vld [vmem:[%s362 + $0x2748] sm:$0xff]
        %v1681 = vld [vmem:[%s362 + $0x2750] sm:$0xff]
        %v1682 = vld [vmem:[%s362 + $0x2758] sm:$0xff]
        %v1683 = vld [vmem:[%s362 + $0x2760] sm:$0xff]
        %v1684 = vld [vmem:[%s362 + $0x2768] sm:$0xff]
        %v1685 = vld [vmem:[%s362 + $0x2770] sm:$0xff]
        %v1686 = vld [vmem:[%s362 + $0x2778] sm:$0xff]
        %v1687 = vld [vmem:[%s362 + $0x2780] sm:$0xff]
        %v1688 = vld [vmem:[%s362 + $0x2788] sm:$0xff]
        %v1689 = vld [vmem:[%s362 + $0x2790] sm:$0xff]
        %v1690 = vld [vmem:[%s362 + $0x2798] sm:$0xff]
        %v1691 = vld [vmem:[%s362 + $0x27a0] sm:$0xff]
        %v1692 = vld [vmem:[%s362 + $0x27a8] sm:$0xff]
        %v1693 = vld [vmem:[%s362 + $0x27b0] sm:$0xff]
        %v1694 = vld [vmem:[%s362 + $0x27b8] sm:$0xff]
        %v1695 = vld [vmem:[%s362 + $0x27c0] sm:$0xff]
        %v1696 = vld [vmem:[%s362 + $0x27c8] sm:$0xff]
        %v1697 = vld [vmem:[%s362 + $0x27d0] sm:$0xff]
        %v1698 = vld [vmem:[%s362 + $0x27d8] sm:$0xff]
        %v1699 = vld [vmem:[%s362 + $0x27e0] sm:$0xff]
        %v1700 = vld [vmem:[%s362 + $0x27e8] sm:$0xff]
        %v1701 = vld [vmem:[%s362 + $0x27f0] sm:$0xff]
        %v1702 = vld [vmem:[%s362 + $0x27f8] sm:$0xff]
        %v1703 = vld [vmem:[%s362 + $0x2800] sm:$0xff]
        %v1704 = vld [vmem:[%s362 + $0x2808] sm:$0xff]
        %v1705 = vld [vmem:[%s362 + $0x2810] sm:$0xff]
        %v1706 = vld [vmem:[%s362 + $0x2818] sm:$0xff]
        %v1707 = vld [vmem:[%s362 + $0x2820] sm:$0xff]
        %v1708 = vld [vmem:[%s362 + $0x2828] sm:$0xff]
        %v1709 = vld [vmem:[%s362 + $0x2830] sm:$0xff]
        %v1710 = vld [vmem:[%s362 + $0x2838] sm:$0xff]
        %v1711 = vld [vmem:[%s362 + $0x2840] sm:$0xff]
        %v1712 = vld [vmem:[%s362 + $0x2848] sm:$0xff]
        %v1713 = vld [vmem:[%s362 + $0x2850] sm:$0xff]
        %v1714 = vld [vmem:[%s362 + $0x2858] sm:$0xff]
        %v1715 = vld [vmem:[%s362 + $0x2860] sm:$0xff]
        %v1716 = vld [vmem:[%s362 + $0x2868] sm:$0xff]
        %v1717 = vld [vmem:[%s362 + $0x2870] sm:$0xff]
        %v1718 = vld [vmem:[%s362 + $0x2878] sm:$0xff]
        %v1719 = vld [vmem:[%s362 + $0x2880] sm:$0xff]
        %v1720 = vld [vmem:[%s362 + $0x2888] sm:$0xff]
        %v1721 = vld [vmem:[%s362 + $0x2890] sm:$0xff]
        %v1722 = vld [vmem:[%s362 + $0x2898] sm:$0xff]
        %v1723 = vld [vmem:[%s362 + $0x28a0] sm:$0xff]
        %v1724 = vld [vmem:[%s362 + $0x28a8] sm:$0xff]
        %v1725 = vld [vmem:[%s362 + $0x28b0] sm:$0xff]
        %v1726 = vld [vmem:[%s362 + $0x28b8] sm:$0xff]
        %v1727 = vld [vmem:[%s362 + $0x28c0] sm:$0xff]
        %v1728 = vld [vmem:[%s362 + $0x28c8] sm:$0xff]
        %v1729 = vld [vmem:[%s362 + $0x28d0] sm:$0xff]
        %v1730 = vld [vmem:[%s362 + $0x28d8] sm:$0xff]
        %v1731 = vld [vmem:[%s362 + $0x28e0] sm:$0xff]
        %v1732 = vld [vmem:[%s362 + $0x28e8] sm:$0xff]
        %v1733 = vld [vmem:[%s362 + $0x28f0] sm:$0xff]
        %v1734 = vld [vmem:[%s362 + $0x28f8] sm:$0xff]
        %v1735 = vld [vmem:[%s362 + $0x2900] sm:$0xff]
        %v1736 = vld [vmem:[%s362 + $0x2908] sm:$0xff]
        %v1737 = vld [vmem:[%s362 + $0x2910] sm:$0xff]
        %v1738 = vld [vmem:[%s362 + $0x2918] sm:$0xff]
        %v1739 = vld [vmem:[%s362 + $0x2920] sm:$0xff]
        %v1740 = vld [vmem:[%s362 + $0x2928] sm:$0xff]
        %v1741 = vld [vmem:[%s362 + $0x2930] sm:$0xff]
        %v1742 = vld [vmem:[%s362 + $0x2938] sm:$0xff]
        %v1743 = vld [vmem:[%s362 + $0x2940] sm:$0xff]
        %v1744 = vld [vmem:[%s362 + $0x2948] sm:$0xff]
        %v1745 = vld [vmem:[%s362 + $0x2950] sm:$0xff]
        %v1746 = vld [vmem:[%s362 + $0x2958] sm:$0xff]
        %v1747 = vld [vmem:[%s362 + $0x2960] sm:$0xff]
        %v1748 = vld [vmem:[%s362 + $0x2968] sm:$0xff]
        %v1749 = vld [vmem:[%s362 + $0x2970] sm:$0xff]
        %v1750 = vld [vmem:[%s362 + $0x2978] sm:$0xff]
        %v1751 = vld [vmem:[%s362 + $0x2980] sm:$0xff]
        %v1752 = vld [vmem:[%s362 + $0x2988] sm:$0xff]
        %v1753 = vld [vmem:[%s362 + $0x2990] sm:$0xff]
        %v1754 = vld [vmem:[%s362 + $0x2998] sm:$0xff]
        %v1755 = vld [vmem:[%s362 + $0x29a0] sm:$0xff]
        %v1756 = vld [vmem:[%s362 + $0x29a8] sm:$0xff]
        %v1757 = vld [vmem:[%s362 + $0x29b0] sm:$0xff]
        %v1758 = vld [vmem:[%s362 + $0x29b8] sm:$0xff]
        %v1759 = vld [vmem:[%s362 + $0x29c0] sm:$0xff]
        %v1760 = vld [vmem:[%s362 + $0x29c8] sm:$0xff]
        %v1761 = vld [vmem:[%s362 + $0x29d0] sm:$0xff]
        %v1762 = vld [vmem:[%s362 + $0x29d8] sm:$0xff]
        %v1763 = vld [vmem:[%s362 + $0x29e0] sm:$0xff]
        %v1764 = vld [vmem:[%s362 + $0x29e8] sm:$0xff]
        %v1765 = vld [vmem:[%s362 + $0x29f0] sm:$0xff]
        %v1766 = vld [vmem:[%s362 + $0x29f8] sm:$0xff]
        %v1767 = vld [vmem:[%s362 + $0x2a00] sm:$0xff]
        %v1768 = vld [vmem:[%s362 + $0x2a08] sm:$0xff]
        %v1769 = vld [vmem:[%s362 + $0x2a10] sm:$0xff]
        %v1770 = vld [vmem:[%s362 + $0x2a18] sm:$0xff]
        %v1771 = vld [vmem:[%s362 + $0x2a20] sm:$0xff]
        %v1772 = vld [vmem:[%s362 + $0x2a28] sm:$0xff]
        %v1773 = vld [vmem:[%s362 + $0x2a30] sm:$0xff]
        %v1774 = vld [vmem:[%s362 + $0x2a38] sm:$0xff]
        %v1775 = vld [vmem:[%s362 + $0x2a40] sm:$0xff]
        %v1776 = vld [vmem:[%s362 + $0x2a48] sm:$0xff]
        %v1777 = vld [vmem:[%s362 + $0x2a50] sm:$0xff]
        %v1778 = vld [vmem:[%s362 + $0x2a58] sm:$0xff]
        %v1779 = vld [vmem:[%s362 + $0x2a60] sm:$0xff]
        %v1780 = vld [vmem:[%s362 + $0x2a68] sm:$0xff]
        %v1781 = vld [vmem:[%s362 + $0x2a70] sm:$0xff]
        %v1782 = vld [vmem:[%s362 + $0x2a78] sm:$0xff]
        %v1783 = vld [vmem:[%s362 + $0x2a80] sm:$0xff]
        %v1784 = vld [vmem:[%s362 + $0x2a88] sm:$0xff]
        %v1785 = vld [vmem:[%s362 + $0x2a90] sm:$0xff]
        %v1786 = vld [vmem:[%s362 + $0x2a98] sm:$0xff]
        %v1787 = vld [vmem:[%s362 + $0x2aa0] sm:$0xff]
        %v1788 = vld [vmem:[%s362 + $0x2aa8] sm:$0xff]
        %v1789 = vld [vmem:[%s362 + $0x2ab0] sm:$0xff]
        %v1790 = vld [vmem:[%s362 + $0x2ab8] sm:$0xff]
        %v1791 = vld [vmem:[%s362 + $0x2ac0] sm:$0xff]
        %v1792 = vld [vmem:[%s362 + $0x2ac8] sm:$0xff]
        %v1793 = vld [vmem:[%s362 + $0x2ad0] sm:$0xff]
        %v1794 = vld [vmem:[%s362 + $0x2ad8] sm:$0xff]
        %v1795 = vld [vmem:[%s362 + $0x2ae0] sm:$0xff]
        %v1796 = vld [vmem:[%s362 + $0x2ae8] sm:$0xff]
        %v1797 = vld [vmem:[%s362 + $0x2af0] sm:$0xff]
        %v1798 = vld [vmem:[%s362 + $0x2af8] sm:$0xff]
        %v1799 = vld [vmem:[%s362 + $0x2b00] sm:$0xff]
        %v1800 = vld [vmem:[%s362 + $0x2b08] sm:$0xff]
        %v1801 = vld [vmem:[%s362 + $0x2b10] sm:$0xff]
        %v1802 = vld [vmem:[%s362 + $0x2b18] sm:$0xff]
        %v1803 = vld [vmem:[%s362 + $0x2b20] sm:$0xff]
        %v1804 = vld [vmem:[%s362 + $0x2b28] sm:$0xff]
        %v1805 = vld [vmem:[%s362 + $0x2b30] sm:$0xff]
        %v1806 = vld [vmem:[%s362 + $0x2b38] sm:$0xff]
        %v1807 = vld [vmem:[%s362 + $0x2b40] sm:$0xff]
        %v1808 = vld [vmem:[%s362 + $0x2b48] sm:$0xff]
        %v1809 = vld [vmem:[%s362 + $0x2b50] sm:$0xff]
        %v1810 = vld [vmem:[%s362 + $0x2b58] sm:$0xff]
        %v1811 = vld [vmem:[%s362 + $0x2b60] sm:$0xff]
        %v1812 = vld [vmem:[%s362 + $0x2b68] sm:$0xff]
        %v1813 = vld [vmem:[%s362 + $0x2b70] sm:$0xff]
        %v1814 = vld [vmem:[%s362 + $0x2b78] sm:$0xff]
        %v1815 = vld [vmem:[%s362 + $0x2b80] sm:$0xff]
        %v1816 = vld [vmem:[%s362 + $0x2b88] sm:$0xff]
        %v1817 = vld [vmem:[%s362 + $0x2b90] sm:$0xff]
        %v1818 = vld [vmem:[%s362 + $0x2b98] sm:$0xff]
        %v1819 = vld [vmem:[%s362 + $0x2ba0] sm:$0xff]
        %v1820 = vld [vmem:[%s362 + $0x2ba8] sm:$0xff]
        %v1821 = vld [vmem:[%s362 + $0x2bb0] sm:$0xff]
        %v1822 = vld [vmem:[%s362 + $0x2bb8] sm:$0xff]
        %v1823 = vld [vmem:[%s362 + $0x2bc0] sm:$0xff]
        %v1824 = vld [vmem:[%s362 + $0x2bc8] sm:$0xff]
        %v1825 = vld [vmem:[%s362 + $0x2bd0] sm:$0xff]
        %v1826 = vld [vmem:[%s362 + $0x2bd8] sm:$0xff]
        %v1827 = vld [vmem:[%s362 + $0x2be0] sm:$0xff]
        %v1828 = vld [vmem:[%s362 + $0x2be8] sm:$0xff]
        %v1829 = vld [vmem:[%s362 + $0x2bf0] sm:$0xff]
        %v1830 = vld [vmem:[%s362 + $0x2bf8] sm:$0xff]
        %v1831 = vld [vmem:[%s362 + $0x2c00] sm:$0xff]
        %v1832 = vld [vmem:[%s362 + $0x2c08] sm:$0xff]
        %v1833 = vld [vmem:[%s362 + $0x2c10] sm:$0xff]
        %v1834 = vld [vmem:[%s362 + $0x2c18] sm:$0xff]
        %v1835 = vld [vmem:[%s362 + $0x2c20] sm:$0xff]
        %v1836 = vld [vmem:[%s362 + $0x2c28] sm:$0xff]
        %v1837 = vld [vmem:[%s362 + $0x2c30] sm:$0xff]
        %v1838 = vld [vmem:[%s362 + $0x2c38] sm:$0xff]
        %v1839 = vld [vmem:[%s362 + $0x2c40] sm:$0xff]
        %v1840 = vld [vmem:[%s362 + $0x2c48] sm:$0xff]
        %v1841 = vld [vmem:[%s362 + $0x2c50] sm:$0xff]
        %v1842 = vld [vmem:[%s362 + $0x2c58] sm:$0xff]
        %v1843 = vld [vmem:[%s362 + $0x2c60] sm:$0xff]
        %v1844 = vld [vmem:[%s362 + $0x2c68] sm:$0xff]
        %v1845 = vld [vmem:[%s362 + $0x2c70] sm:$0xff]
        %v1846 = vld [vmem:[%s362 + $0x2c78] sm:$0xff]
        %v1847 = vld [vmem:[%s362 + $0x2c80] sm:$0xff]
        %v1848 = vld [vmem:[%s362 + $0x2c88] sm:$0xff]
        %v1849 = vld [vmem:[%s362 + $0x2c90] sm:$0xff]
        %v1850 = vld [vmem:[%s362 + $0x2c98] sm:$0xff]
        %v1851 = vld [vmem:[%s362 + $0x2ca0] sm:$0xff]
        %v1852 = vld [vmem:[%s362 + $0x2ca8] sm:$0xff]
        %v1853 = vld [vmem:[%s362 + $0x2cb0] sm:$0xff]
        %v1854 = vld [vmem:[%s362 + $0x2cb8] sm:$0xff]
        %v1855 = vld [vmem:[%s362 + $0x2cc0] sm:$0xff]
        %v1856 = vld [vmem:[%s362 + $0x2cc8] sm:$0xff]
        %v1857 = vld [vmem:[%s362 + $0x2cd0] sm:$0xff]
        %v1858 = vld [vmem:[%s362 + $0x2cd8] sm:$0xff]
        %v1859 = vld [vmem:[%s362 + $0x2ce0] sm:$0xff]
        %v1860 = vld [vmem:[%s362 + $0x2ce8] sm:$0xff]
        %v1861 = vld [vmem:[%s362 + $0x2cf0] sm:$0xff]
        %v1862 = vld [vmem:[%s362 + $0x2cf8] sm:$0xff]
        %v1863 = vld [vmem:[%s362 + $0x2d00] sm:$0xff]
        %v1864 = vld [vmem:[%s362 + $0x2d08] sm:$0xff]
        %v1865 = vld [vmem:[%s362 + $0x2d10] sm:$0xff]
        %v1866 = vld [vmem:[%s362 + $0x2d18] sm:$0xff]
        %v1867 = vld [vmem:[%s362 + $0x2d20] sm:$0xff]
        %v1868 = vld [vmem:[%s362 + $0x2d28] sm:$0xff]
        %v1869 = vld [vmem:[%s362 + $0x2d30] sm:$0xff]
        %v1870 = vld [vmem:[%s362 + $0x2d38] sm:$0xff]
        %v1871 = vld [vmem:[%s362 + $0x2d40] sm:$0xff]
        %v1872 = vld [vmem:[%s362 + $0x2d48] sm:$0xff]
        %v1873 = vld [vmem:[%s362 + $0x2d50] sm:$0xff]
        %v1874 = vld [vmem:[%s362 + $0x2d58] sm:$0xff]
        %v1875 = vld [vmem:[%s362 + $0x2d60] sm:$0xff]
        %v1876 = vld [vmem:[%s362 + $0x2d68] sm:$0xff]
        %v1877 = vld [vmem:[%s362 + $0x2d70] sm:$0xff]
        %v1878 = vld [vmem:[%s362 + $0x2d78] sm:$0xff]
        %v1879 = vld [vmem:[%s362 + $0x2d80] sm:$0xff]
        %v1880 = vld [vmem:[%s362 + $0x2d88] sm:$0xff]
        %v1881 = vld [vmem:[%s362 + $0x2d90] sm:$0xff]
        %v1882 = vld [vmem:[%s362 + $0x2d98] sm:$0xff]
        %v1883 = vld [vmem:[%s362 + $0x2da0] sm:$0xff]
        %v1884 = vld [vmem:[%s362 + $0x2da8] sm:$0xff]
        %v1885 = vld [vmem:[%s362 + $0x2db0] sm:$0xff]
        %v1886 = vld [vmem:[%s362 + $0x2db8] sm:$0xff]
        %v1887 = vld [vmem:[%s362 + $0x2dc0] sm:$0xff]
        %v1888 = vld [vmem:[%s362 + $0x2dc8] sm:$0xff]
        %v1889 = vld [vmem:[%s362 + $0x2dd0] sm:$0xff]
        %v1890 = vld [vmem:[%s362 + $0x2dd8] sm:$0xff]
        %v1891 = vld [vmem:[%s362 + $0x2de0] sm:$0xff]
        %v1892 = vld [vmem:[%s362 + $0x2de8] sm:$0xff]
        %v1893 = vld [vmem:[%s362 + $0x2df0] sm:$0xff]
        %v1894 = vld [vmem:[%s362 + $0x2df8] sm:$0xff]
        %v1895 = vld [vmem:[%s362 + $0x2e00] sm:$0xff]
        %v1896 = vld [vmem:[%s362 + $0x2e08] sm:$0xff]
        %v1897 = vld [vmem:[%s362 + $0x2e10] sm:$0xff]
        %v1898 = vld [vmem:[%s362 + $0x2e18] sm:$0xff]
        %v1899 = vld [vmem:[%s362 + $0x2e20] sm:$0xff]
        %v1900 = vld [vmem:[%s362 + $0x2e28] sm:$0xff]
        %v1901 = vld [vmem:[%s362 + $0x2e30] sm:$0xff]
        %v1902 = vld [vmem:[%s362 + $0x2e38] sm:$0xff]
        %v1903 = vld [vmem:[%s362 + $0x2e40] sm:$0xff]
        %v1904 = vld [vmem:[%s362 + $0x2e48] sm:$0xff]
        %v1905 = vld [vmem:[%s362 + $0x2e50] sm:$0xff]
        %v1906 = vld [vmem:[%s362 + $0x2e58] sm:$0xff]
        %v1907 = vld [vmem:[%s362 + $0x2e60] sm:$0xff]
        %v1908 = vld [vmem:[%s362 + $0x2e68] sm:$0xff]
        %v1909 = vld [vmem:[%s362 + $0x2e70] sm:$0xff]
        %v1910 = vld [vmem:[%s362 + $0x2e78] sm:$0xff]
        %v1911 = vld [vmem:[%s362 + $0x2e80] sm:$0xff]
        %v1912 = vld [vmem:[%s362 + $0x2e88] sm:$0xff]
        %v1913 = vld [vmem:[%s362 + $0x2e90] sm:$0xff]
        %v1914 = vld [vmem:[%s362 + $0x2e98] sm:$0xff]
        %v1915 = vld [vmem:[%s362 + $0x2ea0] sm:$0xff]
        %v1916 = vld [vmem:[%s362 + $0x2ea8] sm:$0xff]
        %v1917 = vld [vmem:[%s362 + $0x2eb0] sm:$0xff]
        %v1918 = vld [vmem:[%s362 + $0x2eb8] sm:$0xff]
        %v1919 = vld [vmem:[%s362 + $0x2ec0] sm:$0xff]
        %v1920 = vld [vmem:[%s362 + $0x2ec8] sm:$0xff]
        %v1921 = vld [vmem:[%s362 + $0x2ed0] sm:$0xff]
        %v1922 = vld [vmem:[%s362 + $0x2ed8] sm:$0xff]
        %v1923 = vld [vmem:[%s362 + $0x2ee0] sm:$0xff]
        %v1924 = vld [vmem:[%s362 + $0x2ee8] sm:$0xff]
        %v1925 = vld [vmem:[%s362 + $0x2ef0] sm:$0xff]
        %v1926 = vld [vmem:[%s362 + $0x2ef8] sm:$0xff]
        %v1927 = vld [vmem:[%s362 + $0x2f00] sm:$0xff]
        %v1928 = vld [vmem:[%s362 + $0x2f08] sm:$0xff]
        %v1929 = vld [vmem:[%s362 + $0x2f10] sm:$0xff]
        %v1930 = vld [vmem:[%s362 + $0x2f18] sm:$0xff]
        %v1931 = vld [vmem:[%s362 + $0x2f20] sm:$0xff]
        %v1932 = vld [vmem:[%s362 + $0x2f28] sm:$0xff]
        %v1933 = vld [vmem:[%s362 + $0x2f30] sm:$0xff]
        %v1934 = vld [vmem:[%s362 + $0x2f38] sm:$0xff]
        %v1935 = vld [vmem:[%s362 + $0x2f40] sm:$0xff]
        %v1936 = vld [vmem:[%s362 + $0x2f48] sm:$0xff]
        %v1937 = vld [vmem:[%s362 + $0x2f50] sm:$0xff]
        %v1938 = vld [vmem:[%s362 + $0x2f58] sm:$0xff]
        %v1939 = vld [vmem:[%s362 + $0x2f60] sm:$0xff]
        %v1940 = vld [vmem:[%s362 + $0x2f68] sm:$0xff]
        %v1941 = vld [vmem:[%s362 + $0x2f70] sm:$0xff]
        %v1942 = vld [vmem:[%s362 + $0x2f78] sm:$0xff]
        %v1943 = vld [vmem:[%s362 + $0x2f80] sm:$0xff]
        %v1944 = vld [vmem:[%s362 + $0x2f88] sm:$0xff]
        %v1945 = vld [vmem:[%s362 + $0x2f90] sm:$0xff]
        %v1946 = vld [vmem:[%s362 + $0x2f98] sm:$0xff]
        %v1947 = vld [vmem:[%s362 + $0x2fa0] sm:$0xff]
        %v1948 = vld [vmem:[%s362 + $0x2fa8] sm:$0xff]
        %v1949 = vld [vmem:[%s362 + $0x2fb0] sm:$0xff]
        %v1950 = vld [vmem:[%s362 + $0x2fb8] sm:$0xff]
        %v1951 = vld [vmem:[%s362 + $0x2fc0] sm:$0xff]
        %v1952 = vld [vmem:[%s362 + $0x2fc8] sm:$0xff]
        %v1953 = vld [vmem:[%s362 + $0x2fd0] sm:$0xff]
        %v1954 = vld [vmem:[%s362 + $0x2fd8] sm:$0xff]
        %v1955 = vld [vmem:[%s362 + $0x2fe0] sm:$0xff]
        %v1956 = vld [vmem:[%s362 + $0x2fe8] sm:$0xff]
        %v1957 = vld [vmem:[%s362 + $0x2ff0] sm:$0xff]
        %v1958 = vld [vmem:[%s362 + $0x2ff8] sm:$0xff]
        %v1959 = vunpack.c.l.s8.bf16 %v423
        %v1960 = vunpack.c.l.s8.bf16 %v424
        %v1961 = vunpack.c.l.s8.bf16 %v425
        %v1962 = vunpack.c.l.s8.bf16 %v426
        %v1963 = vunpack.c.h.s8.bf16 %v423
        %v1964 = vunpack.c.h.s8.bf16 %v424
        %v1965 = vunpack.c.h.s8.bf16 %v425
        %v1966 = vunpack.c.h.s8.bf16 %v426
        %v1967 = vunpack.c.l.s8.bf16 %v427
        %v1968 = vunpack.c.l.s8.bf16 %v428
        %v1969 = vunpack.c.l.s8.bf16 %v429
        %v1970 = vunpack.c.l.s8.bf16 %v430
        %v1971 = vunpack.c.h.s8.bf16 %v427
        %v1972 = vunpack.c.h.s8.bf16 %v428
        %v1973 = vunpack.c.h.s8.bf16 %v429
        %v1974 = vunpack.c.h.s8.bf16 %v430
        %v1975 = vunpack.c.l.s8.bf16 %v431
        %v1976 = vunpack.c.l.s8.bf16 %v432
        %v1977 = vunpack.c.l.s8.bf16 %v433
        %v1978 = vunpack.c.l.s8.bf16 %v434
        %v1979 = vunpack.c.h.s8.bf16 %v431
        %v1980 = vunpack.c.h.s8.bf16 %v432
        %v1981 = vunpack.c.h.s8.bf16 %v433
        %v1982 = vunpack.c.h.s8.bf16 %v434
        %v1983 = vunpack.c.l.s8.bf16 %v435
        %v1984 = vunpack.c.l.s8.bf16 %v436
        %v1985 = vunpack.c.l.s8.bf16 %v437
        %v1986 = vunpack.c.l.s8.bf16 %v438
        %v1987 = vunpack.c.h.s8.bf16 %v435
        %v1988 = vunpack.c.h.s8.bf16 %v436
        %v1989 = vunpack.c.h.s8.bf16 %v437
        %v1990 = vunpack.c.h.s8.bf16 %v438
        %v1991 = vunpack.c.l.s8.bf16 %v439
        %v1992 = vunpack.c.l.s8.bf16 %v440
        %v1993 = vunpack.c.l.s8.bf16 %v441
        %v1994 = vunpack.c.l.s8.bf16 %v442
        %v1995 = vunpack.c.h.s8.bf16 %v439
        %v1996 = vunpack.c.h.s8.bf16 %v440
        %v1997 = vunpack.c.h.s8.bf16 %v441
        %v1998 = vunpack.c.h.s8.bf16 %v442
        %v1999 = vunpack.c.l.s8.bf16 %v443
        %v2000 = vunpack.c.l.s8.bf16 %v444
        %v2001 = vunpack.c.l.s8.bf16 %v445
        %v2002 = vunpack.c.l.s8.bf16 %v446
        %v2003 = vunpack.c.h.s8.bf16 %v443
        %v2004 = vunpack.c.h.s8.bf16 %v444
        %v2005 = vunpack.c.h.s8.bf16 %v445
        %v2006 = vunpack.c.h.s8.bf16 %v446
        %v2007 = vunpack.c.l.s8.bf16 %v447
        %v2008 = vunpack.c.l.s8.bf16 %v448
        %v2009 = vunpack.c.l.s8.bf16 %v449
        %v2010 = vunpack.c.l.s8.bf16 %v450
        %v2011 = vunpack.c.h.s8.bf16 %v447
        %v2012 = vunpack.c.h.s8.bf16 %v448
        %v2013 = vunpack.c.h.s8.bf16 %v449
        %v2014 = vunpack.c.h.s8.bf16 %v450
        %v2015 = vunpack.c.l.s8.bf16 %v451
        %v2016 = vunpack.c.l.s8.bf16 %v452
        %v2017 = vunpack.c.l.s8.bf16 %v453
        %v2018 = vunpack.c.l.s8.bf16 %v454
        %v2019 = vunpack.c.h.s8.bf16 %v451
        %v2020 = vunpack.c.h.s8.bf16 %v452
        %v2021 = vunpack.c.h.s8.bf16 %v453
        %v2022 = vunpack.c.h.s8.bf16 %v454
        %v2023 = vunpack.c.l.s8.bf16 %v455
        %v2024 = vunpack.c.l.s8.bf16 %v456
        %v2025 = vunpack.c.l.s8.bf16 %v457
        %v2026 = vunpack.c.l.s8.bf16 %v458
        %v2027 = vunpack.c.h.s8.bf16 %v455
        %v2028 = vunpack.c.h.s8.bf16 %v456
        %v2029 = vunpack.c.h.s8.bf16 %v457
        %v2030 = vunpack.c.h.s8.bf16 %v458
        %v2031 = vunpack.c.l.s8.bf16 %v459
        %v2032 = vunpack.c.l.s8.bf16 %v460
        %v2033 = vunpack.c.l.s8.bf16 %v461
        %v2034 = vunpack.c.l.s8.bf16 %v462
        %v2035 = vunpack.c.h.s8.bf16 %v459
        %v2036 = vunpack.c.h.s8.bf16 %v460
        %v2037 = vunpack.c.h.s8.bf16 %v461
        %v2038 = vunpack.c.h.s8.bf16 %v462
        %v2039 = vunpack.c.l.s8.bf16 %v463
        %v2040 = vunpack.c.l.s8.bf16 %v464
        %v2041 = vunpack.c.l.s8.bf16 %v465
        %v2042 = vunpack.c.l.s8.bf16 %v466
        %v2043 = vunpack.c.h.s8.bf16 %v463
        %v2044 = vunpack.c.h.s8.bf16 %v464
        %v2045 = vunpack.c.h.s8.bf16 %v465
        %v2046 = vunpack.c.h.s8.bf16 %v466
        %v2047 = vunpack.c.l.s8.bf16 %v467
        %v2048 = vunpack.c.l.s8.bf16 %v468
        %v2049 = vunpack.c.l.s8.bf16 %v469
        %v2050 = vunpack.c.l.s8.bf16 %v470
        %v2051 = vunpack.c.h.s8.bf16 %v467
        %v2052 = vunpack.c.h.s8.bf16 %v468
        %v2053 = vunpack.c.h.s8.bf16 %v469
        %v2054 = vunpack.c.h.s8.bf16 %v470
        %v2055 = vunpack.c.l.s8.bf16 %v471
        %v2056 = vunpack.c.l.s8.bf16 %v472
        %v2057 = vunpack.c.l.s8.bf16 %v473
        %v2058 = vunpack.c.l.s8.bf16 %v474
        %v2059 = vunpack.c.h.s8.bf16 %v471
        %v2060 = vunpack.c.h.s8.bf16 %v472
        %v2061 = vunpack.c.h.s8.bf16 %v473
        %v2062 = vunpack.c.h.s8.bf16 %v474
        %v2063 = vunpack.c.l.s8.bf16 %v475
        %v2064 = vunpack.c.l.s8.bf16 %v476
        %v2065 = vunpack.c.l.s8.bf16 %v477
        %v2066 = vunpack.c.l.s8.bf16 %v478
        %v2067 = vunpack.c.h.s8.bf16 %v475
        %v2068 = vunpack.c.h.s8.bf16 %v476
        %v2069 = vunpack.c.h.s8.bf16 %v477
        %v2070 = vunpack.c.h.s8.bf16 %v478
        %v2071 = vunpack.c.l.s8.bf16 %v479
        %v2072 = vunpack.c.l.s8.bf16 %v480
        %v2073 = vunpack.c.l.s8.bf16 %v481
        %v2074 = vunpack.c.l.s8.bf16 %v482
        %v2075 = vunpack.c.h.s8.bf16 %v479
        %v2076 = vunpack.c.h.s8.bf16 %v480
        %v2077 = vunpack.c.h.s8.bf16 %v481
        %v2078 = vunpack.c.h.s8.bf16 %v482
        %v2079 = vunpack.c.l.s8.bf16 %v483
        %v2080 = vunpack.c.l.s8.bf16 %v484
        %v2081 = vunpack.c.l.s8.bf16 %v485
        %v2082 = vunpack.c.l.s8.bf16 %v486
        %v2083 = vunpack.c.h.s8.bf16 %v483
        %v2084 = vunpack.c.h.s8.bf16 %v484
        %v2085 = vunpack.c.h.s8.bf16 %v485
        %v2086 = vunpack.c.h.s8.bf16 %v486
        %v2087 = vunpack.c.l.s8.bf16 %v487
        %v2088 = vunpack.c.l.s8.bf16 %v488
        %v2089 = vunpack.c.l.s8.bf16 %v489
        %v2090 = vunpack.c.l.s8.bf16 %v490
        %v2091 = vunpack.c.h.s8.bf16 %v487
        %v2092 = vunpack.c.h.s8.bf16 %v488
        %v2093 = vunpack.c.h.s8.bf16 %v489
        %v2094 = vunpack.c.h.s8.bf16 %v490
        %v2095 = vunpack.c.l.s8.bf16 %v491
        %v2096 = vunpack.c.l.s8.bf16 %v492
        %v2097 = vunpack.c.l.s8.bf16 %v493
        %v2098 = vunpack.c.l.s8.bf16 %v494
        %v2099 = vunpack.c.h.s8.bf16 %v491
        %v2100 = vunpack.c.h.s8.bf16 %v492
        %v2101 = vunpack.c.h.s8.bf16 %v493
        %v2102 = vunpack.c.h.s8.bf16 %v494
        %v2103 = vunpack.c.l.s8.bf16 %v495
        %v2104 = vunpack.c.l.s8.bf16 %v496
        %v2105 = vunpack.c.l.s8.bf16 %v497
        %v2106 = vunpack.c.l.s8.bf16 %v498
        %v2107 = vunpack.c.h.s8.bf16 %v495
        %v2108 = vunpack.c.h.s8.bf16 %v496
        %v2109 = vunpack.c.h.s8.bf16 %v497
        %v2110 = vunpack.c.h.s8.bf16 %v498
        %v2111 = vunpack.c.l.s8.bf16 %v499
        %v2112 = vunpack.c.l.s8.bf16 %v500
        %v2113 = vunpack.c.l.s8.bf16 %v501
        %v2114 = vunpack.c.l.s8.bf16 %v502
        %v2115 = vunpack.c.h.s8.bf16 %v499
        %v2116 = vunpack.c.h.s8.bf16 %v500
        %v2117 = vunpack.c.h.s8.bf16 %v501
        %v2118 = vunpack.c.h.s8.bf16 %v502
        %v2119 = vunpack.c.l.s8.bf16 %v503
        %v2120 = vunpack.c.l.s8.bf16 %v504
        %v2121 = vunpack.c.l.s8.bf16 %v505
        %v2122 = vunpack.c.l.s8.bf16 %v506
        %v2123 = vunpack.c.h.s8.bf16 %v503
        %v2124 = vunpack.c.h.s8.bf16 %v504
        %v2125 = vunpack.c.h.s8.bf16 %v505
        %v2126 = vunpack.c.h.s8.bf16 %v506
        %v2127 = vunpack.c.l.s8.bf16 %v507
        %v2128 = vunpack.c.l.s8.bf16 %v508
        %v2129 = vunpack.c.l.s8.bf16 %v509
        %v2130 = vunpack.c.l.s8.bf16 %v510
        %v2131 = vunpack.c.h.s8.bf16 %v507
        %v2132 = vunpack.c.h.s8.bf16 %v508
        %v2133 = vunpack.c.h.s8.bf16 %v509
        %v2134 = vunpack.c.h.s8.bf16 %v510
        %v2135 = vunpack.c.l.s8.bf16 %v511
        %v2136 = vunpack.c.l.s8.bf16 %v512
        %v2137 = vunpack.c.l.s8.bf16 %v513
        %v2138 = vunpack.c.l.s8.bf16 %v514
        %v2139 = vunpack.c.h.s8.bf16 %v511
        %v2140 = vunpack.c.h.s8.bf16 %v512
        %v2141 = vunpack.c.h.s8.bf16 %v513
        %v2142 = vunpack.c.h.s8.bf16 %v514
        %v2143 = vunpack.c.l.s8.bf16 %v515
        %v2144 = vunpack.c.l.s8.bf16 %v516
        %v2145 = vunpack.c.l.s8.bf16 %v517
        %v2146 = vunpack.c.l.s8.bf16 %v518
        %v2147 = vunpack.c.h.s8.bf16 %v515
        %v2148 = vunpack.c.h.s8.bf16 %v516
        %v2149 = vunpack.c.h.s8.bf16 %v517
        %v2150 = vunpack.c.h.s8.bf16 %v518
        %v2151 = vunpack.c.l.s8.bf16 %v519
        %v2152 = vunpack.c.l.s8.bf16 %v520
        %v2153 = vunpack.c.l.s8.bf16 %v521
        %v2154 = vunpack.c.l.s8.bf16 %v522
        %v2155 = vunpack.c.h.s8.bf16 %v519
        %v2156 = vunpack.c.h.s8.bf16 %v520
        %v2157 = vunpack.c.h.s8.bf16 %v521
        %v2158 = vunpack.c.h.s8.bf16 %v522
        %v2159 = vunpack.c.l.s8.bf16 %v523
        %v2160 = vunpack.c.l.s8.bf16 %v524
        %v2161 = vunpack.c.l.s8.bf16 %v525
        %v2162 = vunpack.c.l.s8.bf16 %v526
        %v2163 = vunpack.c.h.s8.bf16 %v523
        %v2164 = vunpack.c.h.s8.bf16 %v524
        %v2165 = vunpack.c.h.s8.bf16 %v525
        %v2166 = vunpack.c.h.s8.bf16 %v526
        %v2167 = vunpack.c.l.s8.bf16 %v527
        %v2168 = vunpack.c.l.s8.bf16 %v528
        %v2169 = vunpack.c.l.s8.bf16 %v529
        %v2170 = vunpack.c.l.s8.bf16 %v530
        %v2171 = vunpack.c.h.s8.bf16 %v527
        %v2172 = vunpack.c.h.s8.bf16 %v528
        %v2173 = vunpack.c.h.s8.bf16 %v529
        %v2174 = vunpack.c.h.s8.bf16 %v530
        %v2175 = vunpack.c.l.s8.bf16 %v531
        %v2176 = vunpack.c.l.s8.bf16 %v532
        %v2177 = vunpack.c.l.s8.bf16 %v533
        %v2178 = vunpack.c.l.s8.bf16 %v534
        %v2179 = vunpack.c.h.s8.bf16 %v531
        %v2180 = vunpack.c.h.s8.bf16 %v532
        %v2181 = vunpack.c.h.s8.bf16 %v533
        %v2182 = vunpack.c.h.s8.bf16 %v534
        %v2183 = vunpack.c.l.s8.bf16 %v535
        %v2184 = vunpack.c.l.s8.bf16 %v536
        %v2185 = vunpack.c.l.s8.bf16 %v537
        %v2186 = vunpack.c.l.s8.bf16 %v538
        %v2187 = vunpack.c.h.s8.bf16 %v535
        %v2188 = vunpack.c.h.s8.bf16 %v536
        %v2189 = vunpack.c.h.s8.bf16 %v537
        %v2190 = vunpack.c.h.s8.bf16 %v538
        %v2191 = vunpack.c.l.s8.bf16 %v539
        %v2192 = vunpack.c.l.s8.bf16 %v540
        %v2193 = vunpack.c.l.s8.bf16 %v541
        %v2194 = vunpack.c.l.s8.bf16 %v542
        %v2195 = vunpack.c.h.s8.bf16 %v539
        %v2196 = vunpack.c.h.s8.bf16 %v540
        %v2197 = vunpack.c.h.s8.bf16 %v541
        %v2198 = vunpack.c.h.s8.bf16 %v542
        %v2199 = vunpack.c.l.s8.bf16 %v543
        %v2200 = vunpack.c.l.s8.bf16 %v544
        %v2201 = vunpack.c.l.s8.bf16 %v545
        %v2202 = vunpack.c.l.s8.bf16 %v546
        %v2203 = vunpack.c.h.s8.bf16 %v543
        %v2204 = vunpack.c.h.s8.bf16 %v544
        %v2205 = vunpack.c.h.s8.bf16 %v545
        %v2206 = vunpack.c.h.s8.bf16 %v546
        %v2207 = vunpack.c.l.s8.bf16 %v547
        %v2208 = vunpack.c.l.s8.bf16 %v548
        %v2209 = vunpack.c.l.s8.bf16 %v549
        %v2210 = vunpack.c.l.s8.bf16 %v550
        %v2211 = vunpack.c.h.s8.bf16 %v547
        %v2212 = vunpack.c.h.s8.bf16 %v548
        %v2213 = vunpack.c.h.s8.bf16 %v549
        %v2214 = vunpack.c.h.s8.bf16 %v550
        %v2215 = vunpack.c.l.s8.bf16 %v551
        %v2216 = vunpack.c.l.s8.bf16 %v552
        %v2217 = vunpack.c.l.s8.bf16 %v553
        %v2218 = vunpack.c.l.s8.bf16 %v554
        %v2219 = vunpack.c.h.s8.bf16 %v551
        %v2220 = vunpack.c.h.s8.bf16 %v552
        %v2221 = vunpack.c.h.s8.bf16 %v553
        %v2222 = vunpack.c.h.s8.bf16 %v554
        %v2223 = vunpack.c.l.s8.bf16 %v555
        %v2224 = vunpack.c.l.s8.bf16 %v556
        %v2225 = vunpack.c.l.s8.bf16 %v557
        %v2226 = vunpack.c.l.s8.bf16 %v558
        %v2227 = vunpack.c.h.s8.bf16 %v555
        %v2228 = vunpack.c.h.s8.bf16 %v556
        %v2229 = vunpack.c.h.s8.bf16 %v557
        %v2230 = vunpack.c.h.s8.bf16 %v558
        %v2231 = vunpack.c.l.s8.bf16 %v559
        %v2232 = vunpack.c.l.s8.bf16 %v560
        %v2233 = vunpack.c.l.s8.bf16 %v561
        %v2234 = vunpack.c.l.s8.bf16 %v562
        %v2235 = vunpack.c.h.s8.bf16 %v559
        %v2236 = vunpack.c.h.s8.bf16 %v560
        %v2237 = vunpack.c.h.s8.bf16 %v561
        %v2238 = vunpack.c.h.s8.bf16 %v562
        %v2239 = vunpack.c.l.s8.bf16 %v563
        %v2240 = vunpack.c.l.s8.bf16 %v564
        %v2241 = vunpack.c.l.s8.bf16 %v565
        %v2242 = vunpack.c.l.s8.bf16 %v566
        %v2243 = vunpack.c.h.s8.bf16 %v563
        %v2244 = vunpack.c.h.s8.bf16 %v564
        %v2245 = vunpack.c.h.s8.bf16 %v565
        %v2246 = vunpack.c.h.s8.bf16 %v566
        %v2247 = vunpack.c.l.s8.bf16 %v567
        %v2248 = vunpack.c.l.s8.bf16 %v568
        %v2249 = vunpack.c.l.s8.bf16 %v569
        %v2250 = vunpack.c.l.s8.bf16 %v570
        %v2251 = vunpack.c.h.s8.bf16 %v567
        %v2252 = vunpack.c.h.s8.bf16 %v568
        %v2253 = vunpack.c.h.s8.bf16 %v569
        %v2254 = vunpack.c.h.s8.bf16 %v570
        %v2255 = vunpack.c.l.s8.bf16 %v571
        %v2256 = vunpack.c.l.s8.bf16 %v572
        %v2257 = vunpack.c.l.s8.bf16 %v573
        %v2258 = vunpack.c.l.s8.bf16 %v574
        %v2259 = vunpack.c.h.s8.bf16 %v571
        %v2260 = vunpack.c.h.s8.bf16 %v572
        %v2261 = vunpack.c.h.s8.bf16 %v573
        %v2262 = vunpack.c.h.s8.bf16 %v574
        %v2263 = vunpack.c.l.s8.bf16 %v575
        %v2264 = vunpack.c.l.s8.bf16 %v576
        %v2265 = vunpack.c.l.s8.bf16 %v577
        %v2266 = vunpack.c.l.s8.bf16 %v578
        %v2267 = vunpack.c.h.s8.bf16 %v575
        %v2268 = vunpack.c.h.s8.bf16 %v576
        %v2269 = vunpack.c.h.s8.bf16 %v577
        %v2270 = vunpack.c.h.s8.bf16 %v578
        %v2271 = vunpack.c.l.s8.bf16 %v579
        %v2272 = vunpack.c.l.s8.bf16 %v580
        %v2273 = vunpack.c.l.s8.bf16 %v581
        %v2274 = vunpack.c.l.s8.bf16 %v582
        %v2275 = vunpack.c.h.s8.bf16 %v579
        %v2276 = vunpack.c.h.s8.bf16 %v580
        %v2277 = vunpack.c.h.s8.bf16 %v581
        %v2278 = vunpack.c.h.s8.bf16 %v582
        %v2279 = vunpack.c.l.s8.bf16 %v583
        %v2280 = vunpack.c.l.s8.bf16 %v584
        %v2281 = vunpack.c.l.s8.bf16 %v585
        %v2282 = vunpack.c.l.s8.bf16 %v586
        %v2283 = vunpack.c.h.s8.bf16 %v583
        %v2284 = vunpack.c.h.s8.bf16 %v584
        %v2285 = vunpack.c.h.s8.bf16 %v585
        %v2286 = vunpack.c.h.s8.bf16 %v586
        %v2287 = vunpack.c.l.s8.bf16 %v587
        %v2288 = vunpack.c.l.s8.bf16 %v588
        %v2289 = vunpack.c.l.s8.bf16 %v589
        %v2290 = vunpack.c.l.s8.bf16 %v590
        %v2291 = vunpack.c.h.s8.bf16 %v587
        %v2292 = vunpack.c.h.s8.bf16 %v588
        %v2293 = vunpack.c.h.s8.bf16 %v589
        %v2294 = vunpack.c.h.s8.bf16 %v590
        %v2295 = vunpack.c.l.s8.bf16 %v591
        %v2296 = vunpack.c.l.s8.bf16 %v592
        %v2297 = vunpack.c.l.s8.bf16 %v593
        %v2298 = vunpack.c.l.s8.bf16 %v594
        %v2299 = vunpack.c.h.s8.bf16 %v591
        %v2300 = vunpack.c.h.s8.bf16 %v592
        %v2301 = vunpack.c.h.s8.bf16 %v593
        %v2302 = vunpack.c.h.s8.bf16 %v594
        %v2303 = vunpack.c.l.s8.bf16 %v595
        %v2304 = vunpack.c.l.s8.bf16 %v596
        %v2305 = vunpack.c.l.s8.bf16 %v597
        %v2306 = vunpack.c.l.s8.bf16 %v598
        %v2307 = vunpack.c.h.s8.bf16 %v595
        %v2308 = vunpack.c.h.s8.bf16 %v596
        %v2309 = vunpack.c.h.s8.bf16 %v597
        %v2310 = vunpack.c.h.s8.bf16 %v598
        %v2311 = vunpack.c.l.s8.bf16 %v599
        %v2312 = vunpack.c.l.s8.bf16 %v600
        %v2313 = vunpack.c.l.s8.bf16 %v601
        %v2314 = vunpack.c.l.s8.bf16 %v602
        %v2315 = vunpack.c.h.s8.bf16 %v599
        %v2316 = vunpack.c.h.s8.bf16 %v600
        %v2317 = vunpack.c.h.s8.bf16 %v601
        %v2318 = vunpack.c.h.s8.bf16 %v602
        %v2319 = vunpack.c.l.s8.bf16 %v603
        %v2320 = vunpack.c.l.s8.bf16 %v604
        %v2321 = vunpack.c.l.s8.bf16 %v605
        %v2322 = vunpack.c.l.s8.bf16 %v606
        %v2323 = vunpack.c.h.s8.bf16 %v603
        %v2324 = vunpack.c.h.s8.bf16 %v604
        %v2325 = vunpack.c.h.s8.bf16 %v605
        %v2326 = vunpack.c.h.s8.bf16 %v606
        %v2327 = vunpack.c.l.s8.bf16 %v607
        %v2328 = vunpack.c.l.s8.bf16 %v608
        %v2329 = vunpack.c.l.s8.bf16 %v609
        %v2330 = vunpack.c.l.s8.bf16 %v610
        %v2331 = vunpack.c.h.s8.bf16 %v607
        %v2332 = vunpack.c.h.s8.bf16 %v608
        %v2333 = vunpack.c.h.s8.bf16 %v609
        %v2334 = vunpack.c.h.s8.bf16 %v610
        %v2335 = vunpack.c.l.s8.bf16 %v611
        %v2336 = vunpack.c.l.s8.bf16 %v612
        %v2337 = vunpack.c.l.s8.bf16 %v613
        %v2338 = vunpack.c.l.s8.bf16 %v614
        %v2339 = vunpack.c.h.s8.bf16 %v611
        %v2340 = vunpack.c.h.s8.bf16 %v612
        %v2341 = vunpack.c.h.s8.bf16 %v613
        %v2342 = vunpack.c.h.s8.bf16 %v614
        %v2343 = vunpack.c.l.s8.bf16 %v615
        %v2344 = vunpack.c.l.s8.bf16 %v616
        %v2345 = vunpack.c.l.s8.bf16 %v617
        %v2346 = vunpack.c.l.s8.bf16 %v618
        %v2347 = vunpack.c.h.s8.bf16 %v615
        %v2348 = vunpack.c.h.s8.bf16 %v616
        %v2349 = vunpack.c.h.s8.bf16 %v617
        %v2350 = vunpack.c.h.s8.bf16 %v618
        %v2351 = vunpack.c.l.s8.bf16 %v619
        %v2352 = vunpack.c.l.s8.bf16 %v620
        %v2353 = vunpack.c.l.s8.bf16 %v621
        %v2354 = vunpack.c.l.s8.bf16 %v622
        %v2355 = vunpack.c.h.s8.bf16 %v619
        %v2356 = vunpack.c.h.s8.bf16 %v620
        %v2357 = vunpack.c.h.s8.bf16 %v621
        %v2358 = vunpack.c.h.s8.bf16 %v622
        %v2359 = vunpack.c.l.s8.bf16 %v623
        %v2360 = vunpack.c.l.s8.bf16 %v624
        %v2361 = vunpack.c.l.s8.bf16 %v625
        %v2362 = vunpack.c.l.s8.bf16 %v626
        %v2363 = vunpack.c.h.s8.bf16 %v623
        %v2364 = vunpack.c.h.s8.bf16 %v624
        %v2365 = vunpack.c.h.s8.bf16 %v625
        %v2366 = vunpack.c.h.s8.bf16 %v626
        %v2367 = vunpack.c.l.s8.bf16 %v627
        %v2368 = vunpack.c.l.s8.bf16 %v628
        %v2369 = vunpack.c.l.s8.bf16 %v629
        %v2370 = vunpack.c.l.s8.bf16 %v630
        %v2371 = vunpack.c.h.s8.bf16 %v627
        %v2372 = vunpack.c.h.s8.bf16 %v628
        %v2373 = vunpack.c.h.s8.bf16 %v629
        %v2374 = vunpack.c.h.s8.bf16 %v630
        %v2375 = vunpack.c.l.s8.bf16 %v631
        %v2376 = vunpack.c.l.s8.bf16 %v632
        %v2377 = vunpack.c.l.s8.bf16 %v633
        %v2378 = vunpack.c.l.s8.bf16 %v634
        %v2379 = vunpack.c.h.s8.bf16 %v631
        %v2380 = vunpack.c.h.s8.bf16 %v632
        %v2381 = vunpack.c.h.s8.bf16 %v633
        %v2382 = vunpack.c.h.s8.bf16 %v634
        %v2383 = vunpack.c.l.s8.bf16 %v635
        %v2384 = vunpack.c.l.s8.bf16 %v636
        %v2385 = vunpack.c.l.s8.bf16 %v637
        %v2386 = vunpack.c.l.s8.bf16 %v638
        %v2387 = vunpack.c.h.s8.bf16 %v635
        %v2388 = vunpack.c.h.s8.bf16 %v636
        %v2389 = vunpack.c.h.s8.bf16 %v637
        %v2390 = vunpack.c.h.s8.bf16 %v638
        %v2391 = vunpack.c.l.s8.bf16 %v639
        %v2392 = vunpack.c.l.s8.bf16 %v640
        %v2393 = vunpack.c.l.s8.bf16 %v641
        %v2394 = vunpack.c.l.s8.bf16 %v642
        %v2395 = vunpack.c.h.s8.bf16 %v639
        %v2396 = vunpack.c.h.s8.bf16 %v640
        %v2397 = vunpack.c.h.s8.bf16 %v641
        %v2398 = vunpack.c.h.s8.bf16 %v642
        %v2399 = vunpack.c.l.s8.bf16 %v643
        %v2400 = vunpack.c.l.s8.bf16 %v644
        %v2401 = vunpack.c.l.s8.bf16 %v645
        %v2402 = vunpack.c.l.s8.bf16 %v646
        %v2403 = vunpack.c.h.s8.bf16 %v643
        %v2404 = vunpack.c.h.s8.bf16 %v644
        %v2405 = vunpack.c.h.s8.bf16 %v645
        %v2406 = vunpack.c.h.s8.bf16 %v646
        %v2407 = vunpack.c.l.s8.bf16 %v647
        %v2408 = vunpack.c.l.s8.bf16 %v648
        %v2409 = vunpack.c.l.s8.bf16 %v649
        %v2410 = vunpack.c.l.s8.bf16 %v650
        %v2411 = vunpack.c.h.s8.bf16 %v647
        %v2412 = vunpack.c.h.s8.bf16 %v648
        %v2413 = vunpack.c.h.s8.bf16 %v649
        %v2414 = vunpack.c.h.s8.bf16 %v650
        %v2415 = vunpack.c.l.s8.bf16 %v651
        %v2416 = vunpack.c.l.s8.bf16 %v652
        %v2417 = vunpack.c.l.s8.bf16 %v653
        %v2418 = vunpack.c.l.s8.bf16 %v654
        %v2419 = vunpack.c.h.s8.bf16 %v651
        %v2420 = vunpack.c.h.s8.bf16 %v652
        %v2421 = vunpack.c.h.s8.bf16 %v653
        %v2422 = vunpack.c.h.s8.bf16 %v654
        %v2423 = vunpack.c.l.s8.bf16 %v655
        %v2424 = vunpack.c.l.s8.bf16 %v656
        %v2425 = vunpack.c.l.s8.bf16 %v657
        %v2426 = vunpack.c.l.s8.bf16 %v658
        %v2427 = vunpack.c.h.s8.bf16 %v655
        %v2428 = vunpack.c.h.s8.bf16 %v656
        %v2429 = vunpack.c.h.s8.bf16 %v657
        %v2430 = vunpack.c.h.s8.bf16 %v658
        %v2431 = vunpack.c.l.s8.bf16 %v659
        %v2432 = vunpack.c.l.s8.bf16 %v660
        %v2433 = vunpack.c.l.s8.bf16 %v661
        %v2434 = vunpack.c.l.s8.bf16 %v662
        %v2435 = vunpack.c.h.s8.bf16 %v659
        %v2436 = vunpack.c.h.s8.bf16 %v660
        %v2437 = vunpack.c.h.s8.bf16 %v661
        %v2438 = vunpack.c.h.s8.bf16 %v662
        %v2439 = vunpack.c.l.s8.bf16 %v663
        %v2440 = vunpack.c.l.s8.bf16 %v664
        %v2441 = vunpack.c.l.s8.bf16 %v665
        %v2442 = vunpack.c.l.s8.bf16 %v666
        %v2443 = vunpack.c.h.s8.bf16 %v663
        %v2444 = vunpack.c.h.s8.bf16 %v664
        %v2445 = vunpack.c.h.s8.bf16 %v665
        %v2446 = vunpack.c.h.s8.bf16 %v666
        %v2447 = vunpack.c.l.s8.bf16 %v667
        %v2448 = vunpack.c.l.s8.bf16 %v668
        %v2449 = vunpack.c.l.s8.bf16 %v669
        %v2450 = vunpack.c.l.s8.bf16 %v670
        %v2451 = vunpack.c.h.s8.bf16 %v667
        %v2452 = vunpack.c.h.s8.bf16 %v668
        %v2453 = vunpack.c.h.s8.bf16 %v669
        %v2454 = vunpack.c.h.s8.bf16 %v670
        %v2455 = vunpack.c.l.s8.bf16 %v671
        %v2456 = vunpack.c.l.s8.bf16 %v672
        %v2457 = vunpack.c.l.s8.bf16 %v673
        %v2458 = vunpack.c.l.s8.bf16 %v674
        %v2459 = vunpack.c.h.s8.bf16 %v671
        %v2460 = vunpack.c.h.s8.bf16 %v672
        %v2461 = vunpack.c.h.s8.bf16 %v673
        %v2462 = vunpack.c.h.s8.bf16 %v674
        %v2463 = vunpack.c.l.s8.bf16 %v675
        %v2464 = vunpack.c.l.s8.bf16 %v676
        %v2465 = vunpack.c.l.s8.bf16 %v677
        %v2466 = vunpack.c.l.s8.bf16 %v678
        %v2467 = vunpack.c.h.s8.bf16 %v675
        %v2468 = vunpack.c.h.s8.bf16 %v676
        %v2469 = vunpack.c.h.s8.bf16 %v677
        %v2470 = vunpack.c.h.s8.bf16 %v678
        %v2471 = vunpack.c.l.s8.bf16 %v679
        %v2472 = vunpack.c.l.s8.bf16 %v680
        %v2473 = vunpack.c.l.s8.bf16 %v681
        %v2474 = vunpack.c.l.s8.bf16 %v682
        %v2475 = vunpack.c.h.s8.bf16 %v679
        %v2476 = vunpack.c.h.s8.bf16 %v680
        %v2477 = vunpack.c.h.s8.bf16 %v681
        %v2478 = vunpack.c.h.s8.bf16 %v682
        %v2479 = vunpack.c.l.s8.bf16 %v683
        %v2480 = vunpack.c.l.s8.bf16 %v684
        %v2481 = vunpack.c.l.s8.bf16 %v685
        %v2482 = vunpack.c.l.s8.bf16 %v686
        %v2483 = vunpack.c.h.s8.bf16 %v683
        %v2484 = vunpack.c.h.s8.bf16 %v684
        %v2485 = vunpack.c.h.s8.bf16 %v685
        %v2486 = vunpack.c.h.s8.bf16 %v686
        %v2487 = vunpack.c.l.s8.bf16 %v687
        %v2488 = vunpack.c.l.s8.bf16 %v688
        %v2489 = vunpack.c.l.s8.bf16 %v689
        %v2490 = vunpack.c.l.s8.bf16 %v690
        %v2491 = vunpack.c.h.s8.bf16 %v687
        %v2492 = vunpack.c.h.s8.bf16 %v688
        %v2493 = vunpack.c.h.s8.bf16 %v689
        %v2494 = vunpack.c.h.s8.bf16 %v690
        %v2495 = vunpack.c.l.s8.bf16 %v691
        %v2496 = vunpack.c.l.s8.bf16 %v692
        %v2497 = vunpack.c.l.s8.bf16 %v693
        %v2498 = vunpack.c.l.s8.bf16 %v694
        %v2499 = vunpack.c.h.s8.bf16 %v691
        %v2500 = vunpack.c.h.s8.bf16 %v692
        %v2501 = vunpack.c.h.s8.bf16 %v693
        %v2502 = vunpack.c.h.s8.bf16 %v694
        %v2503 = vunpack.c.l.s8.bf16 %v695
        %v2504 = vunpack.c.l.s8.bf16 %v696
        %v2505 = vunpack.c.l.s8.bf16 %v697
        %v2506 = vunpack.c.l.s8.bf16 %v698
        %v2507 = vunpack.c.h.s8.bf16 %v695
        %v2508 = vunpack.c.h.s8.bf16 %v696
        %v2509 = vunpack.c.h.s8.bf16 %v697
        %v2510 = vunpack.c.h.s8.bf16 %v698
        %v2511 = vunpack.c.l.s8.bf16 %v699
        %v2512 = vunpack.c.l.s8.bf16 %v700
        %v2513 = vunpack.c.l.s8.bf16 %v701
        %v2514 = vunpack.c.l.s8.bf16 %v702
        %v2515 = vunpack.c.h.s8.bf16 %v699
        %v2516 = vunpack.c.h.s8.bf16 %v700
        %v2517 = vunpack.c.h.s8.bf16 %v701
        %v2518 = vunpack.c.h.s8.bf16 %v702
        %v2519 = vunpack.c.l.s8.bf16 %v703
        %v2520 = vunpack.c.l.s8.bf16 %v704
        %v2521 = vunpack.c.l.s8.bf16 %v705
        %v2522 = vunpack.c.l.s8.bf16 %v706
        %v2523 = vunpack.c.h.s8.bf16 %v703
        %v2524 = vunpack.c.h.s8.bf16 %v704
        %v2525 = vunpack.c.h.s8.bf16 %v705
        %v2526 = vunpack.c.h.s8.bf16 %v706
        %v2527 = vunpack.c.l.s8.bf16 %v707
        %v2528 = vunpack.c.l.s8.bf16 %v708
        %v2529 = vunpack.c.l.s8.bf16 %v709
        %v2530 = vunpack.c.l.s8.bf16 %v710
        %v2531 = vunpack.c.h.s8.bf16 %v707
        %v2532 = vunpack.c.h.s8.bf16 %v708
        %v2533 = vunpack.c.h.s8.bf16 %v709
        %v2534 = vunpack.c.h.s8.bf16 %v710
        %v2535 = vunpack.c.l.s8.bf16 %v711
        %v2536 = vunpack.c.l.s8.bf16 %v712
        %v2537 = vunpack.c.l.s8.bf16 %v713
        %v2538 = vunpack.c.l.s8.bf16 %v714
        %v2539 = vunpack.c.h.s8.bf16 %v711
        %v2540 = vunpack.c.h.s8.bf16 %v712
        %v2541 = vunpack.c.h.s8.bf16 %v713
        %v2542 = vunpack.c.h.s8.bf16 %v714
        %v2543 = vunpack.c.l.s8.bf16 %v715
        %v2544 = vunpack.c.l.s8.bf16 %v716
        %v2545 = vunpack.c.l.s8.bf16 %v717
        %v2546 = vunpack.c.l.s8.bf16 %v718
        %v2547 = vunpack.c.h.s8.bf16 %v715
        %v2548 = vunpack.c.h.s8.bf16 %v716
        %v2549 = vunpack.c.h.s8.bf16 %v717
        %v2550 = vunpack.c.h.s8.bf16 %v718
        %v2551 = vunpack.c.l.s8.bf16 %v719
        %v2552 = vunpack.c.l.s8.bf16 %v720
        %v2553 = vunpack.c.l.s8.bf16 %v721
        %v2554 = vunpack.c.l.s8.bf16 %v722
        %v2555 = vunpack.c.h.s8.bf16 %v719
        %v2556 = vunpack.c.h.s8.bf16 %v720
        %v2557 = vunpack.c.h.s8.bf16 %v721
        %v2558 = vunpack.c.h.s8.bf16 %v722
        %v2559 = vunpack.c.l.s8.bf16 %v723
        %v2560 = vunpack.c.l.s8.bf16 %v724
        %v2561 = vunpack.c.l.s8.bf16 %v725
        %v2562 = vunpack.c.l.s8.bf16 %v726
        %v2563 = vunpack.c.h.s8.bf16 %v723
        %v2564 = vunpack.c.h.s8.bf16 %v724
        %v2565 = vunpack.c.h.s8.bf16 %v725
        %v2566 = vunpack.c.h.s8.bf16 %v726
        %v2567 = vunpack.c.l.s8.bf16 %v727
        %v2568 = vunpack.c.l.s8.bf16 %v728
        %v2569 = vunpack.c.l.s8.bf16 %v729
        %v2570 = vunpack.c.l.s8.bf16 %v730
        %v2571 = vunpack.c.h.s8.bf16 %v727
        %v2572 = vunpack.c.h.s8.bf16 %v728
        %v2573 = vunpack.c.h.s8.bf16 %v729
        %v2574 = vunpack.c.h.s8.bf16 %v730
        %v2575 = vunpack.c.l.s8.bf16 %v731
        %v2576 = vunpack.c.l.s8.bf16 %v732
        %v2577 = vunpack.c.l.s8.bf16 %v733
        %v2578 = vunpack.c.l.s8.bf16 %v734
        %v2579 = vunpack.c.h.s8.bf16 %v731
        %v2580 = vunpack.c.h.s8.bf16 %v732
        %v2581 = vunpack.c.h.s8.bf16 %v733
        %v2582 = vunpack.c.h.s8.bf16 %v734
        %v2583 = vunpack.c.l.s8.bf16 %v735
        %v2584 = vunpack.c.l.s8.bf16 %v736
        %v2585 = vunpack.c.l.s8.bf16 %v737
        %v2586 = vunpack.c.l.s8.bf16 %v738
        %v2587 = vunpack.c.h.s8.bf16 %v735
        %v2588 = vunpack.c.h.s8.bf16 %v736
        %v2589 = vunpack.c.h.s8.bf16 %v737
        %v2590 = vunpack.c.h.s8.bf16 %v738
        %v2591 = vunpack.c.l.s8.bf16 %v739
        %v2592 = vunpack.c.l.s8.bf16 %v740
        %v2593 = vunpack.c.l.s8.bf16 %v741
        %v2594 = vunpack.c.l.s8.bf16 %v742
        %v2595 = vunpack.c.h.s8.bf16 %v739
        %v2596 = vunpack.c.h.s8.bf16 %v740
        %v2597 = vunpack.c.h.s8.bf16 %v741
        %v2598 = vunpack.c.h.s8.bf16 %v742
        %v2599 = vunpack.c.l.s8.bf16 %v743
        %v2600 = vunpack.c.l.s8.bf16 %v744
        %v2601 = vunpack.c.l.s8.bf16 %v745
        %v2602 = vunpack.c.l.s8.bf16 %v746
        %v2603 = vunpack.c.h.s8.bf16 %v743
        %v2604 = vunpack.c.h.s8.bf16 %v744
        %v2605 = vunpack.c.h.s8.bf16 %v745
        %v2606 = vunpack.c.h.s8.bf16 %v746
        %v2607 = vunpack.c.l.s8.bf16 %v747
        %v2608 = vunpack.c.l.s8.bf16 %v748
        %v2609 = vunpack.c.l.s8.bf16 %v749
        %v2610 = vunpack.c.l.s8.bf16 %v750
        %v2611 = vunpack.c.h.s8.bf16 %v747
        %v2612 = vunpack.c.h.s8.bf16 %v748
        %v2613 = vunpack.c.h.s8.bf16 %v749
        %v2614 = vunpack.c.h.s8.bf16 %v750
        %v2615 = vunpack.c.l.s8.bf16 %v751
        %v2616 = vunpack.c.l.s8.bf16 %v752
        %v2617 = vunpack.c.l.s8.bf16 %v753
        %v2618 = vunpack.c.l.s8.bf16 %v754
        %v2619 = vunpack.c.h.s8.bf16 %v751
        %v2620 = vunpack.c.h.s8.bf16 %v752
        %v2621 = vunpack.c.h.s8.bf16 %v753
        %v2622 = vunpack.c.h.s8.bf16 %v754
        %v2623 = vunpack.c.l.s8.bf16 %v755
        %v2624 = vunpack.c.l.s8.bf16 %v756
        %v2625 = vunpack.c.l.s8.bf16 %v757
        %v2626 = vunpack.c.l.s8.bf16 %v758
        %v2627 = vunpack.c.h.s8.bf16 %v755
        %v2628 = vunpack.c.h.s8.bf16 %v756
        %v2629 = vunpack.c.h.s8.bf16 %v757
        %v2630 = vunpack.c.h.s8.bf16 %v758
        %v2631 = vunpack.c.l.s8.bf16 %v759
        %v2632 = vunpack.c.l.s8.bf16 %v760
        %v2633 = vunpack.c.l.s8.bf16 %v761
        %v2634 = vunpack.c.l.s8.bf16 %v762
        %v2635 = vunpack.c.h.s8.bf16 %v759
        %v2636 = vunpack.c.h.s8.bf16 %v760
        %v2637 = vunpack.c.h.s8.bf16 %v761
        %v2638 = vunpack.c.h.s8.bf16 %v762
        %v2639 = vunpack.c.l.s8.bf16 %v763
        %v2640 = vunpack.c.l.s8.bf16 %v764
        %v2641 = vunpack.c.l.s8.bf16 %v765
        %v2642 = vunpack.c.l.s8.bf16 %v766
        %v2643 = vunpack.c.h.s8.bf16 %v763
        %v2644 = vunpack.c.h.s8.bf16 %v764
        %v2645 = vunpack.c.h.s8.bf16 %v765
        %v2646 = vunpack.c.h.s8.bf16 %v766
        %v2647 = vunpack.c.l.s8.bf16 %v767
        %v2648 = vunpack.c.l.s8.bf16 %v768
        %v2649 = vunpack.c.l.s8.bf16 %v769
        %v2650 = vunpack.c.l.s8.bf16 %v770
        %v2651 = vunpack.c.h.s8.bf16 %v767
        %v2652 = vunpack.c.h.s8.bf16 %v768
        %v2653 = vunpack.c.h.s8.bf16 %v769
        %v2654 = vunpack.c.h.s8.bf16 %v770
        %v2655 = vunpack.c.l.s8.bf16 %v771
        %v2656 = vunpack.c.l.s8.bf16 %v772
        %v2657 = vunpack.c.l.s8.bf16 %v773
        %v2658 = vunpack.c.l.s8.bf16 %v774
        %v2659 = vunpack.c.h.s8.bf16 %v771
        %v2660 = vunpack.c.h.s8.bf16 %v772
        %v2661 = vunpack.c.h.s8.bf16 %v773
        %v2662 = vunpack.c.h.s8.bf16 %v774
        %v2663 = vunpack.c.l.s8.bf16 %v775
        %v2664 = vunpack.c.l.s8.bf16 %v776
        %v2665 = vunpack.c.l.s8.bf16 %v777
        %v2666 = vunpack.c.l.s8.bf16 %v778
        %v2667 = vunpack.c.h.s8.bf16 %v775
        %v2668 = vunpack.c.h.s8.bf16 %v776
        %v2669 = vunpack.c.h.s8.bf16 %v777
        %v2670 = vunpack.c.h.s8.bf16 %v778
        %v2671 = vunpack.c.l.s8.bf16 %v779
        %v2672 = vunpack.c.l.s8.bf16 %v780
        %v2673 = vunpack.c.l.s8.bf16 %v781
        %v2674 = vunpack.c.l.s8.bf16 %v782
        %v2675 = vunpack.c.h.s8.bf16 %v779
        %v2676 = vunpack.c.h.s8.bf16 %v780
        %v2677 = vunpack.c.h.s8.bf16 %v781
        %v2678 = vunpack.c.h.s8.bf16 %v782
        %v2679 = vunpack.c.l.s8.bf16 %v783
        %v2680 = vunpack.c.l.s8.bf16 %v784
        %v2681 = vunpack.c.l.s8.bf16 %v785
        %v2682 = vunpack.c.l.s8.bf16 %v786
        %v2683 = vunpack.c.h.s8.bf16 %v783
        %v2684 = vunpack.c.h.s8.bf16 %v784
        %v2685 = vunpack.c.h.s8.bf16 %v785
        %v2686 = vunpack.c.h.s8.bf16 %v786
        %v2687 = vunpack.c.l.s8.bf16 %v787
        %v2688 = vunpack.c.l.s8.bf16 %v788
        %v2689 = vunpack.c.l.s8.bf16 %v789
        %v2690 = vunpack.c.l.s8.bf16 %v790
        %v2691 = vunpack.c.h.s8.bf16 %v787
        %v2692 = vunpack.c.h.s8.bf16 %v788
        %v2693 = vunpack.c.h.s8.bf16 %v789
        %v2694 = vunpack.c.h.s8.bf16 %v790
        %v2695 = vunpack.c.l.s8.bf16 %v791
        %v2696 = vunpack.c.l.s8.bf16 %v792
        %v2697 = vunpack.c.l.s8.bf16 %v793
        %v2698 = vunpack.c.l.s8.bf16 %v794
        %v2699 = vunpack.c.h.s8.bf16 %v791
        %v2700 = vunpack.c.h.s8.bf16 %v792
        %v2701 = vunpack.c.h.s8.bf16 %v793
        %v2702 = vunpack.c.h.s8.bf16 %v794
        %v2703 = vunpack.c.l.s8.bf16 %v795
        %v2704 = vunpack.c.l.s8.bf16 %v796
        %v2705 = vunpack.c.l.s8.bf16 %v797
        %v2706 = vunpack.c.l.s8.bf16 %v798
        %v2707 = vunpack.c.h.s8.bf16 %v795
        %v2708 = vunpack.c.h.s8.bf16 %v796
        %v2709 = vunpack.c.h.s8.bf16 %v797
        %v2710 = vunpack.c.h.s8.bf16 %v798
        %v2711 = vunpack.c.l.s8.bf16 %v799
        %v2712 = vunpack.c.l.s8.bf16 %v800
        %v2713 = vunpack.c.l.s8.bf16 %v801
        %v2714 = vunpack.c.l.s8.bf16 %v802
        %v2715 = vunpack.c.h.s8.bf16 %v799
        %v2716 = vunpack.c.h.s8.bf16 %v800
        %v2717 = vunpack.c.h.s8.bf16 %v801
        %v2718 = vunpack.c.h.s8.bf16 %v802
        %v2719 = vunpack.c.l.s8.bf16 %v803
        %v2720 = vunpack.c.l.s8.bf16 %v804
        %v2721 = vunpack.c.l.s8.bf16 %v805
        %v2722 = vunpack.c.l.s8.bf16 %v806
        %v2723 = vunpack.c.h.s8.bf16 %v803
        %v2724 = vunpack.c.h.s8.bf16 %v804
        %v2725 = vunpack.c.h.s8.bf16 %v805
        %v2726 = vunpack.c.h.s8.bf16 %v806
        %v2727 = vunpack.c.l.s8.bf16 %v807
        %v2728 = vunpack.c.l.s8.bf16 %v808
        %v2729 = vunpack.c.l.s8.bf16 %v809
        %v2730 = vunpack.c.l.s8.bf16 %v810
        %v2731 = vunpack.c.h.s8.bf16 %v807
        %v2732 = vunpack.c.h.s8.bf16 %v808
        %v2733 = vunpack.c.h.s8.bf16 %v809
        %v2734 = vunpack.c.h.s8.bf16 %v810
        %v2735 = vunpack.c.l.s8.bf16 %v811
        %v2736 = vunpack.c.l.s8.bf16 %v812
        %v2737 = vunpack.c.l.s8.bf16 %v813
        %v2738 = vunpack.c.l.s8.bf16 %v814
        %v2739 = vunpack.c.h.s8.bf16 %v811
        %v2740 = vunpack.c.h.s8.bf16 %v812
        %v2741 = vunpack.c.h.s8.bf16 %v813
        %v2742 = vunpack.c.h.s8.bf16 %v814
        %v2743 = vunpack.c.l.s8.bf16 %v815
        %v2744 = vunpack.c.l.s8.bf16 %v816
        %v2745 = vunpack.c.l.s8.bf16 %v817
        %v2746 = vunpack.c.l.s8.bf16 %v818
        %v2747 = vunpack.c.h.s8.bf16 %v815
        %v2748 = vunpack.c.h.s8.bf16 %v816
        %v2749 = vunpack.c.h.s8.bf16 %v817
        %v2750 = vunpack.c.h.s8.bf16 %v818
        %v2751 = vunpack.c.l.s8.bf16 %v819
        %v2752 = vunpack.c.l.s8.bf16 %v820
        %v2753 = vunpack.c.l.s8.bf16 %v821
        %v2754 = vunpack.c.l.s8.bf16 %v822
        %v2755 = vunpack.c.h.s8.bf16 %v819
        %v2756 = vunpack.c.h.s8.bf16 %v820
        %v2757 = vunpack.c.h.s8.bf16 %v821
        %v2758 = vunpack.c.h.s8.bf16 %v822
        %v2759 = vunpack.c.l.s8.bf16 %v823
        %v2760 = vunpack.c.l.s8.bf16 %v824
        %v2761 = vunpack.c.l.s8.bf16 %v825
        %v2762 = vunpack.c.l.s8.bf16 %v826
        %v2763 = vunpack.c.h.s8.bf16 %v823
        %v2764 = vunpack.c.h.s8.bf16 %v824
        %v2765 = vunpack.c.h.s8.bf16 %v825
        %v2766 = vunpack.c.h.s8.bf16 %v826
        %v2767 = vunpack.c.l.s8.bf16 %v827
        %v2768 = vunpack.c.l.s8.bf16 %v828
        %v2769 = vunpack.c.l.s8.bf16 %v829
        %v2770 = vunpack.c.l.s8.bf16 %v830
        %v2771 = vunpack.c.h.s8.bf16 %v827
        %v2772 = vunpack.c.h.s8.bf16 %v828
        %v2773 = vunpack.c.h.s8.bf16 %v829
        %v2774 = vunpack.c.h.s8.bf16 %v830
        %v2775 = vunpack.c.l.s8.bf16 %v831
        %v2776 = vunpack.c.l.s8.bf16 %v832
        %v2777 = vunpack.c.l.s8.bf16 %v833
        %v2778 = vunpack.c.l.s8.bf16 %v834
        %v2779 = vunpack.c.h.s8.bf16 %v831
        %v2780 = vunpack.c.h.s8.bf16 %v832
        %v2781 = vunpack.c.h.s8.bf16 %v833
        %v2782 = vunpack.c.h.s8.bf16 %v834
        %v2783 = vunpack.c.l.s8.bf16 %v835
        %v2784 = vunpack.c.l.s8.bf16 %v836
        %v2785 = vunpack.c.l.s8.bf16 %v837
        %v2786 = vunpack.c.l.s8.bf16 %v838
        %v2787 = vunpack.c.h.s8.bf16 %v835
        %v2788 = vunpack.c.h.s8.bf16 %v836
        %v2789 = vunpack.c.h.s8.bf16 %v837
        %v2790 = vunpack.c.h.s8.bf16 %v838
        %v2791 = vunpack.c.l.s8.bf16 %v839
        %v2792 = vunpack.c.l.s8.bf16 %v840
        %v2793 = vunpack.c.l.s8.bf16 %v841
        %v2794 = vunpack.c.l.s8.bf16 %v842
        %v2795 = vunpack.c.h.s8.bf16 %v839
        %v2796 = vunpack.c.h.s8.bf16 %v840
        %v2797 = vunpack.c.h.s8.bf16 %v841
        %v2798 = vunpack.c.h.s8.bf16 %v842
        %v2799 = vunpack.c.l.s8.bf16 %v843
        %v2800 = vunpack.c.l.s8.bf16 %v844
        %v2801 = vunpack.c.l.s8.bf16 %v845
        %v2802 = vunpack.c.l.s8.bf16 %v846
        %v2803 = vunpack.c.h.s8.bf16 %v843
        %v2804 = vunpack.c.h.s8.bf16 %v844
        %v2805 = vunpack.c.h.s8.bf16 %v845
        %v2806 = vunpack.c.h.s8.bf16 %v846
        %v2807 = vunpack.c.l.s8.bf16 %v847
        %v2808 = vunpack.c.l.s8.bf16 %v848
        %v2809 = vunpack.c.l.s8.bf16 %v849
        %v2810 = vunpack.c.l.s8.bf16 %v850
        %v2811 = vunpack.c.h.s8.bf16 %v847
        %v2812 = vunpack.c.h.s8.bf16 %v848
        %v2813 = vunpack.c.h.s8.bf16 %v849
        %v2814 = vunpack.c.h.s8.bf16 %v850
        %v2815 = vunpack.c.l.s8.bf16 %v851
        %v2816 = vunpack.c.l.s8.bf16 %v852
        %v2817 = vunpack.c.l.s8.bf16 %v853
        %v2818 = vunpack.c.l.s8.bf16 %v854
        %v2819 = vunpack.c.h.s8.bf16 %v851
        %v2820 = vunpack.c.h.s8.bf16 %v852
        %v2821 = vunpack.c.h.s8.bf16 %v853
        %v2822 = vunpack.c.h.s8.bf16 %v854
        %v2823 = vunpack.c.l.s8.bf16 %v855
        %v2824 = vunpack.c.l.s8.bf16 %v856
        %v2825 = vunpack.c.l.s8.bf16 %v857
        %v2826 = vunpack.c.l.s8.bf16 %v858
        %v2827 = vunpack.c.h.s8.bf16 %v855
        %v2828 = vunpack.c.h.s8.bf16 %v856
        %v2829 = vunpack.c.h.s8.bf16 %v857
        %v2830 = vunpack.c.h.s8.bf16 %v858
        %v2831 = vunpack.c.l.s8.bf16 %v859
        %v2832 = vunpack.c.l.s8.bf16 %v860
        %v2833 = vunpack.c.l.s8.bf16 %v861
        %v2834 = vunpack.c.l.s8.bf16 %v862
        %v2835 = vunpack.c.h.s8.bf16 %v859
        %v2836 = vunpack.c.h.s8.bf16 %v860
        %v2837 = vunpack.c.h.s8.bf16 %v861
        %v2838 = vunpack.c.h.s8.bf16 %v862
        %v2839 = vunpack.c.l.s8.bf16 %v863
        %v2840 = vunpack.c.l.s8.bf16 %v864
        %v2841 = vunpack.c.l.s8.bf16 %v865
        %v2842 = vunpack.c.l.s8.bf16 %v866
        %v2843 = vunpack.c.h.s8.bf16 %v863
        %v2844 = vunpack.c.h.s8.bf16 %v864
        %v2845 = vunpack.c.h.s8.bf16 %v865
        %v2846 = vunpack.c.h.s8.bf16 %v866
        %v2847 = vunpack.c.l.s8.bf16 %v867
        %v2848 = vunpack.c.l.s8.bf16 %v868
        %v2849 = vunpack.c.l.s8.bf16 %v869
        %v2850 = vunpack.c.l.s8.bf16 %v870
        %v2851 = vunpack.c.h.s8.bf16 %v867
        %v2852 = vunpack.c.h.s8.bf16 %v868
        %v2853 = vunpack.c.h.s8.bf16 %v869
        %v2854 = vunpack.c.h.s8.bf16 %v870
        %v2855 = vunpack.c.l.s8.bf16 %v871
        %v2856 = vunpack.c.l.s8.bf16 %v872
        %v2857 = vunpack.c.l.s8.bf16 %v873
        %v2858 = vunpack.c.l.s8.bf16 %v874
        %v2859 = vunpack.c.h.s8.bf16 %v871
        %v2860 = vunpack.c.h.s8.bf16 %v872
        %v2861 = vunpack.c.h.s8.bf16 %v873
        %v2862 = vunpack.c.h.s8.bf16 %v874
        %v2863 = vunpack.c.l.s8.bf16 %v875
        %v2864 = vunpack.c.l.s8.bf16 %v876
        %v2865 = vunpack.c.l.s8.bf16 %v877
        %v2866 = vunpack.c.l.s8.bf16 %v878
        %v2867 = vunpack.c.h.s8.bf16 %v875
        %v2868 = vunpack.c.h.s8.bf16 %v876
        %v2869 = vunpack.c.h.s8.bf16 %v877
        %v2870 = vunpack.c.h.s8.bf16 %v878
        %v2871 = vunpack.c.l.s8.bf16 %v879
        %v2872 = vunpack.c.l.s8.bf16 %v880
        %v2873 = vunpack.c.l.s8.bf16 %v881
        %v2874 = vunpack.c.l.s8.bf16 %v882
        %v2875 = vunpack.c.h.s8.bf16 %v879
        %v2876 = vunpack.c.h.s8.bf16 %v880
        %v2877 = vunpack.c.h.s8.bf16 %v881
        %v2878 = vunpack.c.h.s8.bf16 %v882
        %v2879 = vunpack.c.l.s8.bf16 %v883
        %v2880 = vunpack.c.l.s8.bf16 %v884
        %v2881 = vunpack.c.l.s8.bf16 %v885
        %v2882 = vunpack.c.l.s8.bf16 %v886
        %v2883 = vunpack.c.h.s8.bf16 %v883
        %v2884 = vunpack.c.h.s8.bf16 %v884
        %v2885 = vunpack.c.h.s8.bf16 %v885
        %v2886 = vunpack.c.h.s8.bf16 %v886
        %v2887 = vunpack.c.l.s8.bf16 %v887
        %v2888 = vunpack.c.l.s8.bf16 %v888
        %v2889 = vunpack.c.l.s8.bf16 %v889
        %v2890 = vunpack.c.l.s8.bf16 %v890
        %v2891 = vunpack.c.h.s8.bf16 %v887
        %v2892 = vunpack.c.h.s8.bf16 %v888
        %v2893 = vunpack.c.h.s8.bf16 %v889
        %v2894 = vunpack.c.h.s8.bf16 %v890
        %v2895 = vunpack.c.l.s8.bf16 %v891
        %v2896 = vunpack.c.l.s8.bf16 %v892
        %v2897 = vunpack.c.l.s8.bf16 %v893
        %v2898 = vunpack.c.l.s8.bf16 %v894
        %v2899 = vunpack.c.h.s8.bf16 %v891
        %v2900 = vunpack.c.h.s8.bf16 %v892
        %v2901 = vunpack.c.h.s8.bf16 %v893
        %v2902 = vunpack.c.h.s8.bf16 %v894
        %v2903 = vunpack.c.l.s8.bf16 %v895
        %v2904 = vunpack.c.l.s8.bf16 %v896
        %v2905 = vunpack.c.l.s8.bf16 %v897
        %v2906 = vunpack.c.l.s8.bf16 %v898
        %v2907 = vunpack.c.h.s8.bf16 %v895
        %v2908 = vunpack.c.h.s8.bf16 %v896
        %v2909 = vunpack.c.h.s8.bf16 %v897
        %v2910 = vunpack.c.h.s8.bf16 %v898
        %v2911 = vunpack.c.l.s8.bf16 %v899
        %v2912 = vunpack.c.l.s8.bf16 %v900
        %v2913 = vunpack.c.l.s8.bf16 %v901
        %v2914 = vunpack.c.l.s8.bf16 %v902
        %v2915 = vunpack.c.h.s8.bf16 %v899
        %v2916 = vunpack.c.h.s8.bf16 %v900
        %v2917 = vunpack.c.h.s8.bf16 %v901
        %v2918 = vunpack.c.h.s8.bf16 %v902
        %v2919 = vunpack.c.l.s8.bf16 %v903
        %v2920 = vunpack.c.l.s8.bf16 %v904
        %v2921 = vunpack.c.l.s8.bf16 %v905
        %v2922 = vunpack.c.l.s8.bf16 %v906
        %v2923 = vunpack.c.h.s8.bf16 %v903
        %v2924 = vunpack.c.h.s8.bf16 %v904
        %v2925 = vunpack.c.h.s8.bf16 %v905
        %v2926 = vunpack.c.h.s8.bf16 %v906
        %v2927 = vunpack.c.l.s8.bf16 %v907
        %v2928 = vunpack.c.l.s8.bf16 %v908
        %v2929 = vunpack.c.l.s8.bf16 %v909
        %v2930 = vunpack.c.l.s8.bf16 %v910
        %v2931 = vunpack.c.h.s8.bf16 %v907
        %v2932 = vunpack.c.h.s8.bf16 %v908
        %v2933 = vunpack.c.h.s8.bf16 %v909
        %v2934 = vunpack.c.h.s8.bf16 %v910
        %v2935 = vunpack.c.l.s8.bf16 %v911
        %v2936 = vunpack.c.l.s8.bf16 %v912
        %v2937 = vunpack.c.l.s8.bf16 %v913
        %v2938 = vunpack.c.l.s8.bf16 %v914
        %v2939 = vunpack.c.h.s8.bf16 %v911
        %v2940 = vunpack.c.h.s8.bf16 %v912
        %v2941 = vunpack.c.h.s8.bf16 %v913
        %v2942 = vunpack.c.h.s8.bf16 %v914
        %v2943 = vunpack.c.l.s8.bf16 %v915
        %v2944 = vunpack.c.l.s8.bf16 %v916
        %v2945 = vunpack.c.l.s8.bf16 %v917
        %v2946 = vunpack.c.l.s8.bf16 %v918
        %v2947 = vunpack.c.h.s8.bf16 %v915
        %v2948 = vunpack.c.h.s8.bf16 %v916
        %v2949 = vunpack.c.h.s8.bf16 %v917
        %v2950 = vunpack.c.h.s8.bf16 %v918
        %v2951 = vunpack.c.l.s8.bf16 %v919
        %v2952 = vunpack.c.l.s8.bf16 %v920
        %v2953 = vunpack.c.l.s8.bf16 %v921
        %v2954 = vunpack.c.l.s8.bf16 %v922
        %v2955 = vunpack.c.h.s8.bf16 %v919
        %v2956 = vunpack.c.h.s8.bf16 %v920
        %v2957 = vunpack.c.h.s8.bf16 %v921
        %v2958 = vunpack.c.h.s8.bf16 %v922
        %v2959 = vunpack.c.l.s8.bf16 %v923
        %v2960 = vunpack.c.l.s8.bf16 %v924
        %v2961 = vunpack.c.l.s8.bf16 %v925
        %v2962 = vunpack.c.l.s8.bf16 %v926
        %v2963 = vunpack.c.h.s8.bf16 %v923
        %v2964 = vunpack.c.h.s8.bf16 %v924
        %v2965 = vunpack.c.h.s8.bf16 %v925
        %v2966 = vunpack.c.h.s8.bf16 %v926
        %v2967 = vunpack.c.l.s8.bf16 %v927
        %v2968 = vunpack.c.l.s8.bf16 %v928
        %v2969 = vunpack.c.l.s8.bf16 %v929
        %v2970 = vunpack.c.l.s8.bf16 %v930
        %v2971 = vunpack.c.h.s8.bf16 %v927
        %v2972 = vunpack.c.h.s8.bf16 %v928
        %v2973 = vunpack.c.h.s8.bf16 %v929
        %v2974 = vunpack.c.h.s8.bf16 %v930
        %v2975 = vunpack.c.l.s8.bf16 %v931
        %v2976 = vunpack.c.l.s8.bf16 %v932
        %v2977 = vunpack.c.l.s8.bf16 %v933
        %v2978 = vunpack.c.l.s8.bf16 %v934
        %v2979 = vunpack.c.h.s8.bf16 %v931
        %v2980 = vunpack.c.h.s8.bf16 %v932
        %v2981 = vunpack.c.h.s8.bf16 %v933
        %v2982 = vunpack.c.h.s8.bf16 %v934
        %v2983 = vunpack.c.l.s8.bf16 %v935
        %v2984 = vunpack.c.l.s8.bf16 %v936
        %v2985 = vunpack.c.l.s8.bf16 %v937
        %v2986 = vunpack.c.l.s8.bf16 %v938
        %v2987 = vunpack.c.h.s8.bf16 %v935
        %v2988 = vunpack.c.h.s8.bf16 %v936
        %v2989 = vunpack.c.h.s8.bf16 %v937
        %v2990 = vunpack.c.h.s8.bf16 %v938
        %v2991 = vunpack.c.l.s8.bf16 %v939
        %v2992 = vunpack.c.l.s8.bf16 %v940
        %v2993 = vunpack.c.l.s8.bf16 %v941
        %v2994 = vunpack.c.l.s8.bf16 %v942
        %v2995 = vunpack.c.h.s8.bf16 %v939
        %v2996 = vunpack.c.h.s8.bf16 %v940
        %v2997 = vunpack.c.h.s8.bf16 %v941
        %v2998 = vunpack.c.h.s8.bf16 %v942
        %v2999 = vunpack.c.l.s8.bf16 %v943
        %v3000 = vunpack.c.l.s8.bf16 %v944
        %v3001 = vunpack.c.l.s8.bf16 %v945
        %v3002 = vunpack.c.l.s8.bf16 %v946
        %v3003 = vunpack.c.h.s8.bf16 %v943
        %v3004 = vunpack.c.h.s8.bf16 %v944
        %v3005 = vunpack.c.h.s8.bf16 %v945
        %v3006 = vunpack.c.h.s8.bf16 %v946
        %v3007 = vunpack.c.l.s8.bf16 %v947
        %v3008 = vunpack.c.l.s8.bf16 %v948
        %v3009 = vunpack.c.l.s8.bf16 %v949
        %v3010 = vunpack.c.l.s8.bf16 %v950
        %v3011 = vunpack.c.h.s8.bf16 %v947
        %v3012 = vunpack.c.h.s8.bf16 %v948
        %v3013 = vunpack.c.h.s8.bf16 %v949
        %v3014 = vunpack.c.h.s8.bf16 %v950
        %v3015 = vunpack.c.l.s8.bf16 %v951
        %v3016 = vunpack.c.l.s8.bf16 %v952
        %v3017 = vunpack.c.l.s8.bf16 %v953
        %v3018 = vunpack.c.l.s8.bf16 %v954
        %v3019 = vunpack.c.h.s8.bf16 %v951
        %v3020 = vunpack.c.h.s8.bf16 %v952
        %v3021 = vunpack.c.h.s8.bf16 %v953
        %v3022 = vunpack.c.h.s8.bf16 %v954
        %v3023 = vunpack.c.l.s8.bf16 %v955
        %v3024 = vunpack.c.l.s8.bf16 %v956
        %v3025 = vunpack.c.l.s8.bf16 %v957
        %v3026 = vunpack.c.l.s8.bf16 %v958
        %v3027 = vunpack.c.h.s8.bf16 %v955
        %v3028 = vunpack.c.h.s8.bf16 %v956
        %v3029 = vunpack.c.h.s8.bf16 %v957
        %v3030 = vunpack.c.h.s8.bf16 %v958
        %v3031 = vunpack.c.l.s8.bf16 %v959
        %v3032 = vunpack.c.l.s8.bf16 %v960
        %v3033 = vunpack.c.l.s8.bf16 %v961
        %v3034 = vunpack.c.l.s8.bf16 %v962
        %v3035 = vunpack.c.h.s8.bf16 %v959
        %v3036 = vunpack.c.h.s8.bf16 %v960
        %v3037 = vunpack.c.h.s8.bf16 %v961
        %v3038 = vunpack.c.h.s8.bf16 %v962
        %v3039 = vunpack.c.l.s8.bf16 %v963
        %v3040 = vunpack.c.l.s8.bf16 %v964
        %v3041 = vunpack.c.l.s8.bf16 %v965
        %v3042 = vunpack.c.l.s8.bf16 %v966
        %v3043 = vunpack.c.h.s8.bf16 %v963
        %v3044 = vunpack.c.h.s8.bf16 %v964
        %v3045 = vunpack.c.h.s8.bf16 %v965
        %v3046 = vunpack.c.h.s8.bf16 %v966
        %v3047 = vunpack.c.l.s8.bf16 %v967
        %v3048 = vunpack.c.l.s8.bf16 %v968
        %v3049 = vunpack.c.l.s8.bf16 %v969
        %v3050 = vunpack.c.l.s8.bf16 %v970
        %v3051 = vunpack.c.h.s8.bf16 %v967
        %v3052 = vunpack.c.h.s8.bf16 %v968
        %v3053 = vunpack.c.h.s8.bf16 %v969
        %v3054 = vunpack.c.h.s8.bf16 %v970
        %v3055 = vunpack.c.l.s8.bf16 %v971
        %v3056 = vunpack.c.l.s8.bf16 %v972
        %v3057 = vunpack.c.l.s8.bf16 %v973
        %v3058 = vunpack.c.l.s8.bf16 %v974
        %v3059 = vunpack.c.h.s8.bf16 %v971
        %v3060 = vunpack.c.h.s8.bf16 %v972
        %v3061 = vunpack.c.h.s8.bf16 %v973
        %v3062 = vunpack.c.h.s8.bf16 %v974
        %v3063 = vunpack.c.l.s8.bf16 %v975
        %v3064 = vunpack.c.l.s8.bf16 %v976
        %v3065 = vunpack.c.l.s8.bf16 %v977
        %v3066 = vunpack.c.l.s8.bf16 %v978
        %v3067 = vunpack.c.h.s8.bf16 %v975
        %v3068 = vunpack.c.h.s8.bf16 %v976
        %v3069 = vunpack.c.h.s8.bf16 %v977
        %v3070 = vunpack.c.h.s8.bf16 %v978
        %v3071 = vunpack.c.l.s8.bf16 %v979
        %v3072 = vunpack.c.l.s8.bf16 %v980
        %v3073 = vunpack.c.l.s8.bf16 %v981
        %v3074 = vunpack.c.l.s8.bf16 %v982
        %v3075 = vunpack.c.h.s8.bf16 %v979
        %v3076 = vunpack.c.h.s8.bf16 %v980
        %v3077 = vunpack.c.h.s8.bf16 %v981
        %v3078 = vunpack.c.h.s8.bf16 %v982
        %v3079 = vunpack.c.l.s8.bf16 %v983
        %v3080 = vunpack.c.l.s8.bf16 %v984
        %v3081 = vunpack.c.l.s8.bf16 %v985
        %v3082 = vunpack.c.l.s8.bf16 %v986
        %v3083 = vunpack.c.h.s8.bf16 %v983
        %v3084 = vunpack.c.h.s8.bf16 %v984
        %v3085 = vunpack.c.h.s8.bf16 %v985
        %v3086 = vunpack.c.h.s8.bf16 %v986
        %v3087 = vunpack.c.l.s8.bf16 %v987
        %v3088 = vunpack.c.l.s8.bf16 %v988
        %v3089 = vunpack.c.l.s8.bf16 %v989
        %v3090 = vunpack.c.l.s8.bf16 %v990
        %v3091 = vunpack.c.h.s8.bf16 %v987
        %v3092 = vunpack.c.h.s8.bf16 %v988
        %v3093 = vunpack.c.h.s8.bf16 %v989
        %v3094 = vunpack.c.h.s8.bf16 %v990
        %v3095 = vunpack.c.l.s8.bf16 %v991
        %v3096 = vunpack.c.l.s8.bf16 %v992
        %v3097 = vunpack.c.l.s8.bf16 %v993
        %v3098 = vunpack.c.l.s8.bf16 %v994
        %v3099 = vunpack.c.h.s8.bf16 %v991
        %v3100 = vunpack.c.h.s8.bf16 %v992
        %v3101 = vunpack.c.h.s8.bf16 %v993
        %v3102 = vunpack.c.h.s8.bf16 %v994
        %v3103 = vunpack.c.l.s8.bf16 %v995
        %v3104 = vunpack.c.l.s8.bf16 %v996
        %v3105 = vunpack.c.l.s8.bf16 %v997
        %v3106 = vunpack.c.l.s8.bf16 %v998
        %v3107 = vunpack.c.h.s8.bf16 %v995
        %v3108 = vunpack.c.h.s8.bf16 %v996
        %v3109 = vunpack.c.h.s8.bf16 %v997
        %v3110 = vunpack.c.h.s8.bf16 %v998
        %v3111 = vunpack.c.l.s8.bf16 %v999
        %v3112 = vunpack.c.l.s8.bf16 %v1000
        %v3113 = vunpack.c.l.s8.bf16 %v1001
        %v3114 = vunpack.c.l.s8.bf16 %v1002
        %v3115 = vunpack.c.h.s8.bf16 %v999
        %v3116 = vunpack.c.h.s8.bf16 %v1000
        %v3117 = vunpack.c.h.s8.bf16 %v1001
        %v3118 = vunpack.c.h.s8.bf16 %v1002
        %v3119 = vunpack.c.l.s8.bf16 %v1003
        %v3120 = vunpack.c.l.s8.bf16 %v1004
        %v3121 = vunpack.c.l.s8.bf16 %v1005
        %v3122 = vunpack.c.l.s8.bf16 %v1006
        %v3123 = vunpack.c.h.s8.bf16 %v1003
        %v3124 = vunpack.c.h.s8.bf16 %v1004
        %v3125 = vunpack.c.h.s8.bf16 %v1005
        %v3126 = vunpack.c.h.s8.bf16 %v1006
        %v3127 = vunpack.c.l.s8.bf16 %v1007
        %v3128 = vunpack.c.l.s8.bf16 %v1008
        %v3129 = vunpack.c.l.s8.bf16 %v1009
        %v3130 = vunpack.c.l.s8.bf16 %v1010
        %v3131 = vunpack.c.h.s8.bf16 %v1007
        %v3132 = vunpack.c.h.s8.bf16 %v1008
        %v3133 = vunpack.c.h.s8.bf16 %v1009
        %v3134 = vunpack.c.h.s8.bf16 %v1010
        %v3135 = vunpack.c.l.s8.bf16 %v1011
        %v3136 = vunpack.c.l.s8.bf16 %v1012
        %v3137 = vunpack.c.l.s8.bf16 %v1013
        %v3138 = vunpack.c.l.s8.bf16 %v1014
        %v3139 = vunpack.c.h.s8.bf16 %v1011
        %v3140 = vunpack.c.h.s8.bf16 %v1012
        %v3141 = vunpack.c.h.s8.bf16 %v1013
        %v3142 = vunpack.c.h.s8.bf16 %v1014
        %v3143 = vunpack.c.l.s8.bf16 %v1015
        %v3144 = vunpack.c.l.s8.bf16 %v1016
        %v3145 = vunpack.c.l.s8.bf16 %v1017
        %v3146 = vunpack.c.l.s8.bf16 %v1018
        %v3147 = vunpack.c.h.s8.bf16 %v1015
        %v3148 = vunpack.c.h.s8.bf16 %v1016
        %v3149 = vunpack.c.h.s8.bf16 %v1017
        %v3150 = vunpack.c.h.s8.bf16 %v1018
        %v3151 = vunpack.c.l.s8.bf16 %v1019
        %v3152 = vunpack.c.l.s8.bf16 %v1020
        %v3153 = vunpack.c.l.s8.bf16 %v1021
        %v3154 = vunpack.c.l.s8.bf16 %v1022
        %v3155 = vunpack.c.h.s8.bf16 %v1019
        %v3156 = vunpack.c.h.s8.bf16 %v1020
        %v3157 = vunpack.c.h.s8.bf16 %v1021
        %v3158 = vunpack.c.h.s8.bf16 %v1022
        %v3159 = vunpack.c.l.s8.bf16 %v1023
        %v3160 = vunpack.c.l.s8.bf16 %v1024
        %v3161 = vunpack.c.l.s8.bf16 %v1025
        %v3162 = vunpack.c.l.s8.bf16 %v1026
        %v3163 = vunpack.c.h.s8.bf16 %v1023
        %v3164 = vunpack.c.h.s8.bf16 %v1024
        %v3165 = vunpack.c.h.s8.bf16 %v1025
        %v3166 = vunpack.c.h.s8.bf16 %v1026
        %v3167 = vunpack.c.l.s8.bf16 %v1027
        %v3168 = vunpack.c.l.s8.bf16 %v1028
        %v3169 = vunpack.c.l.s8.bf16 %v1029
        %v3170 = vunpack.c.l.s8.bf16 %v1030
        %v3171 = vunpack.c.h.s8.bf16 %v1027
        %v3172 = vunpack.c.h.s8.bf16 %v1028
        %v3173 = vunpack.c.h.s8.bf16 %v1029
        %v3174 = vunpack.c.h.s8.bf16 %v1030
        %v3175 = vunpack.c.l.s8.bf16 %v1031
        %v3176 = vunpack.c.l.s8.bf16 %v1032
        %v3177 = vunpack.c.l.s8.bf16 %v1033
        %v3178 = vunpack.c.l.s8.bf16 %v1034
        %v3179 = vunpack.c.h.s8.bf16 %v1031
        %v3180 = vunpack.c.h.s8.bf16 %v1032
        %v3181 = vunpack.c.h.s8.bf16 %v1033
        %v3182 = vunpack.c.h.s8.bf16 %v1034
        %v3183 = vunpack.c.l.s8.bf16 %v1035
        %v3184 = vunpack.c.l.s8.bf16 %v1036
        %v3185 = vunpack.c.l.s8.bf16 %v1037
        %v3186 = vunpack.c.l.s8.bf16 %v1038
        %v3187 = vunpack.c.h.s8.bf16 %v1035
        %v3188 = vunpack.c.h.s8.bf16 %v1036
        %v3189 = vunpack.c.h.s8.bf16 %v1037
        %v3190 = vunpack.c.h.s8.bf16 %v1038
        %v3191 = vunpack.c.l.s8.bf16 %v1039
        %v3192 = vunpack.c.l.s8.bf16 %v1040
        %v3193 = vunpack.c.l.s8.bf16 %v1041
        %v3194 = vunpack.c.l.s8.bf16 %v1042
        %v3195 = vunpack.c.h.s8.bf16 %v1039
        %v3196 = vunpack.c.h.s8.bf16 %v1040
        %v3197 = vunpack.c.h.s8.bf16 %v1041
        %v3198 = vunpack.c.h.s8.bf16 %v1042
        %v3199 = vunpack.c.l.s8.bf16 %v1043
        %v3200 = vunpack.c.l.s8.bf16 %v1044
        %v3201 = vunpack.c.l.s8.bf16 %v1045
        %v3202 = vunpack.c.l.s8.bf16 %v1046
        %v3203 = vunpack.c.h.s8.bf16 %v1043
        %v3204 = vunpack.c.h.s8.bf16 %v1044
        %v3205 = vunpack.c.h.s8.bf16 %v1045
        %v3206 = vunpack.c.h.s8.bf16 %v1046
        %v3207 = vunpack.c.l.s8.bf16 %v1047
        %v3208 = vunpack.c.l.s8.bf16 %v1048
        %v3209 = vunpack.c.l.s8.bf16 %v1049
        %v3210 = vunpack.c.l.s8.bf16 %v1050
        %v3211 = vunpack.c.h.s8.bf16 %v1047
        %v3212 = vunpack.c.h.s8.bf16 %v1048
        %v3213 = vunpack.c.h.s8.bf16 %v1049
        %v3214 = vunpack.c.h.s8.bf16 %v1050
        %v3215 = vunpack.c.l.s8.bf16 %v1051
        %v3216 = vunpack.c.l.s8.bf16 %v1052
        %v3217 = vunpack.c.l.s8.bf16 %v1053
        %v3218 = vunpack.c.l.s8.bf16 %v1054
        %v3219 = vunpack.c.h.s8.bf16 %v1051
        %v3220 = vunpack.c.h.s8.bf16 %v1052
        %v3221 = vunpack.c.h.s8.bf16 %v1053
        %v3222 = vunpack.c.h.s8.bf16 %v1054
        %v3223 = vunpack.c.l.s8.bf16 %v1055
        %v3224 = vunpack.c.l.s8.bf16 %v1056
        %v3225 = vunpack.c.l.s8.bf16 %v1057
        %v3226 = vunpack.c.l.s8.bf16 %v1058
        %v3227 = vunpack.c.h.s8.bf16 %v1055
        %v3228 = vunpack.c.h.s8.bf16 %v1056
        %v3229 = vunpack.c.h.s8.bf16 %v1057
        %v3230 = vunpack.c.h.s8.bf16 %v1058
        %v3231 = vunpack.c.l.s8.bf16 %v1059
        %v3232 = vunpack.c.l.s8.bf16 %v1060
        %v3233 = vunpack.c.l.s8.bf16 %v1061
        %v3234 = vunpack.c.l.s8.bf16 %v1062
        %v3235 = vunpack.c.h.s8.bf16 %v1059
        %v3236 = vunpack.c.h.s8.bf16 %v1060
        %v3237 = vunpack.c.h.s8.bf16 %v1061
        %v3238 = vunpack.c.h.s8.bf16 %v1062
        %v3239 = vunpack.c.l.s8.bf16 %v1063
        %v3240 = vunpack.c.l.s8.bf16 %v1064
        %v3241 = vunpack.c.l.s8.bf16 %v1065
        %v3242 = vunpack.c.l.s8.bf16 %v1066
        %v3243 = vunpack.c.h.s8.bf16 %v1063
        %v3244 = vunpack.c.h.s8.bf16 %v1064
        %v3245 = vunpack.c.h.s8.bf16 %v1065
        %v3246 = vunpack.c.h.s8.bf16 %v1066
        %v3247 = vunpack.c.l.s8.bf16 %v1067
        %v3248 = vunpack.c.l.s8.bf16 %v1068
        %v3249 = vunpack.c.l.s8.bf16 %v1069
        %v3250 = vunpack.c.l.s8.bf16 %v1070
        %v3251 = vunpack.c.h.s8.bf16 %v1067
        %v3252 = vunpack.c.h.s8.bf16 %v1068
        %v3253 = vunpack.c.h.s8.bf16 %v1069
        %v3254 = vunpack.c.h.s8.bf16 %v1070
        %v3255 = vunpack.c.l.s8.bf16 %v1071
        %v3256 = vunpack.c.l.s8.bf16 %v1072
        %v3257 = vunpack.c.l.s8.bf16 %v1073
        %v3258 = vunpack.c.l.s8.bf16 %v1074
        %v3259 = vunpack.c.h.s8.bf16 %v1071
        %v3260 = vunpack.c.h.s8.bf16 %v1072
        %v3261 = vunpack.c.h.s8.bf16 %v1073
        %v3262 = vunpack.c.h.s8.bf16 %v1074
        %v3263 = vunpack.c.l.s8.bf16 %v1075
        %v3264 = vunpack.c.l.s8.bf16 %v1076
        %v3265 = vunpack.c.l.s8.bf16 %v1077
        %v3266 = vunpack.c.l.s8.bf16 %v1078
        %v3267 = vunpack.c.h.s8.bf16 %v1075
        %v3268 = vunpack.c.h.s8.bf16 %v1076
        %v3269 = vunpack.c.h.s8.bf16 %v1077
        %v3270 = vunpack.c.h.s8.bf16 %v1078
        %v3271 = vunpack.c.l.s8.bf16 %v1079
        %v3272 = vunpack.c.l.s8.bf16 %v1080
        %v3273 = vunpack.c.l.s8.bf16 %v1081
        %v3274 = vunpack.c.l.s8.bf16 %v1082
        %v3275 = vunpack.c.h.s8.bf16 %v1079
        %v3276 = vunpack.c.h.s8.bf16 %v1080
        %v3277 = vunpack.c.h.s8.bf16 %v1081
        %v3278 = vunpack.c.h.s8.bf16 %v1082
        %v3279 = vunpack.c.l.s8.bf16 %v1083
        %v3280 = vunpack.c.l.s8.bf16 %v1084
        %v3281 = vunpack.c.l.s8.bf16 %v1085
        %v3282 = vunpack.c.l.s8.bf16 %v1086
        %v3283 = vunpack.c.h.s8.bf16 %v1083
        %v3284 = vunpack.c.h.s8.bf16 %v1084
        %v3285 = vunpack.c.h.s8.bf16 %v1085
        %v3286 = vunpack.c.h.s8.bf16 %v1086
        %v3287 = vunpack.c.l.s8.bf16 %v1087
        %v3288 = vunpack.c.l.s8.bf16 %v1088
        %v3289 = vunpack.c.l.s8.bf16 %v1089
        %v3290 = vunpack.c.l.s8.bf16 %v1090
        %v3291 = vunpack.c.h.s8.bf16 %v1087
        %v3292 = vunpack.c.h.s8.bf16 %v1088
        %v3293 = vunpack.c.h.s8.bf16 %v1089
        %v3294 = vunpack.c.h.s8.bf16 %v1090
        %v3295 = vunpack.c.l.s8.bf16 %v1091
        %v3296 = vunpack.c.l.s8.bf16 %v1092
        %v3297 = vunpack.c.l.s8.bf16 %v1093
        %v3298 = vunpack.c.l.s8.bf16 %v1094
        %v3299 = vunpack.c.h.s8.bf16 %v1091
        %v3300 = vunpack.c.h.s8.bf16 %v1092
        %v3301 = vunpack.c.h.s8.bf16 %v1093
        %v3302 = vunpack.c.h.s8.bf16 %v1094
        %v3303 = vunpack.c.l.s8.bf16 %v1095
        %v3304 = vunpack.c.l.s8.bf16 %v1096
        %v3305 = vunpack.c.l.s8.bf16 %v1097
        %v3306 = vunpack.c.l.s8.bf16 %v1098
        %v3307 = vunpack.c.h.s8.bf16 %v1095
        %v3308 = vunpack.c.h.s8.bf16 %v1096
        %v3309 = vunpack.c.h.s8.bf16 %v1097
        %v3310 = vunpack.c.h.s8.bf16 %v1098
        %v3311 = vunpack.c.l.s8.bf16 %v1099
        %v3312 = vunpack.c.l.s8.bf16 %v1100
        %v3313 = vunpack.c.l.s8.bf16 %v1101
        %v3314 = vunpack.c.l.s8.bf16 %v1102
        %v3315 = vunpack.c.h.s8.bf16 %v1099
        %v3316 = vunpack.c.h.s8.bf16 %v1100
        %v3317 = vunpack.c.h.s8.bf16 %v1101
        %v3318 = vunpack.c.h.s8.bf16 %v1102
        %v3319 = vunpack.c.l.s8.bf16 %v1103
        %v3320 = vunpack.c.l.s8.bf16 %v1104
        %v3321 = vunpack.c.l.s8.bf16 %v1105
        %v3322 = vunpack.c.l.s8.bf16 %v1106
        %v3323 = vunpack.c.h.s8.bf16 %v1103
        %v3324 = vunpack.c.h.s8.bf16 %v1104
        %v3325 = vunpack.c.h.s8.bf16 %v1105
        %v3326 = vunpack.c.h.s8.bf16 %v1106
        %v3327 = vunpack.c.l.s8.bf16 %v1107
        %v3328 = vunpack.c.l.s8.bf16 %v1108
        %v3329 = vunpack.c.l.s8.bf16 %v1109
        %v3330 = vunpack.c.l.s8.bf16 %v1110
        %v3331 = vunpack.c.h.s8.bf16 %v1107
        %v3332 = vunpack.c.h.s8.bf16 %v1108
        %v3333 = vunpack.c.h.s8.bf16 %v1109
        %v3334 = vunpack.c.h.s8.bf16 %v1110
        %v3335 = vunpack.c.l.s8.bf16 %v1111
        %v3336 = vunpack.c.l.s8.bf16 %v1112
        %v3337 = vunpack.c.l.s8.bf16 %v1113
        %v3338 = vunpack.c.l.s8.bf16 %v1114
        %v3339 = vunpack.c.h.s8.bf16 %v1111
        %v3340 = vunpack.c.h.s8.bf16 %v1112
        %v3341 = vunpack.c.h.s8.bf16 %v1113
        %v3342 = vunpack.c.h.s8.bf16 %v1114
        %v3343 = vunpack.c.l.s8.bf16 %v1115
        %v3344 = vunpack.c.l.s8.bf16 %v1116
        %v3345 = vunpack.c.l.s8.bf16 %v1117
        %v3346 = vunpack.c.l.s8.bf16 %v1118
        %v3347 = vunpack.c.h.s8.bf16 %v1115
        %v3348 = vunpack.c.h.s8.bf16 %v1116
        %v3349 = vunpack.c.h.s8.bf16 %v1117
        %v3350 = vunpack.c.h.s8.bf16 %v1118
        %v3351 = vunpack.c.l.s8.bf16 %v1119
        %v3352 = vunpack.c.l.s8.bf16 %v1120
        %v3353 = vunpack.c.l.s8.bf16 %v1121
        %v3354 = vunpack.c.l.s8.bf16 %v1122
        %v3355 = vunpack.c.h.s8.bf16 %v1119
        %v3356 = vunpack.c.h.s8.bf16 %v1120
        %v3357 = vunpack.c.h.s8.bf16 %v1121
        %v3358 = vunpack.c.h.s8.bf16 %v1122
        %v3359 = vunpack.c.l.s8.bf16 %v1123
        %v3360 = vunpack.c.l.s8.bf16 %v1124
        %v3361 = vunpack.c.l.s8.bf16 %v1125
        %v3362 = vunpack.c.l.s8.bf16 %v1126
        %v3363 = vunpack.c.h.s8.bf16 %v1123
        %v3364 = vunpack.c.h.s8.bf16 %v1124
        %v3365 = vunpack.c.h.s8.bf16 %v1125
        %v3366 = vunpack.c.h.s8.bf16 %v1126
        %v3367 = vunpack.c.l.s8.bf16 %v1127
        %v3368 = vunpack.c.l.s8.bf16 %v1128
        %v3369 = vunpack.c.l.s8.bf16 %v1129
        %v3370 = vunpack.c.l.s8.bf16 %v1130
        %v3371 = vunpack.c.h.s8.bf16 %v1127
        %v3372 = vunpack.c.h.s8.bf16 %v1128
        %v3373 = vunpack.c.h.s8.bf16 %v1129
        %v3374 = vunpack.c.h.s8.bf16 %v1130
        %v3375 = vunpack.c.l.s8.bf16 %v1131
        %v3376 = vunpack.c.l.s8.bf16 %v1132
        %v3377 = vunpack.c.l.s8.bf16 %v1133
        %v3378 = vunpack.c.l.s8.bf16 %v1134
        %v3379 = vunpack.c.h.s8.bf16 %v1131
        %v3380 = vunpack.c.h.s8.bf16 %v1132
        %v3381 = vunpack.c.h.s8.bf16 %v1133
        %v3382 = vunpack.c.h.s8.bf16 %v1134
        %v3383 = vunpack.c.l.s8.bf16 %v1135
        %v3384 = vunpack.c.l.s8.bf16 %v1136
        %v3385 = vunpack.c.l.s8.bf16 %v1137
        %v3386 = vunpack.c.l.s8.bf16 %v1138
        %v3387 = vunpack.c.h.s8.bf16 %v1135
        %v3388 = vunpack.c.h.s8.bf16 %v1136
        %v3389 = vunpack.c.h.s8.bf16 %v1137
        %v3390 = vunpack.c.h.s8.bf16 %v1138
        %v3391 = vunpack.c.l.s8.bf16 %v1139
        %v3392 = vunpack.c.l.s8.bf16 %v1140
        %v3393 = vunpack.c.l.s8.bf16 %v1141
        %v3394 = vunpack.c.l.s8.bf16 %v1142
        %v3395 = vunpack.c.h.s8.bf16 %v1139
        %v3396 = vunpack.c.h.s8.bf16 %v1140
        %v3397 = vunpack.c.h.s8.bf16 %v1141
        %v3398 = vunpack.c.h.s8.bf16 %v1142
        %v3399 = vunpack.c.l.s8.bf16 %v1143
        %v3400 = vunpack.c.l.s8.bf16 %v1144
        %v3401 = vunpack.c.l.s8.bf16 %v1145
        %v3402 = vunpack.c.l.s8.bf16 %v1146
        %v3403 = vunpack.c.h.s8.bf16 %v1143
        %v3404 = vunpack.c.h.s8.bf16 %v1144
        %v3405 = vunpack.c.h.s8.bf16 %v1145
        %v3406 = vunpack.c.h.s8.bf16 %v1146
        %v3407 = vunpack.c.l.s8.bf16 %v1147
        %v3408 = vunpack.c.l.s8.bf16 %v1148
        %v3409 = vunpack.c.l.s8.bf16 %v1149
        %v3410 = vunpack.c.l.s8.bf16 %v1150
        %v3411 = vunpack.c.h.s8.bf16 %v1147
        %v3412 = vunpack.c.h.s8.bf16 %v1148
        %v3413 = vunpack.c.h.s8.bf16 %v1149
        %v3414 = vunpack.c.h.s8.bf16 %v1150
        %v3415 = vunpack.c.l.s8.bf16 %v1151
        %v3416 = vunpack.c.l.s8.bf16 %v1152
        %v3417 = vunpack.c.l.s8.bf16 %v1153
        %v3418 = vunpack.c.l.s8.bf16 %v1154
        %v3419 = vunpack.c.h.s8.bf16 %v1151
        %v3420 = vunpack.c.h.s8.bf16 %v1152
        %v3421 = vunpack.c.h.s8.bf16 %v1153
        %v3422 = vunpack.c.h.s8.bf16 %v1154
        %v3423 = vunpack.c.l.s8.bf16 %v1155
        %v3424 = vunpack.c.l.s8.bf16 %v1156
        %v3425 = vunpack.c.l.s8.bf16 %v1157
        %v3426 = vunpack.c.l.s8.bf16 %v1158
        %v3427 = vunpack.c.h.s8.bf16 %v1155
        %v3428 = vunpack.c.h.s8.bf16 %v1156
        %v3429 = vunpack.c.h.s8.bf16 %v1157
        %v3430 = vunpack.c.h.s8.bf16 %v1158
        %v3431 = vunpack.c.l.s8.bf16 %v1159
        %v3432 = vunpack.c.l.s8.bf16 %v1160
        %v3433 = vunpack.c.l.s8.bf16 %v1161
        %v3434 = vunpack.c.l.s8.bf16 %v1162
        %v3435 = vunpack.c.h.s8.bf16 %v1159
        %v3436 = vunpack.c.h.s8.bf16 %v1160
        %v3437 = vunpack.c.h.s8.bf16 %v1161
        %v3438 = vunpack.c.h.s8.bf16 %v1162
        %v3439 = vunpack.c.l.s8.bf16 %v1163
        %v3440 = vunpack.c.l.s8.bf16 %v1164
        %v3441 = vunpack.c.l.s8.bf16 %v1165
        %v3442 = vunpack.c.l.s8.bf16 %v1166
        %v3443 = vunpack.c.h.s8.bf16 %v1163
        %v3444 = vunpack.c.h.s8.bf16 %v1164
        %v3445 = vunpack.c.h.s8.bf16 %v1165
        %v3446 = vunpack.c.h.s8.bf16 %v1166
        %v3447 = vunpack.c.l.s8.bf16 %v1167
        %v3448 = vunpack.c.l.s8.bf16 %v1168
        %v3449 = vunpack.c.l.s8.bf16 %v1169
        %v3450 = vunpack.c.l.s8.bf16 %v1170
        %v3451 = vunpack.c.h.s8.bf16 %v1167
        %v3452 = vunpack.c.h.s8.bf16 %v1168
        %v3453 = vunpack.c.h.s8.bf16 %v1169
        %v3454 = vunpack.c.h.s8.bf16 %v1170
        %v3455 = vunpack.c.l.s8.bf16 %v1171
        %v3456 = vunpack.c.l.s8.bf16 %v1172
        %v3457 = vunpack.c.l.s8.bf16 %v1173
        %v3458 = vunpack.c.l.s8.bf16 %v1174
        %v3459 = vunpack.c.h.s8.bf16 %v1171
        %v3460 = vunpack.c.h.s8.bf16 %v1172
        %v3461 = vunpack.c.h.s8.bf16 %v1173
        %v3462 = vunpack.c.h.s8.bf16 %v1174
        %v3463 = vunpack.c.l.s8.bf16 %v1175
        %v3464 = vunpack.c.l.s8.bf16 %v1176
        %v3465 = vunpack.c.l.s8.bf16 %v1177
        %v3466 = vunpack.c.l.s8.bf16 %v1178
        %v3467 = vunpack.c.h.s8.bf16 %v1175
        %v3468 = vunpack.c.h.s8.bf16 %v1176
        %v3469 = vunpack.c.h.s8.bf16 %v1177
        %v3470 = vunpack.c.h.s8.bf16 %v1178
        %v3471 = vunpack.c.l.s8.bf16 %v1179
        %v3472 = vunpack.c.l.s8.bf16 %v1180
        %v3473 = vunpack.c.l.s8.bf16 %v1181
        %v3474 = vunpack.c.l.s8.bf16 %v1182
        %v3475 = vunpack.c.h.s8.bf16 %v1179
        %v3476 = vunpack.c.h.s8.bf16 %v1180
        %v3477 = vunpack.c.h.s8.bf16 %v1181
        %v3478 = vunpack.c.h.s8.bf16 %v1182
        %v3479 = vunpack.c.l.s8.bf16 %v1183
        %v3480 = vunpack.c.l.s8.bf16 %v1184
        %v3481 = vunpack.c.l.s8.bf16 %v1185
        %v3482 = vunpack.c.l.s8.bf16 %v1186
        %v3483 = vunpack.c.h.s8.bf16 %v1183
        %v3484 = vunpack.c.h.s8.bf16 %v1184
        %v3485 = vunpack.c.h.s8.bf16 %v1185
        %v3486 = vunpack.c.h.s8.bf16 %v1186
        %v3487 = vunpack.c.l.s8.bf16 %v1187
        %v3488 = vunpack.c.l.s8.bf16 %v1188
        %v3489 = vunpack.c.l.s8.bf16 %v1189
        %v3490 = vunpack.c.l.s8.bf16 %v1190
        %v3491 = vunpack.c.h.s8.bf16 %v1187
        %v3492 = vunpack.c.h.s8.bf16 %v1188
        %v3493 = vunpack.c.h.s8.bf16 %v1189
        %v3494 = vunpack.c.h.s8.bf16 %v1190
        %v3495 = vunpack.c.l.s8.bf16 %v1191
        %v3496 = vunpack.c.l.s8.bf16 %v1192
        %v3497 = vunpack.c.l.s8.bf16 %v1193
        %v3498 = vunpack.c.l.s8.bf16 %v1194
        %v3499 = vunpack.c.h.s8.bf16 %v1191
        %v3500 = vunpack.c.h.s8.bf16 %v1192
        %v3501 = vunpack.c.h.s8.bf16 %v1193
        %v3502 = vunpack.c.h.s8.bf16 %v1194
        %v3503 = vunpack.c.l.s8.bf16 %v1195
        %v3504 = vunpack.c.l.s8.bf16 %v1196
        %v3505 = vunpack.c.l.s8.bf16 %v1197
        %v3506 = vunpack.c.l.s8.bf16 %v1198
        %v3507 = vunpack.c.h.s8.bf16 %v1195
        %v3508 = vunpack.c.h.s8.bf16 %v1196
        %v3509 = vunpack.c.h.s8.bf16 %v1197
        %v3510 = vunpack.c.h.s8.bf16 %v1198
        %v3511 = vunpack.c.l.s8.bf16 %v1199
        %v3512 = vunpack.c.l.s8.bf16 %v1200
        %v3513 = vunpack.c.l.s8.bf16 %v1201
        %v3514 = vunpack.c.l.s8.bf16 %v1202
        %v3515 = vunpack.c.h.s8.bf16 %v1199
        %v3516 = vunpack.c.h.s8.bf16 %v1200
        %v3517 = vunpack.c.h.s8.bf16 %v1201
        %v3518 = vunpack.c.h.s8.bf16 %v1202
        %v3519 = vunpack.c.l.s8.bf16 %v1203
        %v3520 = vunpack.c.l.s8.bf16 %v1204
        %v3521 = vunpack.c.l.s8.bf16 %v1205
        %v3522 = vunpack.c.l.s8.bf16 %v1206
        %v3523 = vunpack.c.h.s8.bf16 %v1203
        %v3524 = vunpack.c.h.s8.bf16 %v1204
        %v3525 = vunpack.c.h.s8.bf16 %v1205
        %v3526 = vunpack.c.h.s8.bf16 %v1206
        %v3527 = vunpack.c.l.s8.bf16 %v1207
        %v3528 = vunpack.c.l.s8.bf16 %v1208
        %v3529 = vunpack.c.l.s8.bf16 %v1209
        %v3530 = vunpack.c.l.s8.bf16 %v1210
        %v3531 = vunpack.c.h.s8.bf16 %v1207
        %v3532 = vunpack.c.h.s8.bf16 %v1208
        %v3533 = vunpack.c.h.s8.bf16 %v1209
        %v3534 = vunpack.c.h.s8.bf16 %v1210
        %v3535 = vunpack.c.l.s8.bf16 %v1211
        %v3536 = vunpack.c.l.s8.bf16 %v1212
        %v3537 = vunpack.c.l.s8.bf16 %v1213
        %v3538 = vunpack.c.l.s8.bf16 %v1214
        %v3539 = vunpack.c.h.s8.bf16 %v1211
        %v3540 = vunpack.c.h.s8.bf16 %v1212
        %v3541 = vunpack.c.h.s8.bf16 %v1213
        %v3542 = vunpack.c.h.s8.bf16 %v1214
        %v3543 = vunpack.c.l.s8.bf16 %v1215
        %v3544 = vunpack.c.l.s8.bf16 %v1216
        %v3545 = vunpack.c.l.s8.bf16 %v1217
        %v3546 = vunpack.c.l.s8.bf16 %v1218
        %v3547 = vunpack.c.h.s8.bf16 %v1215
        %v3548 = vunpack.c.h.s8.bf16 %v1216
        %v3549 = vunpack.c.h.s8.bf16 %v1217
        %v3550 = vunpack.c.h.s8.bf16 %v1218
        %v3551 = vunpack.c.l.s8.bf16 %v1219
        %v3552 = vunpack.c.l.s8.bf16 %v1220
        %v3553 = vunpack.c.l.s8.bf16 %v1221
        %v3554 = vunpack.c.l.s8.bf16 %v1222
        %v3555 = vunpack.c.h.s8.bf16 %v1219
        %v3556 = vunpack.c.h.s8.bf16 %v1220
        %v3557 = vunpack.c.h.s8.bf16 %v1221
        %v3558 = vunpack.c.h.s8.bf16 %v1222
        %v3559 = vunpack.c.l.s8.bf16 %v1223
        %v3560 = vunpack.c.l.s8.bf16 %v1224
        %v3561 = vunpack.c.l.s8.bf16 %v1225
        %v3562 = vunpack.c.l.s8.bf16 %v1226
        %v3563 = vunpack.c.h.s8.bf16 %v1223
        %v3564 = vunpack.c.h.s8.bf16 %v1224
        %v3565 = vunpack.c.h.s8.bf16 %v1225
        %v3566 = vunpack.c.h.s8.bf16 %v1226
        %v3567 = vunpack.c.l.s8.bf16 %v1227
        %v3568 = vunpack.c.l.s8.bf16 %v1228
        %v3569 = vunpack.c.l.s8.bf16 %v1229
        %v3570 = vunpack.c.l.s8.bf16 %v1230
        %v3571 = vunpack.c.h.s8.bf16 %v1227
        %v3572 = vunpack.c.h.s8.bf16 %v1228
        %v3573 = vunpack.c.h.s8.bf16 %v1229
        %v3574 = vunpack.c.h.s8.bf16 %v1230
        %v3575 = vunpack.c.l.s8.bf16 %v1231
        %v3576 = vunpack.c.l.s8.bf16 %v1232
        %v3577 = vunpack.c.l.s8.bf16 %v1233
        %v3578 = vunpack.c.l.s8.bf16 %v1234
        %v3579 = vunpack.c.h.s8.bf16 %v1231
        %v3580 = vunpack.c.h.s8.bf16 %v1232
        %v3581 = vunpack.c.h.s8.bf16 %v1233
        %v3582 = vunpack.c.h.s8.bf16 %v1234
        %v3583 = vunpack.c.l.s8.bf16 %v1235
        %v3584 = vunpack.c.l.s8.bf16 %v1236
        %v3585 = vunpack.c.l.s8.bf16 %v1237
        %v3586 = vunpack.c.l.s8.bf16 %v1238
        %v3587 = vunpack.c.h.s8.bf16 %v1235
        %v3588 = vunpack.c.h.s8.bf16 %v1236
        %v3589 = vunpack.c.h.s8.bf16 %v1237
        %v3590 = vunpack.c.h.s8.bf16 %v1238
        %v3591 = vunpack.c.l.s8.bf16 %v1239
        %v3592 = vunpack.c.l.s8.bf16 %v1240
        %v3593 = vunpack.c.l.s8.bf16 %v1241
        %v3594 = vunpack.c.l.s8.bf16 %v1242
        %v3595 = vunpack.c.h.s8.bf16 %v1239
        %v3596 = vunpack.c.h.s8.bf16 %v1240
        %v3597 = vunpack.c.h.s8.bf16 %v1241
        %v3598 = vunpack.c.h.s8.bf16 %v1242
        %v3599 = vunpack.c.l.s8.bf16 %v1243
        %v3600 = vunpack.c.l.s8.bf16 %v1244
        %v3601 = vunpack.c.l.s8.bf16 %v1245
        %v3602 = vunpack.c.l.s8.bf16 %v1246
        %v3603 = vunpack.c.h.s8.bf16 %v1243
        %v3604 = vunpack.c.h.s8.bf16 %v1244
        %v3605 = vunpack.c.h.s8.bf16 %v1245
        %v3606 = vunpack.c.h.s8.bf16 %v1246
        %v3607 = vunpack.c.l.s8.bf16 %v1247
        %v3608 = vunpack.c.l.s8.bf16 %v1248
        %v3609 = vunpack.c.l.s8.bf16 %v1249
        %v3610 = vunpack.c.l.s8.bf16 %v1250
        %v3611 = vunpack.c.h.s8.bf16 %v1247
        %v3612 = vunpack.c.h.s8.bf16 %v1248
        %v3613 = vunpack.c.h.s8.bf16 %v1249
        %v3614 = vunpack.c.h.s8.bf16 %v1250
        %v3615 = vunpack.c.l.s8.bf16 %v1251
        %v3616 = vunpack.c.l.s8.bf16 %v1252
        %v3617 = vunpack.c.l.s8.bf16 %v1253
        %v3618 = vunpack.c.l.s8.bf16 %v1254
        %v3619 = vunpack.c.h.s8.bf16 %v1251
        %v3620 = vunpack.c.h.s8.bf16 %v1252
        %v3621 = vunpack.c.h.s8.bf16 %v1253
        %v3622 = vunpack.c.h.s8.bf16 %v1254
        %v3623 = vunpack.c.l.s8.bf16 %v1255
        %v3624 = vunpack.c.l.s8.bf16 %v1256
        %v3625 = vunpack.c.l.s8.bf16 %v1257
        %v3626 = vunpack.c.l.s8.bf16 %v1258
        %v3627 = vunpack.c.h.s8.bf16 %v1255
        %v3628 = vunpack.c.h.s8.bf16 %v1256
        %v3629 = vunpack.c.h.s8.bf16 %v1257
        %v3630 = vunpack.c.h.s8.bf16 %v1258
        %v3631 = vunpack.c.l.s8.bf16 %v1259
        %v3632 = vunpack.c.l.s8.bf16 %v1260
        %v3633 = vunpack.c.l.s8.bf16 %v1261
        %v3634 = vunpack.c.l.s8.bf16 %v1262
        %v3635 = vunpack.c.h.s8.bf16 %v1259
        %v3636 = vunpack.c.h.s8.bf16 %v1260
        %v3637 = vunpack.c.h.s8.bf16 %v1261
        %v3638 = vunpack.c.h.s8.bf16 %v1262
        %v3639 = vunpack.c.l.s8.bf16 %v1263
        %v3640 = vunpack.c.l.s8.bf16 %v1264
        %v3641 = vunpack.c.l.s8.bf16 %v1265
        %v3642 = vunpack.c.l.s8.bf16 %v1266
        %v3643 = vunpack.c.h.s8.bf16 %v1263
        %v3644 = vunpack.c.h.s8.bf16 %v1264
        %v3645 = vunpack.c.h.s8.bf16 %v1265
        %v3646 = vunpack.c.h.s8.bf16 %v1266
        %v3647 = vunpack.c.l.s8.bf16 %v1267
        %v3648 = vunpack.c.l.s8.bf16 %v1268
        %v3649 = vunpack.c.l.s8.bf16 %v1269
        %v3650 = vunpack.c.l.s8.bf16 %v1270
        %v3651 = vunpack.c.h.s8.bf16 %v1267
        %v3652 = vunpack.c.h.s8.bf16 %v1268
        %v3653 = vunpack.c.h.s8.bf16 %v1269
        %v3654 = vunpack.c.h.s8.bf16 %v1270
        %v3655 = vunpack.c.l.s8.bf16 %v1271
        %v3656 = vunpack.c.l.s8.bf16 %v1272
        %v3657 = vunpack.c.l.s8.bf16 %v1273
        %v3658 = vunpack.c.l.s8.bf16 %v1274
        %v3659 = vunpack.c.h.s8.bf16 %v1271
        %v3660 = vunpack.c.h.s8.bf16 %v1272
        %v3661 = vunpack.c.h.s8.bf16 %v1273
        %v3662 = vunpack.c.h.s8.bf16 %v1274
        %v3663 = vunpack.c.l.s8.bf16 %v1275
        %v3664 = vunpack.c.l.s8.bf16 %v1276
        %v3665 = vunpack.c.l.s8.bf16 %v1277
        %v3666 = vunpack.c.l.s8.bf16 %v1278
        %v3667 = vunpack.c.h.s8.bf16 %v1275
        %v3668 = vunpack.c.h.s8.bf16 %v1276
        %v3669 = vunpack.c.h.s8.bf16 %v1277
        %v3670 = vunpack.c.h.s8.bf16 %v1278
        %v3671 = vunpack.c.l.s8.bf16 %v1279
        %v3672 = vunpack.c.l.s8.bf16 %v1280
        %v3673 = vunpack.c.l.s8.bf16 %v1281
        %v3674 = vunpack.c.l.s8.bf16 %v1282
        %v3675 = vunpack.c.h.s8.bf16 %v1279
        %v3676 = vunpack.c.h.s8.bf16 %v1280
        %v3677 = vunpack.c.h.s8.bf16 %v1281
        %v3678 = vunpack.c.h.s8.bf16 %v1282
        %v3679 = vunpack.c.l.s8.bf16 %v1283
        %v3680 = vunpack.c.l.s8.bf16 %v1284
        %v3681 = vunpack.c.l.s8.bf16 %v1285
        %v3682 = vunpack.c.l.s8.bf16 %v1286
        %v3683 = vunpack.c.h.s8.bf16 %v1283
        %v3684 = vunpack.c.h.s8.bf16 %v1284
        %v3685 = vunpack.c.h.s8.bf16 %v1285
        %v3686 = vunpack.c.h.s8.bf16 %v1286
        %v3687 = vunpack.c.l.s8.bf16 %v1287
        %v3688 = vunpack.c.l.s8.bf16 %v1288
        %v3689 = vunpack.c.l.s8.bf16 %v1289
        %v3690 = vunpack.c.l.s8.bf16 %v1290
        %v3691 = vunpack.c.h.s8.bf16 %v1287
        %v3692 = vunpack.c.h.s8.bf16 %v1288
        %v3693 = vunpack.c.h.s8.bf16 %v1289
        %v3694 = vunpack.c.h.s8.bf16 %v1290
        %v3695 = vunpack.c.l.s8.bf16 %v1291
        %v3696 = vunpack.c.l.s8.bf16 %v1292
        %v3697 = vunpack.c.l.s8.bf16 %v1293
        %v3698 = vunpack.c.l.s8.bf16 %v1294
        %v3699 = vunpack.c.h.s8.bf16 %v1291
        %v3700 = vunpack.c.h.s8.bf16 %v1292
        %v3701 = vunpack.c.h.s8.bf16 %v1293
        %v3702 = vunpack.c.h.s8.bf16 %v1294
        %v3703 = vunpack.c.l.s8.bf16 %v1295
        %v3704 = vunpack.c.l.s8.bf16 %v1296
        %v3705 = vunpack.c.l.s8.bf16 %v1297
        %v3706 = vunpack.c.l.s8.bf16 %v1298
        %v3707 = vunpack.c.h.s8.bf16 %v1295
        %v3708 = vunpack.c.h.s8.bf16 %v1296
        %v3709 = vunpack.c.h.s8.bf16 %v1297
        %v3710 = vunpack.c.h.s8.bf16 %v1298
        %v3711 = vunpack.c.l.s8.bf16 %v1299
        %v3712 = vunpack.c.l.s8.bf16 %v1300
        %v3713 = vunpack.c.l.s8.bf16 %v1301
        %v3714 = vunpack.c.l.s8.bf16 %v1302
        %v3715 = vunpack.c.h.s8.bf16 %v1299
        %v3716 = vunpack.c.h.s8.bf16 %v1300
        %v3717 = vunpack.c.h.s8.bf16 %v1301
        %v3718 = vunpack.c.h.s8.bf16 %v1302
        %v3719 = vunpack.c.l.s8.bf16 %v1303
        %v3720 = vunpack.c.l.s8.bf16 %v1304
        %v3721 = vunpack.c.l.s8.bf16 %v1305
        %v3722 = vunpack.c.l.s8.bf16 %v1306
        %v3723 = vunpack.c.h.s8.bf16 %v1303
        %v3724 = vunpack.c.h.s8.bf16 %v1304
        %v3725 = vunpack.c.h.s8.bf16 %v1305
        %v3726 = vunpack.c.h.s8.bf16 %v1306
        %v3727 = vunpack.c.l.s8.bf16 %v1307
        %v3728 = vunpack.c.l.s8.bf16 %v1308
        %v3729 = vunpack.c.l.s8.bf16 %v1309
        %v3730 = vunpack.c.l.s8.bf16 %v1310
        %v3731 = vunpack.c.h.s8.bf16 %v1307
        %v3732 = vunpack.c.h.s8.bf16 %v1308
        %v3733 = vunpack.c.h.s8.bf16 %v1309
        %v3734 = vunpack.c.h.s8.bf16 %v1310
        %v3735 = vunpack.c.l.s8.bf16 %v1311
        %v3736 = vunpack.c.l.s8.bf16 %v1312
        %v3737 = vunpack.c.l.s8.bf16 %v1313
        %v3738 = vunpack.c.l.s8.bf16 %v1314
        %v3739 = vunpack.c.h.s8.bf16 %v1311
        %v3740 = vunpack.c.h.s8.bf16 %v1312
        %v3741 = vunpack.c.h.s8.bf16 %v1313
        %v3742 = vunpack.c.h.s8.bf16 %v1314
        %v3743 = vunpack.c.l.s8.bf16 %v1315
        %v3744 = vunpack.c.l.s8.bf16 %v1316
        %v3745 = vunpack.c.l.s8.bf16 %v1317
        %v3746 = vunpack.c.l.s8.bf16 %v1318
        %v3747 = vunpack.c.h.s8.bf16 %v1315
        %v3748 = vunpack.c.h.s8.bf16 %v1316
        %v3749 = vunpack.c.h.s8.bf16 %v1317
        %v3750 = vunpack.c.h.s8.bf16 %v1318
        %v3751 = vunpack.c.l.s8.bf16 %v1319
        %v3752 = vunpack.c.l.s8.bf16 %v1320
        %v3753 = vunpack.c.l.s8.bf16 %v1321
        %v3754 = vunpack.c.l.s8.bf16 %v1322
        %v3755 = vunpack.c.h.s8.bf16 %v1319
        %v3756 = vunpack.c.h.s8.bf16 %v1320
        %v3757 = vunpack.c.h.s8.bf16 %v1321
        %v3758 = vunpack.c.h.s8.bf16 %v1322
        %v3759 = vunpack.c.l.s8.bf16 %v1323
        %v3760 = vunpack.c.l.s8.bf16 %v1324
        %v3761 = vunpack.c.l.s8.bf16 %v1325
        %v3762 = vunpack.c.l.s8.bf16 %v1326
        %v3763 = vunpack.c.h.s8.bf16 %v1323
        %v3764 = vunpack.c.h.s8.bf16 %v1324
        %v3765 = vunpack.c.h.s8.bf16 %v1325
        %v3766 = vunpack.c.h.s8.bf16 %v1326
        %v3767 = vunpack.c.l.s8.bf16 %v1327
        %v3768 = vunpack.c.l.s8.bf16 %v1328
        %v3769 = vunpack.c.l.s8.bf16 %v1329
        %v3770 = vunpack.c.l.s8.bf16 %v1330
        %v3771 = vunpack.c.h.s8.bf16 %v1327
        %v3772 = vunpack.c.h.s8.bf16 %v1328
        %v3773 = vunpack.c.h.s8.bf16 %v1329
        %v3774 = vunpack.c.h.s8.bf16 %v1330
        %v3775 = vunpack.c.l.s8.bf16 %v1331
        %v3776 = vunpack.c.l.s8.bf16 %v1332
        %v3777 = vunpack.c.l.s8.bf16 %v1333
        %v3778 = vunpack.c.l.s8.bf16 %v1334
        %v3779 = vunpack.c.h.s8.bf16 %v1331
        %v3780 = vunpack.c.h.s8.bf16 %v1332
        %v3781 = vunpack.c.h.s8.bf16 %v1333
        %v3782 = vunpack.c.h.s8.bf16 %v1334
        %v3783 = vunpack.c.l.s8.bf16 %v1335
        %v3784 = vunpack.c.l.s8.bf16 %v1336
        %v3785 = vunpack.c.l.s8.bf16 %v1337
        %v3786 = vunpack.c.l.s8.bf16 %v1338
        %v3787 = vunpack.c.h.s8.bf16 %v1335
        %v3788 = vunpack.c.h.s8.bf16 %v1336
        %v3789 = vunpack.c.h.s8.bf16 %v1337
        %v3790 = vunpack.c.h.s8.bf16 %v1338
        %v3791 = vunpack.c.l.s8.bf16 %v1339
        %v3792 = vunpack.c.l.s8.bf16 %v1340
        %v3793 = vunpack.c.l.s8.bf16 %v1341
        %v3794 = vunpack.c.l.s8.bf16 %v1342
        %v3795 = vunpack.c.h.s8.bf16 %v1339
        %v3796 = vunpack.c.h.s8.bf16 %v1340
        %v3797 = vunpack.c.h.s8.bf16 %v1341
        %v3798 = vunpack.c.h.s8.bf16 %v1342
        %v3799 = vunpack.c.l.s8.bf16 %v1343
        %v3800 = vunpack.c.l.s8.bf16 %v1344
        %v3801 = vunpack.c.l.s8.bf16 %v1345
        %v3802 = vunpack.c.l.s8.bf16 %v1346
        %v3803 = vunpack.c.h.s8.bf16 %v1343
        %v3804 = vunpack.c.h.s8.bf16 %v1344
        %v3805 = vunpack.c.h.s8.bf16 %v1345
        %v3806 = vunpack.c.h.s8.bf16 %v1346
        %v3807 = vunpack.c.l.s8.bf16 %v1347
        %v3808 = vunpack.c.l.s8.bf16 %v1348
        %v3809 = vunpack.c.l.s8.bf16 %v1349
        %v3810 = vunpack.c.l.s8.bf16 %v1350
        %v3811 = vunpack.c.h.s8.bf16 %v1347
        %v3812 = vunpack.c.h.s8.bf16 %v1348
        %v3813 = vunpack.c.h.s8.bf16 %v1349
        %v3814 = vunpack.c.h.s8.bf16 %v1350
        %v3815 = vunpack.c.l.s8.bf16 %v1351
        %v3816 = vunpack.c.l.s8.bf16 %v1352
        %v3817 = vunpack.c.l.s8.bf16 %v1353
        %v3818 = vunpack.c.l.s8.bf16 %v1354
        %v3819 = vunpack.c.h.s8.bf16 %v1351
        %v3820 = vunpack.c.h.s8.bf16 %v1352
        %v3821 = vunpack.c.h.s8.bf16 %v1353
        %v3822 = vunpack.c.h.s8.bf16 %v1354
        %v3823 = vunpack.c.l.s8.bf16 %v1355
        %v3824 = vunpack.c.l.s8.bf16 %v1356
        %v3825 = vunpack.c.l.s8.bf16 %v1357
        %v3826 = vunpack.c.l.s8.bf16 %v1358
        %v3827 = vunpack.c.h.s8.bf16 %v1355
        %v3828 = vunpack.c.h.s8.bf16 %v1356
        %v3829 = vunpack.c.h.s8.bf16 %v1357
        %v3830 = vunpack.c.h.s8.bf16 %v1358
        %v3831 = vunpack.c.l.s8.bf16 %v1359
        %v3832 = vunpack.c.l.s8.bf16 %v1360
        %v3833 = vunpack.c.l.s8.bf16 %v1361
        %v3834 = vunpack.c.l.s8.bf16 %v1362
        %v3835 = vunpack.c.h.s8.bf16 %v1359
        %v3836 = vunpack.c.h.s8.bf16 %v1360
        %v3837 = vunpack.c.h.s8.bf16 %v1361
        %v3838 = vunpack.c.h.s8.bf16 %v1362
        %v3839 = vunpack.c.l.s8.bf16 %v1363
        %v3840 = vunpack.c.l.s8.bf16 %v1364
        %v3841 = vunpack.c.l.s8.bf16 %v1365
        %v3842 = vunpack.c.l.s8.bf16 %v1366
        %v3843 = vunpack.c.h.s8.bf16 %v1363
        %v3844 = vunpack.c.h.s8.bf16 %v1364
        %v3845 = vunpack.c.h.s8.bf16 %v1365
        %v3846 = vunpack.c.h.s8.bf16 %v1366
        %v3847 = vunpack.c.l.s8.bf16 %v1367
        %v3848 = vunpack.c.l.s8.bf16 %v1368
        %v3849 = vunpack.c.l.s8.bf16 %v1369
        %v3850 = vunpack.c.l.s8.bf16 %v1370
        %v3851 = vunpack.c.h.s8.bf16 %v1367
        %v3852 = vunpack.c.h.s8.bf16 %v1368
        %v3853 = vunpack.c.h.s8.bf16 %v1369
        %v3854 = vunpack.c.h.s8.bf16 %v1370
        %v3855 = vunpack.c.l.s8.bf16 %v1371
        %v3856 = vunpack.c.l.s8.bf16 %v1372
        %v3857 = vunpack.c.l.s8.bf16 %v1373
        %v3858 = vunpack.c.l.s8.bf16 %v1374
        %v3859 = vunpack.c.h.s8.bf16 %v1371
        %v3860 = vunpack.c.h.s8.bf16 %v1372
        %v3861 = vunpack.c.h.s8.bf16 %v1373
        %v3862 = vunpack.c.h.s8.bf16 %v1374
        %v3863 = vunpack.c.l.s8.bf16 %v1375
        %v3864 = vunpack.c.l.s8.bf16 %v1376
        %v3865 = vunpack.c.l.s8.bf16 %v1377
        %v3866 = vunpack.c.l.s8.bf16 %v1378
        %v3867 = vunpack.c.h.s8.bf16 %v1375
        %v3868 = vunpack.c.h.s8.bf16 %v1376
        %v3869 = vunpack.c.h.s8.bf16 %v1377
        %v3870 = vunpack.c.h.s8.bf16 %v1378
        %v3871 = vunpack.c.l.s8.bf16 %v1379
        %v3872 = vunpack.c.l.s8.bf16 %v1380
        %v3873 = vunpack.c.l.s8.bf16 %v1381
        %v3874 = vunpack.c.l.s8.bf16 %v1382
        %v3875 = vunpack.c.h.s8.bf16 %v1379
        %v3876 = vunpack.c.h.s8.bf16 %v1380
        %v3877 = vunpack.c.h.s8.bf16 %v1381
        %v3878 = vunpack.c.h.s8.bf16 %v1382
        %v3879 = vunpack.c.l.s8.bf16 %v1383
        %v3880 = vunpack.c.l.s8.bf16 %v1384
        %v3881 = vunpack.c.l.s8.bf16 %v1385
        %v3882 = vunpack.c.l.s8.bf16 %v1386
        %v3883 = vunpack.c.h.s8.bf16 %v1383
        %v3884 = vunpack.c.h.s8.bf16 %v1384
        %v3885 = vunpack.c.h.s8.bf16 %v1385
        %v3886 = vunpack.c.h.s8.bf16 %v1386
        %v3887 = vunpack.c.l.s8.bf16 %v1387
        %v3888 = vunpack.c.l.s8.bf16 %v1388
        %v3889 = vunpack.c.l.s8.bf16 %v1389
        %v3890 = vunpack.c.l.s8.bf16 %v1390
        %v3891 = vunpack.c.h.s8.bf16 %v1387
        %v3892 = vunpack.c.h.s8.bf16 %v1388
        %v3893 = vunpack.c.h.s8.bf16 %v1389
        %v3894 = vunpack.c.h.s8.bf16 %v1390
        %v3895 = vunpack.c.l.s8.bf16 %v1391
        %v3896 = vunpack.c.l.s8.bf16 %v1392
        %v3897 = vunpack.c.l.s8.bf16 %v1393
        %v3898 = vunpack.c.l.s8.bf16 %v1394
        %v3899 = vunpack.c.h.s8.bf16 %v1391
        %v3900 = vunpack.c.h.s8.bf16 %v1392
        %v3901 = vunpack.c.h.s8.bf16 %v1393
        %v3902 = vunpack.c.h.s8.bf16 %v1394
        %v3903 = vunpack.c.l.s8.bf16 %v1395
        %v3904 = vunpack.c.l.s8.bf16 %v1396
        %v3905 = vunpack.c.l.s8.bf16 %v1397
        %v3906 = vunpack.c.l.s8.bf16 %v1398
        %v3907 = vunpack.c.h.s8.bf16 %v1395
        %v3908 = vunpack.c.h.s8.bf16 %v1396
        %v3909 = vunpack.c.h.s8.bf16 %v1397
        %v3910 = vunpack.c.h.s8.bf16 %v1398
        %v3911 = vunpack.c.l.s8.bf16 %v1399
        %v3912 = vunpack.c.l.s8.bf16 %v1400
        %v3913 = vunpack.c.l.s8.bf16 %v1401
        %v3914 = vunpack.c.l.s8.bf16 %v1402
        %v3915 = vunpack.c.h.s8.bf16 %v1399
        %v3916 = vunpack.c.h.s8.bf16 %v1400
        %v3917 = vunpack.c.h.s8.bf16 %v1401
        %v3918 = vunpack.c.h.s8.bf16 %v1402
        %v3919 = vunpack.c.l.s8.bf16 %v1403
        %v3920 = vunpack.c.l.s8.bf16 %v1404
        %v3921 = vunpack.c.l.s8.bf16 %v1405
        %v3922 = vunpack.c.l.s8.bf16 %v1406
        %v3923 = vunpack.c.h.s8.bf16 %v1403
        %v3924 = vunpack.c.h.s8.bf16 %v1404
        %v3925 = vunpack.c.h.s8.bf16 %v1405
        %v3926 = vunpack.c.h.s8.bf16 %v1406
        %v3927 = vunpack.c.l.s8.bf16 %v1407
        %v3928 = vunpack.c.l.s8.bf16 %v1408
        %v3929 = vunpack.c.l.s8.bf16 %v1409
        %v3930 = vunpack.c.l.s8.bf16 %v1410
        %v3931 = vunpack.c.h.s8.bf16 %v1407
        %v3932 = vunpack.c.h.s8.bf16 %v1408
        %v3933 = vunpack.c.h.s8.bf16 %v1409
        %v3934 = vunpack.c.h.s8.bf16 %v1410
        %v3935 = vunpack.c.l.s8.bf16 %v1411
        %v3936 = vunpack.c.l.s8.bf16 %v1412
        %v3937 = vunpack.c.l.s8.bf16 %v1413
        %v3938 = vunpack.c.l.s8.bf16 %v1414
        %v3939 = vunpack.c.h.s8.bf16 %v1411
        %v3940 = vunpack.c.h.s8.bf16 %v1412
        %v3941 = vunpack.c.h.s8.bf16 %v1413
        %v3942 = vunpack.c.h.s8.bf16 %v1414
        %v3943 = vunpack.c.l.s8.bf16 %v1415
        %v3944 = vunpack.c.l.s8.bf16 %v1416
        %v3945 = vunpack.c.l.s8.bf16 %v1417
        %v3946 = vunpack.c.l.s8.bf16 %v1418
        %v3947 = vunpack.c.h.s8.bf16 %v1415
        %v3948 = vunpack.c.h.s8.bf16 %v1416
        %v3949 = vunpack.c.h.s8.bf16 %v1417
        %v3950 = vunpack.c.h.s8.bf16 %v1418
        %v3951 = vunpack.c.l.s8.bf16 %v1419
        %v3952 = vunpack.c.l.s8.bf16 %v1420
        %v3953 = vunpack.c.l.s8.bf16 %v1421
        %v3954 = vunpack.c.l.s8.bf16 %v1422
        %v3955 = vunpack.c.h.s8.bf16 %v1419
        %v3956 = vunpack.c.h.s8.bf16 %v1420
        %v3957 = vunpack.c.h.s8.bf16 %v1421
        %v3958 = vunpack.c.h.s8.bf16 %v1422
        %v3959 = vunpack.c.l.s8.bf16 %v1423
        %v3960 = vunpack.c.l.s8.bf16 %v1424
        %v3961 = vunpack.c.l.s8.bf16 %v1425
        %v3962 = vunpack.c.l.s8.bf16 %v1426
        %v3963 = vunpack.c.h.s8.bf16 %v1423
        %v3964 = vunpack.c.h.s8.bf16 %v1424
        %v3965 = vunpack.c.h.s8.bf16 %v1425
        %v3966 = vunpack.c.h.s8.bf16 %v1426
        %v3967 = vunpack.c.l.s8.bf16 %v1427
        %v3968 = vunpack.c.l.s8.bf16 %v1428
        %v3969 = vunpack.c.l.s8.bf16 %v1429
        %v3970 = vunpack.c.l.s8.bf16 %v1430
        %v3971 = vunpack.c.h.s8.bf16 %v1427
        %v3972 = vunpack.c.h.s8.bf16 %v1428
        %v3973 = vunpack.c.h.s8.bf16 %v1429
        %v3974 = vunpack.c.h.s8.bf16 %v1430
        %v3975 = vunpack.c.l.s8.bf16 %v1431
        %v3976 = vunpack.c.l.s8.bf16 %v1432
        %v3977 = vunpack.c.l.s8.bf16 %v1433
        %v3978 = vunpack.c.l.s8.bf16 %v1434
        %v3979 = vunpack.c.h.s8.bf16 %v1431
        %v3980 = vunpack.c.h.s8.bf16 %v1432
        %v3981 = vunpack.c.h.s8.bf16 %v1433
        %v3982 = vunpack.c.h.s8.bf16 %v1434
        %v3983 = vunpack.c.l.s8.bf16 %v1435
        %v3984 = vunpack.c.l.s8.bf16 %v1436
        %v3985 = vunpack.c.l.s8.bf16 %v1437
        %v3986 = vunpack.c.l.s8.bf16 %v1438
        %v3987 = vunpack.c.h.s8.bf16 %v1435
        %v3988 = vunpack.c.h.s8.bf16 %v1436
        %v3989 = vunpack.c.h.s8.bf16 %v1437
        %v3990 = vunpack.c.h.s8.bf16 %v1438
        %v3991 = vunpack.c.l.s8.bf16 %v1439
        %v3992 = vunpack.c.l.s8.bf16 %v1440
        %v3993 = vunpack.c.l.s8.bf16 %v1441
        %v3994 = vunpack.c.l.s8.bf16 %v1442
        %v3995 = vunpack.c.h.s8.bf16 %v1439
        %v3996 = vunpack.c.h.s8.bf16 %v1440
        %v3997 = vunpack.c.h.s8.bf16 %v1441
        %v3998 = vunpack.c.h.s8.bf16 %v1442
        %v3999 = vunpack.c.l.s8.bf16 %v1443
        %v4000 = vunpack.c.l.s8.bf16 %v1444
        %v4001 = vunpack.c.l.s8.bf16 %v1445
        %v4002 = vunpack.c.l.s8.bf16 %v1446
        %v4003 = vunpack.c.h.s8.bf16 %v1443
        %v4004 = vunpack.c.h.s8.bf16 %v1444
        %v4005 = vunpack.c.h.s8.bf16 %v1445
        %v4006 = vunpack.c.h.s8.bf16 %v1446
        %v4007 = vunpack.c.l.s8.bf16 %v1447
        %v4008 = vunpack.c.l.s8.bf16 %v1448
        %v4009 = vunpack.c.l.s8.bf16 %v1449
        %v4010 = vunpack.c.l.s8.bf16 %v1450
        %v4011 = vunpack.c.h.s8.bf16 %v1447
        %v4012 = vunpack.c.h.s8.bf16 %v1448
        %v4013 = vunpack.c.h.s8.bf16 %v1449
        %v4014 = vunpack.c.h.s8.bf16 %v1450
        %v4015 = vunpack.c.l.s8.bf16 %v1451
        %v4016 = vunpack.c.l.s8.bf16 %v1452
        %v4017 = vunpack.c.l.s8.bf16 %v1453
        %v4018 = vunpack.c.l.s8.bf16 %v1454
        %v4019 = vunpack.c.h.s8.bf16 %v1451
        %v4020 = vunpack.c.h.s8.bf16 %v1452
        %v4021 = vunpack.c.h.s8.bf16 %v1453
        %v4022 = vunpack.c.h.s8.bf16 %v1454
        %v4023 = vunpack.c.l.s8.bf16 %v1455
        %v4024 = vunpack.c.l.s8.bf16 %v1456
        %v4025 = vunpack.c.l.s8.bf16 %v1457
        %v4026 = vunpack.c.l.s8.bf16 %v1458
        %v4027 = vunpack.c.h.s8.bf16 %v1455
        %v4028 = vunpack.c.h.s8.bf16 %v1456
        %v4029 = vunpack.c.h.s8.bf16 %v1457
        %v4030 = vunpack.c.h.s8.bf16 %v1458
        %v4031 = vunpack.c.l.s8.bf16 %v1459
        %v4032 = vunpack.c.l.s8.bf16 %v1460
        %v4033 = vunpack.c.l.s8.bf16 %v1461
        %v4034 = vunpack.c.l.s8.bf16 %v1462
        %v4035 = vunpack.c.h.s8.bf16 %v1459
        %v4036 = vunpack.c.h.s8.bf16 %v1460
        %v4037 = vunpack.c.h.s8.bf16 %v1461
        %v4038 = vunpack.c.h.s8.bf16 %v1462
        %v4039 = vunpack.c.l.s8.bf16 %v1463
        %v4040 = vunpack.c.l.s8.bf16 %v1464
        %v4041 = vunpack.c.l.s8.bf16 %v1465
        %v4042 = vunpack.c.l.s8.bf16 %v1466
        %v4043 = vunpack.c.h.s8.bf16 %v1463
        %v4044 = vunpack.c.h.s8.bf16 %v1464
        %v4045 = vunpack.c.h.s8.bf16 %v1465
        %v4046 = vunpack.c.h.s8.bf16 %v1466
        %v4047 = vunpack.c.l.s8.bf16 %v1467
        %v4048 = vunpack.c.l.s8.bf16 %v1468
        %v4049 = vunpack.c.l.s8.bf16 %v1469
        %v4050 = vunpack.c.l.s8.bf16 %v1470
        %v4051 = vunpack.c.h.s8.bf16 %v1467
        %v4052 = vunpack.c.h.s8.bf16 %v1468
        %v4053 = vunpack.c.h.s8.bf16 %v1469
        %v4054 = vunpack.c.h.s8.bf16 %v1470
        %v4055 = vunpack.c.l.s8.bf16 %v1471
        %v4056 = vunpack.c.l.s8.bf16 %v1472
        %v4057 = vunpack.c.l.s8.bf16 %v1473
        %v4058 = vunpack.c.l.s8.bf16 %v1474
        %v4059 = vunpack.c.h.s8.bf16 %v1471
        %v4060 = vunpack.c.h.s8.bf16 %v1472
        %v4061 = vunpack.c.h.s8.bf16 %v1473
        %v4062 = vunpack.c.h.s8.bf16 %v1474
        %v4063 = vunpack.c.l.s8.bf16 %v1475
        %v4064 = vunpack.c.l.s8.bf16 %v1476
        %v4065 = vunpack.c.l.s8.bf16 %v1477
        %v4066 = vunpack.c.l.s8.bf16 %v1478
        %v4067 = vunpack.c.h.s8.bf16 %v1475
        %v4068 = vunpack.c.h.s8.bf16 %v1476
        %v4069 = vunpack.c.h.s8.bf16 %v1477
        %v4070 = vunpack.c.h.s8.bf16 %v1478
        %v4071 = vunpack.c.l.s8.bf16 %v1479
        %v4072 = vunpack.c.l.s8.bf16 %v1480
        %v4073 = vunpack.c.l.s8.bf16 %v1481
        %v4074 = vunpack.c.l.s8.bf16 %v1482
        %v4075 = vunpack.c.h.s8.bf16 %v1479
        %v4076 = vunpack.c.h.s8.bf16 %v1480
        %v4077 = vunpack.c.h.s8.bf16 %v1481
        %v4078 = vunpack.c.h.s8.bf16 %v1482
        %v4079 = vunpack.c.l.s8.bf16 %v1483
        %v4080 = vunpack.c.l.s8.bf16 %v1484
        %v4081 = vunpack.c.l.s8.bf16 %v1485
        %v4082 = vunpack.c.l.s8.bf16 %v1486
        %v4083 = vunpack.c.h.s8.bf16 %v1483
        %v4084 = vunpack.c.h.s8.bf16 %v1484
        %v4085 = vunpack.c.h.s8.bf16 %v1485
        %v4086 = vunpack.c.h.s8.bf16 %v1486
        %v4087 = vunpack.c.l.s8.bf16 %v1487
        %v4088 = vunpack.c.l.s8.bf16 %v1488
        %v4089 = vunpack.c.l.s8.bf16 %v1489
        %v4090 = vunpack.c.l.s8.bf16 %v1490
        %v4091 = vunpack.c.h.s8.bf16 %v1487
        %v4092 = vunpack.c.h.s8.bf16 %v1488
        %v4093 = vunpack.c.h.s8.bf16 %v1489
        %v4094 = vunpack.c.h.s8.bf16 %v1490
        %v4095 = vunpack.c.l.s8.bf16 %v1491
        %v4096 = vunpack.c.l.s8.bf16 %v1492
        %v4097 = vunpack.c.l.s8.bf16 %v1493
        %v4098 = vunpack.c.l.s8.bf16 %v1494
        %v4099 = vunpack.c.h.s8.bf16 %v1491
        %v4100 = vunpack.c.h.s8.bf16 %v1492
        %v4101 = vunpack.c.h.s8.bf16 %v1493
        %v4102 = vunpack.c.h.s8.bf16 %v1494
        %v4103 = vunpack.c.l.s8.bf16 %v1495
        %v4104 = vunpack.c.l.s8.bf16 %v1496
        %v4105 = vunpack.c.l.s8.bf16 %v1497
        %v4106 = vunpack.c.l.s8.bf16 %v1498
        %v4107 = vunpack.c.h.s8.bf16 %v1495
        %v4108 = vunpack.c.h.s8.bf16 %v1496
        %v4109 = vunpack.c.h.s8.bf16 %v1497
        %v4110 = vunpack.c.h.s8.bf16 %v1498
        %v4111 = vunpack.c.l.s8.bf16 %v1499
        %v4112 = vunpack.c.l.s8.bf16 %v1500
        %v4113 = vunpack.c.l.s8.bf16 %v1501
        %v4114 = vunpack.c.l.s8.bf16 %v1502
        %v4115 = vunpack.c.h.s8.bf16 %v1499
        %v4116 = vunpack.c.h.s8.bf16 %v1500
        %v4117 = vunpack.c.h.s8.bf16 %v1501
        %v4118 = vunpack.c.h.s8.bf16 %v1502
        %v4119 = vunpack.c.l.s8.bf16 %v1503
        %v4120 = vunpack.c.l.s8.bf16 %v1504
        %v4121 = vunpack.c.l.s8.bf16 %v1505
        %v4122 = vunpack.c.l.s8.bf16 %v1506
        %v4123 = vunpack.c.h.s8.bf16 %v1503
        %v4124 = vunpack.c.h.s8.bf16 %v1504
        %v4125 = vunpack.c.h.s8.bf16 %v1505
        %v4126 = vunpack.c.h.s8.bf16 %v1506
        %v4127 = vunpack.c.l.s8.bf16 %v1507
        %v4128 = vunpack.c.l.s8.bf16 %v1508
        %v4129 = vunpack.c.l.s8.bf16 %v1509
        %v4130 = vunpack.c.l.s8.bf16 %v1510
        %v4131 = vunpack.c.h.s8.bf16 %v1507
        %v4132 = vunpack.c.h.s8.bf16 %v1508
        %v4133 = vunpack.c.h.s8.bf16 %v1509
        %v4134 = vunpack.c.h.s8.bf16 %v1510
        %v4135 = vunpack.c.l.s8.bf16 %v1511
        %v4136 = vunpack.c.l.s8.bf16 %v1512
        %v4137 = vunpack.c.l.s8.bf16 %v1513
        %v4138 = vunpack.c.l.s8.bf16 %v1514
        %v4139 = vunpack.c.h.s8.bf16 %v1511
        %v4140 = vunpack.c.h.s8.bf16 %v1512
        %v4141 = vunpack.c.h.s8.bf16 %v1513
        %v4142 = vunpack.c.h.s8.bf16 %v1514
        %v4143 = vunpack.c.l.s8.bf16 %v1515
        %v4144 = vunpack.c.l.s8.bf16 %v1516
        %v4145 = vunpack.c.l.s8.bf16 %v1517
        %v4146 = vunpack.c.l.s8.bf16 %v1518
        %v4147 = vunpack.c.h.s8.bf16 %v1515
        %v4148 = vunpack.c.h.s8.bf16 %v1516
        %v4149 = vunpack.c.h.s8.bf16 %v1517
        %v4150 = vunpack.c.h.s8.bf16 %v1518
        %v4151 = vunpack.c.l.s8.bf16 %v1519
        %v4152 = vunpack.c.l.s8.bf16 %v1520
        %v4153 = vunpack.c.l.s8.bf16 %v1521
        %v4154 = vunpack.c.l.s8.bf16 %v1522
        %v4155 = vunpack.c.h.s8.bf16 %v1519
        %v4156 = vunpack.c.h.s8.bf16 %v1520
        %v4157 = vunpack.c.h.s8.bf16 %v1521
        %v4158 = vunpack.c.h.s8.bf16 %v1522
        %v4159 = vunpack.c.l.s8.bf16 %v1523
        %v4160 = vunpack.c.l.s8.bf16 %v1524
        %v4161 = vunpack.c.l.s8.bf16 %v1525
        %v4162 = vunpack.c.l.s8.bf16 %v1526
        %v4163 = vunpack.c.h.s8.bf16 %v1523
        %v4164 = vunpack.c.h.s8.bf16 %v1524
        %v4165 = vunpack.c.h.s8.bf16 %v1525
        %v4166 = vunpack.c.h.s8.bf16 %v1526
        %v4167 = vunpack.c.l.s8.bf16 %v1527
        %v4168 = vunpack.c.l.s8.bf16 %v1528
        %v4169 = vunpack.c.l.s8.bf16 %v1529
        %v4170 = vunpack.c.l.s8.bf16 %v1530
        %v4171 = vunpack.c.h.s8.bf16 %v1527
        %v4172 = vunpack.c.h.s8.bf16 %v1528
        %v4173 = vunpack.c.h.s8.bf16 %v1529
        %v4174 = vunpack.c.h.s8.bf16 %v1530
        %v4175 = vunpack.c.l.s8.bf16 %v1531
        %v4176 = vunpack.c.l.s8.bf16 %v1532
        %v4177 = vunpack.c.l.s8.bf16 %v1533
        %v4178 = vunpack.c.l.s8.bf16 %v1534
        %v4179 = vunpack.c.h.s8.bf16 %v1531
        %v4180 = vunpack.c.h.s8.bf16 %v1532
        %v4181 = vunpack.c.h.s8.bf16 %v1533
        %v4182 = vunpack.c.h.s8.bf16 %v1534
        %v4183 = vunpack.c.l.s8.bf16 %v1535
        %v4184 = vunpack.c.l.s8.bf16 %v1536
        %v4185 = vunpack.c.l.s8.bf16 %v1537
        %v4186 = vunpack.c.l.s8.bf16 %v1538
        %v4187 = vunpack.c.h.s8.bf16 %v1535
        %v4188 = vunpack.c.h.s8.bf16 %v1536
        %v4189 = vunpack.c.h.s8.bf16 %v1537
        %v4190 = vunpack.c.h.s8.bf16 %v1538
        %v4191 = vunpack.c.l.s8.bf16 %v1539
        %v4192 = vunpack.c.l.s8.bf16 %v1540
        %v4193 = vunpack.c.l.s8.bf16 %v1541
        %v4194 = vunpack.c.l.s8.bf16 %v1542
        %v4195 = vunpack.c.h.s8.bf16 %v1539
        %v4196 = vunpack.c.h.s8.bf16 %v1540
        %v4197 = vunpack.c.h.s8.bf16 %v1541
        %v4198 = vunpack.c.h.s8.bf16 %v1542
        %v4199 = vunpack.c.l.s8.bf16 %v1543
        %v4200 = vunpack.c.l.s8.bf16 %v1544
        %v4201 = vunpack.c.l.s8.bf16 %v1545
        %v4202 = vunpack.c.l.s8.bf16 %v1546
        %v4203 = vunpack.c.h.s8.bf16 %v1543
        %v4204 = vunpack.c.h.s8.bf16 %v1544
        %v4205 = vunpack.c.h.s8.bf16 %v1545
        %v4206 = vunpack.c.h.s8.bf16 %v1546
        %v4207 = vunpack.c.l.s8.bf16 %v1547
        %v4208 = vunpack.c.l.s8.bf16 %v1548
        %v4209 = vunpack.c.l.s8.bf16 %v1549
        %v4210 = vunpack.c.l.s8.bf16 %v1550
        %v4211 = vunpack.c.h.s8.bf16 %v1547
        %v4212 = vunpack.c.h.s8.bf16 %v1548
        %v4213 = vunpack.c.h.s8.bf16 %v1549
        %v4214 = vunpack.c.h.s8.bf16 %v1550
        %v4215 = vunpack.c.l.s8.bf16 %v1551
        %v4216 = vunpack.c.l.s8.bf16 %v1552
        %v4217 = vunpack.c.l.s8.bf16 %v1553
        %v4218 = vunpack.c.l.s8.bf16 %v1554
        %v4219 = vunpack.c.h.s8.bf16 %v1551
        %v4220 = vunpack.c.h.s8.bf16 %v1552
        %v4221 = vunpack.c.h.s8.bf16 %v1553
        %v4222 = vunpack.c.h.s8.bf16 %v1554
        %v4223 = vunpack.c.l.s8.bf16 %v1555
        %v4224 = vunpack.c.l.s8.bf16 %v1556
        %v4225 = vunpack.c.l.s8.bf16 %v1557
        %v4226 = vunpack.c.l.s8.bf16 %v1558
        %v4227 = vunpack.c.h.s8.bf16 %v1555
        %v4228 = vunpack.c.h.s8.bf16 %v1556
        %v4229 = vunpack.c.h.s8.bf16 %v1557
        %v4230 = vunpack.c.h.s8.bf16 %v1558
        %v4231 = vunpack.c.l.s8.bf16 %v1559
        %v4232 = vunpack.c.l.s8.bf16 %v1560
        %v4233 = vunpack.c.l.s8.bf16 %v1561
        %v4234 = vunpack.c.l.s8.bf16 %v1562
        %v4235 = vunpack.c.h.s8.bf16 %v1559
        %v4236 = vunpack.c.h.s8.bf16 %v1560
        %v4237 = vunpack.c.h.s8.bf16 %v1561
        %v4238 = vunpack.c.h.s8.bf16 %v1562
        %v4239 = vunpack.c.l.s8.bf16 %v1563
        %v4240 = vunpack.c.l.s8.bf16 %v1564
        %v4241 = vunpack.c.l.s8.bf16 %v1565
        %v4242 = vunpack.c.l.s8.bf16 %v1566
        %v4243 = vunpack.c.h.s8.bf16 %v1563
        %v4244 = vunpack.c.h.s8.bf16 %v1564
        %v4245 = vunpack.c.h.s8.bf16 %v1565
        %v4246 = vunpack.c.h.s8.bf16 %v1566
        %v4247 = vunpack.c.l.s8.bf16 %v1567
        %v4248 = vunpack.c.l.s8.bf16 %v1568
        %v4249 = vunpack.c.l.s8.bf16 %v1569
        %v4250 = vunpack.c.l.s8.bf16 %v1570
        %v4251 = vunpack.c.h.s8.bf16 %v1567
        %v4252 = vunpack.c.h.s8.bf16 %v1568
        %v4253 = vunpack.c.h.s8.bf16 %v1569
        %v4254 = vunpack.c.h.s8.bf16 %v1570
        %v4255 = vunpack.c.l.s8.bf16 %v1571
        %v4256 = vunpack.c.l.s8.bf16 %v1572
        %v4257 = vunpack.c.l.s8.bf16 %v1573
        %v4258 = vunpack.c.l.s8.bf16 %v1574
        %v4259 = vunpack.c.h.s8.bf16 %v1571
        %v4260 = vunpack.c.h.s8.bf16 %v1572
        %v4261 = vunpack.c.h.s8.bf16 %v1573
        %v4262 = vunpack.c.h.s8.bf16 %v1574
        %v4263 = vunpack.c.l.s8.bf16 %v1575
        %v4264 = vunpack.c.l.s8.bf16 %v1576
        %v4265 = vunpack.c.l.s8.bf16 %v1577
        %v4266 = vunpack.c.l.s8.bf16 %v1578
        %v4267 = vunpack.c.h.s8.bf16 %v1575
        %v4268 = vunpack.c.h.s8.bf16 %v1576
        %v4269 = vunpack.c.h.s8.bf16 %v1577
        %v4270 = vunpack.c.h.s8.bf16 %v1578
        %v4271 = vunpack.c.l.s8.bf16 %v1579
        %v4272 = vunpack.c.l.s8.bf16 %v1580
        %v4273 = vunpack.c.l.s8.bf16 %v1581
        %v4274 = vunpack.c.l.s8.bf16 %v1582
        %v4275 = vunpack.c.h.s8.bf16 %v1579
        %v4276 = vunpack.c.h.s8.bf16 %v1580
        %v4277 = vunpack.c.h.s8.bf16 %v1581
        %v4278 = vunpack.c.h.s8.bf16 %v1582
        %v4279 = vunpack.c.l.s8.bf16 %v1583
        %v4280 = vunpack.c.l.s8.bf16 %v1584
        %v4281 = vunpack.c.l.s8.bf16 %v1585
        %v4282 = vunpack.c.l.s8.bf16 %v1586
        %v4283 = vunpack.c.h.s8.bf16 %v1583
        %v4284 = vunpack.c.h.s8.bf16 %v1584
        %v4285 = vunpack.c.h.s8.bf16 %v1585
        %v4286 = vunpack.c.h.s8.bf16 %v1586
        %v4287 = vunpack.c.l.s8.bf16 %v1587
        %v4288 = vunpack.c.l.s8.bf16 %v1588
        %v4289 = vunpack.c.l.s8.bf16 %v1589
        %v4290 = vunpack.c.l.s8.bf16 %v1590
        %v4291 = vunpack.c.h.s8.bf16 %v1587
        %v4292 = vunpack.c.h.s8.bf16 %v1588
        %v4293 = vunpack.c.h.s8.bf16 %v1589
        %v4294 = vunpack.c.h.s8.bf16 %v1590
        %v4295 = vunpack.c.l.s8.bf16 %v1591
        %v4296 = vunpack.c.l.s8.bf16 %v1592
        %v4297 = vunpack.c.l.s8.bf16 %v1593
        %v4298 = vunpack.c.l.s8.bf16 %v1594
        %v4299 = vunpack.c.h.s8.bf16 %v1591
        %v4300 = vunpack.c.h.s8.bf16 %v1592
        %v4301 = vunpack.c.h.s8.bf16 %v1593
        %v4302 = vunpack.c.h.s8.bf16 %v1594
        %v4303 = vunpack.c.l.s8.bf16 %v1595
        %v4304 = vunpack.c.l.s8.bf16 %v1596
        %v4305 = vunpack.c.l.s8.bf16 %v1597
        %v4306 = vunpack.c.l.s8.bf16 %v1598
        %v4307 = vunpack.c.h.s8.bf16 %v1595
        %v4308 = vunpack.c.h.s8.bf16 %v1596
        %v4309 = vunpack.c.h.s8.bf16 %v1597
        %v4310 = vunpack.c.h.s8.bf16 %v1598
        %v4311 = vunpack.c.l.s8.bf16 %v1599
        %v4312 = vunpack.c.l.s8.bf16 %v1600
        %v4313 = vunpack.c.l.s8.bf16 %v1601
        %v4314 = vunpack.c.l.s8.bf16 %v1602
        %v4315 = vunpack.c.h.s8.bf16 %v1599
        %v4316 = vunpack.c.h.s8.bf16 %v1600
        %v4317 = vunpack.c.h.s8.bf16 %v1601
        %v4318 = vunpack.c.h.s8.bf16 %v1602
        %v4319 = vunpack.c.l.s8.bf16 %v1603
        %v4320 = vunpack.c.l.s8.bf16 %v1604
        %v4321 = vunpack.c.l.s8.bf16 %v1605
        %v4322 = vunpack.c.l.s8.bf16 %v1606
        %v4323 = vunpack.c.h.s8.bf16 %v1603
        %v4324 = vunpack.c.h.s8.bf16 %v1604
        %v4325 = vunpack.c.h.s8.bf16 %v1605
        %v4326 = vunpack.c.h.s8.bf16 %v1606
        %v4327 = vunpack.c.l.s8.bf16 %v1607
        %v4328 = vunpack.c.l.s8.bf16 %v1608
        %v4329 = vunpack.c.l.s8.bf16 %v1609
        %v4330 = vunpack.c.l.s8.bf16 %v1610
        %v4331 = vunpack.c.h.s8.bf16 %v1607
        %v4332 = vunpack.c.h.s8.bf16 %v1608
        %v4333 = vunpack.c.h.s8.bf16 %v1609
        %v4334 = vunpack.c.h.s8.bf16 %v1610
        %v4335 = vunpack.c.l.s8.bf16 %v1611
        %v4336 = vunpack.c.l.s8.bf16 %v1612
        %v4337 = vunpack.c.l.s8.bf16 %v1613
        %v4338 = vunpack.c.l.s8.bf16 %v1614
        %v4339 = vunpack.c.h.s8.bf16 %v1611
        %v4340 = vunpack.c.h.s8.bf16 %v1612
        %v4341 = vunpack.c.h.s8.bf16 %v1613
        %v4342 = vunpack.c.h.s8.bf16 %v1614
        %v4343 = vunpack.c.l.s8.bf16 %v1615
        %v4344 = vunpack.c.l.s8.bf16 %v1616
        %v4345 = vunpack.c.l.s8.bf16 %v1617
        %v4346 = vunpack.c.l.s8.bf16 %v1618
        %v4347 = vunpack.c.h.s8.bf16 %v1615
        %v4348 = vunpack.c.h.s8.bf16 %v1616
        %v4349 = vunpack.c.h.s8.bf16 %v1617
        %v4350 = vunpack.c.h.s8.bf16 %v1618
        %v4351 = vunpack.c.l.s8.bf16 %v1619
        %v4352 = vunpack.c.l.s8.bf16 %v1620
        %v4353 = vunpack.c.l.s8.bf16 %v1621
        %v4354 = vunpack.c.l.s8.bf16 %v1622
        %v4355 = vunpack.c.h.s8.bf16 %v1619
        %v4356 = vunpack.c.h.s8.bf16 %v1620
        %v4357 = vunpack.c.h.s8.bf16 %v1621
        %v4358 = vunpack.c.h.s8.bf16 %v1622
        %v4359 = vunpack.c.l.s8.bf16 %v1623
        %v4360 = vunpack.c.l.s8.bf16 %v1624
        %v4361 = vunpack.c.l.s8.bf16 %v1625
        %v4362 = vunpack.c.l.s8.bf16 %v1626
        %v4363 = vunpack.c.h.s8.bf16 %v1623
        %v4364 = vunpack.c.h.s8.bf16 %v1624
        %v4365 = vunpack.c.h.s8.bf16 %v1625
        %v4366 = vunpack.c.h.s8.bf16 %v1626
        %v4367 = vunpack.c.l.s8.bf16 %v1627
        %v4368 = vunpack.c.l.s8.bf16 %v1628
        %v4369 = vunpack.c.l.s8.bf16 %v1629
        %v4370 = vunpack.c.l.s8.bf16 %v1630
        %v4371 = vunpack.c.h.s8.bf16 %v1627
        %v4372 = vunpack.c.h.s8.bf16 %v1628
        %v4373 = vunpack.c.h.s8.bf16 %v1629
        %v4374 = vunpack.c.h.s8.bf16 %v1630
        %v4375 = vunpack.c.l.s8.bf16 %v1631
        %v4376 = vunpack.c.l.s8.bf16 %v1632
        %v4377 = vunpack.c.l.s8.bf16 %v1633
        %v4378 = vunpack.c.l.s8.bf16 %v1634
        %v4379 = vunpack.c.h.s8.bf16 %v1631
        %v4380 = vunpack.c.h.s8.bf16 %v1632
        %v4381 = vunpack.c.h.s8.bf16 %v1633
        %v4382 = vunpack.c.h.s8.bf16 %v1634
        %v4383 = vunpack.c.l.s8.bf16 %v1635
        %v4384 = vunpack.c.l.s8.bf16 %v1636
        %v4385 = vunpack.c.l.s8.bf16 %v1637
        %v4386 = vunpack.c.l.s8.bf16 %v1638
        %v4387 = vunpack.c.h.s8.bf16 %v1635
        %v4388 = vunpack.c.h.s8.bf16 %v1636
        %v4389 = vunpack.c.h.s8.bf16 %v1637
        %v4390 = vunpack.c.h.s8.bf16 %v1638
        %v4391 = vunpack.c.l.s8.bf16 %v1639
        %v4392 = vunpack.c.l.s8.bf16 %v1640
        %v4393 = vunpack.c.l.s8.bf16 %v1641
        %v4394 = vunpack.c.l.s8.bf16 %v1642
        %v4395 = vunpack.c.h.s8.bf16 %v1639
        %v4396 = vunpack.c.h.s8.bf16 %v1640
        %v4397 = vunpack.c.h.s8.bf16 %v1641
        %v4398 = vunpack.c.h.s8.bf16 %v1642
        %v4399 = vunpack.c.l.s8.bf16 %v1643
        %v4400 = vunpack.c.l.s8.bf16 %v1644
        %v4401 = vunpack.c.l.s8.bf16 %v1645
        %v4402 = vunpack.c.l.s8.bf16 %v1646
        %v4403 = vunpack.c.h.s8.bf16 %v1643
        %v4404 = vunpack.c.h.s8.bf16 %v1644
        %v4405 = vunpack.c.h.s8.bf16 %v1645
        %v4406 = vunpack.c.h.s8.bf16 %v1646
        %v4407 = vunpack.c.l.s8.bf16 %v1647
        %v4408 = vunpack.c.l.s8.bf16 %v1648
        %v4409 = vunpack.c.l.s8.bf16 %v1649
        %v4410 = vunpack.c.l.s8.bf16 %v1650
        %v4411 = vunpack.c.h.s8.bf16 %v1647
        %v4412 = vunpack.c.h.s8.bf16 %v1648
        %v4413 = vunpack.c.h.s8.bf16 %v1649
        %v4414 = vunpack.c.h.s8.bf16 %v1650
        %v4415 = vunpack.c.l.s8.bf16 %v1651
        %v4416 = vunpack.c.l.s8.bf16 %v1652
        %v4417 = vunpack.c.l.s8.bf16 %v1653
        %v4418 = vunpack.c.l.s8.bf16 %v1654
        %v4419 = vunpack.c.h.s8.bf16 %v1651
        %v4420 = vunpack.c.h.s8.bf16 %v1652
        %v4421 = vunpack.c.h.s8.bf16 %v1653
        %v4422 = vunpack.c.h.s8.bf16 %v1654
        %v4423 = vunpack.c.l.s8.bf16 %v1655
        %v4424 = vunpack.c.l.s8.bf16 %v1656
        %v4425 = vunpack.c.l.s8.bf16 %v1657
        %v4426 = vunpack.c.l.s8.bf16 %v1658
        %v4427 = vunpack.c.h.s8.bf16 %v1655
        %v4428 = vunpack.c.h.s8.bf16 %v1656
        %v4429 = vunpack.c.h.s8.bf16 %v1657
        %v4430 = vunpack.c.h.s8.bf16 %v1658
        %v4431 = vunpack.c.l.s8.bf16 %v1659
        %v4432 = vunpack.c.l.s8.bf16 %v1660
        %v4433 = vunpack.c.l.s8.bf16 %v1661
        %v4434 = vunpack.c.l.s8.bf16 %v1662
        %v4435 = vunpack.c.h.s8.bf16 %v1659
        %v4436 = vunpack.c.h.s8.bf16 %v1660
        %v4437 = vunpack.c.h.s8.bf16 %v1661
        %v4438 = vunpack.c.h.s8.bf16 %v1662
        %v4439 = vunpack.c.l.s8.bf16 %v1663
        %v4440 = vunpack.c.l.s8.bf16 %v1664
        %v4441 = vunpack.c.l.s8.bf16 %v1665
        %v4442 = vunpack.c.l.s8.bf16 %v1666
        %v4443 = vunpack.c.h.s8.bf16 %v1663
        %v4444 = vunpack.c.h.s8.bf16 %v1664
        %v4445 = vunpack.c.h.s8.bf16 %v1665
        %v4446 = vunpack.c.h.s8.bf16 %v1666
        %v4447 = vunpack.c.l.s8.bf16 %v1667
        %v4448 = vunpack.c.l.s8.bf16 %v1668
        %v4449 = vunpack.c.l.s8.bf16 %v1669
        %v4450 = vunpack.c.l.s8.bf16 %v1670
        %v4451 = vunpack.c.h.s8.bf16 %v1667
        %v4452 = vunpack.c.h.s8.bf16 %v1668
        %v4453 = vunpack.c.h.s8.bf16 %v1669
        %v4454 = vunpack.c.h.s8.bf16 %v1670
        %v4455 = vunpack.c.l.s8.bf16 %v1671
        %v4456 = vunpack.c.l.s8.bf16 %v1672
        %v4457 = vunpack.c.l.s8.bf16 %v1673
        %v4458 = vunpack.c.l.s8.bf16 %v1674
        %v4459 = vunpack.c.h.s8.bf16 %v1671
        %v4460 = vunpack.c.h.s8.bf16 %v1672
        %v4461 = vunpack.c.h.s8.bf16 %v1673
        %v4462 = vunpack.c.h.s8.bf16 %v1674
        %v4463 = vunpack.c.l.s8.bf16 %v1675
        %v4464 = vunpack.c.l.s8.bf16 %v1676
        %v4465 = vunpack.c.l.s8.bf16 %v1677
        %v4466 = vunpack.c.l.s8.bf16 %v1678
        %v4467 = vunpack.c.h.s8.bf16 %v1675
        %v4468 = vunpack.c.h.s8.bf16 %v1676
        %v4469 = vunpack.c.h.s8.bf16 %v1677
        %v4470 = vunpack.c.h.s8.bf16 %v1678
        %v4471 = vunpack.c.l.s8.bf16 %v1679
        %v4472 = vunpack.c.l.s8.bf16 %v1680
        %v4473 = vunpack.c.l.s8.bf16 %v1681
        %v4474 = vunpack.c.l.s8.bf16 %v1682
        %v4475 = vunpack.c.h.s8.bf16 %v1679
        %v4476 = vunpack.c.h.s8.bf16 %v1680
        %v4477 = vunpack.c.h.s8.bf16 %v1681
        %v4478 = vunpack.c.h.s8.bf16 %v1682
        %v4479 = vunpack.c.l.s8.bf16 %v1683
        %v4480 = vunpack.c.l.s8.bf16 %v1684
        %v4481 = vunpack.c.l.s8.bf16 %v1685
        %v4482 = vunpack.c.l.s8.bf16 %v1686
        %v4483 = vunpack.c.h.s8.bf16 %v1683
        %v4484 = vunpack.c.h.s8.bf16 %v1684
        %v4485 = vunpack.c.h.s8.bf16 %v1685
        %v4486 = vunpack.c.h.s8.bf16 %v1686
        %v4487 = vunpack.c.l.s8.bf16 %v1687
        %v4488 = vunpack.c.l.s8.bf16 %v1688
        %v4489 = vunpack.c.l.s8.bf16 %v1689
        %v4490 = vunpack.c.l.s8.bf16 %v1690
        %v4491 = vunpack.c.h.s8.bf16 %v1687
        %v4492 = vunpack.c.h.s8.bf16 %v1688
        %v4493 = vunpack.c.h.s8.bf16 %v1689
        %v4494 = vunpack.c.h.s8.bf16 %v1690
        %v4495 = vunpack.c.l.s8.bf16 %v1691
        %v4496 = vunpack.c.l.s8.bf16 %v1692
        %v4497 = vunpack.c.l.s8.bf16 %v1693
        %v4498 = vunpack.c.l.s8.bf16 %v1694
        %v4499 = vunpack.c.h.s8.bf16 %v1691
        %v4500 = vunpack.c.h.s8.bf16 %v1692
        %v4501 = vunpack.c.h.s8.bf16 %v1693
        %v4502 = vunpack.c.h.s8.bf16 %v1694
        %v4503 = vunpack.c.l.s8.bf16 %v1695
        %v4504 = vunpack.c.l.s8.bf16 %v1696
        %v4505 = vunpack.c.l.s8.bf16 %v1697
        %v4506 = vunpack.c.l.s8.bf16 %v1698
        %v4507 = vunpack.c.h.s8.bf16 %v1695
        %v4508 = vunpack.c.h.s8.bf16 %v1696
        %v4509 = vunpack.c.h.s8.bf16 %v1697
        %v4510 = vunpack.c.h.s8.bf16 %v1698
        %v4511 = vunpack.c.l.s8.bf16 %v1699
        %v4512 = vunpack.c.l.s8.bf16 %v1700
        %v4513 = vunpack.c.l.s8.bf16 %v1701
        %v4514 = vunpack.c.l.s8.bf16 %v1702
        %v4515 = vunpack.c.h.s8.bf16 %v1699
        %v4516 = vunpack.c.h.s8.bf16 %v1700
        %v4517 = vunpack.c.h.s8.bf16 %v1701
        %v4518 = vunpack.c.h.s8.bf16 %v1702
        %v4519 = vunpack.c.l.s8.bf16 %v1703
        %v4520 = vunpack.c.l.s8.bf16 %v1704
        %v4521 = vunpack.c.l.s8.bf16 %v1705
        %v4522 = vunpack.c.l.s8.bf16 %v1706
        %v4523 = vunpack.c.h.s8.bf16 %v1703
        %v4524 = vunpack.c.h.s8.bf16 %v1704
        %v4525 = vunpack.c.h.s8.bf16 %v1705
        %v4526 = vunpack.c.h.s8.bf16 %v1706
        %v4527 = vunpack.c.l.s8.bf16 %v1707
        %v4528 = vunpack.c.l.s8.bf16 %v1708
        %v4529 = vunpack.c.l.s8.bf16 %v1709
        %v4530 = vunpack.c.l.s8.bf16 %v1710
        %v4531 = vunpack.c.h.s8.bf16 %v1707
        %v4532 = vunpack.c.h.s8.bf16 %v1708
        %v4533 = vunpack.c.h.s8.bf16 %v1709
        %v4534 = vunpack.c.h.s8.bf16 %v1710
        %v4535 = vunpack.c.l.s8.bf16 %v1711
        %v4536 = vunpack.c.l.s8.bf16 %v1712
        %v4537 = vunpack.c.l.s8.bf16 %v1713
        %v4538 = vunpack.c.l.s8.bf16 %v1714
        %v4539 = vunpack.c.h.s8.bf16 %v1711
        %v4540 = vunpack.c.h.s8.bf16 %v1712
        %v4541 = vunpack.c.h.s8.bf16 %v1713
        %v4542 = vunpack.c.h.s8.bf16 %v1714
        %v4543 = vunpack.c.l.s8.bf16 %v1715
        %v4544 = vunpack.c.l.s8.bf16 %v1716
        %v4545 = vunpack.c.l.s8.bf16 %v1717
        %v4546 = vunpack.c.l.s8.bf16 %v1718
        %v4547 = vunpack.c.h.s8.bf16 %v1715
        %v4548 = vunpack.c.h.s8.bf16 %v1716
        %v4549 = vunpack.c.h.s8.bf16 %v1717
        %v4550 = vunpack.c.h.s8.bf16 %v1718
        %v4551 = vunpack.c.l.s8.bf16 %v1719
        %v4552 = vunpack.c.l.s8.bf16 %v1720
        %v4553 = vunpack.c.l.s8.bf16 %v1721
        %v4554 = vunpack.c.l.s8.bf16 %v1722
        %v4555 = vunpack.c.h.s8.bf16 %v1719
        %v4556 = vunpack.c.h.s8.bf16 %v1720
        %v4557 = vunpack.c.h.s8.bf16 %v1721
        %v4558 = vunpack.c.h.s8.bf16 %v1722
        %v4559 = vunpack.c.l.s8.bf16 %v1723
        %v4560 = vunpack.c.l.s8.bf16 %v1724
        %v4561 = vunpack.c.l.s8.bf16 %v1725
        %v4562 = vunpack.c.l.s8.bf16 %v1726
        %v4563 = vunpack.c.h.s8.bf16 %v1723
        %v4564 = vunpack.c.h.s8.bf16 %v1724
        %v4565 = vunpack.c.h.s8.bf16 %v1725
        %v4566 = vunpack.c.h.s8.bf16 %v1726
        %v4567 = vunpack.c.l.s8.bf16 %v1727
        %v4568 = vunpack.c.l.s8.bf16 %v1728
        %v4569 = vunpack.c.l.s8.bf16 %v1729
        %v4570 = vunpack.c.l.s8.bf16 %v1730
        %v4571 = vunpack.c.h.s8.bf16 %v1727
        %v4572 = vunpack.c.h.s8.bf16 %v1728
        %v4573 = vunpack.c.h.s8.bf16 %v1729
        %v4574 = vunpack.c.h.s8.bf16 %v1730
        %v4575 = vunpack.c.l.s8.bf16 %v1731
        %v4576 = vunpack.c.l.s8.bf16 %v1732
        %v4577 = vunpack.c.l.s8.bf16 %v1733
        %v4578 = vunpack.c.l.s8.bf16 %v1734
        %v4579 = vunpack.c.h.s8.bf16 %v1731
        %v4580 = vunpack.c.h.s8.bf16 %v1732
        %v4581 = vunpack.c.h.s8.bf16 %v1733
        %v4582 = vunpack.c.h.s8.bf16 %v1734
        %v4583 = vunpack.c.l.s8.bf16 %v1735
        %v4584 = vunpack.c.l.s8.bf16 %v1736
        %v4585 = vunpack.c.l.s8.bf16 %v1737
        %v4586 = vunpack.c.l.s8.bf16 %v1738
        %v4587 = vunpack.c.h.s8.bf16 %v1735
        %v4588 = vunpack.c.h.s8.bf16 %v1736
        %v4589 = vunpack.c.h.s8.bf16 %v1737
        %v4590 = vunpack.c.h.s8.bf16 %v1738
        %v4591 = vunpack.c.l.s8.bf16 %v1739
        %v4592 = vunpack.c.l.s8.bf16 %v1740
        %v4593 = vunpack.c.l.s8.bf16 %v1741
        %v4594 = vunpack.c.l.s8.bf16 %v1742
        %v4595 = vunpack.c.h.s8.bf16 %v1739
        %v4596 = vunpack.c.h.s8.bf16 %v1740
        %v4597 = vunpack.c.h.s8.bf16 %v1741
        %v4598 = vunpack.c.h.s8.bf16 %v1742
        %v4599 = vunpack.c.l.s8.bf16 %v1743
        %v4600 = vunpack.c.l.s8.bf16 %v1744
        %v4601 = vunpack.c.l.s8.bf16 %v1745
        %v4602 = vunpack.c.l.s8.bf16 %v1746
        %v4603 = vunpack.c.h.s8.bf16 %v1743
        %v4604 = vunpack.c.h.s8.bf16 %v1744
        %v4605 = vunpack.c.h.s8.bf16 %v1745
        %v4606 = vunpack.c.h.s8.bf16 %v1746
        %v4607 = vunpack.c.l.s8.bf16 %v1747
        %v4608 = vunpack.c.l.s8.bf16 %v1748
        %v4609 = vunpack.c.l.s8.bf16 %v1749
        %v4610 = vunpack.c.l.s8.bf16 %v1750
        %v4611 = vunpack.c.h.s8.bf16 %v1747
        %v4612 = vunpack.c.h.s8.bf16 %v1748
        %v4613 = vunpack.c.h.s8.bf16 %v1749
        %v4614 = vunpack.c.h.s8.bf16 %v1750
        %v4615 = vunpack.c.l.s8.bf16 %v1751
        %v4616 = vunpack.c.l.s8.bf16 %v1752
        %v4617 = vunpack.c.l.s8.bf16 %v1753
        %v4618 = vunpack.c.l.s8.bf16 %v1754
        %v4619 = vunpack.c.h.s8.bf16 %v1751
        %v4620 = vunpack.c.h.s8.bf16 %v1752
        %v4621 = vunpack.c.h.s8.bf16 %v1753
        %v4622 = vunpack.c.h.s8.bf16 %v1754
        %v4623 = vunpack.c.l.s8.bf16 %v1755
        %v4624 = vunpack.c.l.s8.bf16 %v1756
        %v4625 = vunpack.c.l.s8.bf16 %v1757
        %v4626 = vunpack.c.l.s8.bf16 %v1758
        %v4627 = vunpack.c.h.s8.bf16 %v1755
        %v4628 = vunpack.c.h.s8.bf16 %v1756
        %v4629 = vunpack.c.h.s8.bf16 %v1757
        %v4630 = vunpack.c.h.s8.bf16 %v1758
        %v4631 = vunpack.c.l.s8.bf16 %v1759
        %v4632 = vunpack.c.l.s8.bf16 %v1760
        %v4633 = vunpack.c.l.s8.bf16 %v1761
        %v4634 = vunpack.c.l.s8.bf16 %v1762
        %v4635 = vunpack.c.h.s8.bf16 %v1759
        %v4636 = vunpack.c.h.s8.bf16 %v1760
        %v4637 = vunpack.c.h.s8.bf16 %v1761
        %v4638 = vunpack.c.h.s8.bf16 %v1762
        %v4639 = vunpack.c.l.s8.bf16 %v1763
        %v4640 = vunpack.c.l.s8.bf16 %v1764
        %v4641 = vunpack.c.l.s8.bf16 %v1765
        %v4642 = vunpack.c.l.s8.bf16 %v1766
        %v4643 = vunpack.c.h.s8.bf16 %v1763
        %v4644 = vunpack.c.h.s8.bf16 %v1764
        %v4645 = vunpack.c.h.s8.bf16 %v1765
        %v4646 = vunpack.c.h.s8.bf16 %v1766
        %v4647 = vunpack.c.l.s8.bf16 %v1767
        %v4648 = vunpack.c.l.s8.bf16 %v1768
        %v4649 = vunpack.c.l.s8.bf16 %v1769
        %v4650 = vunpack.c.l.s8.bf16 %v1770
        %v4651 = vunpack.c.h.s8.bf16 %v1767
        %v4652 = vunpack.c.h.s8.bf16 %v1768
        %v4653 = vunpack.c.h.s8.bf16 %v1769
        %v4654 = vunpack.c.h.s8.bf16 %v1770
        %v4655 = vunpack.c.l.s8.bf16 %v1771
        %v4656 = vunpack.c.l.s8.bf16 %v1772
        %v4657 = vunpack.c.l.s8.bf16 %v1773
        %v4658 = vunpack.c.l.s8.bf16 %v1774
        %v4659 = vunpack.c.h.s8.bf16 %v1771
        %v4660 = vunpack.c.h.s8.bf16 %v1772
        %v4661 = vunpack.c.h.s8.bf16 %v1773
        %v4662 = vunpack.c.h.s8.bf16 %v1774
        %v4663 = vunpack.c.l.s8.bf16 %v1775
        %v4664 = vunpack.c.l.s8.bf16 %v1776
        %v4665 = vunpack.c.l.s8.bf16 %v1777
        %v4666 = vunpack.c.l.s8.bf16 %v1778
        %v4667 = vunpack.c.h.s8.bf16 %v1775
        %v4668 = vunpack.c.h.s8.bf16 %v1776
        %v4669 = vunpack.c.h.s8.bf16 %v1777
        %v4670 = vunpack.c.h.s8.bf16 %v1778
        %v4671 = vunpack.c.l.s8.bf16 %v1779
        %v4672 = vunpack.c.l.s8.bf16 %v1780
        %v4673 = vunpack.c.l.s8.bf16 %v1781
        %v4674 = vunpack.c.l.s8.bf16 %v1782
        %v4675 = vunpack.c.h.s8.bf16 %v1779
        %v4676 = vunpack.c.h.s8.bf16 %v1780
        %v4677 = vunpack.c.h.s8.bf16 %v1781
        %v4678 = vunpack.c.h.s8.bf16 %v1782
        %v4679 = vunpack.c.l.s8.bf16 %v1783
        %v4680 = vunpack.c.l.s8.bf16 %v1784
        %v4681 = vunpack.c.l.s8.bf16 %v1785
        %v4682 = vunpack.c.l.s8.bf16 %v1786
        %v4683 = vunpack.c.h.s8.bf16 %v1783
        %v4684 = vunpack.c.h.s8.bf16 %v1784
        %v4685 = vunpack.c.h.s8.bf16 %v1785
        %v4686 = vunpack.c.h.s8.bf16 %v1786
        %v4687 = vunpack.c.l.s8.bf16 %v1787
        %v4688 = vunpack.c.l.s8.bf16 %v1788
        %v4689 = vunpack.c.l.s8.bf16 %v1789
        %v4690 = vunpack.c.l.s8.bf16 %v1790
        %v4691 = vunpack.c.h.s8.bf16 %v1787
        %v4692 = vunpack.c.h.s8.bf16 %v1788
        %v4693 = vunpack.c.h.s8.bf16 %v1789
        %v4694 = vunpack.c.h.s8.bf16 %v1790
        %v4695 = vunpack.c.l.s8.bf16 %v1791
        %v4696 = vunpack.c.l.s8.bf16 %v1792
        %v4697 = vunpack.c.l.s8.bf16 %v1793
        %v4698 = vunpack.c.l.s8.bf16 %v1794
        %v4699 = vunpack.c.h.s8.bf16 %v1791
        %v4700 = vunpack.c.h.s8.bf16 %v1792
        %v4701 = vunpack.c.h.s8.bf16 %v1793
        %v4702 = vunpack.c.h.s8.bf16 %v1794
        %v4703 = vunpack.c.l.s8.bf16 %v1795
        %v4704 = vunpack.c.l.s8.bf16 %v1796
        %v4705 = vunpack.c.l.s8.bf16 %v1797
        %v4706 = vunpack.c.l.s8.bf16 %v1798
        %v4707 = vunpack.c.h.s8.bf16 %v1795
        %v4708 = vunpack.c.h.s8.bf16 %v1796
        %v4709 = vunpack.c.h.s8.bf16 %v1797
        %v4710 = vunpack.c.h.s8.bf16 %v1798
        %v4711 = vunpack.c.l.s8.bf16 %v1799
        %v4712 = vunpack.c.l.s8.bf16 %v1800
        %v4713 = vunpack.c.l.s8.bf16 %v1801
        %v4714 = vunpack.c.l.s8.bf16 %v1802
        %v4715 = vunpack.c.h.s8.bf16 %v1799
        %v4716 = vunpack.c.h.s8.bf16 %v1800
        %v4717 = vunpack.c.h.s8.bf16 %v1801
        %v4718 = vunpack.c.h.s8.bf16 %v1802
        %v4719 = vunpack.c.l.s8.bf16 %v1803
        %v4720 = vunpack.c.l.s8.bf16 %v1804
        %v4721 = vunpack.c.l.s8.bf16 %v1805
        %v4722 = vunpack.c.l.s8.bf16 %v1806
        %v4723 = vunpack.c.h.s8.bf16 %v1803
        %v4724 = vunpack.c.h.s8.bf16 %v1804
        %v4725 = vunpack.c.h.s8.bf16 %v1805
        %v4726 = vunpack.c.h.s8.bf16 %v1806
        %v4727 = vunpack.c.l.s8.bf16 %v1807
        %v4728 = vunpack.c.l.s8.bf16 %v1808
        %v4729 = vunpack.c.l.s8.bf16 %v1809
        %v4730 = vunpack.c.l.s8.bf16 %v1810
        %v4731 = vunpack.c.h.s8.bf16 %v1807
        %v4732 = vunpack.c.h.s8.bf16 %v1808
        %v4733 = vunpack.c.h.s8.bf16 %v1809
        %v4734 = vunpack.c.h.s8.bf16 %v1810
        %v4735 = vunpack.c.l.s8.bf16 %v1811
        %v4736 = vunpack.c.l.s8.bf16 %v1812
        %v4737 = vunpack.c.l.s8.bf16 %v1813
        %v4738 = vunpack.c.l.s8.bf16 %v1814
        %v4739 = vunpack.c.h.s8.bf16 %v1811
        %v4740 = vunpack.c.h.s8.bf16 %v1812
        %v4741 = vunpack.c.h.s8.bf16 %v1813
        %v4742 = vunpack.c.h.s8.bf16 %v1814
        %v4743 = vunpack.c.l.s8.bf16 %v1815
        %v4744 = vunpack.c.l.s8.bf16 %v1816
        %v4745 = vunpack.c.l.s8.bf16 %v1817
        %v4746 = vunpack.c.l.s8.bf16 %v1818
        %v4747 = vunpack.c.h.s8.bf16 %v1815
        %v4748 = vunpack.c.h.s8.bf16 %v1816
        %v4749 = vunpack.c.h.s8.bf16 %v1817
        %v4750 = vunpack.c.h.s8.bf16 %v1818
        %v4751 = vunpack.c.l.s8.bf16 %v1819
        %v4752 = vunpack.c.l.s8.bf16 %v1820
        %v4753 = vunpack.c.l.s8.bf16 %v1821
        %v4754 = vunpack.c.l.s8.bf16 %v1822
        %v4755 = vunpack.c.h.s8.bf16 %v1819
        %v4756 = vunpack.c.h.s8.bf16 %v1820
        %v4757 = vunpack.c.h.s8.bf16 %v1821
        %v4758 = vunpack.c.h.s8.bf16 %v1822
        %v4759 = vunpack.c.l.s8.bf16 %v1823
        %v4760 = vunpack.c.l.s8.bf16 %v1824
        %v4761 = vunpack.c.l.s8.bf16 %v1825
        %v4762 = vunpack.c.l.s8.bf16 %v1826
        %v4763 = vunpack.c.h.s8.bf16 %v1823
        %v4764 = vunpack.c.h.s8.bf16 %v1824
        %v4765 = vunpack.c.h.s8.bf16 %v1825
        %v4766 = vunpack.c.h.s8.bf16 %v1826
        %v4767 = vunpack.c.l.s8.bf16 %v1827
        %v4768 = vunpack.c.l.s8.bf16 %v1828
        %v4769 = vunpack.c.l.s8.bf16 %v1829
        %v4770 = vunpack.c.l.s8.bf16 %v1830
        %v4771 = vunpack.c.h.s8.bf16 %v1827
        %v4772 = vunpack.c.h.s8.bf16 %v1828
        %v4773 = vunpack.c.h.s8.bf16 %v1829
        %v4774 = vunpack.c.h.s8.bf16 %v1830
        %v4775 = vunpack.c.l.s8.bf16 %v1831
        %v4776 = vunpack.c.l.s8.bf16 %v1832
        %v4777 = vunpack.c.l.s8.bf16 %v1833
        %v4778 = vunpack.c.l.s8.bf16 %v1834
        %v4779 = vunpack.c.h.s8.bf16 %v1831
        %v4780 = vunpack.c.h.s8.bf16 %v1832
        %v4781 = vunpack.c.h.s8.bf16 %v1833
        %v4782 = vunpack.c.h.s8.bf16 %v1834
        %v4783 = vunpack.c.l.s8.bf16 %v1835
        %v4784 = vunpack.c.l.s8.bf16 %v1836
        %v4785 = vunpack.c.l.s8.bf16 %v1837
        %v4786 = vunpack.c.l.s8.bf16 %v1838
        %v4787 = vunpack.c.h.s8.bf16 %v1835
        %v4788 = vunpack.c.h.s8.bf16 %v1836
        %v4789 = vunpack.c.h.s8.bf16 %v1837
        %v4790 = vunpack.c.h.s8.bf16 %v1838
        %v4791 = vunpack.c.l.s8.bf16 %v1839
        %v4792 = vunpack.c.l.s8.bf16 %v1840
        %v4793 = vunpack.c.l.s8.bf16 %v1841
        %v4794 = vunpack.c.l.s8.bf16 %v1842
        %v4795 = vunpack.c.h.s8.bf16 %v1839
        %v4796 = vunpack.c.h.s8.bf16 %v1840
        %v4797 = vunpack.c.h.s8.bf16 %v1841
        %v4798 = vunpack.c.h.s8.bf16 %v1842
        %v4799 = vunpack.c.l.s8.bf16 %v1843
        %v4800 = vunpack.c.l.s8.bf16 %v1844
        %v4801 = vunpack.c.l.s8.bf16 %v1845
        %v4802 = vunpack.c.l.s8.bf16 %v1846
        %v4803 = vunpack.c.h.s8.bf16 %v1843
        %v4804 = vunpack.c.h.s8.bf16 %v1844
        %v4805 = vunpack.c.h.s8.bf16 %v1845
        %v4806 = vunpack.c.h.s8.bf16 %v1846
        %v4807 = vunpack.c.l.s8.bf16 %v1847
        %v4808 = vunpack.c.l.s8.bf16 %v1848
        %v4809 = vunpack.c.l.s8.bf16 %v1849
        %v4810 = vunpack.c.l.s8.bf16 %v1850
        %v4811 = vunpack.c.h.s8.bf16 %v1847
        %v4812 = vunpack.c.h.s8.bf16 %v1848
        %v4813 = vunpack.c.h.s8.bf16 %v1849
        %v4814 = vunpack.c.h.s8.bf16 %v1850
        %v4815 = vunpack.c.l.s8.bf16 %v1851
        %v4816 = vunpack.c.l.s8.bf16 %v1852
        %v4817 = vunpack.c.l.s8.bf16 %v1853
        %v4818 = vunpack.c.l.s8.bf16 %v1854
        %v4819 = vunpack.c.h.s8.bf16 %v1851
        %v4820 = vunpack.c.h.s8.bf16 %v1852
        %v4821 = vunpack.c.h.s8.bf16 %v1853
        %v4822 = vunpack.c.h.s8.bf16 %v1854
        %v4823 = vunpack.c.l.s8.bf16 %v1855
        %v4824 = vunpack.c.l.s8.bf16 %v1856
        %v4825 = vunpack.c.l.s8.bf16 %v1857
        %v4826 = vunpack.c.l.s8.bf16 %v1858
        %v4827 = vunpack.c.h.s8.bf16 %v1855
        %v4828 = vunpack.c.h.s8.bf16 %v1856
        %v4829 = vunpack.c.h.s8.bf16 %v1857
        %v4830 = vunpack.c.h.s8.bf16 %v1858
        %v4831 = vunpack.c.l.s8.bf16 %v1859
        %v4832 = vunpack.c.l.s8.bf16 %v1860
        %v4833 = vunpack.c.l.s8.bf16 %v1861
        %v4834 = vunpack.c.l.s8.bf16 %v1862
        %v4835 = vunpack.c.h.s8.bf16 %v1859
        %v4836 = vunpack.c.h.s8.bf16 %v1860
        %v4837 = vunpack.c.h.s8.bf16 %v1861
        %v4838 = vunpack.c.h.s8.bf16 %v1862
        %v4839 = vunpack.c.l.s8.bf16 %v1863
        %v4840 = vunpack.c.l.s8.bf16 %v1864
        %v4841 = vunpack.c.l.s8.bf16 %v1865
        %v4842 = vunpack.c.l.s8.bf16 %v1866
        %v4843 = vunpack.c.h.s8.bf16 %v1863
        %v4844 = vunpack.c.h.s8.bf16 %v1864
        %v4845 = vunpack.c.h.s8.bf16 %v1865
        %v4846 = vunpack.c.h.s8.bf16 %v1866
        %v4847 = vunpack.c.l.s8.bf16 %v1867
        %v4848 = vunpack.c.l.s8.bf16 %v1868
        %v4849 = vunpack.c.l.s8.bf16 %v1869
        %v4850 = vunpack.c.l.s8.bf16 %v1870
        %v4851 = vunpack.c.h.s8.bf16 %v1867
        %v4852 = vunpack.c.h.s8.bf16 %v1868
        %v4853 = vunpack.c.h.s8.bf16 %v1869
        %v4854 = vunpack.c.h.s8.bf16 %v1870
        %v4855 = vunpack.c.l.s8.bf16 %v1871
        %v4856 = vunpack.c.l.s8.bf16 %v1872
        %v4857 = vunpack.c.l.s8.bf16 %v1873
        %v4858 = vunpack.c.l.s8.bf16 %v1874
        %v4859 = vunpack.c.h.s8.bf16 %v1871
        %v4860 = vunpack.c.h.s8.bf16 %v1872
        %v4861 = vunpack.c.h.s8.bf16 %v1873
        %v4862 = vunpack.c.h.s8.bf16 %v1874
        %v4863 = vunpack.c.l.s8.bf16 %v1875
        %v4864 = vunpack.c.l.s8.bf16 %v1876
        %v4865 = vunpack.c.l.s8.bf16 %v1877
        %v4866 = vunpack.c.l.s8.bf16 %v1878
        %v4867 = vunpack.c.h.s8.bf16 %v1875
        %v4868 = vunpack.c.h.s8.bf16 %v1876
        %v4869 = vunpack.c.h.s8.bf16 %v1877
        %v4870 = vunpack.c.h.s8.bf16 %v1878
        %v4871 = vunpack.c.l.s8.bf16 %v1879
        %v4872 = vunpack.c.l.s8.bf16 %v1880
        %v4873 = vunpack.c.l.s8.bf16 %v1881
        %v4874 = vunpack.c.l.s8.bf16 %v1882
        %v4875 = vunpack.c.h.s8.bf16 %v1879
        %v4876 = vunpack.c.h.s8.bf16 %v1880
        %v4877 = vunpack.c.h.s8.bf16 %v1881
        %v4878 = vunpack.c.h.s8.bf16 %v1882
        %v4879 = vunpack.c.l.s8.bf16 %v1883
        %v4880 = vunpack.c.l.s8.bf16 %v1884
        %v4881 = vunpack.c.l.s8.bf16 %v1885
        %v4882 = vunpack.c.l.s8.bf16 %v1886
        %v4883 = vunpack.c.h.s8.bf16 %v1883
        %v4884 = vunpack.c.h.s8.bf16 %v1884
        %v4885 = vunpack.c.h.s8.bf16 %v1885
        %v4886 = vunpack.c.h.s8.bf16 %v1886
        %v4887 = vunpack.c.l.s8.bf16 %v1887
        %v4888 = vunpack.c.l.s8.bf16 %v1888
        %v4889 = vunpack.c.l.s8.bf16 %v1889
        %v4890 = vunpack.c.l.s8.bf16 %v1890
        %v4891 = vunpack.c.h.s8.bf16 %v1887
        %v4892 = vunpack.c.h.s8.bf16 %v1888
        %v4893 = vunpack.c.h.s8.bf16 %v1889
        %v4894 = vunpack.c.h.s8.bf16 %v1890
        %v4895 = vunpack.c.l.s8.bf16 %v1891
        %v4896 = vunpack.c.l.s8.bf16 %v1892
        %v4897 = vunpack.c.l.s8.bf16 %v1893
        %v4898 = vunpack.c.l.s8.bf16 %v1894
        %v4899 = vunpack.c.h.s8.bf16 %v1891
        %v4900 = vunpack.c.h.s8.bf16 %v1892
        %v4901 = vunpack.c.h.s8.bf16 %v1893
        %v4902 = vunpack.c.h.s8.bf16 %v1894
        %v4903 = vunpack.c.l.s8.bf16 %v1895
        %v4904 = vunpack.c.l.s8.bf16 %v1896
        %v4905 = vunpack.c.l.s8.bf16 %v1897
        %v4906 = vunpack.c.l.s8.bf16 %v1898
        %v4907 = vunpack.c.h.s8.bf16 %v1895
        %v4908 = vunpack.c.h.s8.bf16 %v1896
        %v4909 = vunpack.c.h.s8.bf16 %v1897
        %v4910 = vunpack.c.h.s8.bf16 %v1898
        %v4911 = vunpack.c.l.s8.bf16 %v1899
        %v4912 = vunpack.c.l.s8.bf16 %v1900
        %v4913 = vunpack.c.l.s8.bf16 %v1901
        %v4914 = vunpack.c.l.s8.bf16 %v1902
        %v4915 = vunpack.c.h.s8.bf16 %v1899
        %v4916 = vunpack.c.h.s8.bf16 %v1900
        %v4917 = vunpack.c.h.s8.bf16 %v1901
        %v4918 = vunpack.c.h.s8.bf16 %v1902
        %v4919 = vunpack.c.l.s8.bf16 %v1903
        %v4920 = vunpack.c.l.s8.bf16 %v1904
        %v4921 = vunpack.c.l.s8.bf16 %v1905
        %v4922 = vunpack.c.l.s8.bf16 %v1906
        %v4923 = vunpack.c.h.s8.bf16 %v1903
        %v4924 = vunpack.c.h.s8.bf16 %v1904
        %v4925 = vunpack.c.h.s8.bf16 %v1905
        %v4926 = vunpack.c.h.s8.bf16 %v1906
        %v4927 = vunpack.c.l.s8.bf16 %v1907
        %v4928 = vunpack.c.l.s8.bf16 %v1908
        %v4929 = vunpack.c.l.s8.bf16 %v1909
        %v4930 = vunpack.c.l.s8.bf16 %v1910
        %v4931 = vunpack.c.h.s8.bf16 %v1907
        %v4932 = vunpack.c.h.s8.bf16 %v1908
        %v4933 = vunpack.c.h.s8.bf16 %v1909
        %v4934 = vunpack.c.h.s8.bf16 %v1910
        %v4935 = vunpack.c.l.s8.bf16 %v1911
        %v4936 = vunpack.c.l.s8.bf16 %v1912
        %v4937 = vunpack.c.l.s8.bf16 %v1913
        %v4938 = vunpack.c.l.s8.bf16 %v1914
        %v4939 = vunpack.c.h.s8.bf16 %v1911
        %v4940 = vunpack.c.h.s8.bf16 %v1912
        %v4941 = vunpack.c.h.s8.bf16 %v1913
        %v4942 = vunpack.c.h.s8.bf16 %v1914
        %v4943 = vunpack.c.l.s8.bf16 %v1915
        %v4944 = vunpack.c.l.s8.bf16 %v1916
        %v4945 = vunpack.c.l.s8.bf16 %v1917
        %v4946 = vunpack.c.l.s8.bf16 %v1918
        %v4947 = vunpack.c.h.s8.bf16 %v1915
        %v4948 = vunpack.c.h.s8.bf16 %v1916
        %v4949 = vunpack.c.h.s8.bf16 %v1917
        %v4950 = vunpack.c.h.s8.bf16 %v1918
        %v4951 = vunpack.c.l.s8.bf16 %v1919
        %v4952 = vunpack.c.l.s8.bf16 %v1920
        %v4953 = vunpack.c.l.s8.bf16 %v1921
        %v4954 = vunpack.c.l.s8.bf16 %v1922
        %v4955 = vunpack.c.h.s8.bf16 %v1919
        %v4956 = vunpack.c.h.s8.bf16 %v1920
        %v4957 = vunpack.c.h.s8.bf16 %v1921
        %v4958 = vunpack.c.h.s8.bf16 %v1922
        %v4959 = vunpack.c.l.s8.bf16 %v1923
        %v4960 = vunpack.c.l.s8.bf16 %v1924
        %v4961 = vunpack.c.l.s8.bf16 %v1925
        %v4962 = vunpack.c.l.s8.bf16 %v1926
        %v4963 = vunpack.c.h.s8.bf16 %v1923
        %v4964 = vunpack.c.h.s8.bf16 %v1924
        %v4965 = vunpack.c.h.s8.bf16 %v1925
        %v4966 = vunpack.c.h.s8.bf16 %v1926
        %v4967 = vunpack.c.l.s8.bf16 %v1927
        %v4968 = vunpack.c.l.s8.bf16 %v1928
        %v4969 = vunpack.c.l.s8.bf16 %v1929
        %v4970 = vunpack.c.l.s8.bf16 %v1930
        %v4971 = vunpack.c.h.s8.bf16 %v1927
        %v4972 = vunpack.c.h.s8.bf16 %v1928
        %v4973 = vunpack.c.h.s8.bf16 %v1929
        %v4974 = vunpack.c.h.s8.bf16 %v1930
        %v4975 = vunpack.c.l.s8.bf16 %v1931
        %v4976 = vunpack.c.l.s8.bf16 %v1932
        %v4977 = vunpack.c.l.s8.bf16 %v1933
        %v4978 = vunpack.c.l.s8.bf16 %v1934
        %v4979 = vunpack.c.h.s8.bf16 %v1931
        %v4980 = vunpack.c.h.s8.bf16 %v1932
        %v4981 = vunpack.c.h.s8.bf16 %v1933
        %v4982 = vunpack.c.h.s8.bf16 %v1934
        %v4983 = vunpack.c.l.s8.bf16 %v1935
        %v4984 = vunpack.c.l.s8.bf16 %v1936
        %v4985 = vunpack.c.l.s8.bf16 %v1937
        %v4986 = vunpack.c.l.s8.bf16 %v1938
        %v4987 = vunpack.c.h.s8.bf16 %v1935
        %v4988 = vunpack.c.h.s8.bf16 %v1936
        %v4989 = vunpack.c.h.s8.bf16 %v1937
        %v4990 = vunpack.c.h.s8.bf16 %v1938
        %v4991 = vunpack.c.l.s8.bf16 %v1939
        %v4992 = vunpack.c.l.s8.bf16 %v1940
        %v4993 = vunpack.c.l.s8.bf16 %v1941
        %v4994 = vunpack.c.l.s8.bf16 %v1942
        %v4995 = vunpack.c.h.s8.bf16 %v1939
        %v4996 = vunpack.c.h.s8.bf16 %v1940
        %v4997 = vunpack.c.h.s8.bf16 %v1941
        %v4998 = vunpack.c.h.s8.bf16 %v1942
        %v4999 = vunpack.c.l.s8.bf16 %v1943
        %v5000 = vunpack.c.l.s8.bf16 %v1944
        %v5001 = vunpack.c.l.s8.bf16 %v1945
        %v5002 = vunpack.c.l.s8.bf16 %v1946
        %v5003 = vunpack.c.h.s8.bf16 %v1943
        %v5004 = vunpack.c.h.s8.bf16 %v1944
        %v5005 = vunpack.c.h.s8.bf16 %v1945
        %v5006 = vunpack.c.h.s8.bf16 %v1946
        %v5007 = vunpack.c.l.s8.bf16 %v1947
        %v5008 = vunpack.c.l.s8.bf16 %v1948
        %v5009 = vunpack.c.l.s8.bf16 %v1949
        %v5010 = vunpack.c.l.s8.bf16 %v1950
        %v5011 = vunpack.c.h.s8.bf16 %v1947
        %v5012 = vunpack.c.h.s8.bf16 %v1948
        %v5013 = vunpack.c.h.s8.bf16 %v1949
        %v5014 = vunpack.c.h.s8.bf16 %v1950
        %v5015 = vunpack.c.l.s8.bf16 %v1951
        %v5016 = vunpack.c.l.s8.bf16 %v1952
        %v5017 = vunpack.c.l.s8.bf16 %v1953
        %v5018 = vunpack.c.l.s8.bf16 %v1954
        %v5019 = vunpack.c.h.s8.bf16 %v1951
        %v5020 = vunpack.c.h.s8.bf16 %v1952
        %v5021 = vunpack.c.h.s8.bf16 %v1953
        %v5022 = vunpack.c.h.s8.bf16 %v1954
        %v5023 = vunpack.c.l.s8.bf16 %v1955
        %v5024 = vunpack.c.l.s8.bf16 %v1956
        %v5025 = vunpack.c.l.s8.bf16 %v1957
        %v5026 = vunpack.c.l.s8.bf16 %v1958
        %v5027 = vunpack.c.h.s8.bf16 %v1955
        %v5028 = vunpack.c.h.s8.bf16 %v1956
        %v5029 = vunpack.c.h.s8.bf16 %v1957
        %v5030 = vunpack.c.h.s8.bf16 %v1958
        %v5031 = vld [vmem:[#allocation2] sm:$0xff]
        %v5032 = vld [vmem:[%s353] sm:$0xff]
        %v5033 = vld [vmem:[%s353 + $0x8] sm:$0xff]
        %v5034 = vld [vmem:[%s353 + $0x10] sm:$0xff]
        %v5035 = vld [vmem:[%s353 + $0x18] sm:$0xff]
        %v5036 = vld [vmem:[%s353 + $0x20] sm:$0xff]
        %v5037 = vld [vmem:[%s353 + $0x28] sm:$0xff]
        %v5038 = vld [vmem:[%s353 + $0x30] sm:$0xff]
        %v5039 = vld [vmem:[%s353 + $0x38] sm:$0xff]
        %v5040 = vld [vmem:[%s353 + $0x40] sm:$0xff]
        %v5041 = vld [vmem:[%s353 + $0x48] sm:$0xff]
        %v5042 = vld [vmem:[%s353 + $0x50] sm:$0xff]
        %v5043 = vld [vmem:[%s353 + $0x58] sm:$0xff]
        %v5056 = vcombine.high %v5032, %v5032
        %v5058 = vunpack.c.l.s4 1966171168
        %v5059 = vunpack.c.0.s8 %v5058
        %v5060 = vlaneseq
        %v5061 = vshrl.u32 %v5060, 7
        %v5062 = vsub.s32 %v5059, %v5061
        %v5063 = vrot.slane %v5032, %v5062
        %v5065 = vunpack.c.l.s4 1966171168
        %v5066 = vunpack.c.0.s8 %v5065
        %v5067 = vlaneseq
        %v5068 = vshrl.u32 %v5067, 7
        %v5069 = vsub.s32 %v5066, %v5068
        %v5070 = vrot.slane %v5056, %v5069
        %v5071 = vcombine.high %v5063, %v5063
        %v5072 = vcombine.high %v5070, %v5070
        %v5074 = vunpack.c.l.s4 1966171168
        %v5075 = vunpack.c.0.s8 %v5074
        %v5076 = vlaneseq
        %v5077 = vshrl.u32 %v5076, 7
        %v5078 = vsub.s32 %v5075, %v5077
        %v5079 = vrot.slane %v5063, %v5078
        %v5081 = vunpack.c.l.s4 1966171168
        %v5082 = vunpack.c.0.s8 %v5081
        %v5083 = vlaneseq
        %v5084 = vshrl.u32 %v5083, 7
        %v5085 = vsub.s32 %v5082, %v5084
        %v5086 = vrot.slane %v5070, %v5085
        %v5088 = vunpack.c.l.s4 1966171168
        %v5089 = vunpack.c.0.s8 %v5088
        %v5090 = vlaneseq
        %v5091 = vshrl.u32 %v5090, 7
        %v5092 = vsub.s32 %v5089, %v5091
        %v5093 = vrot.slane %v5071, %v5092
        %v5095 = vunpack.c.l.s4 1966171168
        %v5096 = vunpack.c.0.s8 %v5095
        %v5097 = vlaneseq
        %v5098 = vshrl.u32 %v5097, 7
        %v5099 = vsub.s32 %v5096, %v5098
        %v5100 = vrot.slane %v5072, %v5099
        %v5101 = vcombine.high %v5079, %v5079
        %v5102 = vcombine.high %v5086, %v5086
        %v5103 = vcombine.high %v5093, %v5093
        %v5104 = vcombine.high %v5100, %v5100
        %v5105 = vcombine.high %v5033, %v5033
        %v5107 = vunpack.c.l.s4 1966171168
        %v5108 = vunpack.c.0.s8 %v5107
        %v5109 = vlaneseq
        %v5110 = vshrl.u32 %v5109, 7
        %v5111 = vsub.s32 %v5108, %v5110
        %v5112 = vrot.slane %v5033, %v5111
        %v5114 = vunpack.c.l.s4 1966171168
        %v5115 = vunpack.c.0.s8 %v5114
        %v5116 = vlaneseq
        %v5117 = vshrl.u32 %v5116, 7
        %v5118 = vsub.s32 %v5115, %v5117
        %v5119 = vrot.slane %v5105, %v5118
        %v5120 = vcombine.high %v5112, %v5112
        %v5121 = vcombine.high %v5119, %v5119
        %v5123 = vunpack.c.l.s4 1966171168
        %v5124 = vunpack.c.0.s8 %v5123
        %v5125 = vlaneseq
        %v5126 = vshrl.u32 %v5125, 7
        %v5127 = vsub.s32 %v5124, %v5126
        %v5128 = vrot.slane %v5112, %v5127
        %v5130 = vunpack.c.l.s4 1966171168
        %v5131 = vunpack.c.0.s8 %v5130
        %v5132 = vlaneseq
        %v5133 = vshrl.u32 %v5132, 7
        %v5134 = vsub.s32 %v5131, %v5133
        %v5135 = vrot.slane %v5119, %v5134
        %v5137 = vunpack.c.l.s4 1966171168
        %v5138 = vunpack.c.0.s8 %v5137
        %v5139 = vlaneseq
        %v5140 = vshrl.u32 %v5139, 7
        %v5141 = vsub.s32 %v5138, %v5140
        %v5142 = vrot.slane %v5120, %v5141
        %v5144 = vunpack.c.l.s4 1966171168
        %v5145 = vunpack.c.0.s8 %v5144
        %v5146 = vlaneseq
        %v5147 = vshrl.u32 %v5146, 7
        %v5148 = vsub.s32 %v5145, %v5147
        %v5149 = vrot.slane %v5121, %v5148
        %v5150 = vcombine.high %v5128, %v5128
        %v5151 = vcombine.high %v5135, %v5135
        %v5152 = vcombine.high %v5142, %v5142
        %v5153 = vcombine.high %v5149, %v5149
        %v5154 = vcombine.high %v5034, %v5034
        %v5156 = vunpack.c.l.s4 1966171168
        %v5157 = vunpack.c.0.s8 %v5156
        %v5158 = vlaneseq
        %v5159 = vshrl.u32 %v5158, 7
        %v5160 = vsub.s32 %v5157, %v5159
        %v5161 = vrot.slane %v5034, %v5160
        %v5163 = vunpack.c.l.s4 1966171168
        %v5164 = vunpack.c.0.s8 %v5163
        %v5165 = vlaneseq
        %v5166 = vshrl.u32 %v5165, 7
        %v5167 = vsub.s32 %v5164, %v5166
        %v5168 = vrot.slane %v5154, %v5167
        %v5169 = vcombine.high %v5161, %v5161
        %v5170 = vcombine.high %v5168, %v5168
        %v5172 = vunpack.c.l.s4 1966171168
        %v5173 = vunpack.c.0.s8 %v5172
        %v5174 = vlaneseq
        %v5175 = vshrl.u32 %v5174, 7
        %v5176 = vsub.s32 %v5173, %v5175
        %v5177 = vrot.slane %v5161, %v5176
        %v5179 = vunpack.c.l.s4 1966171168
        %v5180 = vunpack.c.0.s8 %v5179
        %v5181 = vlaneseq
        %v5182 = vshrl.u32 %v5181, 7
        %v5183 = vsub.s32 %v5180, %v5182
        %v5184 = vrot.slane %v5168, %v5183
        %v5186 = vunpack.c.l.s4 1966171168
        %v5187 = vunpack.c.0.s8 %v5186
        %v5188 = vlaneseq
        %v5189 = vshrl.u32 %v5188, 7
        %v5190 = vsub.s32 %v5187, %v5189
        %v5191 = vrot.slane %v5169, %v5190
        %v5193 = vunpack.c.l.s4 1966171168
        %v5194 = vunpack.c.0.s8 %v5193
        %v5195 = vlaneseq
        %v5196 = vshrl.u32 %v5195, 7
        %v5197 = vsub.s32 %v5194, %v5196
        %v5198 = vrot.slane %v5170, %v5197
        %v5199 = vcombine.high %v5177, %v5177
        %v5200 = vcombine.high %v5184, %v5184
        %v5201 = vcombine.high %v5191, %v5191
        %v5202 = vcombine.high %v5198, %v5198
        %v5203 = vcombine.high %v5035, %v5035
        %v5205 = vunpack.c.l.s4 1966171168
        %v5206 = vunpack.c.0.s8 %v5205
        %v5207 = vlaneseq
        %v5208 = vshrl.u32 %v5207, 7
        %v5209 = vsub.s32 %v5206, %v5208
        %v5210 = vrot.slane %v5035, %v5209
        %v5212 = vunpack.c.l.s4 1966171168
        %v5213 = vunpack.c.0.s8 %v5212
        %v5214 = vlaneseq
        %v5215 = vshrl.u32 %v5214, 7
        %v5216 = vsub.s32 %v5213, %v5215
        %v5217 = vrot.slane %v5203, %v5216
        %v5218 = vcombine.high %v5210, %v5210
        %v5219 = vcombine.high %v5217, %v5217
        %v5221 = vunpack.c.l.s4 1966171168
        %v5222 = vunpack.c.0.s8 %v5221
        %v5223 = vlaneseq
        %v5224 = vshrl.u32 %v5223, 7
        %v5225 = vsub.s32 %v5222, %v5224
        %v5226 = vrot.slane %v5210, %v5225
        %v5228 = vunpack.c.l.s4 1966171168
        %v5229 = vunpack.c.0.s8 %v5228
        %v5230 = vlaneseq
        %v5231 = vshrl.u32 %v5230, 7
        %v5232 = vsub.s32 %v5229, %v5231
        %v5233 = vrot.slane %v5217, %v5232
        %v5235 = vunpack.c.l.s4 1966171168
        %v5236 = vunpack.c.0.s8 %v5235
        %v5237 = vlaneseq
        %v5238 = vshrl.u32 %v5237, 7
        %v5239 = vsub.s32 %v5236, %v5238
        %v5240 = vrot.slane %v5218, %v5239
        %v5242 = vunpack.c.l.s4 1966171168
        %v5243 = vunpack.c.0.s8 %v5242
        %v5244 = vlaneseq
        %v5245 = vshrl.u32 %v5244, 7
        %v5246 = vsub.s32 %v5243, %v5245
        %v5247 = vrot.slane %v5219, %v5246
        %v5248 = vcombine.high %v5226, %v5226
        %v5249 = vcombine.high %v5233, %v5233
        %v5250 = vcombine.high %v5240, %v5240
        %v5251 = vcombine.high %v5247, %v5247
        %v5252 = vcombine.high %v5036, %v5036
        %v5254 = vunpack.c.l.s4 1966171168
        %v5255 = vunpack.c.0.s8 %v5254
        %v5256 = vlaneseq
        %v5257 = vshrl.u32 %v5256, 7
        %v5258 = vsub.s32 %v5255, %v5257
        %v5259 = vrot.slane %v5036, %v5258
        %v5261 = vunpack.c.l.s4 1966171168
        %v5262 = vunpack.c.0.s8 %v5261
        %v5263 = vlaneseq
        %v5264 = vshrl.u32 %v5263, 7
        %v5265 = vsub.s32 %v5262, %v5264
        %v5266 = vrot.slane %v5252, %v5265
        %v5267 = vcombine.high %v5259, %v5259
        %v5268 = vcombine.high %v5266, %v5266
        %v5270 = vunpack.c.l.s4 1966171168
        %v5271 = vunpack.c.0.s8 %v5270
        %v5272 = vlaneseq
        %v5273 = vshrl.u32 %v5272, 7
        %v5274 = vsub.s32 %v5271, %v5273
        %v5275 = vrot.slane %v5259, %v5274
        %v5277 = vunpack.c.l.s4 1966171168
        %v5278 = vunpack.c.0.s8 %v5277
        %v5279 = vlaneseq
        %v5280 = vshrl.u32 %v5279, 7
        %v5281 = vsub.s32 %v5278, %v5280
        %v5282 = vrot.slane %v5266, %v5281
        %v5284 = vunpack.c.l.s4 1966171168
        %v5285 = vunpack.c.0.s8 %v5284
        %v5286 = vlaneseq
        %v5287 = vshrl.u32 %v5286, 7
        %v5288 = vsub.s32 %v5285, %v5287
        %v5289 = vrot.slane %v5267, %v5288
        %v5291 = vunpack.c.l.s4 1966171168
        %v5292 = vunpack.c.0.s8 %v5291
        %v5293 = vlaneseq
        %v5294 = vshrl.u32 %v5293, 7
        %v5295 = vsub.s32 %v5292, %v5294
        %v5296 = vrot.slane %v5268, %v5295
        %v5297 = vcombine.high %v5275, %v5275
        %v5298 = vcombine.high %v5282, %v5282
        %v5299 = vcombine.high %v5289, %v5289
        %v5300 = vcombine.high %v5296, %v5296
        %v5301 = vcombine.high %v5037, %v5037
        %v5303 = vunpack.c.l.s4 1966171168
        %v5304 = vunpack.c.0.s8 %v5303
        %v5305 = vlaneseq
        %v5306 = vshrl.u32 %v5305, 7
        %v5307 = vsub.s32 %v5304, %v5306
        %v5308 = vrot.slane %v5037, %v5307
        %v5310 = vunpack.c.l.s4 1966171168
        %v5311 = vunpack.c.0.s8 %v5310
        %v5312 = vlaneseq
        %v5313 = vshrl.u32 %v5312, 7
        %v5314 = vsub.s32 %v5311, %v5313
        %v5315 = vrot.slane %v5301, %v5314
        %v5316 = vcombine.high %v5308, %v5308
        %v5317 = vcombine.high %v5315, %v5315
        %v5319 = vunpack.c.l.s4 1966171168
        %v5320 = vunpack.c.0.s8 %v5319
        %v5321 = vlaneseq
        %v5322 = vshrl.u32 %v5321, 7
        %v5323 = vsub.s32 %v5320, %v5322
        %v5324 = vrot.slane %v5308, %v5323
        %v5326 = vunpack.c.l.s4 1966171168
        %v5327 = vunpack.c.0.s8 %v5326
        %v5328 = vlaneseq
        %v5329 = vshrl.u32 %v5328, 7
        %v5330 = vsub.s32 %v5327, %v5329
        %v5331 = vrot.slane %v5315, %v5330
        %v5333 = vunpack.c.l.s4 1966171168
        %v5334 = vunpack.c.0.s8 %v5333
        %v5335 = vlaneseq
        %v5336 = vshrl.u32 %v5335, 7
        %v5337 = vsub.s32 %v5334, %v5336
        %v5338 = vrot.slane %v5316, %v5337
        %v5340 = vunpack.c.l.s4 1966171168
        %v5341 = vunpack.c.0.s8 %v5340
        %v5342 = vlaneseq
        %v5343 = vshrl.u32 %v5342, 7
        %v5344 = vsub.s32 %v5341, %v5343
        %v5345 = vrot.slane %v5317, %v5344
        %v5346 = vcombine.high %v5324, %v5324
        %v5347 = vcombine.high %v5331, %v5331
        %v5348 = vcombine.high %v5338, %v5338
        %v5349 = vcombine.high %v5345, %v5345
        %v5350 = vcombine.high %v5038, %v5038
        %v5352 = vunpack.c.l.s4 1966171168
        %v5353 = vunpack.c.0.s8 %v5352
        %v5354 = vlaneseq
        %v5355 = vshrl.u32 %v5354, 7
        %v5356 = vsub.s32 %v5353, %v5355
        %v5357 = vrot.slane %v5038, %v5356
        %v5359 = vunpack.c.l.s4 1966171168
        %v5360 = vunpack.c.0.s8 %v5359
        %v5361 = vlaneseq
        %v5362 = vshrl.u32 %v5361, 7
        %v5363 = vsub.s32 %v5360, %v5362
        %v5364 = vrot.slane %v5350, %v5363
        %v5365 = vcombine.high %v5357, %v5357
        %v5366 = vcombine.high %v5364, %v5364
        %v5368 = vunpack.c.l.s4 1966171168
        %v5369 = vunpack.c.0.s8 %v5368
        %v5370 = vlaneseq
        %v5371 = vshrl.u32 %v5370, 7
        %v5372 = vsub.s32 %v5369, %v5371
        %v5373 = vrot.slane %v5357, %v5372
        %v5375 = vunpack.c.l.s4 1966171168
        %v5376 = vunpack.c.0.s8 %v5375
        %v5377 = vlaneseq
        %v5378 = vshrl.u32 %v5377, 7
        %v5379 = vsub.s32 %v5376, %v5378
        %v5380 = vrot.slane %v5364, %v5379
        %v5382 = vunpack.c.l.s4 1966171168
        %v5383 = vunpack.c.0.s8 %v5382
        %v5384 = vlaneseq
        %v5385 = vshrl.u32 %v5384, 7
        %v5386 = vsub.s32 %v5383, %v5385
        %v5387 = vrot.slane %v5365, %v5386
        %v5389 = vunpack.c.l.s4 1966171168
        %v5390 = vunpack.c.0.s8 %v5389
        %v5391 = vlaneseq
        %v5392 = vshrl.u32 %v5391, 7
        %v5393 = vsub.s32 %v5390, %v5392
        %v5394 = vrot.slane %v5366, %v5393
        %v5395 = vcombine.high %v5373, %v5373
        %v5396 = vcombine.high %v5380, %v5380
        %v5397 = vcombine.high %v5387, %v5387
        %v5398 = vcombine.high %v5394, %v5394
        %v5399 = vcombine.high %v5039, %v5039
        %v5401 = vunpack.c.l.s4 1966171168
        %v5402 = vunpack.c.0.s8 %v5401
        %v5403 = vlaneseq
        %v5404 = vshrl.u32 %v5403, 7
        %v5405 = vsub.s32 %v5402, %v5404
        %v5406 = vrot.slane %v5039, %v5405
        %v5408 = vunpack.c.l.s4 1966171168
        %v5409 = vunpack.c.0.s8 %v5408
        %v5410 = vlaneseq
        %v5411 = vshrl.u32 %v5410, 7
        %v5412 = vsub.s32 %v5409, %v5411
        %v5413 = vrot.slane %v5399, %v5412
        %v5414 = vcombine.high %v5406, %v5406
        %v5415 = vcombine.high %v5413, %v5413
        %v5417 = vunpack.c.l.s4 1966171168
        %v5418 = vunpack.c.0.s8 %v5417
        %v5419 = vlaneseq
        %v5420 = vshrl.u32 %v5419, 7
        %v5421 = vsub.s32 %v5418, %v5420
        %v5422 = vrot.slane %v5406, %v5421
        %v5424 = vunpack.c.l.s4 1966171168
        %v5425 = vunpack.c.0.s8 %v5424
        %v5426 = vlaneseq
        %v5427 = vshrl.u32 %v5426, 7
        %v5428 = vsub.s32 %v5425, %v5427
        %v5429 = vrot.slane %v5413, %v5428
        %v5431 = vunpack.c.l.s4 1966171168
        %v5432 = vunpack.c.0.s8 %v5431
        %v5433 = vlaneseq
        %v5434 = vshrl.u32 %v5433, 7
        %v5435 = vsub.s32 %v5432, %v5434
        %v5436 = vrot.slane %v5414, %v5435
        %v5438 = vunpack.c.l.s4 1966171168
        %v5439 = vunpack.c.0.s8 %v5438
        %v5440 = vlaneseq
        %v5441 = vshrl.u32 %v5440, 7
        %v5442 = vsub.s32 %v5439, %v5441
        %v5443 = vrot.slane %v5415, %v5442
        %v5444 = vcombine.high %v5422, %v5422
        %v5445 = vcombine.high %v5429, %v5429
        %v5446 = vcombine.high %v5436, %v5436
        %v5447 = vcombine.high %v5443, %v5443
        %v5448 = vcombine.high %v5040, %v5040
        %v5450 = vunpack.c.l.s4 1966171168
        %v5451 = vunpack.c.0.s8 %v5450
        %v5452 = vlaneseq
        %v5453 = vshrl.u32 %v5452, 7
        %v5454 = vsub.s32 %v5451, %v5453
        %v5455 = vrot.slane %v5040, %v5454
        %v5457 = vunpack.c.l.s4 1966171168
        %v5458 = vunpack.c.0.s8 %v5457
        %v5459 = vlaneseq
        %v5460 = vshrl.u32 %v5459, 7
        %v5461 = vsub.s32 %v5458, %v5460
        %v5462 = vrot.slane %v5448, %v5461
        %v5463 = vcombine.high %v5455, %v5455
        %v5464 = vcombine.high %v5462, %v5462
        %v5466 = vunpack.c.l.s4 1966171168
        %v5467 = vunpack.c.0.s8 %v5466
        %v5468 = vlaneseq
        %v5469 = vshrl.u32 %v5468, 7
        %v5470 = vsub.s32 %v5467, %v5469
        %v5471 = vrot.slane %v5455, %v5470
        %v5473 = vunpack.c.l.s4 1966171168
        %v5474 = vunpack.c.0.s8 %v5473
        %v5475 = vlaneseq
        %v5476 = vshrl.u32 %v5475, 7
        %v5477 = vsub.s32 %v5474, %v5476
        %v5478 = vrot.slane %v5462, %v5477
        %v5480 = vunpack.c.l.s4 1966171168
        %v5481 = vunpack.c.0.s8 %v5480
        %v5482 = vlaneseq
        %v5483 = vshrl.u32 %v5482, 7
        %v5484 = vsub.s32 %v5481, %v5483
        %v5485 = vrot.slane %v5463, %v5484
        %v5487 = vunpack.c.l.s4 1966171168
        %v5488 = vunpack.c.0.s8 %v5487
        %v5489 = vlaneseq
        %v5490 = vshrl.u32 %v5489, 7
        %v5491 = vsub.s32 %v5488, %v5490
        %v5492 = vrot.slane %v5464, %v5491
        %v5493 = vcombine.high %v5471, %v5471
        %v5494 = vcombine.high %v5478, %v5478
        %v5495 = vcombine.high %v5485, %v5485
        %v5496 = vcombine.high %v5492, %v5492
        %v5497 = vcombine.high %v5041, %v5041
        %v5499 = vunpack.c.l.s4 1966171168
        %v5500 = vunpack.c.0.s8 %v5499
        %v5501 = vlaneseq
        %v5502 = vshrl.u32 %v5501, 7
        %v5503 = vsub.s32 %v5500, %v5502
        %v5504 = vrot.slane %v5041, %v5503
        %v5506 = vunpack.c.l.s4 1966171168
        %v5507 = vunpack.c.0.s8 %v5506
        %v5508 = vlaneseq
        %v5509 = vshrl.u32 %v5508, 7
        %v5510 = vsub.s32 %v5507, %v5509
        %v5511 = vrot.slane %v5497, %v5510
        %v5512 = vcombine.high %v5504, %v5504
        %v5513 = vcombine.high %v5511, %v5511
        %v5515 = vunpack.c.l.s4 1966171168
        %v5516 = vunpack.c.0.s8 %v5515
        %v5517 = vlaneseq
        %v5518 = vshrl.u32 %v5517, 7
        %v5519 = vsub.s32 %v5516, %v5518
        %v5520 = vrot.slane %v5504, %v5519
        %v5522 = vunpack.c.l.s4 1966171168
        %v5523 = vunpack.c.0.s8 %v5522
        %v5524 = vlaneseq
        %v5525 = vshrl.u32 %v5524, 7
        %v5526 = vsub.s32 %v5523, %v5525
        %v5527 = vrot.slane %v5511, %v5526
        %v5529 = vunpack.c.l.s4 1966171168
        %v5530 = vunpack.c.0.s8 %v5529
        %v5531 = vlaneseq
        %v5532 = vshrl.u32 %v5531, 7
        %v5533 = vsub.s32 %v5530, %v5532
        %v5534 = vrot.slane %v5512, %v5533
        %v5536 = vunpack.c.l.s4 1966171168
        %v5537 = vunpack.c.0.s8 %v5536
        %v5538 = vlaneseq
        %v5539 = vshrl.u32 %v5538, 7
        %v5540 = vsub.s32 %v5537, %v5539
        %v5541 = vrot.slane %v5513, %v5540
        %v5542 = vcombine.high %v5520, %v5520
        %v5543 = vcombine.high %v5527, %v5527
        %v5544 = vcombine.high %v5534, %v5534
        %v5545 = vcombine.high %v5541, %v5541
        %v5546 = vcombine.high %v5042, %v5042
        %v5548 = vunpack.c.l.s4 1966171168
        %v5549 = vunpack.c.0.s8 %v5548
        %v5550 = vlaneseq
        %v5551 = vshrl.u32 %v5550, 7
        %v5552 = vsub.s32 %v5549, %v5551
        %v5553 = vrot.slane %v5042, %v5552
        %v5555 = vunpack.c.l.s4 1966171168
        %v5556 = vunpack.c.0.s8 %v5555
        %v5557 = vlaneseq
        %v5558 = vshrl.u32 %v5557, 7
        %v5559 = vsub.s32 %v5556, %v5558
        %v5560 = vrot.slane %v5546, %v5559
        %v5561 = vcombine.high %v5553, %v5553
        %v5562 = vcombine.high %v5560, %v5560
        %v5564 = vunpack.c.l.s4 1966171168
        %v5565 = vunpack.c.0.s8 %v5564
        %v5566 = vlaneseq
        %v5567 = vshrl.u32 %v5566, 7
        %v5568 = vsub.s32 %v5565, %v5567
        %v5569 = vrot.slane %v5553, %v5568
        %v5571 = vunpack.c.l.s4 1966171168
        %v5572 = vunpack.c.0.s8 %v5571
        %v5573 = vlaneseq
        %v5574 = vshrl.u32 %v5573, 7
        %v5575 = vsub.s32 %v5572, %v5574
        %v5576 = vrot.slane %v5560, %v5575
        %v5578 = vunpack.c.l.s4 1966171168
        %v5579 = vunpack.c.0.s8 %v5578
        %v5580 = vlaneseq
        %v5581 = vshrl.u32 %v5580, 7
        %v5582 = vsub.s32 %v5579, %v5581
        %v5583 = vrot.slane %v5561, %v5582
        %v5585 = vunpack.c.l.s4 1966171168
        %v5586 = vunpack.c.0.s8 %v5585
        %v5587 = vlaneseq
        %v5588 = vshrl.u32 %v5587, 7
        %v5589 = vsub.s32 %v5586, %v5588
        %v5590 = vrot.slane %v5562, %v5589
        %v5591 = vcombine.high %v5569, %v5569
        %v5592 = vcombine.high %v5576, %v5576
        %v5593 = vcombine.high %v5583, %v5583
        %v5594 = vcombine.high %v5590, %v5590
        %v5595 = vcombine.high %v5043, %v5043
        %v5597 = vunpack.c.l.s4 1966171168
        %v5598 = vunpack.c.0.s8 %v5597
        %v5599 = vlaneseq
        %v5600 = vshrl.u32 %v5599, 7
        %v5601 = vsub.s32 %v5598, %v5600
        %v5602 = vrot.slane %v5043, %v5601
        %v5604 = vunpack.c.l.s4 1966171168
        %v5605 = vunpack.c.0.s8 %v5604
        %v5606 = vlaneseq
        %v5607 = vshrl.u32 %v5606, 7
        %v5608 = vsub.s32 %v5605, %v5607
        %v5609 = vrot.slane %v5595, %v5608
        %v5610 = vcombine.high %v5602, %v5602
        %v5611 = vcombine.high %v5609, %v5609
        %v5613 = vunpack.c.l.s4 1966171168
        %v5614 = vunpack.c.0.s8 %v5613
        %v5615 = vlaneseq
        %v5616 = vshrl.u32 %v5615, 7
        %v5617 = vsub.s32 %v5614, %v5616
        %v5618 = vrot.slane %v5602, %v5617
        %v5620 = vunpack.c.l.s4 1966171168
        %v5621 = vunpack.c.0.s8 %v5620
        %v5622 = vlaneseq
        %v5623 = vshrl.u32 %v5622, 7
        %v5624 = vsub.s32 %v5621, %v5623
        %v5625 = vrot.slane %v5609, %v5624
        %v5627 = vunpack.c.l.s4 1966171168
        %v5628 = vunpack.c.0.s8 %v5627
        %v5629 = vlaneseq
        %v5630 = vshrl.u32 %v5629, 7
        %v5631 = vsub.s32 %v5628, %v5630
        %v5632 = vrot.slane %v5610, %v5631
        %v5634 = vunpack.c.l.s4 1966171168
        %v5635 = vunpack.c.0.s8 %v5634
        %v5636 = vlaneseq
        %v5637 = vshrl.u32 %v5636, 7
        %v5638 = vsub.s32 %v5635, %v5637
        %v5639 = vrot.slane %v5611, %v5638
        %v5640 = vcombine.high %v5618, %v5618
        %v5641 = vcombine.high %v5625, %v5625
        %v5642 = vcombine.high %v5632, %v5632
        %v5643 = vcombine.high %v5639, %v5639
        %5740 = vmatprep.subr.bf16.mxu0 %v1988
        %5741 = vmatpush1.bf16.msra.mxu0 %v1987
        %5742 = vmatprep.subr.bf16.mxu0 %v1984
        %5743 = vmatpush1.bf16.msra.mxu0 %v1983
        %5744 = vmatprep.subr.bf16.mxu0 %v1980
        %5745 = vmatpush1.bf16.msra.mxu0 %v1979
        %5746 = vmatprep.subr.bf16.mxu0 %v1976
        %5747 = vmatpush1.bf16.msra.mxu0 %v1975
        %5748 = vmatprep.subr.bf16.mxu0 %v1972
        %5749 = vmatpush1.bf16.msra.mxu0 %v1971
        %5750 = vmatprep.subr.bf16.mxu0 %v1968
        %5751 = vmatpush1.bf16.msra.mxu0 %v1967
        %5752 = vmatprep.subr.bf16.mxu0 %v1964
        %5753 = vmatpush1.bf16.msra.mxu0 %v1963
        %5754 = vmatprep.subr.bf16.mxu0 %v1960
        %5755 = vmatpush1.bf16.msra.mxu0 %v1959
        %5756 = vmatprep.subr.bf16.mxu0 %v2020
        %5757 = vmatpush2.bf16.msra.mxu0 %v2019
        %5758 = vmatprep.subr.bf16.mxu0 %v2016
        %5759 = vmatpush2.bf16.msra.mxu0 %v2015
        %5760 = vmatprep.subr.bf16.mxu0 %v2012
        %5761 = vmatpush2.bf16.msra.mxu0 %v2011
        %5762 = vmatprep.subr.bf16.mxu0 %v2008
        %5763 = vmatpush2.bf16.msra.mxu0 %v2007
        %5764 = vmatprep.subr.bf16.mxu0 %v2004
        %5765 = vmatpush2.bf16.msra.mxu0 %v2003
        %5766 = vmatprep.subr.bf16.mxu0 %v2000
        %5767 = vmatpush2.bf16.msra.mxu0 %v1999
        %5768 = vmatprep.subr.bf16.mxu0 %v1996
        %5769 = vmatpush2.bf16.msra.mxu0 %v1995
        %5770 = vmatprep.subr.bf16.mxu0 %v1992
        %5771 = vmatpush2.bf16.msra.mxu0 %v1991
        %5772 = vmatprep.mubr.bf16.mxu0 %v5093
        %5773 = vmatmul.mubr.bf16.gmra.mxu0 %v5079
        %v5774 = vpop.f32.mrf.mxu0
        %v5775 = vadd.f32 0.0, %v5774
        %v5776 = vpop.f32.mrf.mxu0
        %v5777 = vadd.f32 0.0, %v5776
        %v5778 = vpop.f32.mrf.mxu0
        %v5779 = vpop.f32.mrf.mxu0
        %5780 = vdwg.mxu0
        %5781 = vmatprep.subr.bf16.mxu0 %v2052
        %5782 = vmatpush1.bf16.msra.mxu0 %v2051
        %5783 = vmatprep.subr.bf16.mxu0 %v2048
        %5784 = vmatpush1.bf16.msra.mxu0 %v2047
        %5785 = vmatprep.subr.bf16.mxu0 %v2044
        %5786 = vmatpush1.bf16.msra.mxu0 %v2043
        %5787 = vmatprep.subr.bf16.mxu0 %v2040
        %5788 = vmatpush1.bf16.msra.mxu0 %v2039
        %5789 = vmatprep.subr.bf16.mxu0 %v2036
        %5790 = vmatpush1.bf16.msra.mxu0 %v2035
        %5791 = vmatprep.subr.bf16.mxu0 %v2032
        %5792 = vmatpush1.bf16.msra.mxu0 %v2031
        %5793 = vmatprep.subr.bf16.mxu0 %v2028
        %5794 = vmatpush1.bf16.msra.mxu0 %v2027
        %5795 = vmatprep.subr.bf16.mxu0 %v2024
        %5796 = vmatpush1.bf16.msra.mxu0 %v2023
        %5797 = vmatprep.subr.bf16.mxu0 %v2084
        %5798 = vmatpush2.bf16.msra.mxu0 %v2083
        %5799 = vmatprep.subr.bf16.mxu0 %v2080
        %5800 = vmatpush2.bf16.msra.mxu0 %v2079
        %5801 = vmatprep.subr.bf16.mxu0 %v2076
        %5802 = vmatpush2.bf16.msra.mxu0 %v2075
        %5803 = vmatprep.subr.bf16.mxu0 %v2072
        %5804 = vmatpush2.bf16.msra.mxu0 %v2071
        %5805 = vmatprep.subr.bf16.mxu0 %v2068
        %5806 = vmatpush2.bf16.msra.mxu0 %v2067
        %5807 = vmatprep.subr.bf16.mxu0 %v2064
        %5808 = vmatpush2.bf16.msra.mxu0 %v2063
        %5809 = vmatprep.subr.bf16.mxu0 %v2060
        %5810 = vmatpush2.bf16.msra.mxu0 %v2059
        %5811 = vmatprep.subr.bf16.mxu0 %v2056
        %5812 = vmatpush2.bf16.msra.mxu0 %v2055
        %5813 = vmatprep.mubr.bf16.mxu0 %v5103
        %5814 = vmatmul.mubr.bf16.gmra.mxu0 %v5101
        %v5815 = vpop.f32.mrf.mxu0
        %v5816 = vadd.f32 %v5775, %v5815
        %v5817 = vpop.f32.mrf.mxu0
        %v5818 = vadd.f32 %v5777, %v5817
        %v5819 = vpop.f32.mrf.mxu0
        %v5820 = vpop.f32.mrf.mxu0
        %5821 = vdwg.mxu0
        %5822 = vmatprep.subr.bf16.mxu0 %v2116
        %5823 = vmatpush1.bf16.msra.mxu0 %v2115
        %5824 = vmatprep.subr.bf16.mxu0 %v2112
        %5825 = vmatpush1.bf16.msra.mxu0 %v2111
        %5826 = vmatprep.subr.bf16.mxu0 %v2108
        %5827 = vmatpush1.bf16.msra.mxu0 %v2107
        %5828 = vmatprep.subr.bf16.mxu0 %v2104
        %5829 = vmatpush1.bf16.msra.mxu0 %v2103
        %5830 = vmatprep.subr.bf16.mxu0 %v2100
        %5831 = vmatpush1.bf16.msra.mxu0 %v2099
        %5832 = vmatprep.subr.bf16.mxu0 %v2096
        %5833 = vmatpush1.bf16.msra.mxu0 %v2095
        %5834 = vmatprep.subr.bf16.mxu0 %v2092
        %5835 = vmatpush1.bf16.msra.mxu0 %v2091
        %5836 = vmatprep.subr.bf16.mxu0 %v2088
        %5837 = vmatpush1.bf16.msra.mxu0 %v2087
        %5838 = vmatprep.subr.bf16.mxu0 %v2148
        %5839 = vmatpush2.bf16.msra.mxu0 %v2147
        %5840 = vmatprep.subr.bf16.mxu0 %v2144
        %5841 = vmatpush2.bf16.msra.mxu0 %v2143
        %5842 = vmatprep.subr.bf16.mxu0 %v2140
        %5843 = vmatpush2.bf16.msra.mxu0 %v2139
        %5844 = vmatprep.subr.bf16.mxu0 %v2136
        %5845 = vmatpush2.bf16.msra.mxu0 %v2135
        %5846 = vmatprep.subr.bf16.mxu0 %v2132
        %5847 = vmatpush2.bf16.msra.mxu0 %v2131
        %5848 = vmatprep.subr.bf16.mxu0 %v2128
        %5849 = vmatpush2.bf16.msra.mxu0 %v2127
        %5850 = vmatprep.subr.bf16.mxu0 %v2124
        %5851 = vmatpush2.bf16.msra.mxu0 %v2123
        %5852 = vmatprep.subr.bf16.mxu0 %v2120
        %5853 = vmatpush2.bf16.msra.mxu0 %v2119
        %5854 = vmatprep.mubr.bf16.mxu0 %v5100
        %5855 = vmatmul.mubr.bf16.gmra.mxu0 %v5086
        %v5856 = vpop.f32.mrf.mxu0
        %v5857 = vadd.f32 %v5816, %v5856
        %v5858 = vpop.f32.mrf.mxu0
        %v5859 = vadd.f32 %v5818, %v5858
        %v5860 = vpop.f32.mrf.mxu0
        %v5861 = vpop.f32.mrf.mxu0
        %5862 = vdwg.mxu0
        %5863 = vmatprep.subr.bf16.mxu0 %v2180
        %5864 = vmatpush1.bf16.msra.mxu0 %v2179
        %5865 = vmatprep.subr.bf16.mxu0 %v2176
        %5866 = vmatpush1.bf16.msra.mxu0 %v2175
        %5867 = vmatprep.subr.bf16.mxu0 %v2172
        %5868 = vmatpush1.bf16.msra.mxu0 %v2171
        %5869 = vmatprep.subr.bf16.mxu0 %v2168
        %5870 = vmatpush1.bf16.msra.mxu0 %v2167
        %5871 = vmatprep.subr.bf16.mxu0 %v2164
        %5872 = vmatpush1.bf16.msra.mxu0 %v2163
        %5873 = vmatprep.subr.bf16.mxu0 %v2160
        %5874 = vmatpush1.bf16.msra.mxu0 %v2159
        %5875 = vmatprep.subr.bf16.mxu0 %v2156
        %5876 = vmatpush1.bf16.msra.mxu0 %v2155
        %5877 = vmatprep.subr.bf16.mxu0 %v2152
        %5878 = vmatpush1.bf16.msra.mxu0 %v2151
        %5879 = vmatprep.subr.bf16.mxu0 %v2212
        %5880 = vmatpush2.bf16.msra.mxu0 %v2211
        %5881 = vmatprep.subr.bf16.mxu0 %v2208
        %5882 = vmatpush2.bf16.msra.mxu0 %v2207
        %5883 = vmatprep.subr.bf16.mxu0 %v2204
        %5884 = vmatpush2.bf16.msra.mxu0 %v2203
        %5885 = vmatprep.subr.bf16.mxu0 %v2200
        %5886 = vmatpush2.bf16.msra.mxu0 %v2199
        %5887 = vmatprep.subr.bf16.mxu0 %v2196
        %5888 = vmatpush2.bf16.msra.mxu0 %v2195
        %5889 = vmatprep.subr.bf16.mxu0 %v2192
        %5890 = vmatpush2.bf16.msra.mxu0 %v2191
        %5891 = vmatprep.subr.bf16.mxu0 %v2188
        %5892 = vmatpush2.bf16.msra.mxu0 %v2187
        %5893 = vmatprep.subr.bf16.mxu0 %v2184
        %5894 = vmatpush2.bf16.msra.mxu0 %v2183
        %5895 = vmatprep.mubr.bf16.mxu0 %v5104
        %5896 = vmatmul.mubr.bf16.gmra.mxu0 %v5102
        %v5897 = vpop.f32.mrf.mxu0
        %v5898 = vadd.f32 %v5857, %v5897
        %v5899 = vpop.f32.mrf.mxu0
        %v5900 = vadd.f32 %v5859, %v5899
        %v5901 = vpop.f32.mrf.mxu0
        %v5902 = vpop.f32.mrf.mxu0
        %5903 = vdwg.mxu0
        %5904 = vmatprep.subr.bf16.mxu0 %v2244
        %5905 = vmatpush1.bf16.msra.mxu0 %v2243
        %5906 = vmatprep.subr.bf16.mxu0 %v2240
        %5907 = vmatpush1.bf16.msra.mxu0 %v2239
        %5908 = vmatprep.subr.bf16.mxu0 %v2236
        %5909 = vmatpush1.bf16.msra.mxu0 %v2235
        %5910 = vmatprep.subr.bf16.mxu0 %v2232
        %5911 = vmatpush1.bf16.msra.mxu0 %v2231
        %5912 = vmatprep.subr.bf16.mxu0 %v2228
        %5913 = vmatpush1.bf16.msra.mxu0 %v2227
        %5914 = vmatprep.subr.bf16.mxu0 %v2224
        %5915 = vmatpush1.bf16.msra.mxu0 %v2223
        %5916 = vmatprep.subr.bf16.mxu0 %v2220
        %5917 = vmatpush1.bf16.msra.mxu0 %v2219
        %5918 = vmatprep.subr.bf16.mxu0 %v2216
        %5919 = vmatpush1.bf16.msra.mxu0 %v2215
        %5920 = vmatprep.subr.bf16.mxu0 %v2276
        %5921 = vmatpush2.bf16.msra.mxu0 %v2275
        %5922 = vmatprep.subr.bf16.mxu0 %v2272
        %5923 = vmatpush2.bf16.msra.mxu0 %v2271
        %5924 = vmatprep.subr.bf16.mxu0 %v2268
        %5925 = vmatpush2.bf16.msra.mxu0 %v2267
        %5926 = vmatprep.subr.bf16.mxu0 %v2264
        %5927 = vmatpush2.bf16.msra.mxu0 %v2263
        %5928 = vmatprep.subr.bf16.mxu0 %v2260
        %5929 = vmatpush2.bf16.msra.mxu0 %v2259
        %5930 = vmatprep.subr.bf16.mxu0 %v2256
        %5931 = vmatpush2.bf16.msra.mxu0 %v2255
        %5932 = vmatprep.subr.bf16.mxu0 %v2252
        %5933 = vmatpush2.bf16.msra.mxu0 %v2251
        %5934 = vmatprep.subr.bf16.mxu0 %v2248
        %5935 = vmatpush2.bf16.msra.mxu0 %v2247
        %5936 = vmatprep.mubr.bf16.mxu0 %v5142
        %5937 = vmatmul.mubr.bf16.gmra.mxu0 %v5128
        %v5938 = vpop.f32.mrf.mxu0
        %v5939 = vadd.f32 %v5898, %v5938
        %v5940 = vpop.f32.mrf.mxu0
        %v5941 = vadd.f32 %v5900, %v5940
        %v5942 = vpop.f32.mrf.mxu0
        %v5943 = vpop.f32.mrf.mxu0
        %5944 = vdwg.mxu0
        %5945 = vmatprep.subr.bf16.mxu0 %v2308
        %5946 = vmatpush1.bf16.msra.mxu0 %v2307
        %5947 = vmatprep.subr.bf16.mxu0 %v2304
        %5948 = vmatpush1.bf16.msra.mxu0 %v2303
        %5949 = vmatprep.subr.bf16.mxu0 %v2300
        %5950 = vmatpush1.bf16.msra.mxu0 %v2299
        %5951 = vmatprep.subr.bf16.mxu0 %v2296
        %5952 = vmatpush1.bf16.msra.mxu0 %v2295
        %5953 = vmatprep.subr.bf16.mxu0 %v2292
        %5954 = vmatpush1.bf16.msra.mxu0 %v2291
        %5955 = vmatprep.subr.bf16.mxu0 %v2288
        %5956 = vmatpush1.bf16.msra.mxu0 %v2287
        %5957 = vmatprep.subr.bf16.mxu0 %v2284
        %5958 = vmatpush1.bf16.msra.mxu0 %v2283
        %5959 = vmatprep.subr.bf16.mxu0 %v2280
        %5960 = vmatpush1.bf16.msra.mxu0 %v2279
        %5961 = vmatprep.subr.bf16.mxu0 %v2340
        %5962 = vmatpush2.bf16.msra.mxu0 %v2339
        %5963 = vmatprep.subr.bf16.mxu0 %v2336
        %5964 = vmatpush2.bf16.msra.mxu0 %v2335
        %5965 = vmatprep.subr.bf16.mxu0 %v2332
        %5966 = vmatpush2.bf16.msra.mxu0 %v2331
        %5967 = vmatprep.subr.bf16.mxu0 %v2328
        %5968 = vmatpush2.bf16.msra.mxu0 %v2327
        %5969 = vmatprep.subr.bf16.mxu0 %v2324
        %5970 = vmatpush2.bf16.msra.mxu0 %v2323
        %5971 = vmatprep.subr.bf16.mxu0 %v2320
        %5972 = vmatpush2.bf16.msra.mxu0 %v2319
        %5973 = vmatprep.subr.bf16.mxu0 %v2316
        %5974 = vmatpush2.bf16.msra.mxu0 %v2315
        %5975 = vmatprep.subr.bf16.mxu0 %v2312
        %5976 = vmatpush2.bf16.msra.mxu0 %v2311
        %5977 = vmatprep.mubr.bf16.mxu0 %v5152
        %5978 = vmatmul.mubr.bf16.gmra.mxu0 %v5150
        %v5979 = vpop.f32.mrf.mxu0
        %v5980 = vadd.f32 %v5939, %v5979
        %v5981 = vpop.f32.mrf.mxu0
        %v5982 = vadd.f32 %v5941, %v5981
        %v5983 = vpop.f32.mrf.mxu0
        %v5984 = vpop.f32.mrf.mxu0
        %5985 = vdwg.mxu0
        %5986 = vmatprep.subr.bf16.mxu0 %v2372
        %5987 = vmatpush1.bf16.msra.mxu0 %v2371
        %5988 = vmatprep.subr.bf16.mxu0 %v2368
        %5989 = vmatpush1.bf16.msra.mxu0 %v2367
        %5990 = vmatprep.subr.bf16.mxu0 %v2364
        %5991 = vmatpush1.bf16.msra.mxu0 %v2363
        %5992 = vmatprep.subr.bf16.mxu0 %v2360
        %5993 = vmatpush1.bf16.msra.mxu0 %v2359
        %5994 = vmatprep.subr.bf16.mxu0 %v2356
        %5995 = vmatpush1.bf16.msra.mxu0 %v2355
        %5996 = vmatprep.subr.bf16.mxu0 %v2352
        %5997 = vmatpush1.bf16.msra.mxu0 %v2351
        %5998 = vmatprep.subr.bf16.mxu0 %v2348
        %5999 = vmatpush1.bf16.msra.mxu0 %v2347
        %6000 = vmatprep.subr.bf16.mxu0 %v2344
        %6001 = vmatpush1.bf16.msra.mxu0 %v2343
        %6002 = vmatprep.subr.bf16.mxu0 %v2404
        %6003 = vmatpush2.bf16.msra.mxu0 %v2403
        %6004 = vmatprep.subr.bf16.mxu0 %v2400
        %6005 = vmatpush2.bf16.msra.mxu0 %v2399
        %6006 = vmatprep.subr.bf16.mxu0 %v2396
        %6007 = vmatpush2.bf16.msra.mxu0 %v2395
        %6008 = vmatprep.subr.bf16.mxu0 %v2392
        %6009 = vmatpush2.bf16.msra.mxu0 %v2391
        %6010 = vmatprep.subr.bf16.mxu0 %v2388
        %6011 = vmatpush2.bf16.msra.mxu0 %v2387
        %6012 = vmatprep.subr.bf16.mxu0 %v2384
        %6013 = vmatpush2.bf16.msra.mxu0 %v2383
        %6014 = vmatprep.subr.bf16.mxu0 %v2380
        %6015 = vmatpush2.bf16.msra.mxu0 %v2379
        %6016 = vmatprep.subr.bf16.mxu0 %v2376
        %6017 = vmatpush2.bf16.msra.mxu0 %v2375
        %6018 = vmatprep.mubr.bf16.mxu0 %v5149
        %6019 = vmatmul.mubr.bf16.gmra.mxu0 %v5135
        %v6020 = vpop.f32.mrf.mxu0
        %v6021 = vadd.f32 %v5980, %v6020
        %v6022 = vpop.f32.mrf.mxu0
        %v6023 = vadd.f32 %v5982, %v6022
        %v6024 = vpop.f32.mrf.mxu0
        %v6025 = vpop.f32.mrf.mxu0
        %6026 = vdwg.mxu0
        %6027 = vmatprep.subr.bf16.mxu0 %v2436
        %6028 = vmatpush1.bf16.msra.mxu0 %v2435
        %6029 = vmatprep.subr.bf16.mxu0 %v2432
        %6030 = vmatpush1.bf16.msra.mxu0 %v2431
        %6031 = vmatprep.subr.bf16.mxu0 %v2428
        %6032 = vmatpush1.bf16.msra.mxu0 %v2427
        %6033 = vmatprep.subr.bf16.mxu0 %v2424
        %6034 = vmatpush1.bf16.msra.mxu0 %v2423
        %6035 = vmatprep.subr.bf16.mxu0 %v2420
        %6036 = vmatpush1.bf16.msra.mxu0 %v2419
        %6037 = vmatprep.subr.bf16.mxu0 %v2416
        %6038 = vmatpush1.bf16.msra.mxu0 %v2415
        %6039 = vmatprep.subr.bf16.mxu0 %v2412
        %6040 = vmatpush1.bf16.msra.mxu0 %v2411
        %6041 = vmatprep.subr.bf16.mxu0 %v2408
        %6042 = vmatpush1.bf16.msra.mxu0 %v2407
        %6043 = vmatprep.subr.bf16.mxu0 %v2468
        %6044 = vmatpush2.bf16.msra.mxu0 %v2467
        %6045 = vmatprep.subr.bf16.mxu0 %v2464
        %6046 = vmatpush2.bf16.msra.mxu0 %v2463
        %6047 = vmatprep.subr.bf16.mxu0 %v2460
        %6048 = vmatpush2.bf16.msra.mxu0 %v2459
        %6049 = vmatprep.subr.bf16.mxu0 %v2456
        %6050 = vmatpush2.bf16.msra.mxu0 %v2455
        %6051 = vmatprep.subr.bf16.mxu0 %v2452
        %6052 = vmatpush2.bf16.msra.mxu0 %v2451
        %6053 = vmatprep.subr.bf16.mxu0 %v2448
        %6054 = vmatpush2.bf16.msra.mxu0 %v2447
        %6055 = vmatprep.subr.bf16.mxu0 %v2444
        %6056 = vmatpush2.bf16.msra.mxu0 %v2443
        %6057 = vmatprep.subr.bf16.mxu0 %v2440
        %6058 = vmatpush2.bf16.msra.mxu0 %v2439
        %6059 = vmatprep.mubr.bf16.mxu0 %v5153
        %6060 = vmatmul.mubr.bf16.gmra.mxu0 %v5151
        %v6061 = vpop.f32.mrf.mxu0
        %v6062 = vadd.f32 %v6021, %v6061
        %v6063 = vpop.f32.mrf.mxu0
        %v6064 = vadd.f32 %v6023, %v6063
        %v6065 = vpop.f32.mrf.mxu0
        %v6066 = vpop.f32.mrf.mxu0
        %6067 = vdwg.mxu0
        %6068 = vmatprep.subr.bf16.mxu0 %v2500
        %6069 = vmatpush1.bf16.msra.mxu0 %v2499
        %6070 = vmatprep.subr.bf16.mxu0 %v2496
        %6071 = vmatpush1.bf16.msra.mxu0 %v2495
        %6072 = vmatprep.subr.bf16.mxu0 %v2492
        %6073 = vmatpush1.bf16.msra.mxu0 %v2491
        %6074 = vmatprep.subr.bf16.mxu0 %v2488
        %6075 = vmatpush1.bf16.msra.mxu0 %v2487
        %6076 = vmatprep.subr.bf16.mxu0 %v2484
        %6077 = vmatpush1.bf16.msra.mxu0 %v2483
        %6078 = vmatprep.subr.bf16.mxu0 %v2480
        %6079 = vmatpush1.bf16.msra.mxu0 %v2479
        %6080 = vmatprep.subr.bf16.mxu0 %v2476
        %6081 = vmatpush1.bf16.msra.mxu0 %v2475
        %6082 = vmatprep.subr.bf16.mxu0 %v2472
        %6083 = vmatpush1.bf16.msra.mxu0 %v2471
        %6084 = vmatprep.subr.bf16.mxu0 %v2532
        %6085 = vmatpush2.bf16.msra.mxu0 %v2531
        %6086 = vmatprep.subr.bf16.mxu0 %v2528
        %6087 = vmatpush2.bf16.msra.mxu0 %v2527
        %6088 = vmatprep.subr.bf16.mxu0 %v2524
        %6089 = vmatpush2.bf16.msra.mxu0 %v2523
        %6090 = vmatprep.subr.bf16.mxu0 %v2520
        %6091 = vmatpush2.bf16.msra.mxu0 %v2519
        %6092 = vmatprep.subr.bf16.mxu0 %v2516
        %6093 = vmatpush2.bf16.msra.mxu0 %v2515
        %6094 = vmatprep.subr.bf16.mxu0 %v2512
        %6095 = vmatpush2.bf16.msra.mxu0 %v2511
        %6096 = vmatprep.subr.bf16.mxu0 %v2508
        %6097 = vmatpush2.bf16.msra.mxu0 %v2507
        %6098 = vmatprep.subr.bf16.mxu0 %v2504
        %6099 = vmatpush2.bf16.msra.mxu0 %v2503
        %6100 = vmatprep.mubr.bf16.mxu0 %v5191
        %6101 = vmatmul.mubr.bf16.gmra.mxu0 %v5177
        %v6102 = vpop.f32.mrf.mxu0
        %v6103 = vadd.f32 %v6062, %v6102
        %v6104 = vpop.f32.mrf.mxu0
        %v6105 = vadd.f32 %v6064, %v6104
        %v6106 = vpop.f32.mrf.mxu0
        %v6107 = vpop.f32.mrf.mxu0
        %6108 = vdwg.mxu0
        %6109 = vmatprep.subr.bf16.mxu0 %v2564
        %6110 = vmatpush1.bf16.msra.mxu0 %v2563
        %6111 = vmatprep.subr.bf16.mxu0 %v2560
        %6112 = vmatpush1.bf16.msra.mxu0 %v2559
        %6113 = vmatprep.subr.bf16.mxu0 %v2556
        %6114 = vmatpush1.bf16.msra.mxu0 %v2555
        %6115 = vmatprep.subr.bf16.mxu0 %v2552
        %6116 = vmatpush1.bf16.msra.mxu0 %v2551
        %6117 = vmatprep.subr.bf16.mxu0 %v2548
        %6118 = vmatpush1.bf16.msra.mxu0 %v2547
        %6119 = vmatprep.subr.bf16.mxu0 %v2544
        %6120 = vmatpush1.bf16.msra.mxu0 %v2543
        %6121 = vmatprep.subr.bf16.mxu0 %v2540
        %6122 = vmatpush1.bf16.msra.mxu0 %v2539
        %6123 = vmatprep.subr.bf16.mxu0 %v2536
        %6124 = vmatpush1.bf16.msra.mxu0 %v2535
        %6125 = vmatprep.subr.bf16.mxu0 %v2596
        %6126 = vmatpush2.bf16.msra.mxu0 %v2595
        %6127 = vmatprep.subr.bf16.mxu0 %v2592
        %6128 = vmatpush2.bf16.msra.mxu0 %v2591
        %6129 = vmatprep.subr.bf16.mxu0 %v2588
        %6130 = vmatpush2.bf16.msra.mxu0 %v2587
        %6131 = vmatprep.subr.bf16.mxu0 %v2584
        %6132 = vmatpush2.bf16.msra.mxu0 %v2583
        %6133 = vmatprep.subr.bf16.mxu0 %v2580
        %6134 = vmatpush2.bf16.msra.mxu0 %v2579
        %6135 = vmatprep.subr.bf16.mxu0 %v2576
        %6136 = vmatpush2.bf16.msra.mxu0 %v2575
        %6137 = vmatprep.subr.bf16.mxu0 %v2572
        %6138 = vmatpush2.bf16.msra.mxu0 %v2571
        %6139 = vmatprep.subr.bf16.mxu0 %v2568
        %6140 = vmatpush2.bf16.msra.mxu0 %v2567
        %6141 = vmatprep.mubr.bf16.mxu0 %v5201
        %6142 = vmatmul.mubr.bf16.gmra.mxu0 %v5199
        %v6143 = vpop.f32.mrf.mxu0
        %v6144 = vadd.f32 %v6103, %v6143
        %v6145 = vpop.f32.mrf.mxu0
        %v6146 = vadd.f32 %v6105, %v6145
        %v6147 = vpop.f32.mrf.mxu0
        %v6148 = vpop.f32.mrf.mxu0
        %6149 = vdwg.mxu0
        %6150 = vmatprep.subr.bf16.mxu0 %v2628
        %6151 = vmatpush1.bf16.msra.mxu0 %v2627
        %6152 = vmatprep.subr.bf16.mxu0 %v2624
        %6153 = vmatpush1.bf16.msra.mxu0 %v2623
        %6154 = vmatprep.subr.bf16.mxu0 %v2620
        %6155 = vmatpush1.bf16.msra.mxu0 %v2619
        %6156 = vmatprep.subr.bf16.mxu0 %v2616
        %6157 = vmatpush1.bf16.msra.mxu0 %v2615
        %6158 = vmatprep.subr.bf16.mxu0 %v2612
        %6159 = vmatpush1.bf16.msra.mxu0 %v2611
        %6160 = vmatprep.subr.bf16.mxu0 %v2608
        %6161 = vmatpush1.bf16.msra.mxu0 %v2607
        %6162 = vmatprep.subr.bf16.mxu0 %v2604
        %6163 = vmatpush1.bf16.msra.mxu0 %v2603
        %6164 = vmatprep.subr.bf16.mxu0 %v2600
        %6165 = vmatpush1.bf16.msra.mxu0 %v2599
        %6166 = vmatprep.subr.bf16.mxu0 %v2660
        %6167 = vmatpush2.bf16.msra.mxu0 %v2659
        %6168 = vmatprep.subr.bf16.mxu0 %v2656
        %6169 = vmatpush2.bf16.msra.mxu0 %v2655
        %6170 = vmatprep.subr.bf16.mxu0 %v2652
        %6171 = vmatpush2.bf16.msra.mxu0 %v2651
        %6172 = vmatprep.subr.bf16.mxu0 %v2648
        %6173 = vmatpush2.bf16.msra.mxu0 %v2647
        %6174 = vmatprep.subr.bf16.mxu0 %v2644
        %6175 = vmatpush2.bf16.msra.mxu0 %v2643
        %6176 = vmatprep.subr.bf16.mxu0 %v2640
        %6177 = vmatpush2.bf16.msra.mxu0 %v2639
        %6178 = vmatprep.subr.bf16.mxu0 %v2636
        %6179 = vmatpush2.bf16.msra.mxu0 %v2635
        %6180 = vmatprep.subr.bf16.mxu0 %v2632
        %6181 = vmatpush2.bf16.msra.mxu0 %v2631
        %6182 = vmatprep.mubr.bf16.mxu0 %v5198
        %6183 = vmatmul.mubr.bf16.gmra.mxu0 %v5184
        %v6184 = vpop.f32.mrf.mxu0
        %v6185 = vadd.f32 %v6144, %v6184
        %v6186 = vpop.f32.mrf.mxu0
        %v6187 = vadd.f32 %v6146, %v6186
        %v6188 = vpop.f32.mrf.mxu0
        %v6189 = vpop.f32.mrf.mxu0
        %6190 = vdwg.mxu0
        %6191 = vmatprep.subr.bf16.mxu0 %v2692
        %6192 = vmatpush1.bf16.msra.mxu0 %v2691
        %6193 = vmatprep.subr.bf16.mxu0 %v2688
        %6194 = vmatpush1.bf16.msra.mxu0 %v2687
        %6195 = vmatprep.subr.bf16.mxu0 %v2684
        %6196 = vmatpush1.bf16.msra.mxu0 %v2683
        %6197 = vmatprep.subr.bf16.mxu0 %v2680
        %6198 = vmatpush1.bf16.msra.mxu0 %v2679
        %6199 = vmatprep.subr.bf16.mxu0 %v2676
        %6200 = vmatpush1.bf16.msra.mxu0 %v2675
        %6201 = vmatprep.subr.bf16.mxu0 %v2672
        %6202 = vmatpush1.bf16.msra.mxu0 %v2671
        %6203 = vmatprep.subr.bf16.mxu0 %v2668
        %6204 = vmatpush1.bf16.msra.mxu0 %v2667
        %6205 = vmatprep.subr.bf16.mxu0 %v2664
        %6206 = vmatpush1.bf16.msra.mxu0 %v2663
        %6207 = vmatprep.subr.bf16.mxu0 %v2724
        %6208 = vmatpush2.bf16.msra.mxu0 %v2723
        %6209 = vmatprep.subr.bf16.mxu0 %v2720
        %6210 = vmatpush2.bf16.msra.mxu0 %v2719
        %6211 = vmatprep.subr.bf16.mxu0 %v2716
        %6212 = vmatpush2.bf16.msra.mxu0 %v2715
        %6213 = vmatprep.subr.bf16.mxu0 %v2712
        %6214 = vmatpush2.bf16.msra.mxu0 %v2711
        %6215 = vmatprep.subr.bf16.mxu0 %v2708
        %6216 = vmatpush2.bf16.msra.mxu0 %v2707
        %6217 = vmatprep.subr.bf16.mxu0 %v2704
        %6218 = vmatpush2.bf16.msra.mxu0 %v2703
        %6219 = vmatprep.subr.bf16.mxu0 %v2700
        %6220 = vmatpush2.bf16.msra.mxu0 %v2699
        %6221 = vmatprep.subr.bf16.mxu0 %v2696
        %6222 = vmatpush2.bf16.msra.mxu0 %v2695
        %6223 = vmatprep.mubr.bf16.mxu0 %v5202
        %6224 = vmatmul.mubr.bf16.gmra.mxu0 %v5200
        %v6225 = vpop.f32.mrf.mxu0
        %v6226 = vadd.f32 %v6185, %v6225
        %v6227 = vpop.f32.mrf.mxu0
        %v6228 = vadd.f32 %v6187, %v6227
        %v6229 = vpop.f32.mrf.mxu0
        %v6230 = vpop.f32.mrf.mxu0
        %6231 = vdwg.mxu0
        %6232 = vmatprep.subr.bf16.mxu0 %v2756
        %6233 = vmatpush1.bf16.msra.mxu0 %v2755
        %6234 = vmatprep.subr.bf16.mxu0 %v2752
        %6235 = vmatpush1.bf16.msra.mxu0 %v2751
        %6236 = vmatprep.subr.bf16.mxu0 %v2748
        %6237 = vmatpush1.bf16.msra.mxu0 %v2747
        %6238 = vmatprep.subr.bf16.mxu0 %v2744
        %6239 = vmatpush1.bf16.msra.mxu0 %v2743
        %6240 = vmatprep.subr.bf16.mxu0 %v2740
        %6241 = vmatpush1.bf16.msra.mxu0 %v2739
        %6242 = vmatprep.subr.bf16.mxu0 %v2736
        %6243 = vmatpush1.bf16.msra.mxu0 %v2735
        %6244 = vmatprep.subr.bf16.mxu0 %v2732
        %6245 = vmatpush1.bf16.msra.mxu0 %v2731
        %6246 = vmatprep.subr.bf16.mxu0 %v2728
        %6247 = vmatpush1.bf16.msra.mxu0 %v2727
        %6248 = vmatprep.subr.bf16.mxu0 %v2788
        %6249 = vmatpush2.bf16.msra.mxu0 %v2787
        %6250 = vmatprep.subr.bf16.mxu0 %v2784
        %6251 = vmatpush2.bf16.msra.mxu0 %v2783
        %6252 = vmatprep.subr.bf16.mxu0 %v2780
        %6253 = vmatpush2.bf16.msra.mxu0 %v2779
        %6254 = vmatprep.subr.bf16.mxu0 %v2776
        %6255 = vmatpush2.bf16.msra.mxu0 %v2775
        %6256 = vmatprep.subr.bf16.mxu0 %v2772
        %6257 = vmatpush2.bf16.msra.mxu0 %v2771
        %6258 = vmatprep.subr.bf16.mxu0 %v2768
        %6259 = vmatpush2.bf16.msra.mxu0 %v2767
        %6260 = vmatprep.subr.bf16.mxu0 %v2764
        %6261 = vmatpush2.bf16.msra.mxu0 %v2763
        %6262 = vmatprep.subr.bf16.mxu0 %v2760
        %6263 = vmatpush2.bf16.msra.mxu0 %v2759
        %6264 = vmatprep.mubr.bf16.mxu0 %v5240
        %6265 = vmatmul.mubr.bf16.gmra.mxu0 %v5226
        %v6266 = vpop.f32.mrf.mxu0
        %v6267 = vadd.f32 %v6226, %v6266
        %v6268 = vpop.f32.mrf.mxu0
        %v6269 = vadd.f32 %v6228, %v6268
        %v6270 = vpop.f32.mrf.mxu0
        %v6271 = vpop.f32.mrf.mxu0
        %6272 = vdwg.mxu0
        %6273 = vmatprep.subr.bf16.mxu0 %v2820
        %6274 = vmatpush1.bf16.msra.mxu0 %v2819
        %6275 = vmatprep.subr.bf16.mxu0 %v2816
        %6276 = vmatpush1.bf16.msra.mxu0 %v2815
        %6277 = vmatprep.subr.bf16.mxu0 %v2812
        %6278 = vmatpush1.bf16.msra.mxu0 %v2811
        %6279 = vmatprep.subr.bf16.mxu0 %v2808
        %6280 = vmatpush1.bf16.msra.mxu0 %v2807
        %6281 = vmatprep.subr.bf16.mxu0 %v2804
        %6282 = vmatpush1.bf16.msra.mxu0 %v2803
        %6283 = vmatprep.subr.bf16.mxu0 %v2800
        %6284 = vmatpush1.bf16.msra.mxu0 %v2799
        %6285 = vmatprep.subr.bf16.mxu0 %v2796
        %6286 = vmatpush1.bf16.msra.mxu0 %v2795
        %6287 = vmatprep.subr.bf16.mxu0 %v2792
        %6288 = vmatpush1.bf16.msra.mxu0 %v2791
        %6289 = vmatprep.subr.bf16.mxu0 %v2852
        %6290 = vmatpush2.bf16.msra.mxu0 %v2851
        %6291 = vmatprep.subr.bf16.mxu0 %v2848
        %6292 = vmatpush2.bf16.msra.mxu0 %v2847
        %6293 = vmatprep.subr.bf16.mxu0 %v2844
        %6294 = vmatpush2.bf16.msra.mxu0 %v2843
        %6295 = vmatprep.subr.bf16.mxu0 %v2840
        %6296 = vmatpush2.bf16.msra.mxu0 %v2839
        %6297 = vmatprep.subr.bf16.mxu0 %v2836
        %6298 = vmatpush2.bf16.msra.mxu0 %v2835
        %6299 = vmatprep.subr.bf16.mxu0 %v2832
        %6300 = vmatpush2.bf16.msra.mxu0 %v2831
        %6301 = vmatprep.subr.bf16.mxu0 %v2828
        %6302 = vmatpush2.bf16.msra.mxu0 %v2827
        %6303 = vmatprep.subr.bf16.mxu0 %v2824
        %6304 = vmatpush2.bf16.msra.mxu0 %v2823
        %6305 = vmatprep.mubr.bf16.mxu0 %v5250
        %6306 = vmatmul.mubr.bf16.gmra.mxu0 %v5248
        %v6307 = vpop.f32.mrf.mxu0
        %v6308 = vadd.f32 %v6267, %v6307
        %v6309 = vpop.f32.mrf.mxu0
        %v6310 = vadd.f32 %v6269, %v6309
        %v6311 = vpop.f32.mrf.mxu0
        %v6312 = vpop.f32.mrf.mxu0
        %6313 = vdwg.mxu0
        %6314 = vmatprep.subr.bf16.mxu0 %v2884
        %6315 = vmatpush1.bf16.msra.mxu0 %v2883
        %6316 = vmatprep.subr.bf16.mxu0 %v2880
        %6317 = vmatpush1.bf16.msra.mxu0 %v2879
        %6318 = vmatprep.subr.bf16.mxu0 %v2876
        %6319 = vmatpush1.bf16.msra.mxu0 %v2875
        %6320 = vmatprep.subr.bf16.mxu0 %v2872
        %6321 = vmatpush1.bf16.msra.mxu0 %v2871
        %6322 = vmatprep.subr.bf16.mxu0 %v2868
        %6323 = vmatpush1.bf16.msra.mxu0 %v2867
        %6324 = vmatprep.subr.bf16.mxu0 %v2864
        %6325 = vmatpush1.bf16.msra.mxu0 %v2863
        %6326 = vmatprep.subr.bf16.mxu0 %v2860
        %6327 = vmatpush1.bf16.msra.mxu0 %v2859
        %6328 = vmatprep.subr.bf16.mxu0 %v2856
        %6329 = vmatpush1.bf16.msra.mxu0 %v2855
        %6330 = vmatprep.subr.bf16.mxu0 %v2916
        %6331 = vmatpush2.bf16.msra.mxu0 %v2915
        %6332 = vmatprep.subr.bf16.mxu0 %v2912
        %6333 = vmatpush2.bf16.msra.mxu0 %v2911
        %6334 = vmatprep.subr.bf16.mxu0 %v2908
        %6335 = vmatpush2.bf16.msra.mxu0 %v2907
        %6336 = vmatprep.subr.bf16.mxu0 %v2904
        %6337 = vmatpush2.bf16.msra.mxu0 %v2903
        %6338 = vmatprep.subr.bf16.mxu0 %v2900
        %6339 = vmatpush2.bf16.msra.mxu0 %v2899
        %6340 = vmatprep.subr.bf16.mxu0 %v2896
        %6341 = vmatpush2.bf16.msra.mxu0 %v2895
        %6342 = vmatprep.subr.bf16.mxu0 %v2892
        %6343 = vmatpush2.bf16.msra.mxu0 %v2891
        %6344 = vmatprep.subr.bf16.mxu0 %v2888
        %6345 = vmatpush2.bf16.msra.mxu0 %v2887
        %6346 = vmatprep.mubr.bf16.mxu0 %v5247
        %6347 = vmatmul.mubr.bf16.gmra.mxu0 %v5233
        %v6348 = vpop.f32.mrf.mxu0
        %v6349 = vadd.f32 %v6308, %v6348
        %v6350 = vpop.f32.mrf.mxu0
        %v6351 = vadd.f32 %v6310, %v6350
        %v6352 = vpop.f32.mrf.mxu0
        %v6353 = vpop.f32.mrf.mxu0
        %6354 = vdwg.mxu0
        %6355 = vmatprep.subr.bf16.mxu0 %v2948
        %6356 = vmatpush1.bf16.msra.mxu0 %v2947
        %6357 = vmatprep.subr.bf16.mxu0 %v2944
        %6358 = vmatpush1.bf16.msra.mxu0 %v2943
        %6359 = vmatprep.subr.bf16.mxu0 %v2940
        %6360 = vmatpush1.bf16.msra.mxu0 %v2939
        %6361 = vmatprep.subr.bf16.mxu0 %v2936
        %6362 = vmatpush1.bf16.msra.mxu0 %v2935
        %6363 = vmatprep.subr.bf16.mxu0 %v2932
        %6364 = vmatpush1.bf16.msra.mxu0 %v2931
        %6365 = vmatprep.subr.bf16.mxu0 %v2928
        %6366 = vmatpush1.bf16.msra.mxu0 %v2927
        %6367 = vmatprep.subr.bf16.mxu0 %v2924
        %6368 = vmatpush1.bf16.msra.mxu0 %v2923
        %6369 = vmatprep.subr.bf16.mxu0 %v2920
        %6370 = vmatpush1.bf16.msra.mxu0 %v2919
        %6371 = vmatprep.subr.bf16.mxu0 %v2980
        %6372 = vmatpush2.bf16.msra.mxu0 %v2979
        %6373 = vmatprep.subr.bf16.mxu0 %v2976
        %6374 = vmatpush2.bf16.msra.mxu0 %v2975
        %6375 = vmatprep.subr.bf16.mxu0 %v2972
        %6376 = vmatpush2.bf16.msra.mxu0 %v2971
        %6377 = vmatprep.subr.bf16.mxu0 %v2968
        %6378 = vmatpush2.bf16.msra.mxu0 %v2967
        %6379 = vmatprep.subr.bf16.mxu0 %v2964
        %6380 = vmatpush2.bf16.msra.mxu0 %v2963
        %6381 = vmatprep.subr.bf16.mxu0 %v2960
        %6382 = vmatpush2.bf16.msra.mxu0 %v2959
        %6383 = vmatprep.subr.bf16.mxu0 %v2956
        %6384 = vmatpush2.bf16.msra.mxu0 %v2955
        %6385 = vmatprep.subr.bf16.mxu0 %v2952
        %6386 = vmatpush2.bf16.msra.mxu0 %v2951
        %6387 = vmatprep.mubr.bf16.mxu0 %v5251
        %6388 = vmatmul.mubr.bf16.gmra.mxu0 %v5249
        %v6389 = vpop.f32.mrf.mxu0
        %v6390 = vadd.f32 %v6349, %v6389
        %v6391 = vpop.f32.mrf.mxu0
        %v6392 = vadd.f32 %v6351, %v6391
        %v6393 = vpop.f32.mrf.mxu0
        %v6394 = vpop.f32.mrf.mxu0
        %6395 = vdwg.mxu0
        %6396 = vmatprep.subr.bf16.mxu0 %v3012
        %6397 = vmatpush1.bf16.msra.mxu0 %v3011
        %6398 = vmatprep.subr.bf16.mxu0 %v3008
        %6399 = vmatpush1.bf16.msra.mxu0 %v3007
        %6400 = vmatprep.subr.bf16.mxu0 %v3004
        %6401 = vmatpush1.bf16.msra.mxu0 %v3003
        %6402 = vmatprep.subr.bf16.mxu0 %v3000
        %6403 = vmatpush1.bf16.msra.mxu0 %v2999
        %6404 = vmatprep.subr.bf16.mxu0 %v2996
        %6405 = vmatpush1.bf16.msra.mxu0 %v2995
        %6406 = vmatprep.subr.bf16.mxu0 %v2992
        %6407 = vmatpush1.bf16.msra.mxu0 %v2991
        %6408 = vmatprep.subr.bf16.mxu0 %v2988
        %6409 = vmatpush1.bf16.msra.mxu0 %v2987
        %6410 = vmatprep.subr.bf16.mxu0 %v2984
        %6411 = vmatpush1.bf16.msra.mxu0 %v2983
        %6412 = vmatprep.subr.bf16.mxu0 %v3044
        %6413 = vmatpush2.bf16.msra.mxu0 %v3043
        %6414 = vmatprep.subr.bf16.mxu0 %v3040
        %6415 = vmatpush2.bf16.msra.mxu0 %v3039
        %6416 = vmatprep.subr.bf16.mxu0 %v3036
        %6417 = vmatpush2.bf16.msra.mxu0 %v3035
        %6418 = vmatprep.subr.bf16.mxu0 %v3032
        %6419 = vmatpush2.bf16.msra.mxu0 %v3031
        %6420 = vmatprep.subr.bf16.mxu0 %v3028
        %6421 = vmatpush2.bf16.msra.mxu0 %v3027
        %6422 = vmatprep.subr.bf16.mxu0 %v3024
        %6423 = vmatpush2.bf16.msra.mxu0 %v3023
        %6424 = vmatprep.subr.bf16.mxu0 %v3020
        %6425 = vmatpush2.bf16.msra.mxu0 %v3019
        %6426 = vmatprep.subr.bf16.mxu0 %v3016
        %6427 = vmatpush2.bf16.msra.mxu0 %v3015
        %6428 = vmatprep.mubr.bf16.mxu0 %v5289
        %6429 = vmatmul.mubr.bf16.gmra.mxu0 %v5275
        %v6430 = vpop.f32.mrf.mxu0
        %v6431 = vadd.f32 %v6390, %v6430
        %v6432 = vpop.f32.mrf.mxu0
        %v6433 = vadd.f32 %v6392, %v6432
        %v6434 = vpop.f32.mrf.mxu0
        %v6435 = vpop.f32.mrf.mxu0
        %6436 = vdwg.mxu0
        %6437 = vmatprep.subr.bf16.mxu0 %v3076
        %6438 = vmatpush1.bf16.msra.mxu0 %v3075
        %6439 = vmatprep.subr.bf16.mxu0 %v3072
        %6440 = vmatpush1.bf16.msra.mxu0 %v3071
        %6441 = vmatprep.subr.bf16.mxu0 %v3068
        %6442 = vmatpush1.bf16.msra.mxu0 %v3067
        %6443 = vmatprep.subr.bf16.mxu0 %v3064
        %6444 = vmatpush1.bf16.msra.mxu0 %v3063
        %6445 = vmatprep.subr.bf16.mxu0 %v3060
        %6446 = vmatpush1.bf16.msra.mxu0 %v3059
        %6447 = vmatprep.subr.bf16.mxu0 %v3056
        %6448 = vmatpush1.bf16.msra.mxu0 %v3055
        %6449 = vmatprep.subr.bf16.mxu0 %v3052
        %6450 = vmatpush1.bf16.msra.mxu0 %v3051
        %6451 = vmatprep.subr.bf16.mxu0 %v3048
        %6452 = vmatpush1.bf16.msra.mxu0 %v3047
        %6453 = vmatprep.subr.bf16.mxu0 %v3108
        %6454 = vmatpush2.bf16.msra.mxu0 %v3107
        %6455 = vmatprep.subr.bf16.mxu0 %v3104
        %6456 = vmatpush2.bf16.msra.mxu0 %v3103
        %6457 = vmatprep.subr.bf16.mxu0 %v3100
        %6458 = vmatpush2.bf16.msra.mxu0 %v3099
        %6459 = vmatprep.subr.bf16.mxu0 %v3096
        %6460 = vmatpush2.bf16.msra.mxu0 %v3095
        %6461 = vmatprep.subr.bf16.mxu0 %v3092
        %6462 = vmatpush2.bf16.msra.mxu0 %v3091
        %6463 = vmatprep.subr.bf16.mxu0 %v3088
        %6464 = vmatpush2.bf16.msra.mxu0 %v3087
        %6465 = vmatprep.subr.bf16.mxu0 %v3084
        %6466 = vmatpush2.bf16.msra.mxu0 %v3083
        %6467 = vmatprep.subr.bf16.mxu0 %v3080
        %6468 = vmatpush2.bf16.msra.mxu0 %v3079
        %6469 = vmatprep.mubr.bf16.mxu0 %v5299
        %6470 = vmatmul.mubr.bf16.gmra.mxu0 %v5297
        %v6471 = vpop.f32.mrf.mxu0
        %v6472 = vadd.f32 %v6431, %v6471
        %v6473 = vpop.f32.mrf.mxu0
        %v6474 = vadd.f32 %v6433, %v6473
        %v6475 = vpop.f32.mrf.mxu0
        %v6476 = vpop.f32.mrf.mxu0
        %6477 = vdwg.mxu0
        %6478 = vmatprep.subr.bf16.mxu0 %v3140
        %6479 = vmatpush1.bf16.msra.mxu0 %v3139
        %6480 = vmatprep.subr.bf16.mxu0 %v3136
        %6481 = vmatpush1.bf16.msra.mxu0 %v3135
        %6482 = vmatprep.subr.bf16.mxu0 %v3132
        %6483 = vmatpush1.bf16.msra.mxu0 %v3131
        %6484 = vmatprep.subr.bf16.mxu0 %v3128
        %6485 = vmatpush1.bf16.msra.mxu0 %v3127
        %6486 = vmatprep.subr.bf16.mxu0 %v3124
        %6487 = vmatpush1.bf16.msra.mxu0 %v3123
        %6488 = vmatprep.subr.bf16.mxu0 %v3120
        %6489 = vmatpush1.bf16.msra.mxu0 %v3119
        %6490 = vmatprep.subr.bf16.mxu0 %v3116
        %6491 = vmatpush1.bf16.msra.mxu0 %v3115
        %6492 = vmatprep.subr.bf16.mxu0 %v3112
        %6493 = vmatpush1.bf16.msra.mxu0 %v3111
        %6494 = vmatprep.subr.bf16.mxu0 %v3172
        %6495 = vmatpush2.bf16.msra.mxu0 %v3171
        %6496 = vmatprep.subr.bf16.mxu0 %v3168
        %6497 = vmatpush2.bf16.msra.mxu0 %v3167
        %6498 = vmatprep.subr.bf16.mxu0 %v3164
        %6499 = vmatpush2.bf16.msra.mxu0 %v3163
        %6500 = vmatprep.subr.bf16.mxu0 %v3160
        %6501 = vmatpush2.bf16.msra.mxu0 %v3159
        %6502 = vmatprep.subr.bf16.mxu0 %v3156
        %6503 = vmatpush2.bf16.msra.mxu0 %v3155
        %6504 = vmatprep.subr.bf16.mxu0 %v3152
        %6505 = vmatpush2.bf16.msra.mxu0 %v3151
        %6506 = vmatprep.subr.bf16.mxu0 %v3148
        %6507 = vmatpush2.bf16.msra.mxu0 %v3147
        %6508 = vmatprep.subr.bf16.mxu0 %v3144
        %6509 = vmatpush2.bf16.msra.mxu0 %v3143
        %6510 = vmatprep.mubr.bf16.mxu0 %v5296
        %6511 = vmatmul.mubr.bf16.gmra.mxu0 %v5282
        %v6512 = vpop.f32.mrf.mxu0
        %v6513 = vadd.f32 %v6472, %v6512
        %v6514 = vpop.f32.mrf.mxu0
        %v6515 = vadd.f32 %v6474, %v6514
        %v6516 = vpop.f32.mrf.mxu0
        %v6517 = vpop.f32.mrf.mxu0
        %6518 = vdwg.mxu0
        %6519 = vmatprep.subr.bf16.mxu0 %v3204
        %6520 = vmatpush1.bf16.msra.mxu0 %v3203
        %6521 = vmatprep.subr.bf16.mxu0 %v3200
        %6522 = vmatpush1.bf16.msra.mxu0 %v3199
        %6523 = vmatprep.subr.bf16.mxu0 %v3196
        %6524 = vmatpush1.bf16.msra.mxu0 %v3195
        %6525 = vmatprep.subr.bf16.mxu0 %v3192
        %6526 = vmatpush1.bf16.msra.mxu0 %v3191
        %6527 = vmatprep.subr.bf16.mxu0 %v3188
        %6528 = vmatpush1.bf16.msra.mxu0 %v3187
        %6529 = vmatprep.subr.bf16.mxu0 %v3184
        %6530 = vmatpush1.bf16.msra.mxu0 %v3183
        %6531 = vmatprep.subr.bf16.mxu0 %v3180
        %6532 = vmatpush1.bf16.msra.mxu0 %v3179
        %6533 = vmatprep.subr.bf16.mxu0 %v3176
        %6534 = vmatpush1.bf16.msra.mxu0 %v3175
        %6535 = vmatprep.subr.bf16.mxu0 %v3236
        %6536 = vmatpush2.bf16.msra.mxu0 %v3235
        %6537 = vmatprep.subr.bf16.mxu0 %v3232
        %6538 = vmatpush2.bf16.msra.mxu0 %v3231
        %6539 = vmatprep.subr.bf16.mxu0 %v3228
        %6540 = vmatpush2.bf16.msra.mxu0 %v3227
        %6541 = vmatprep.subr.bf16.mxu0 %v3224
        %6542 = vmatpush2.bf16.msra.mxu0 %v3223
        %6543 = vmatprep.subr.bf16.mxu0 %v3220
        %6544 = vmatpush2.bf16.msra.mxu0 %v3219
        %6545 = vmatprep.subr.bf16.mxu0 %v3216
        %6546 = vmatpush2.bf16.msra.mxu0 %v3215
        %6547 = vmatprep.subr.bf16.mxu0 %v3212
        %6548 = vmatpush2.bf16.msra.mxu0 %v3211
        %6549 = vmatprep.subr.bf16.mxu0 %v3208
        %6550 = vmatpush2.bf16.msra.mxu0 %v3207
        %6551 = vmatprep.mubr.bf16.mxu0 %v5300
        %6552 = vmatmul.mubr.bf16.gmra.mxu0 %v5298
        %v6553 = vpop.f32.mrf.mxu0
        %v6554 = vadd.f32 %v6513, %v6553
        %v6555 = vpop.f32.mrf.mxu0
        %v6556 = vadd.f32 %v6515, %v6555
        %v6557 = vpop.f32.mrf.mxu0
        %v6558 = vpop.f32.mrf.mxu0
        %6559 = vdwg.mxu0
        %6560 = vmatprep.subr.bf16.mxu0 %v3268
        %6561 = vmatpush1.bf16.msra.mxu0 %v3267
        %6562 = vmatprep.subr.bf16.mxu0 %v3264
        %6563 = vmatpush1.bf16.msra.mxu0 %v3263
        %6564 = vmatprep.subr.bf16.mxu0 %v3260
        %6565 = vmatpush1.bf16.msra.mxu0 %v3259
        %6566 = vmatprep.subr.bf16.mxu0 %v3256
        %6567 = vmatpush1.bf16.msra.mxu0 %v3255
        %6568 = vmatprep.subr.bf16.mxu0 %v3252
        %6569 = vmatpush1.bf16.msra.mxu0 %v3251
        %6570 = vmatprep.subr.bf16.mxu0 %v3248
        %6571 = vmatpush1.bf16.msra.mxu0 %v3247
        %6572 = vmatprep.subr.bf16.mxu0 %v3244
        %6573 = vmatpush1.bf16.msra.mxu0 %v3243
        %6574 = vmatprep.subr.bf16.mxu0 %v3240
        %6575 = vmatpush1.bf16.msra.mxu0 %v3239
        %6576 = vmatprep.subr.bf16.mxu0 %v3300
        %6577 = vmatpush2.bf16.msra.mxu0 %v3299
        %6578 = vmatprep.subr.bf16.mxu0 %v3296
        %6579 = vmatpush2.bf16.msra.mxu0 %v3295
        %6580 = vmatprep.subr.bf16.mxu0 %v3292
        %6581 = vmatpush2.bf16.msra.mxu0 %v3291
        %6582 = vmatprep.subr.bf16.mxu0 %v3288
        %6583 = vmatpush2.bf16.msra.mxu0 %v3287
        %6584 = vmatprep.subr.bf16.mxu0 %v3284
        %6585 = vmatpush2.bf16.msra.mxu0 %v3283
        %6586 = vmatprep.subr.bf16.mxu0 %v3280
        %6587 = vmatpush2.bf16.msra.mxu0 %v3279
        %6588 = vmatprep.subr.bf16.mxu0 %v3276
        %6589 = vmatpush2.bf16.msra.mxu0 %v3275
        %6590 = vmatprep.subr.bf16.mxu0 %v3272
        %6591 = vmatpush2.bf16.msra.mxu0 %v3271
        %6592 = vmatprep.mubr.bf16.mxu0 %v5338
        %6593 = vmatmul.mubr.bf16.gmra.mxu0 %v5324
        %v6594 = vpop.f32.mrf.mxu0
        %v6595 = vadd.f32 %v6554, %v6594
        %v6596 = vpop.f32.mrf.mxu0
        %v6597 = vadd.f32 %v6556, %v6596
        %v6598 = vpop.f32.mrf.mxu0
        %v6599 = vpop.f32.mrf.mxu0
        %6600 = vdwg.mxu0
        %6601 = vmatprep.subr.bf16.mxu0 %v3332
        %6602 = vmatpush1.bf16.msra.mxu0 %v3331
        %6603 = vmatprep.subr.bf16.mxu0 %v3328
        %6604 = vmatpush1.bf16.msra.mxu0 %v3327
        %6605 = vmatprep.subr.bf16.mxu0 %v3324
        %6606 = vmatpush1.bf16.msra.mxu0 %v3323
        %6607 = vmatprep.subr.bf16.mxu0 %v3320
        %6608 = vmatpush1.bf16.msra.mxu0 %v3319
        %6609 = vmatprep.subr.bf16.mxu0 %v3316
        %6610 = vmatpush1.bf16.msra.mxu0 %v3315
        %6611 = vmatprep.subr.bf16.mxu0 %v3312
        %6612 = vmatpush1.bf16.msra.mxu0 %v3311
        %6613 = vmatprep.subr.bf16.mxu0 %v3308
        %6614 = vmatpush1.bf16.msra.mxu0 %v3307
        %6615 = vmatprep.subr.bf16.mxu0 %v3304
        %6616 = vmatpush1.bf16.msra.mxu0 %v3303
        %6617 = vmatprep.subr.bf16.mxu0 %v3364
        %6618 = vmatpush2.bf16.msra.mxu0 %v3363
        %6619 = vmatprep.subr.bf16.mxu0 %v3360
        %6620 = vmatpush2.bf16.msra.mxu0 %v3359
        %6621 = vmatprep.subr.bf16.mxu0 %v3356
        %6622 = vmatpush2.bf16.msra.mxu0 %v3355
        %6623 = vmatprep.subr.bf16.mxu0 %v3352
        %6624 = vmatpush2.bf16.msra.mxu0 %v3351
        %6625 = vmatprep.subr.bf16.mxu0 %v3348
        %6626 = vmatpush2.bf16.msra.mxu0 %v3347
        %6627 = vmatprep.subr.bf16.mxu0 %v3344
        %6628 = vmatpush2.bf16.msra.mxu0 %v3343
        %6629 = vmatprep.subr.bf16.mxu0 %v3340
        %6630 = vmatpush2.bf16.msra.mxu0 %v3339
        %6631 = vmatprep.subr.bf16.mxu0 %v3336
        %6632 = vmatpush2.bf16.msra.mxu0 %v3335
        %6633 = vmatprep.mubr.bf16.mxu0 %v5348
        %6634 = vmatmul.mubr.bf16.gmra.mxu0 %v5346
        %v6635 = vpop.f32.mrf.mxu0
        %v6636 = vadd.f32 %v6595, %v6635
        %v6637 = vpop.f32.mrf.mxu0
        %v6638 = vadd.f32 %v6597, %v6637
        %v6639 = vpop.f32.mrf.mxu0
        %v6640 = vpop.f32.mrf.mxu0
        %6641 = vdwg.mxu0
        %6642 = vmatprep.subr.bf16.mxu0 %v3396
        %6643 = vmatpush1.bf16.msra.mxu0 %v3395
        %6644 = vmatprep.subr.bf16.mxu0 %v3392
        %6645 = vmatpush1.bf16.msra.mxu0 %v3391
        %6646 = vmatprep.subr.bf16.mxu0 %v3388
        %6647 = vmatpush1.bf16.msra.mxu0 %v3387
        %6648 = vmatprep.subr.bf16.mxu0 %v3384
        %6649 = vmatpush1.bf16.msra.mxu0 %v3383
        %6650 = vmatprep.subr.bf16.mxu0 %v3380
        %6651 = vmatpush1.bf16.msra.mxu0 %v3379
        %6652 = vmatprep.subr.bf16.mxu0 %v3376
        %6653 = vmatpush1.bf16.msra.mxu0 %v3375
        %6654 = vmatprep.subr.bf16.mxu0 %v3372
        %6655 = vmatpush1.bf16.msra.mxu0 %v3371
        %6656 = vmatprep.subr.bf16.mxu0 %v3368
        %6657 = vmatpush1.bf16.msra.mxu0 %v3367
        %6658 = vmatprep.subr.bf16.mxu0 %v3428
        %6659 = vmatpush2.bf16.msra.mxu0 %v3427
        %6660 = vmatprep.subr.bf16.mxu0 %v3424
        %6661 = vmatpush2.bf16.msra.mxu0 %v3423
        %6662 = vmatprep.subr.bf16.mxu0 %v3420
        %6663 = vmatpush2.bf16.msra.mxu0 %v3419
        %6664 = vmatprep.subr.bf16.mxu0 %v3416
        %6665 = vmatpush2.bf16.msra.mxu0 %v3415
        %6666 = vmatprep.subr.bf16.mxu0 %v3412
        %6667 = vmatpush2.bf16.msra.mxu0 %v3411
        %6668 = vmatprep.subr.bf16.mxu0 %v3408
        %6669 = vmatpush2.bf16.msra.mxu0 %v3407
        %6670 = vmatprep.subr.bf16.mxu0 %v3404
        %6671 = vmatpush2.bf16.msra.mxu0 %v3403
        %6672 = vmatprep.subr.bf16.mxu0 %v3400
        %6673 = vmatpush2.bf16.msra.mxu0 %v3399
        %6674 = vmatprep.mubr.bf16.mxu0 %v5345
        %6675 = vmatmul.mubr.bf16.gmra.mxu0 %v5331
        %v6676 = vpop.f32.mrf.mxu0
        %v6677 = vadd.f32 %v6636, %v6676
        %v6678 = vpop.f32.mrf.mxu0
        %v6679 = vadd.f32 %v6638, %v6678
        %v6680 = vpop.f32.mrf.mxu0
        %v6681 = vpop.f32.mrf.mxu0
        %6682 = vdwg.mxu0
        %6683 = vmatprep.subr.bf16.mxu0 %v3460
        %6684 = vmatpush1.bf16.msra.mxu0 %v3459
        %6685 = vmatprep.subr.bf16.mxu0 %v3456
        %6686 = vmatpush1.bf16.msra.mxu0 %v3455
        %6687 = vmatprep.subr.bf16.mxu0 %v3452
        %6688 = vmatpush1.bf16.msra.mxu0 %v3451
        %6689 = vmatprep.subr.bf16.mxu0 %v3448
        %6690 = vmatpush1.bf16.msra.mxu0 %v3447
        %6691 = vmatprep.subr.bf16.mxu0 %v3444
        %6692 = vmatpush1.bf16.msra.mxu0 %v3443
        %6693 = vmatprep.subr.bf16.mxu0 %v3440
        %6694 = vmatpush1.bf16.msra.mxu0 %v3439
        %6695 = vmatprep.subr.bf16.mxu0 %v3436
        %6696 = vmatpush1.bf16.msra.mxu0 %v3435
        %6697 = vmatprep.subr.bf16.mxu0 %v3432
        %6698 = vmatpush1.bf16.msra.mxu0 %v3431
        %6699 = vmatprep.subr.bf16.mxu0 %v3492
        %6700 = vmatpush2.bf16.msra.mxu0 %v3491
        %6701 = vmatprep.subr.bf16.mxu0 %v3488
        %6702 = vmatpush2.bf16.msra.mxu0 %v3487
        %6703 = vmatprep.subr.bf16.mxu0 %v3484
        %6704 = vmatpush2.bf16.msra.mxu0 %v3483
        %6705 = vmatprep.subr.bf16.mxu0 %v3480
        %6706 = vmatpush2.bf16.msra.mxu0 %v3479
        %6707 = vmatprep.subr.bf16.mxu0 %v3476
        %6708 = vmatpush2.bf16.msra.mxu0 %v3475
        %6709 = vmatprep.subr.bf16.mxu0 %v3472
        %6710 = vmatpush2.bf16.msra.mxu0 %v3471
        %6711 = vmatprep.subr.bf16.mxu0 %v3468
        %6712 = vmatpush2.bf16.msra.mxu0 %v3467
        %6713 = vmatprep.subr.bf16.mxu0 %v3464
        %6714 = vmatpush2.bf16.msra.mxu0 %v3463
        %6715 = vmatprep.mubr.bf16.mxu0 %v5349
        %6716 = vmatmul.mubr.bf16.gmra.mxu0 %v5347
        %v6717 = vpop.f32.mrf.mxu0
        %v6718 = vadd.f32 %v6677, %v6717
        %v6719 = vpop.f32.mrf.mxu0
        %v6720 = vadd.f32 %v6679, %v6719
        %v6721 = vpop.f32.mrf.mxu0
        %v6722 = vpop.f32.mrf.mxu0
        %6723 = vdwg.mxu0
        %6724 = vmatprep.subr.bf16.mxu0 %v3524
        %6725 = vmatpush1.bf16.msra.mxu0 %v3523
        %6726 = vmatprep.subr.bf16.mxu0 %v3520
        %6727 = vmatpush1.bf16.msra.mxu0 %v3519
        %6728 = vmatprep.subr.bf16.mxu0 %v3516
        %6729 = vmatpush1.bf16.msra.mxu0 %v3515
        %6730 = vmatprep.subr.bf16.mxu0 %v3512
        %6731 = vmatpush1.bf16.msra.mxu0 %v3511
        %6732 = vmatprep.subr.bf16.mxu0 %v3508
        %6733 = vmatpush1.bf16.msra.mxu0 %v3507
        %6734 = vmatprep.subr.bf16.mxu0 %v3504
        %6735 = vmatpush1.bf16.msra.mxu0 %v3503
        %6736 = vmatprep.subr.bf16.mxu0 %v3500
        %6737 = vmatpush1.bf16.msra.mxu0 %v3499
        %6738 = vmatprep.subr.bf16.mxu0 %v3496
        %6739 = vmatpush1.bf16.msra.mxu0 %v3495
        %6740 = vmatprep.subr.bf16.mxu0 %v3556
        %6741 = vmatpush2.bf16.msra.mxu0 %v3555
        %6742 = vmatprep.subr.bf16.mxu0 %v3552
        %6743 = vmatpush2.bf16.msra.mxu0 %v3551
        %6744 = vmatprep.subr.bf16.mxu0 %v3548
        %6745 = vmatpush2.bf16.msra.mxu0 %v3547
        %6746 = vmatprep.subr.bf16.mxu0 %v3544
        %6747 = vmatpush2.bf16.msra.mxu0 %v3543
        %6748 = vmatprep.subr.bf16.mxu0 %v3540
        %6749 = vmatpush2.bf16.msra.mxu0 %v3539
        %6750 = vmatprep.subr.bf16.mxu0 %v3536
        %6751 = vmatpush2.bf16.msra.mxu0 %v3535
        %6752 = vmatprep.subr.bf16.mxu0 %v3532
        %6753 = vmatpush2.bf16.msra.mxu0 %v3531
        %6754 = vmatprep.subr.bf16.mxu0 %v3528
        %6755 = vmatpush2.bf16.msra.mxu0 %v3527
        %6756 = vmatprep.mubr.bf16.mxu0 %v5387
        %6757 = vmatmul.mubr.bf16.gmra.mxu0 %v5373
        %v6758 = vpop.f32.mrf.mxu0
        %v6759 = vadd.f32 %v6718, %v6758
        %v6760 = vpop.f32.mrf.mxu0
        %v6761 = vadd.f32 %v6720, %v6760
        %v6762 = vpop.f32.mrf.mxu0
        %v6763 = vpop.f32.mrf.mxu0
        %6764 = vdwg.mxu0
        %6765 = vmatprep.subr.bf16.mxu0 %v3588
        %6766 = vmatpush1.bf16.msra.mxu0 %v3587
        %6767 = vmatprep.subr.bf16.mxu0 %v3584
        %6768 = vmatpush1.bf16.msra.mxu0 %v3583
        %6769 = vmatprep.subr.bf16.mxu0 %v3580
        %6770 = vmatpush1.bf16.msra.mxu0 %v3579
        %6771 = vmatprep.subr.bf16.mxu0 %v3576
        %6772 = vmatpush1.bf16.msra.mxu0 %v3575
        %6773 = vmatprep.subr.bf16.mxu0 %v3572
        %6774 = vmatpush1.bf16.msra.mxu0 %v3571
        %6775 = vmatprep.subr.bf16.mxu0 %v3568
        %6776 = vmatpush1.bf16.msra.mxu0 %v3567
        %6777 = vmatprep.subr.bf16.mxu0 %v3564
        %6778 = vmatpush1.bf16.msra.mxu0 %v3563
        %6779 = vmatprep.subr.bf16.mxu0 %v3560
        %6780 = vmatpush1.bf16.msra.mxu0 %v3559
        %6781 = vmatprep.subr.bf16.mxu0 %v3620
        %6782 = vmatpush2.bf16.msra.mxu0 %v3619
        %6783 = vmatprep.subr.bf16.mxu0 %v3616
        %6784 = vmatpush2.bf16.msra.mxu0 %v3615
        %6785 = vmatprep.subr.bf16.mxu0 %v3612
        %6786 = vmatpush2.bf16.msra.mxu0 %v3611
        %6787 = vmatprep.subr.bf16.mxu0 %v3608
        %6788 = vmatpush2.bf16.msra.mxu0 %v3607
        %6789 = vmatprep.subr.bf16.mxu0 %v3604
        %6790 = vmatpush2.bf16.msra.mxu0 %v3603
        %6791 = vmatprep.subr.bf16.mxu0 %v3600
        %6792 = vmatpush2.bf16.msra.mxu0 %v3599
        %6793 = vmatprep.subr.bf16.mxu0 %v3596
        %6794 = vmatpush2.bf16.msra.mxu0 %v3595
        %6795 = vmatprep.subr.bf16.mxu0 %v3592
        %6796 = vmatpush2.bf16.msra.mxu0 %v3591
        %6797 = vmatprep.mubr.bf16.mxu0 %v5397
        %6798 = vmatmul.mubr.bf16.gmra.mxu0 %v5395
        %v6799 = vpop.f32.mrf.mxu0
        %v6800 = vadd.f32 %v6759, %v6799
        %v6801 = vpop.f32.mrf.mxu0
        %v6802 = vadd.f32 %v6761, %v6801
        %v6803 = vpop.f32.mrf.mxu0
        %v6804 = vpop.f32.mrf.mxu0
        %6805 = vdwg.mxu0
        %6806 = vmatprep.subr.bf16.mxu0 %v3652
        %6807 = vmatpush1.bf16.msra.mxu0 %v3651
        %6808 = vmatprep.subr.bf16.mxu0 %v3648
        %6809 = vmatpush1.bf16.msra.mxu0 %v3647
        %6810 = vmatprep.subr.bf16.mxu0 %v3644
        %6811 = vmatpush1.bf16.msra.mxu0 %v3643
        %6812 = vmatprep.subr.bf16.mxu0 %v3640
        %6813 = vmatpush1.bf16.msra.mxu0 %v3639
        %6814 = vmatprep.subr.bf16.mxu0 %v3636
        %6815 = vmatpush1.bf16.msra.mxu0 %v3635
        %6816 = vmatprep.subr.bf16.mxu0 %v3632
        %6817 = vmatpush1.bf16.msra.mxu0 %v3631
        %6818 = vmatprep.subr.bf16.mxu0 %v3628
        %6819 = vmatpush1.bf16.msra.mxu0 %v3627
        %6820 = vmatprep.subr.bf16.mxu0 %v3624
        %6821 = vmatpush1.bf16.msra.mxu0 %v3623
        %6822 = vmatprep.subr.bf16.mxu0 %v3684
        %6823 = vmatpush2.bf16.msra.mxu0 %v3683
        %6824 = vmatprep.subr.bf16.mxu0 %v3680
        %6825 = vmatpush2.bf16.msra.mxu0 %v3679
        %6826 = vmatprep.subr.bf16.mxu0 %v3676
        %6827 = vmatpush2.bf16.msra.mxu0 %v3675
        %6828 = vmatprep.subr.bf16.mxu0 %v3672
        %6829 = vmatpush2.bf16.msra.mxu0 %v3671
        %6830 = vmatprep.subr.bf16.mxu0 %v3668
        %6831 = vmatpush2.bf16.msra.mxu0 %v3667
        %6832 = vmatprep.subr.bf16.mxu0 %v3664
        %6833 = vmatpush2.bf16.msra.mxu0 %v3663
        %6834 = vmatprep.subr.bf16.mxu0 %v3660
        %6835 = vmatpush2.bf16.msra.mxu0 %v3659
        %6836 = vmatprep.subr.bf16.mxu0 %v3656
        %6837 = vmatpush2.bf16.msra.mxu0 %v3655
        %6838 = vmatprep.mubr.bf16.mxu0 %v5394
        %6839 = vmatmul.mubr.bf16.gmra.mxu0 %v5380
        %v6840 = vpop.f32.mrf.mxu0
        %v6841 = vadd.f32 %v6800, %v6840
        %v6842 = vpop.f32.mrf.mxu0
        %v6843 = vadd.f32 %v6802, %v6842
        %v6844 = vpop.f32.mrf.mxu0
        %v6845 = vpop.f32.mrf.mxu0
        %6846 = vdwg.mxu0
        %6847 = vmatprep.subr.bf16.mxu0 %v3716
        %6848 = vmatpush1.bf16.msra.mxu0 %v3715
        %6849 = vmatprep.subr.bf16.mxu0 %v3712
        %6850 = vmatpush1.bf16.msra.mxu0 %v3711
        %6851 = vmatprep.subr.bf16.mxu0 %v3708
        %6852 = vmatpush1.bf16.msra.mxu0 %v3707
        %6853 = vmatprep.subr.bf16.mxu0 %v3704
        %6854 = vmatpush1.bf16.msra.mxu0 %v3703
        %6855 = vmatprep.subr.bf16.mxu0 %v3700
        %6856 = vmatpush1.bf16.msra.mxu0 %v3699
        %6857 = vmatprep.subr.bf16.mxu0 %v3696
        %6858 = vmatpush1.bf16.msra.mxu0 %v3695
        %6859 = vmatprep.subr.bf16.mxu0 %v3692
        %6860 = vmatpush1.bf16.msra.mxu0 %v3691
        %6861 = vmatprep.subr.bf16.mxu0 %v3688
        %6862 = vmatpush1.bf16.msra.mxu0 %v3687
        %6863 = vmatprep.subr.bf16.mxu0 %v3748
        %6864 = vmatpush2.bf16.msra.mxu0 %v3747
        %6865 = vmatprep.subr.bf16.mxu0 %v3744
        %6866 = vmatpush2.bf16.msra.mxu0 %v3743
        %6867 = vmatprep.subr.bf16.mxu0 %v3740
        %6868 = vmatpush2.bf16.msra.mxu0 %v3739
        %6869 = vmatprep.subr.bf16.mxu0 %v3736
        %6870 = vmatpush2.bf16.msra.mxu0 %v3735
        %6871 = vmatprep.subr.bf16.mxu0 %v3732
        %6872 = vmatpush2.bf16.msra.mxu0 %v3731
        %6873 = vmatprep.subr.bf16.mxu0 %v3728
        %6874 = vmatpush2.bf16.msra.mxu0 %v3727
        %6875 = vmatprep.subr.bf16.mxu0 %v3724
        %6876 = vmatpush2.bf16.msra.mxu0 %v3723
        %6877 = vmatprep.subr.bf16.mxu0 %v3720
        %6878 = vmatpush2.bf16.msra.mxu0 %v3719
        %6879 = vmatprep.mubr.bf16.mxu0 %v5398
        %6880 = vmatmul.mubr.bf16.gmra.mxu0 %v5396
        %v6881 = vpop.f32.mrf.mxu0
        %v6882 = vadd.f32 %v6841, %v6881
        %v6883 = vpop.f32.mrf.mxu0
        %v6884 = vadd.f32 %v6843, %v6883
        %v6885 = vpop.f32.mrf.mxu0
        %v6886 = vpop.f32.mrf.mxu0
        %6887 = vdwg.mxu0
        %6888 = vmatprep.subr.bf16.mxu0 %v3780
        %6889 = vmatpush1.bf16.msra.mxu0 %v3779
        %6890 = vmatprep.subr.bf16.mxu0 %v3776
        %6891 = vmatpush1.bf16.msra.mxu0 %v3775
        %6892 = vmatprep.subr.bf16.mxu0 %v3772
        %6893 = vmatpush1.bf16.msra.mxu0 %v3771
        %6894 = vmatprep.subr.bf16.mxu0 %v3768
        %6895 = vmatpush1.bf16.msra.mxu0 %v3767
        %6896 = vmatprep.subr.bf16.mxu0 %v3764
        %6897 = vmatpush1.bf16.msra.mxu0 %v3763
        %6898 = vmatprep.subr.bf16.mxu0 %v3760
        %6899 = vmatpush1.bf16.msra.mxu0 %v3759
        %6900 = vmatprep.subr.bf16.mxu0 %v3756
        %6901 = vmatpush1.bf16.msra.mxu0 %v3755
        %6902 = vmatprep.subr.bf16.mxu0 %v3752
        %6903 = vmatpush1.bf16.msra.mxu0 %v3751
        %6904 = vmatprep.subr.bf16.mxu0 %v3812
        %6905 = vmatpush2.bf16.msra.mxu0 %v3811
        %6906 = vmatprep.subr.bf16.mxu0 %v3808
        %6907 = vmatpush2.bf16.msra.mxu0 %v3807
        %6908 = vmatprep.subr.bf16.mxu0 %v3804
        %6909 = vmatpush2.bf16.msra.mxu0 %v3803
        %6910 = vmatprep.subr.bf16.mxu0 %v3800
        %6911 = vmatpush2.bf16.msra.mxu0 %v3799
        %6912 = vmatprep.subr.bf16.mxu0 %v3796
        %6913 = vmatpush2.bf16.msra.mxu0 %v3795
        %6914 = vmatprep.subr.bf16.mxu0 %v3792
        %6915 = vmatpush2.bf16.msra.mxu0 %v3791
        %6916 = vmatprep.subr.bf16.mxu0 %v3788
        %6917 = vmatpush2.bf16.msra.mxu0 %v3787
        %6918 = vmatprep.subr.bf16.mxu0 %v3784
        %6919 = vmatpush2.bf16.msra.mxu0 %v3783
        %6920 = vmatprep.mubr.bf16.mxu0 %v5436
        %6921 = vmatmul.mubr.bf16.gmra.mxu0 %v5422
        %v6922 = vpop.f32.mrf.mxu0
        %v6923 = vadd.f32 %v6882, %v6922
        %v6924 = vpop.f32.mrf.mxu0
        %v6925 = vadd.f32 %v6884, %v6924
        %v6926 = vpop.f32.mrf.mxu0
        %v6927 = vpop.f32.mrf.mxu0
        %6928 = vdwg.mxu0
        %6929 = vmatprep.subr.bf16.mxu0 %v3844
        %6930 = vmatpush1.bf16.msra.mxu0 %v3843
        %6931 = vmatprep.subr.bf16.mxu0 %v3840
        %6932 = vmatpush1.bf16.msra.mxu0 %v3839
        %6933 = vmatprep.subr.bf16.mxu0 %v3836
        %6934 = vmatpush1.bf16.msra.mxu0 %v3835
        %6935 = vmatprep.subr.bf16.mxu0 %v3832
        %6936 = vmatpush1.bf16.msra.mxu0 %v3831
        %6937 = vmatprep.subr.bf16.mxu0 %v3828
        %6938 = vmatpush1.bf16.msra.mxu0 %v3827
        %6939 = vmatprep.subr.bf16.mxu0 %v3824
        %6940 = vmatpush1.bf16.msra.mxu0 %v3823
        %6941 = vmatprep.subr.bf16.mxu0 %v3820
        %6942 = vmatpush1.bf16.msra.mxu0 %v3819
        %6943 = vmatprep.subr.bf16.mxu0 %v3816
        %6944 = vmatpush1.bf16.msra.mxu0 %v3815
        %6945 = vmatprep.subr.bf16.mxu0 %v3876
        %6946 = vmatpush2.bf16.msra.mxu0 %v3875
        %6947 = vmatprep.subr.bf16.mxu0 %v3872
        %6948 = vmatpush2.bf16.msra.mxu0 %v3871
        %6949 = vmatprep.subr.bf16.mxu0 %v3868
        %6950 = vmatpush2.bf16.msra.mxu0 %v3867
        %6951 = vmatprep.subr.bf16.mxu0 %v3864
        %6952 = vmatpush2.bf16.msra.mxu0 %v3863
        %6953 = vmatprep.subr.bf16.mxu0 %v3860
        %6954 = vmatpush2.bf16.msra.mxu0 %v3859
        %6955 = vmatprep.subr.bf16.mxu0 %v3856
        %6956 = vmatpush2.bf16.msra.mxu0 %v3855
        %6957 = vmatprep.subr.bf16.mxu0 %v3852
        %6958 = vmatpush2.bf16.msra.mxu0 %v3851
        %6959 = vmatprep.subr.bf16.mxu0 %v3848
        %6960 = vmatpush2.bf16.msra.mxu0 %v3847
        %6961 = vmatprep.mubr.bf16.mxu0 %v5446
        %6962 = vmatmul.mubr.bf16.gmra.mxu0 %v5444
        %v6963 = vpop.f32.mrf.mxu0
        %v6964 = vadd.f32 %v6923, %v6963
        %v6965 = vpop.f32.mrf.mxu0
        %v6966 = vadd.f32 %v6925, %v6965
        %v6967 = vpop.f32.mrf.mxu0
        %v6968 = vpop.f32.mrf.mxu0
        %6969 = vdwg.mxu0
        %6970 = vmatprep.subr.bf16.mxu0 %v3908
        %6971 = vmatpush1.bf16.msra.mxu0 %v3907
        %6972 = vmatprep.subr.bf16.mxu0 %v3904
        %6973 = vmatpush1.bf16.msra.mxu0 %v3903
        %6974 = vmatprep.subr.bf16.mxu0 %v3900
        %6975 = vmatpush1.bf16.msra.mxu0 %v3899
        %6976 = vmatprep.subr.bf16.mxu0 %v3896
        %6977 = vmatpush1.bf16.msra.mxu0 %v3895
        %6978 = vmatprep.subr.bf16.mxu0 %v3892
        %6979 = vmatpush1.bf16.msra.mxu0 %v3891
        %6980 = vmatprep.subr.bf16.mxu0 %v3888
        %6981 = vmatpush1.bf16.msra.mxu0 %v3887
        %6982 = vmatprep.subr.bf16.mxu0 %v3884
        %6983 = vmatpush1.bf16.msra.mxu0 %v3883
        %6984 = vmatprep.subr.bf16.mxu0 %v3880
        %6985 = vmatpush1.bf16.msra.mxu0 %v3879
        %6986 = vmatprep.subr.bf16.mxu0 %v3940
        %6987 = vmatpush2.bf16.msra.mxu0 %v3939
        %6988 = vmatprep.subr.bf16.mxu0 %v3936
        %6989 = vmatpush2.bf16.msra.mxu0 %v3935
        %6990 = vmatprep.subr.bf16.mxu0 %v3932
        %6991 = vmatpush2.bf16.msra.mxu0 %v3931
        %6992 = vmatprep.subr.bf16.mxu0 %v3928
        %6993 = vmatpush2.bf16.msra.mxu0 %v3927
        %6994 = vmatprep.subr.bf16.mxu0 %v3924
        %6995 = vmatpush2.bf16.msra.mxu0 %v3923
        %6996 = vmatprep.subr.bf16.mxu0 %v3920
        %6997 = vmatpush2.bf16.msra.mxu0 %v3919
        %6998 = vmatprep.subr.bf16.mxu0 %v3916
        %6999 = vmatpush2.bf16.msra.mxu0 %v3915
        %7000 = vmatprep.subr.bf16.mxu0 %v3912
        %7001 = vmatpush2.bf16.msra.mxu0 %v3911
        %7002 = vmatprep.mubr.bf16.mxu0 %v5443
        %7003 = vmatmul.mubr.bf16.gmra.mxu0 %v5429
        %v7004 = vpop.f32.mrf.mxu0
        %v7005 = vadd.f32 %v6964, %v7004
        %v7006 = vpop.f32.mrf.mxu0
        %v7007 = vadd.f32 %v6966, %v7006
        %v7008 = vpop.f32.mrf.mxu0
        %v7009 = vpop.f32.mrf.mxu0
        %7010 = vdwg.mxu0
        %7011 = vmatprep.subr.bf16.mxu0 %v3972
        %7012 = vmatpush1.bf16.msra.mxu0 %v3971
        %7013 = vmatprep.subr.bf16.mxu0 %v3968
        %7014 = vmatpush1.bf16.msra.mxu0 %v3967
        %7015 = vmatprep.subr.bf16.mxu0 %v3964
        %7016 = vmatpush1.bf16.msra.mxu0 %v3963
        %7017 = vmatprep.subr.bf16.mxu0 %v3960
        %7018 = vmatpush1.bf16.msra.mxu0 %v3959
        %7019 = vmatprep.subr.bf16.mxu0 %v3956
        %7020 = vmatpush1.bf16.msra.mxu0 %v3955
        %7021 = vmatprep.subr.bf16.mxu0 %v3952
        %7022 = vmatpush1.bf16.msra.mxu0 %v3951
        %7023 = vmatprep.subr.bf16.mxu0 %v3948
        %7024 = vmatpush1.bf16.msra.mxu0 %v3947
        %7025 = vmatprep.subr.bf16.mxu0 %v3944
        %7026 = vmatpush1.bf16.msra.mxu0 %v3943
        %7027 = vmatprep.subr.bf16.mxu0 %v4004
        %7028 = vmatpush2.bf16.msra.mxu0 %v4003
        %7029 = vmatprep.subr.bf16.mxu0 %v4000
        %7030 = vmatpush2.bf16.msra.mxu0 %v3999
        %7031 = vmatprep.subr.bf16.mxu0 %v3996
        %7032 = vmatpush2.bf16.msra.mxu0 %v3995
        %7033 = vmatprep.subr.bf16.mxu0 %v3992
        %7034 = vmatpush2.bf16.msra.mxu0 %v3991
        %7035 = vmatprep.subr.bf16.mxu0 %v3988
        %7036 = vmatpush2.bf16.msra.mxu0 %v3987
        %7037 = vmatprep.subr.bf16.mxu0 %v3984
        %7038 = vmatpush2.bf16.msra.mxu0 %v3983
        %7039 = vmatprep.subr.bf16.mxu0 %v3980
        %7040 = vmatpush2.bf16.msra.mxu0 %v3979
        %7041 = vmatprep.subr.bf16.mxu0 %v3976
        %7042 = vmatpush2.bf16.msra.mxu0 %v3975
        %7043 = vmatprep.mubr.bf16.mxu0 %v5447
        %7044 = vmatmul.mubr.bf16.gmra.mxu0 %v5445
        %v7045 = vpop.f32.mrf.mxu0
        %v7046 = vadd.f32 %v7005, %v7045
        %v7047 = vpop.f32.mrf.mxu0
        %v7048 = vadd.f32 %v7007, %v7047
        %v7049 = vpop.f32.mrf.mxu0
        %v7050 = vpop.f32.mrf.mxu0
        %7051 = vdwg.mxu0
        %7052 = vmatprep.subr.bf16.mxu0 %v4036
        %7053 = vmatpush1.bf16.msra.mxu0 %v4035
        %7054 = vmatprep.subr.bf16.mxu0 %v4032
        %7055 = vmatpush1.bf16.msra.mxu0 %v4031
        %7056 = vmatprep.subr.bf16.mxu0 %v4028
        %7057 = vmatpush1.bf16.msra.mxu0 %v4027
        %7058 = vmatprep.subr.bf16.mxu0 %v4024
        %7059 = vmatpush1.bf16.msra.mxu0 %v4023
        %7060 = vmatprep.subr.bf16.mxu0 %v4020
        %7061 = vmatpush1.bf16.msra.mxu0 %v4019
        %7062 = vmatprep.subr.bf16.mxu0 %v4016
        %7063 = vmatpush1.bf16.msra.mxu0 %v4015
        %7064 = vmatprep.subr.bf16.mxu0 %v4012
        %7065 = vmatpush1.bf16.msra.mxu0 %v4011
        %7066 = vmatprep.subr.bf16.mxu0 %v4008
        %7067 = vmatpush1.bf16.msra.mxu0 %v4007
        %7068 = vmatprep.subr.bf16.mxu0 %v4068
        %7069 = vmatpush2.bf16.msra.mxu0 %v4067
        %7070 = vmatprep.subr.bf16.mxu0 %v4064
        %7071 = vmatpush2.bf16.msra.mxu0 %v4063
        %7072 = vmatprep.subr.bf16.mxu0 %v4060
        %7073 = vmatpush2.bf16.msra.mxu0 %v4059
        %7074 = vmatprep.subr.bf16.mxu0 %v4056
        %7075 = vmatpush2.bf16.msra.mxu0 %v4055
        %7076 = vmatprep.subr.bf16.mxu0 %v4052
        %7077 = vmatpush2.bf16.msra.mxu0 %v4051
        %7078 = vmatprep.subr.bf16.mxu0 %v4048
        %7079 = vmatpush2.bf16.msra.mxu0 %v4047
        %7080 = vmatprep.subr.bf16.mxu0 %v4044
        %7081 = vmatpush2.bf16.msra.mxu0 %v4043
        %7082 = vmatprep.subr.bf16.mxu0 %v4040
        %7083 = vmatpush2.bf16.msra.mxu0 %v4039
        %7084 = vmatprep.mubr.bf16.mxu0 %v5485
        %7085 = vmatmul.mubr.bf16.gmra.mxu0 %v5471
        %v7086 = vpop.f32.mrf.mxu0
        %v7087 = vadd.f32 %v7046, %v7086
        %v7088 = vpop.f32.mrf.mxu0
        %v7089 = vadd.f32 %v7048, %v7088
        %v7090 = vpop.f32.mrf.mxu0
        %v7091 = vpop.f32.mrf.mxu0
        %7092 = vdwg.mxu0
        %7093 = vmatprep.subr.bf16.mxu0 %v4100
        %7094 = vmatpush1.bf16.msra.mxu0 %v4099
        %7095 = vmatprep.subr.bf16.mxu0 %v4096
        %7096 = vmatpush1.bf16.msra.mxu0 %v4095
        %7097 = vmatprep.subr.bf16.mxu0 %v4092
        %7098 = vmatpush1.bf16.msra.mxu0 %v4091
        %7099 = vmatprep.subr.bf16.mxu0 %v4088
        %7100 = vmatpush1.bf16.msra.mxu0 %v4087
        %7101 = vmatprep.subr.bf16.mxu0 %v4084
        %7102 = vmatpush1.bf16.msra.mxu0 %v4083
        %7103 = vmatprep.subr.bf16.mxu0 %v4080
        %7104 = vmatpush1.bf16.msra.mxu0 %v4079
        %7105 = vmatprep.subr.bf16.mxu0 %v4076
        %7106 = vmatpush1.bf16.msra.mxu0 %v4075
        %7107 = vmatprep.subr.bf16.mxu0 %v4072
        %7108 = vmatpush1.bf16.msra.mxu0 %v4071
        %7109 = vmatprep.subr.bf16.mxu0 %v4132
        %7110 = vmatpush2.bf16.msra.mxu0 %v4131
        %7111 = vmatprep.subr.bf16.mxu0 %v4128
        %7112 = vmatpush2.bf16.msra.mxu0 %v4127
        %7113 = vmatprep.subr.bf16.mxu0 %v4124
        %7114 = vmatpush2.bf16.msra.mxu0 %v4123
        %7115 = vmatprep.subr.bf16.mxu0 %v4120
        %7116 = vmatpush2.bf16.msra.mxu0 %v4119
        %7117 = vmatprep.subr.bf16.mxu0 %v4116
        %7118 = vmatpush2.bf16.msra.mxu0 %v4115
        %7119 = vmatprep.subr.bf16.mxu0 %v4112
        %7120 = vmatpush2.bf16.msra.mxu0 %v4111
        %7121 = vmatprep.subr.bf16.mxu0 %v4108
        %7122 = vmatpush2.bf16.msra.mxu0 %v4107
        %7123 = vmatprep.subr.bf16.mxu0 %v4104
        %7124 = vmatpush2.bf16.msra.mxu0 %v4103
        %7125 = vmatprep.mubr.bf16.mxu0 %v5495
        %7126 = vmatmul.mubr.bf16.gmra.mxu0 %v5493
        %v7127 = vpop.f32.mrf.mxu0
        %v7128 = vadd.f32 %v7087, %v7127
        %v7129 = vpop.f32.mrf.mxu0
        %v7130 = vadd.f32 %v7089, %v7129
        %v7131 = vpop.f32.mrf.mxu0
        %v7132 = vpop.f32.mrf.mxu0
        %7133 = vdwg.mxu0
        %7134 = vmatprep.subr.bf16.mxu0 %v4164
        %7135 = vmatpush1.bf16.msra.mxu0 %v4163
        %7136 = vmatprep.subr.bf16.mxu0 %v4160
        %7137 = vmatpush1.bf16.msra.mxu0 %v4159
        %7138 = vmatprep.subr.bf16.mxu0 %v4156
        %7139 = vmatpush1.bf16.msra.mxu0 %v4155
        %7140 = vmatprep.subr.bf16.mxu0 %v4152
        %7141 = vmatpush1.bf16.msra.mxu0 %v4151
        %7142 = vmatprep.subr.bf16.mxu0 %v4148
        %7143 = vmatpush1.bf16.msra.mxu0 %v4147
        %7144 = vmatprep.subr.bf16.mxu0 %v4144
        %7145 = vmatpush1.bf16.msra.mxu0 %v4143
        %7146 = vmatprep.subr.bf16.mxu0 %v4140
        %7147 = vmatpush1.bf16.msra.mxu0 %v4139
        %7148 = vmatprep.subr.bf16.mxu0 %v4136
        %7149 = vmatpush1.bf16.msra.mxu0 %v4135
        %7150 = vmatprep.subr.bf16.mxu0 %v4196
        %7151 = vmatpush2.bf16.msra.mxu0 %v4195
        %7152 = vmatprep.subr.bf16.mxu0 %v4192
        %7153 = vmatpush2.bf16.msra.mxu0 %v4191
        %7154 = vmatprep.subr.bf16.mxu0 %v4188
        %7155 = vmatpush2.bf16.msra.mxu0 %v4187
        %7156 = vmatprep.subr.bf16.mxu0 %v4184
        %7157 = vmatpush2.bf16.msra.mxu0 %v4183
        %7158 = vmatprep.subr.bf16.mxu0 %v4180
        %7159 = vmatpush2.bf16.msra.mxu0 %v4179
        %7160 = vmatprep.subr.bf16.mxu0 %v4176
        %7161 = vmatpush2.bf16.msra.mxu0 %v4175
        %7162 = vmatprep.subr.bf16.mxu0 %v4172
        %7163 = vmatpush2.bf16.msra.mxu0 %v4171
        %7164 = vmatprep.subr.bf16.mxu0 %v4168
        %7165 = vmatpush2.bf16.msra.mxu0 %v4167
        %7166 = vmatprep.mubr.bf16.mxu0 %v5492
        %7167 = vmatmul.mubr.bf16.gmra.mxu0 %v5478
        %v7168 = vpop.f32.mrf.mxu0
        %v7169 = vadd.f32 %v7128, %v7168
        %v7170 = vpop.f32.mrf.mxu0
        %v7171 = vadd.f32 %v7130, %v7170
        %v7172 = vpop.f32.mrf.mxu0
        %v7173 = vpop.f32.mrf.mxu0
        %7174 = vdwg.mxu0
        %7175 = vmatprep.subr.bf16.mxu0 %v4228
        %7176 = vmatpush1.bf16.msra.mxu0 %v4227
        %7177 = vmatprep.subr.bf16.mxu0 %v4224
        %7178 = vmatpush1.bf16.msra.mxu0 %v4223
        %7179 = vmatprep.subr.bf16.mxu0 %v4220
        %7180 = vmatpush1.bf16.msra.mxu0 %v4219
        %7181 = vmatprep.subr.bf16.mxu0 %v4216
        %7182 = vmatpush1.bf16.msra.mxu0 %v4215
        %7183 = vmatprep.subr.bf16.mxu0 %v4212
        %7184 = vmatpush1.bf16.msra.mxu0 %v4211
        %7185 = vmatprep.subr.bf16.mxu0 %v4208
        %7186 = vmatpush1.bf16.msra.mxu0 %v4207
        %7187 = vmatprep.subr.bf16.mxu0 %v4204
        %7188 = vmatpush1.bf16.msra.mxu0 %v4203
        %7189 = vmatprep.subr.bf16.mxu0 %v4200
        %7190 = vmatpush1.bf16.msra.mxu0 %v4199
        %7191 = vmatprep.subr.bf16.mxu0 %v4260
        %7192 = vmatpush2.bf16.msra.mxu0 %v4259
        %7193 = vmatprep.subr.bf16.mxu0 %v4256
        %7194 = vmatpush2.bf16.msra.mxu0 %v4255
        %7195 = vmatprep.subr.bf16.mxu0 %v4252
        %7196 = vmatpush2.bf16.msra.mxu0 %v4251
        %7197 = vmatprep.subr.bf16.mxu0 %v4248
        %7198 = vmatpush2.bf16.msra.mxu0 %v4247
        %7199 = vmatprep.subr.bf16.mxu0 %v4244
        %7200 = vmatpush2.bf16.msra.mxu0 %v4243
        %7201 = vmatprep.subr.bf16.mxu0 %v4240
        %7202 = vmatpush2.bf16.msra.mxu0 %v4239
        %7203 = vmatprep.subr.bf16.mxu0 %v4236
        %7204 = vmatpush2.bf16.msra.mxu0 %v4235
        %7205 = vmatprep.subr.bf16.mxu0 %v4232
        %7206 = vmatpush2.bf16.msra.mxu0 %v4231
        %7207 = vmatprep.mubr.bf16.mxu0 %v5496
        %7208 = vmatmul.mubr.bf16.gmra.mxu0 %v5494
        %v7209 = vpop.f32.mrf.mxu0
        %v7210 = vadd.f32 %v7169, %v7209
        %v7211 = vpop.f32.mrf.mxu0
        %v7212 = vadd.f32 %v7171, %v7211
        %v7213 = vpop.f32.mrf.mxu0
        %v7214 = vpop.f32.mrf.mxu0
        %7215 = vdwg.mxu0
        %7216 = vmatprep.subr.bf16.mxu0 %v4292
        %7217 = vmatpush1.bf16.msra.mxu0 %v4291
        %7218 = vmatprep.subr.bf16.mxu0 %v4288
        %7219 = vmatpush1.bf16.msra.mxu0 %v4287
        %7220 = vmatprep.subr.bf16.mxu0 %v4284
        %7221 = vmatpush1.bf16.msra.mxu0 %v4283
        %7222 = vmatprep.subr.bf16.mxu0 %v4280
        %7223 = vmatpush1.bf16.msra.mxu0 %v4279
        %7224 = vmatprep.subr.bf16.mxu0 %v4276
        %7225 = vmatpush1.bf16.msra.mxu0 %v4275
        %7226 = vmatprep.subr.bf16.mxu0 %v4272
        %7227 = vmatpush1.bf16.msra.mxu0 %v4271
        %7228 = vmatprep.subr.bf16.mxu0 %v4268
        %7229 = vmatpush1.bf16.msra.mxu0 %v4267
        %7230 = vmatprep.subr.bf16.mxu0 %v4264
        %7231 = vmatpush1.bf16.msra.mxu0 %v4263
        %7232 = vmatprep.subr.bf16.mxu0 %v4324
        %7233 = vmatpush2.bf16.msra.mxu0 %v4323
        %7234 = vmatprep.subr.bf16.mxu0 %v4320
        %7235 = vmatpush2.bf16.msra.mxu0 %v4319
        %7236 = vmatprep.subr.bf16.mxu0 %v4316
        %7237 = vmatpush2.bf16.msra.mxu0 %v4315
        %7238 = vmatprep.subr.bf16.mxu0 %v4312
        %7239 = vmatpush2.bf16.msra.mxu0 %v4311
        %7240 = vmatprep.subr.bf16.mxu0 %v4308
        %7241 = vmatpush2.bf16.msra.mxu0 %v4307
        %7242 = vmatprep.subr.bf16.mxu0 %v4304
        %7243 = vmatpush2.bf16.msra.mxu0 %v4303
        %7244 = vmatprep.subr.bf16.mxu0 %v4300
        %7245 = vmatpush2.bf16.msra.mxu0 %v4299
        %7246 = vmatprep.subr.bf16.mxu0 %v4296
        %7247 = vmatpush2.bf16.msra.mxu0 %v4295
        %7248 = vmatprep.mubr.bf16.mxu0 %v5534
        %7249 = vmatmul.mubr.bf16.gmra.mxu0 %v5520
        %v7250 = vpop.f32.mrf.mxu0
        %v7251 = vadd.f32 %v7210, %v7250
        %v7252 = vpop.f32.mrf.mxu0
        %v7253 = vadd.f32 %v7212, %v7252
        %v7254 = vpop.f32.mrf.mxu0
        %v7255 = vpop.f32.mrf.mxu0
        %7256 = vdwg.mxu0
        %7257 = vmatprep.subr.bf16.mxu0 %v4356
        %7258 = vmatpush1.bf16.msra.mxu0 %v4355
        %7259 = vmatprep.subr.bf16.mxu0 %v4352
        %7260 = vmatpush1.bf16.msra.mxu0 %v4351
        %7261 = vmatprep.subr.bf16.mxu0 %v4348
        %7262 = vmatpush1.bf16.msra.mxu0 %v4347
        %7263 = vmatprep.subr.bf16.mxu0 %v4344
        %7264 = vmatpush1.bf16.msra.mxu0 %v4343
        %7265 = vmatprep.subr.bf16.mxu0 %v4340
        %7266 = vmatpush1.bf16.msra.mxu0 %v4339
        %7267 = vmatprep.subr.bf16.mxu0 %v4336
        %7268 = vmatpush1.bf16.msra.mxu0 %v4335
        %7269 = vmatprep.subr.bf16.mxu0 %v4332
        %7270 = vmatpush1.bf16.msra.mxu0 %v4331
        %7271 = vmatprep.subr.bf16.mxu0 %v4328
        %7272 = vmatpush1.bf16.msra.mxu0 %v4327
        %7273 = vmatprep.subr.bf16.mxu0 %v4388
        %7274 = vmatpush2.bf16.msra.mxu0 %v4387
        %7275 = vmatprep.subr.bf16.mxu0 %v4384
        %7276 = vmatpush2.bf16.msra.mxu0 %v4383
        %7277 = vmatprep.subr.bf16.mxu0 %v4380
        %7278 = vmatpush2.bf16.msra.mxu0 %v4379
        %7279 = vmatprep.subr.bf16.mxu0 %v4376
        %7280 = vmatpush2.bf16.msra.mxu0 %v4375
        %7281 = vmatprep.subr.bf16.mxu0 %v4372
        %7282 = vmatpush2.bf16.msra.mxu0 %v4371
        %7283 = vmatprep.subr.bf16.mxu0 %v4368
        %7284 = vmatpush2.bf16.msra.mxu0 %v4367
        %7285 = vmatprep.subr.bf16.mxu0 %v4364
        %7286 = vmatpush2.bf16.msra.mxu0 %v4363
        %7287 = vmatprep.subr.bf16.mxu0 %v4360
        %7288 = vmatpush2.bf16.msra.mxu0 %v4359
        %7289 = vmatprep.mubr.bf16.mxu0 %v5544
        %7290 = vmatmul.mubr.bf16.gmra.mxu0 %v5542
        %v7291 = vpop.f32.mrf.mxu0
        %v7292 = vadd.f32 %v7251, %v7291
        %v7293 = vpop.f32.mrf.mxu0
        %v7294 = vadd.f32 %v7253, %v7293
        %v7295 = vpop.f32.mrf.mxu0
        %v7296 = vpop.f32.mrf.mxu0
        %7297 = vdwg.mxu0
        %7298 = vmatprep.subr.bf16.mxu0 %v4420
        %7299 = vmatpush1.bf16.msra.mxu0 %v4419
        %7300 = vmatprep.subr.bf16.mxu0 %v4416
        %7301 = vmatpush1.bf16.msra.mxu0 %v4415
        %7302 = vmatprep.subr.bf16.mxu0 %v4412
        %7303 = vmatpush1.bf16.msra.mxu0 %v4411
        %7304 = vmatprep.subr.bf16.mxu0 %v4408
        %7305 = vmatpush1.bf16.msra.mxu0 %v4407
        %7306 = vmatprep.subr.bf16.mxu0 %v4404
        %7307 = vmatpush1.bf16.msra.mxu0 %v4403
        %7308 = vmatprep.subr.bf16.mxu0 %v4400
        %7309 = vmatpush1.bf16.msra.mxu0 %v4399
        %7310 = vmatprep.subr.bf16.mxu0 %v4396
        %7311 = vmatpush1.bf16.msra.mxu0 %v4395
        %7312 = vmatprep.subr.bf16.mxu0 %v4392
        %7313 = vmatpush1.bf16.msra.mxu0 %v4391
        %7314 = vmatprep.subr.bf16.mxu0 %v4452
        %7315 = vmatpush2.bf16.msra.mxu0 %v4451
        %7316 = vmatprep.subr.bf16.mxu0 %v4448
        %7317 = vmatpush2.bf16.msra.mxu0 %v4447
        %7318 = vmatprep.subr.bf16.mxu0 %v4444
        %7319 = vmatpush2.bf16.msra.mxu0 %v4443
        %7320 = vmatprep.subr.bf16.mxu0 %v4440
        %7321 = vmatpush2.bf16.msra.mxu0 %v4439
        %7322 = vmatprep.subr.bf16.mxu0 %v4436
        %7323 = vmatpush2.bf16.msra.mxu0 %v4435
        %7324 = vmatprep.subr.bf16.mxu0 %v4432
        %7325 = vmatpush2.bf16.msra.mxu0 %v4431
        %7326 = vmatprep.subr.bf16.mxu0 %v4428
        %7327 = vmatpush2.bf16.msra.mxu0 %v4427
        %7328 = vmatprep.subr.bf16.mxu0 %v4424
        %7329 = vmatpush2.bf16.msra.mxu0 %v4423
        %7330 = vmatprep.mubr.bf16.mxu0 %v5541
        %7331 = vmatmul.mubr.bf16.gmra.mxu0 %v5527
        %v7332 = vpop.f32.mrf.mxu0
        %v7333 = vadd.f32 %v7292, %v7332
        %v7334 = vpop.f32.mrf.mxu0
        %v7335 = vadd.f32 %v7294, %v7334
        %v7336 = vpop.f32.mrf.mxu0
        %v7337 = vpop.f32.mrf.mxu0
        %7338 = vdwg.mxu0
        %7339 = vmatprep.subr.bf16.mxu0 %v4484
        %7340 = vmatpush1.bf16.msra.mxu0 %v4483
        %7341 = vmatprep.subr.bf16.mxu0 %v4480
        %7342 = vmatpush1.bf16.msra.mxu0 %v4479
        %7343 = vmatprep.subr.bf16.mxu0 %v4476
        %7344 = vmatpush1.bf16.msra.mxu0 %v4475
        %7345 = vmatprep.subr.bf16.mxu0 %v4472
        %7346 = vmatpush1.bf16.msra.mxu0 %v4471
        %7347 = vmatprep.subr.bf16.mxu0 %v4468
        %7348 = vmatpush1.bf16.msra.mxu0 %v4467
        %7349 = vmatprep.subr.bf16.mxu0 %v4464
        %7350 = vmatpush1.bf16.msra.mxu0 %v4463
        %7351 = vmatprep.subr.bf16.mxu0 %v4460
        %7352 = vmatpush1.bf16.msra.mxu0 %v4459
        %7353 = vmatprep.subr.bf16.mxu0 %v4456
        %7354 = vmatpush1.bf16.msra.mxu0 %v4455
        %7355 = vmatprep.subr.bf16.mxu0 %v4516
        %7356 = vmatpush2.bf16.msra.mxu0 %v4515
        %7357 = vmatprep.subr.bf16.mxu0 %v4512
        %7358 = vmatpush2.bf16.msra.mxu0 %v4511
        %7359 = vmatprep.subr.bf16.mxu0 %v4508
        %7360 = vmatpush2.bf16.msra.mxu0 %v4507
        %7361 = vmatprep.subr.bf16.mxu0 %v4504
        %7362 = vmatpush2.bf16.msra.mxu0 %v4503
        %7363 = vmatprep.subr.bf16.mxu0 %v4500
        %7364 = vmatpush2.bf16.msra.mxu0 %v4499
        %7365 = vmatprep.subr.bf16.mxu0 %v4496
        %7366 = vmatpush2.bf16.msra.mxu0 %v4495
        %7367 = vmatprep.subr.bf16.mxu0 %v4492
        %7368 = vmatpush2.bf16.msra.mxu0 %v4491
        %7369 = vmatprep.subr.bf16.mxu0 %v4488
        %7370 = vmatpush2.bf16.msra.mxu0 %v4487
        %7371 = vmatprep.mubr.bf16.mxu0 %v5545
        %7372 = vmatmul.mubr.bf16.gmra.mxu0 %v5543
        %v7373 = vpop.f32.mrf.mxu0
        %v7374 = vadd.f32 %v7333, %v7373
        %v7375 = vpop.f32.mrf.mxu0
        %v7376 = vadd.f32 %v7335, %v7375
        %v7377 = vpop.f32.mrf.mxu0
        %v7378 = vpop.f32.mrf.mxu0
        %7379 = vdwg.mxu0
        %7380 = vmatprep.subr.bf16.mxu0 %v4548
        %7381 = vmatpush1.bf16.msra.mxu0 %v4547
        %7382 = vmatprep.subr.bf16.mxu0 %v4544
        %7383 = vmatpush1.bf16.msra.mxu0 %v4543
        %7384 = vmatprep.subr.bf16.mxu0 %v4540
        %7385 = vmatpush1.bf16.msra.mxu0 %v4539
        %7386 = vmatprep.subr.bf16.mxu0 %v4536
        %7387 = vmatpush1.bf16.msra.mxu0 %v4535
        %7388 = vmatprep.subr.bf16.mxu0 %v4532
        %7389 = vmatpush1.bf16.msra.mxu0 %v4531
        %7390 = vmatprep.subr.bf16.mxu0 %v4528
        %7391 = vmatpush1.bf16.msra.mxu0 %v4527
        %7392 = vmatprep.subr.bf16.mxu0 %v4524
        %7393 = vmatpush1.bf16.msra.mxu0 %v4523
        %7394 = vmatprep.subr.bf16.mxu0 %v4520
        %7395 = vmatpush1.bf16.msra.mxu0 %v4519
        %7396 = vmatprep.subr.bf16.mxu0 %v4580
        %7397 = vmatpush2.bf16.msra.mxu0 %v4579
        %7398 = vmatprep.subr.bf16.mxu0 %v4576
        %7399 = vmatpush2.bf16.msra.mxu0 %v4575
        %7400 = vmatprep.subr.bf16.mxu0 %v4572
        %7401 = vmatpush2.bf16.msra.mxu0 %v4571
        %7402 = vmatprep.subr.bf16.mxu0 %v4568
        %7403 = vmatpush2.bf16.msra.mxu0 %v4567
        %7404 = vmatprep.subr.bf16.mxu0 %v4564
        %7405 = vmatpush2.bf16.msra.mxu0 %v4563
        %7406 = vmatprep.subr.bf16.mxu0 %v4560
        %7407 = vmatpush2.bf16.msra.mxu0 %v4559
        %7408 = vmatprep.subr.bf16.mxu0 %v4556
        %7409 = vmatpush2.bf16.msra.mxu0 %v4555
        %7410 = vmatprep.subr.bf16.mxu0 %v4552
        %7411 = vmatpush2.bf16.msra.mxu0 %v4551
        %7412 = vmatprep.mubr.bf16.mxu0 %v5583
        %7413 = vmatmul.mubr.bf16.gmra.mxu0 %v5569
        %v7414 = vpop.f32.mrf.mxu0
        %v7415 = vadd.f32 %v7374, %v7414
        %v7416 = vpop.f32.mrf.mxu0
        %v7417 = vadd.f32 %v7376, %v7416
        %v7418 = vpop.f32.mrf.mxu0
        %v7419 = vpop.f32.mrf.mxu0
        %7420 = vdwg.mxu0
        %7421 = vmatprep.subr.bf16.mxu0 %v4612
        %7422 = vmatpush1.bf16.msra.mxu0 %v4611
        %7423 = vmatprep.subr.bf16.mxu0 %v4608
        %7424 = vmatpush1.bf16.msra.mxu0 %v4607
        %7425 = vmatprep.subr.bf16.mxu0 %v4604
        %7426 = vmatpush1.bf16.msra.mxu0 %v4603
        %7427 = vmatprep.subr.bf16.mxu0 %v4600
        %7428 = vmatpush1.bf16.msra.mxu0 %v4599
        %7429 = vmatprep.subr.bf16.mxu0 %v4596
        %7430 = vmatpush1.bf16.msra.mxu0 %v4595
        %7431 = vmatprep.subr.bf16.mxu0 %v4592
        %7432 = vmatpush1.bf16.msra.mxu0 %v4591
        %7433 = vmatprep.subr.bf16.mxu0 %v4588
        %7434 = vmatpush1.bf16.msra.mxu0 %v4587
        %7435 = vmatprep.subr.bf16.mxu0 %v4584
        %7436 = vmatpush1.bf16.msra.mxu0 %v4583
        %7437 = vmatprep.subr.bf16.mxu0 %v4644
        %7438 = vmatpush2.bf16.msra.mxu0 %v4643
        %7439 = vmatprep.subr.bf16.mxu0 %v4640
        %7440 = vmatpush2.bf16.msra.mxu0 %v4639
        %7441 = vmatprep.subr.bf16.mxu0 %v4636
        %7442 = vmatpush2.bf16.msra.mxu0 %v4635
        %7443 = vmatprep.subr.bf16.mxu0 %v4632
        %7444 = vmatpush2.bf16.msra.mxu0 %v4631
        %7445 = vmatprep.subr.bf16.mxu0 %v4628
        %7446 = vmatpush2.bf16.msra.mxu0 %v4627
        %7447 = vmatprep.subr.bf16.mxu0 %v4624
        %7448 = vmatpush2.bf16.msra.mxu0 %v4623
        %7449 = vmatprep.subr.bf16.mxu0 %v4620
        %7450 = vmatpush2.bf16.msra.mxu0 %v4619
        %7451 = vmatprep.subr.bf16.mxu0 %v4616
        %7452 = vmatpush2.bf16.msra.mxu0 %v4615
        %7453 = vmatprep.mubr.bf16.mxu0 %v5593
        %7454 = vmatmul.mubr.bf16.gmra.mxu0 %v5591
        %v7455 = vpop.f32.mrf.mxu0
        %v7456 = vadd.f32 %v7415, %v7455
        %v7457 = vpop.f32.mrf.mxu0
        %v7458 = vadd.f32 %v7417, %v7457
        %v7459 = vpop.f32.mrf.mxu0
        %v7460 = vpop.f32.mrf.mxu0
        %7461 = vdwg.mxu0
        %7462 = vmatprep.subr.bf16.mxu0 %v4676
        %7463 = vmatpush1.bf16.msra.mxu0 %v4675
        %7464 = vmatprep.subr.bf16.mxu0 %v4672
        %7465 = vmatpush1.bf16.msra.mxu0 %v4671
        %7466 = vmatprep.subr.bf16.mxu0 %v4668
        %7467 = vmatpush1.bf16.msra.mxu0 %v4667
        %7468 = vmatprep.subr.bf16.mxu0 %v4664
        %7469 = vmatpush1.bf16.msra.mxu0 %v4663
        %7470 = vmatprep.subr.bf16.mxu0 %v4660
        %7471 = vmatpush1.bf16.msra.mxu0 %v4659
        %7472 = vmatprep.subr.bf16.mxu0 %v4656
        %7473 = vmatpush1.bf16.msra.mxu0 %v4655
        %7474 = vmatprep.subr.bf16.mxu0 %v4652
        %7475 = vmatpush1.bf16.msra.mxu0 %v4651
        %7476 = vmatprep.subr.bf16.mxu0 %v4648
        %7477 = vmatpush1.bf16.msra.mxu0 %v4647
        %7478 = vmatprep.subr.bf16.mxu0 %v4708
        %7479 = vmatpush2.bf16.msra.mxu0 %v4707
        %7480 = vmatprep.subr.bf16.mxu0 %v4704
        %7481 = vmatpush2.bf16.msra.mxu0 %v4703
        %7482 = vmatprep.subr.bf16.mxu0 %v4700
        %7483 = vmatpush2.bf16.msra.mxu0 %v4699
        %7484 = vmatprep.subr.bf16.mxu0 %v4696
        %7485 = vmatpush2.bf16.msra.mxu0 %v4695
        %7486 = vmatprep.subr.bf16.mxu0 %v4692
        %7487 = vmatpush2.bf16.msra.mxu0 %v4691
        %7488 = vmatprep.subr.bf16.mxu0 %v4688
        %7489 = vmatpush2.bf16.msra.mxu0 %v4687
        %7490 = vmatprep.subr.bf16.mxu0 %v4684
        %7491 = vmatpush2.bf16.msra.mxu0 %v4683
        %7492 = vmatprep.subr.bf16.mxu0 %v4680
        %7493 = vmatpush2.bf16.msra.mxu0 %v4679
        %7494 = vmatprep.mubr.bf16.mxu0 %v5590
        %7495 = vmatmul.mubr.bf16.gmra.mxu0 %v5576
        %v7496 = vpop.f32.mrf.mxu0
        %v7497 = vadd.f32 %v7456, %v7496
        %v7498 = vpop.f32.mrf.mxu0
        %v7499 = vadd.f32 %v7458, %v7498
        %v7500 = vpop.f32.mrf.mxu0
        %v7501 = vpop.f32.mrf.mxu0
        %7502 = vdwg.mxu0
        %7503 = vmatprep.subr.bf16.mxu0 %v4740
        %7504 = vmatpush1.bf16.msra.mxu0 %v4739
        %7505 = vmatprep.subr.bf16.mxu0 %v4736
        %7506 = vmatpush1.bf16.msra.mxu0 %v4735
        %7507 = vmatprep.subr.bf16.mxu0 %v4732
        %7508 = vmatpush1.bf16.msra.mxu0 %v4731
        %7509 = vmatprep.subr.bf16.mxu0 %v4728
        %7510 = vmatpush1.bf16.msra.mxu0 %v4727
        %7511 = vmatprep.subr.bf16.mxu0 %v4724
        %7512 = vmatpush1.bf16.msra.mxu0 %v4723
        %7513 = vmatprep.subr.bf16.mxu0 %v4720
        %7514 = vmatpush1.bf16.msra.mxu0 %v4719
        %7515 = vmatprep.subr.bf16.mxu0 %v4716
        %7516 = vmatpush1.bf16.msra.mxu0 %v4715
        %7517 = vmatprep.subr.bf16.mxu0 %v4712
        %7518 = vmatpush1.bf16.msra.mxu0 %v4711
        %7519 = vmatprep.subr.bf16.mxu0 %v4772
        %7520 = vmatpush2.bf16.msra.mxu0 %v4771
        %7521 = vmatprep.subr.bf16.mxu0 %v4768
        %7522 = vmatpush2.bf16.msra.mxu0 %v4767
        %7523 = vmatprep.subr.bf16.mxu0 %v4764
        %7524 = vmatpush2.bf16.msra.mxu0 %v4763
        %7525 = vmatprep.subr.bf16.mxu0 %v4760
        %7526 = vmatpush2.bf16.msra.mxu0 %v4759
        %7527 = vmatprep.subr.bf16.mxu0 %v4756
        %7528 = vmatpush2.bf16.msra.mxu0 %v4755
        %7529 = vmatprep.subr.bf16.mxu0 %v4752
        %7530 = vmatpush2.bf16.msra.mxu0 %v4751
        %7531 = vmatprep.subr.bf16.mxu0 %v4748
        %7532 = vmatpush2.bf16.msra.mxu0 %v4747
        %7533 = vmatprep.subr.bf16.mxu0 %v4744
        %7534 = vmatpush2.bf16.msra.mxu0 %v4743
        %7535 = vmatprep.mubr.bf16.mxu0 %v5594
        %7536 = vmatmul.mubr.bf16.gmra.mxu0 %v5592
        %v7537 = vpop.f32.mrf.mxu0
        %v7538 = vadd.f32 %v7497, %v7537
        %v7539 = vpop.f32.mrf.mxu0
        %v7540 = vadd.f32 %v7499, %v7539
        %v7541 = vpop.f32.mrf.mxu0
        %v7542 = vpop.f32.mrf.mxu0
        %7543 = vdwg.mxu0
        %7544 = vmatprep.subr.bf16.mxu0 %v4804
        %7545 = vmatpush1.bf16.msra.mxu0 %v4803
        %7546 = vmatprep.subr.bf16.mxu0 %v4800
        %7547 = vmatpush1.bf16.msra.mxu0 %v4799
        %7548 = vmatprep.subr.bf16.mxu0 %v4796
        %7549 = vmatpush1.bf16.msra.mxu0 %v4795
        %7550 = vmatprep.subr.bf16.mxu0 %v4792
        %7551 = vmatpush1.bf16.msra.mxu0 %v4791
        %7552 = vmatprep.subr.bf16.mxu0 %v4788
        %7553 = vmatpush1.bf16.msra.mxu0 %v4787
        %7554 = vmatprep.subr.bf16.mxu0 %v4784
        %7555 = vmatpush1.bf16.msra.mxu0 %v4783
        %7556 = vmatprep.subr.bf16.mxu0 %v4780
        %7557 = vmatpush1.bf16.msra.mxu0 %v4779
        %7558 = vmatprep.subr.bf16.mxu0 %v4776
        %7559 = vmatpush1.bf16.msra.mxu0 %v4775
        %7560 = vmatprep.subr.bf16.mxu0 %v4836
        %7561 = vmatpush2.bf16.msra.mxu0 %v4835
        %7562 = vmatprep.subr.bf16.mxu0 %v4832
        %7563 = vmatpush2.bf16.msra.mxu0 %v4831
        %7564 = vmatprep.subr.bf16.mxu0 %v4828
        %7565 = vmatpush2.bf16.msra.mxu0 %v4827
        %7566 = vmatprep.subr.bf16.mxu0 %v4824
        %7567 = vmatpush2.bf16.msra.mxu0 %v4823
        %7568 = vmatprep.subr.bf16.mxu0 %v4820
        %7569 = vmatpush2.bf16.msra.mxu0 %v4819
        %7570 = vmatprep.subr.bf16.mxu0 %v4816
        %7571 = vmatpush2.bf16.msra.mxu0 %v4815
        %7572 = vmatprep.subr.bf16.mxu0 %v4812
        %7573 = vmatpush2.bf16.msra.mxu0 %v4811
        %7574 = vmatprep.subr.bf16.mxu0 %v4808
        %7575 = vmatpush2.bf16.msra.mxu0 %v4807
        %7576 = vmatprep.mubr.bf16.mxu0 %v5632
        %7577 = vmatmul.mubr.bf16.gmra.mxu0 %v5618
        %v7578 = vpop.f32.mrf.mxu0
        %v7579 = vadd.f32 %v7538, %v7578
        %v7580 = vpop.f32.mrf.mxu0
        %v7581 = vadd.f32 %v7540, %v7580
        %v7582 = vpop.f32.mrf.mxu0
        %v7583 = vpop.f32.mrf.mxu0
        %7584 = vdwg.mxu0
        %7585 = vmatprep.subr.bf16.mxu0 %v4868
        %7586 = vmatpush1.bf16.msra.mxu0 %v4867
        %7587 = vmatprep.subr.bf16.mxu0 %v4864
        %7588 = vmatpush1.bf16.msra.mxu0 %v4863
        %7589 = vmatprep.subr.bf16.mxu0 %v4860
        %7590 = vmatpush1.bf16.msra.mxu0 %v4859
        %7591 = vmatprep.subr.bf16.mxu0 %v4856
        %7592 = vmatpush1.bf16.msra.mxu0 %v4855
        %7593 = vmatprep.subr.bf16.mxu0 %v4852
        %7594 = vmatpush1.bf16.msra.mxu0 %v4851
        %7595 = vmatprep.subr.bf16.mxu0 %v4848
        %7596 = vmatpush1.bf16.msra.mxu0 %v4847
        %7597 = vmatprep.subr.bf16.mxu0 %v4844
        %7598 = vmatpush1.bf16.msra.mxu0 %v4843
        %7599 = vmatprep.subr.bf16.mxu0 %v4840
        %7600 = vmatpush1.bf16.msra.mxu0 %v4839
        %7601 = vmatprep.subr.bf16.mxu0 %v4900
        %7602 = vmatpush2.bf16.msra.mxu0 %v4899
        %7603 = vmatprep.subr.bf16.mxu0 %v4896
        %7604 = vmatpush2.bf16.msra.mxu0 %v4895
        %7605 = vmatprep.subr.bf16.mxu0 %v4892
        %7606 = vmatpush2.bf16.msra.mxu0 %v4891
        %7607 = vmatprep.subr.bf16.mxu0 %v4888
        %7608 = vmatpush2.bf16.msra.mxu0 %v4887
        %7609 = vmatprep.subr.bf16.mxu0 %v4884
        %7610 = vmatpush2.bf16.msra.mxu0 %v4883
        %7611 = vmatprep.subr.bf16.mxu0 %v4880
        %7612 = vmatpush2.bf16.msra.mxu0 %v4879
        %7613 = vmatprep.subr.bf16.mxu0 %v4876
        %7614 = vmatpush2.bf16.msra.mxu0 %v4875
        %7615 = vmatprep.subr.bf16.mxu0 %v4872
        %7616 = vmatpush2.bf16.msra.mxu0 %v4871
        %7617 = vmatprep.mubr.bf16.mxu0 %v5642
        %7618 = vmatmul.mubr.bf16.gmra.mxu0 %v5640
        %v7619 = vpop.f32.mrf.mxu0
        %v7620 = vadd.f32 %v7579, %v7619
        %v7621 = vpop.f32.mrf.mxu0
        %v7622 = vadd.f32 %v7581, %v7621
        %v7623 = vpop.f32.mrf.mxu0
        %v7624 = vpop.f32.mrf.mxu0
        %7625 = vdwg.mxu0
        %7626 = vmatprep.subr.bf16.mxu0 %v4932
        %7627 = vmatpush1.bf16.msra.mxu0 %v4931
        %7628 = vmatprep.subr.bf16.mxu0 %v4928
        %7629 = vmatpush1.bf16.msra.mxu0 %v4927
        %7630 = vmatprep.subr.bf16.mxu0 %v4924
        %7631 = vmatpush1.bf16.msra.mxu0 %v4923
        %7632 = vmatprep.subr.bf16.mxu0 %v4920
        %7633 = vmatpush1.bf16.msra.mxu0 %v4919
        %7634 = vmatprep.subr.bf16.mxu0 %v4916
        %7635 = vmatpush1.bf16.msra.mxu0 %v4915
        %7636 = vmatprep.subr.bf16.mxu0 %v4912
        %7637 = vmatpush1.bf16.msra.mxu0 %v4911
        %7638 = vmatprep.subr.bf16.mxu0 %v4908
        %7639 = vmatpush1.bf16.msra.mxu0 %v4907
        %7640 = vmatprep.subr.bf16.mxu0 %v4904
        %7641 = vmatpush1.bf16.msra.mxu0 %v4903
        %7642 = vmatprep.subr.bf16.mxu0 %v4964
        %7643 = vmatpush2.bf16.msra.mxu0 %v4963
        %7644 = vmatprep.subr.bf16.mxu0 %v4960
        %7645 = vmatpush2.bf16.msra.mxu0 %v4959
        %7646 = vmatprep.subr.bf16.mxu0 %v4956
        %7647 = vmatpush2.bf16.msra.mxu0 %v4955
        %7648 = vmatprep.subr.bf16.mxu0 %v4952
        %7649 = vmatpush2.bf16.msra.mxu0 %v4951
        %7650 = vmatprep.subr.bf16.mxu0 %v4948
        %7651 = vmatpush2.bf16.msra.mxu0 %v4947
        %7652 = vmatprep.subr.bf16.mxu0 %v4944
        %7653 = vmatpush2.bf16.msra.mxu0 %v4943
        %7654 = vmatprep.subr.bf16.mxu0 %v4940
        %7655 = vmatpush2.bf16.msra.mxu0 %v4939
        %7656 = vmatprep.subr.bf16.mxu0 %v4936
        %7657 = vmatpush2.bf16.msra.mxu0 %v4935
        %7658 = vmatprep.mubr.bf16.mxu0 %v5639
        %7659 = vmatmul.mubr.bf16.gmra.mxu0 %v5625
        %v7660 = vpop.f32.mrf.mxu0
        %v7661 = vadd.f32 %v7620, %v7660
        %v7662 = vpop.f32.mrf.mxu0
        %v7663 = vadd.f32 %v7622, %v7662
        %v7664 = vpop.f32.mrf.mxu0
        %v7665 = vpop.f32.mrf.mxu0
        %7666 = vdwg.mxu0
        %7667 = vmatprep.subr.bf16.mxu0 %v4996
        %7668 = vmatpush1.bf16.msra.mxu0 %v4995
        %7669 = vmatprep.subr.bf16.mxu0 %v4992
        %7670 = vmatpush1.bf16.msra.mxu0 %v4991
        %7671 = vmatprep.subr.bf16.mxu0 %v4988
        %7672 = vmatpush1.bf16.msra.mxu0 %v4987
        %7673 = vmatprep.subr.bf16.mxu0 %v4984
        %7674 = vmatpush1.bf16.msra.mxu0 %v4983
        %7675 = vmatprep.subr.bf16.mxu0 %v4980
        %7676 = vmatpush1.bf16.msra.mxu0 %v4979
        %7677 = vmatprep.subr.bf16.mxu0 %v4976
        %7678 = vmatpush1.bf16.msra.mxu0 %v4975
        %7679 = vmatprep.subr.bf16.mxu0 %v4972
        %7680 = vmatpush1.bf16.msra.mxu0 %v4971
        %7681 = vmatprep.subr.bf16.mxu0 %v4968
        %7682 = vmatpush1.bf16.msra.mxu0 %v4967
        %7683 = vmatprep.subr.bf16.mxu0 %v5028
        %7684 = vmatpush2.bf16.msra.mxu0 %v5027
        %7685 = vmatprep.subr.bf16.mxu0 %v5024
        %7686 = vmatpush2.bf16.msra.mxu0 %v5023
        %7687 = vmatprep.subr.bf16.mxu0 %v5020
        %7688 = vmatpush2.bf16.msra.mxu0 %v5019
        %7689 = vmatprep.subr.bf16.mxu0 %v5016
        %7690 = vmatpush2.bf16.msra.mxu0 %v5015
        %7691 = vmatprep.subr.bf16.mxu0 %v5012
        %7692 = vmatpush2.bf16.msra.mxu0 %v5011
        %7693 = vmatprep.subr.bf16.mxu0 %v5008
        %7694 = vmatpush2.bf16.msra.mxu0 %v5007
        %7695 = vmatprep.subr.bf16.mxu0 %v5004
        %7696 = vmatpush2.bf16.msra.mxu0 %v5003
        %7697 = vmatprep.subr.bf16.mxu0 %v5000
        %7698 = vmatpush2.bf16.msra.mxu0 %v4999
        %7699 = vmatprep.mubr.bf16.mxu0 %v5643
        %7700 = vmatmul.mubr.bf16.gmra.mxu0 %v5641
        %v7701 = vpop.f32.mrf.mxu0
        %v7702 = vadd.f32 %v7661, %v7701
        %v7703 = vpop.f32.mrf.mxu0
        %v7704 = vadd.f32 %v7663, %v7703
        %v7705 = vpop.f32.mrf.mxu0
        %v7706 = vpop.f32.mrf.mxu0
        %7707 = vdwg.mxu0
        %7708 = vmatprep.subr.bf16.mxu0 %v1990
        %7709 = vmatpush1.bf16.msra.mxu0 %v1989
        %7710 = vmatprep.subr.bf16.mxu0 %v1986
        %7711 = vmatpush1.bf16.msra.mxu0 %v1985
        %7712 = vmatprep.subr.bf16.mxu0 %v1982
        %7713 = vmatpush1.bf16.msra.mxu0 %v1981
        %7714 = vmatprep.subr.bf16.mxu0 %v1978
        %7715 = vmatpush1.bf16.msra.mxu0 %v1977
        %7716 = vmatprep.subr.bf16.mxu0 %v1974
        %7717 = vmatpush1.bf16.msra.mxu0 %v1973
        %7718 = vmatprep.subr.bf16.mxu0 %v1970
        %7719 = vmatpush1.bf16.msra.mxu0 %v1969
        %7720 = vmatprep.subr.bf16.mxu0 %v1966
        %7721 = vmatpush1.bf16.msra.mxu0 %v1965
        %7722 = vmatprep.subr.bf16.mxu0 %v1962
        %7723 = vmatpush1.bf16.msra.mxu0 %v1961
        %7724 = vmatprep.subr.bf16.mxu0 %v2022
        %7725 = vmatpush2.bf16.msra.mxu0 %v2021
        %7726 = vmatprep.subr.bf16.mxu0 %v2018
        %7727 = vmatpush2.bf16.msra.mxu0 %v2017
        %7728 = vmatprep.subr.bf16.mxu0 %v2014
        %7729 = vmatpush2.bf16.msra.mxu0 %v2013
        %7730 = vmatprep.subr.bf16.mxu0 %v2010
        %7731 = vmatpush2.bf16.msra.mxu0 %v2009
        %7732 = vmatprep.subr.bf16.mxu0 %v2006
        %7733 = vmatpush2.bf16.msra.mxu0 %v2005
        %7734 = vmatprep.subr.bf16.mxu0 %v2002
        %7735 = vmatpush2.bf16.msra.mxu0 %v2001
        %7736 = vmatprep.subr.bf16.mxu0 %v1998
        %7737 = vmatpush2.bf16.msra.mxu0 %v1997
        %7738 = vmatprep.subr.bf16.mxu0 %v1994
        %7739 = vmatpush2.bf16.msra.mxu0 %v1993
        %7740 = vmatprep.mubr.bf16.mxu0 %v5093
        %7741 = vmatmul.mubr.bf16.gmra.mxu0 %v5079
        %v7742 = vpop.f32.mrf.mxu0
        %v7743 = vadd.f32 0.0, %v7742
        %v7744 = vpop.f32.mrf.mxu0
        %v7745 = vadd.f32 0.0, %v7744
        %v7746 = vpop.f32.mrf.mxu0
        %v7747 = vpop.f32.mrf.mxu0
        %7748 = vdwg.mxu0
        %7749 = vmatprep.subr.bf16.mxu0 %v2054
        %7750 = vmatpush1.bf16.msra.mxu0 %v2053
        %7751 = vmatprep.subr.bf16.mxu0 %v2050
        %7752 = vmatpush1.bf16.msra.mxu0 %v2049
        %7753 = vmatprep.subr.bf16.mxu0 %v2046
        %7754 = vmatpush1.bf16.msra.mxu0 %v2045
        %7755 = vmatprep.subr.bf16.mxu0 %v2042
        %7756 = vmatpush1.bf16.msra.mxu0 %v2041
        %7757 = vmatprep.subr.bf16.mxu0 %v2038
        %7758 = vmatpush1.bf16.msra.mxu0 %v2037
        %7759 = vmatprep.subr.bf16.mxu0 %v2034
        %7760 = vmatpush1.bf16.msra.mxu0 %v2033
        %7761 = vmatprep.subr.bf16.mxu0 %v2030
        %7762 = vmatpush1.bf16.msra.mxu0 %v2029
        %7763 = vmatprep.subr.bf16.mxu0 %v2026
        %7764 = vmatpush1.bf16.msra.mxu0 %v2025
        %7765 = vmatprep.subr.bf16.mxu0 %v2086
        %7766 = vmatpush2.bf16.msra.mxu0 %v2085
        %7767 = vmatprep.subr.bf16.mxu0 %v2082
        %7768 = vmatpush2.bf16.msra.mxu0 %v2081
        %7769 = vmatprep.subr.bf16.mxu0 %v2078
        %7770 = vmatpush2.bf16.msra.mxu0 %v2077
        %7771 = vmatprep.subr.bf16.mxu0 %v2074
        %7772 = vmatpush2.bf16.msra.mxu0 %v2073
        %7773 = vmatprep.subr.bf16.mxu0 %v2070
        %7774 = vmatpush2.bf16.msra.mxu0 %v2069
        %7775 = vmatprep.subr.bf16.mxu0 %v2066
        %7776 = vmatpush2.bf16.msra.mxu0 %v2065
        %7777 = vmatprep.subr.bf16.mxu0 %v2062
        %7778 = vmatpush2.bf16.msra.mxu0 %v2061
        %7779 = vmatprep.subr.bf16.mxu0 %v2058
        %7780 = vmatpush2.bf16.msra.mxu0 %v2057
        %7781 = vmatprep.mubr.bf16.mxu0 %v5103
        %7782 = vmatmul.mubr.bf16.gmra.mxu0 %v5101
        %v7783 = vpop.f32.mrf.mxu0
        %v7784 = vadd.f32 %v7743, %v7783
        %v7785 = vpop.f32.mrf.mxu0
        %v7786 = vadd.f32 %v7745, %v7785
        %v7787 = vpop.f32.mrf.mxu0
        %v7788 = vpop.f32.mrf.mxu0
        %7789 = vdwg.mxu0
        %7790 = vmatprep.subr.bf16.mxu0 %v2118
        %7791 = vmatpush1.bf16.msra.mxu0 %v2117
        %7792 = vmatprep.subr.bf16.mxu0 %v2114
        %7793 = vmatpush1.bf16.msra.mxu0 %v2113
        %7794 = vmatprep.subr.bf16.mxu0 %v2110
        %7795 = vmatpush1.bf16.msra.mxu0 %v2109
        %7796 = vmatprep.subr.bf16.mxu0 %v2106
        %7797 = vmatpush1.bf16.msra.mxu0 %v2105
        %7798 = vmatprep.subr.bf16.mxu0 %v2102
        %7799 = vmatpush1.bf16.msra.mxu0 %v2101
        %7800 = vmatprep.subr.bf16.mxu0 %v2098
        %7801 = vmatpush1.bf16.msra.mxu0 %v2097
        %7802 = vmatprep.subr.bf16.mxu0 %v2094
        %7803 = vmatpush1.bf16.msra.mxu0 %v2093
        %7804 = vmatprep.subr.bf16.mxu0 %v2090
        %7805 = vmatpush1.bf16.msra.mxu0 %v2089
        %7806 = vmatprep.subr.bf16.mxu0 %v2150
        %7807 = vmatpush2.bf16.msra.mxu0 %v2149
        %7808 = vmatprep.subr.bf16.mxu0 %v2146
        %7809 = vmatpush2.bf16.msra.mxu0 %v2145
        %7810 = vmatprep.subr.bf16.mxu0 %v2142
        %7811 = vmatpush2.bf16.msra.mxu0 %v2141
        %7812 = vmatprep.subr.bf16.mxu0 %v2138
        %7813 = vmatpush2.bf16.msra.mxu0 %v2137
        %7814 = vmatprep.subr.bf16.mxu0 %v2134
        %7815 = vmatpush2.bf16.msra.mxu0 %v2133
        %7816 = vmatprep.subr.bf16.mxu0 %v2130
        %7817 = vmatpush2.bf16.msra.mxu0 %v2129
        %7818 = vmatprep.subr.bf16.mxu0 %v2126
        %7819 = vmatpush2.bf16.msra.mxu0 %v2125
        %7820 = vmatprep.subr.bf16.mxu0 %v2122
        %7821 = vmatpush2.bf16.msra.mxu0 %v2121
        %7822 = vmatprep.mubr.bf16.mxu0 %v5100
        %7823 = vmatmul.mubr.bf16.gmra.mxu0 %v5086
        %v7824 = vpop.f32.mrf.mxu0
        %v7825 = vadd.f32 %v7784, %v7824
        %v7826 = vpop.f32.mrf.mxu0
        %v7827 = vadd.f32 %v7786, %v7826
        %v7828 = vpop.f32.mrf.mxu0
        %v7829 = vpop.f32.mrf.mxu0
        %7830 = vdwg.mxu0
        %7831 = vmatprep.subr.bf16.mxu0 %v2182
        %7832 = vmatpush1.bf16.msra.mxu0 %v2181
        %7833 = vmatprep.subr.bf16.mxu0 %v2178
        %7834 = vmatpush1.bf16.msra.mxu0 %v2177
        %7835 = vmatprep.subr.bf16.mxu0 %v2174
        %7836 = vmatpush1.bf16.msra.mxu0 %v2173
        %7837 = vmatprep.subr.bf16.mxu0 %v2170
        %7838 = vmatpush1.bf16.msra.mxu0 %v2169
        %7839 = vmatprep.subr.bf16.mxu0 %v2166
        %7840 = vmatpush1.bf16.msra.mxu0 %v2165
        %7841 = vmatprep.subr.bf16.mxu0 %v2162
        %7842 = vmatpush1.bf16.msra.mxu0 %v2161
        %7843 = vmatprep.subr.bf16.mxu0 %v2158
        %7844 = vmatpush1.bf16.msra.mxu0 %v2157
        %7845 = vmatprep.subr.bf16.mxu0 %v2154
        %7846 = vmatpush1.bf16.msra.mxu0 %v2153
        %7847 = vmatprep.subr.bf16.mxu0 %v2214
        %7848 = vmatpush2.bf16.msra.mxu0 %v2213
        %7849 = vmatprep.subr.bf16.mxu0 %v2210
        %7850 = vmatpush2.bf16.msra.mxu0 %v2209
        %7851 = vmatprep.subr.bf16.mxu0 %v2206
        %7852 = vmatpush2.bf16.msra.mxu0 %v2205
        %7853 = vmatprep.subr.bf16.mxu0 %v2202
        %7854 = vmatpush2.bf16.msra.mxu0 %v2201
        %7855 = vmatprep.subr.bf16.mxu0 %v2198
        %7856 = vmatpush2.bf16.msra.mxu0 %v2197
        %7857 = vmatprep.subr.bf16.mxu0 %v2194
        %7858 = vmatpush2.bf16.msra.mxu0 %v2193
        %7859 = vmatprep.subr.bf16.mxu0 %v2190
        %7860 = vmatpush2.bf16.msra.mxu0 %v2189
        %7861 = vmatprep.subr.bf16.mxu0 %v2186
        %7862 = vmatpush2.bf16.msra.mxu0 %v2185
        %7863 = vmatprep.mubr.bf16.mxu0 %v5104
        %7864 = vmatmul.mubr.bf16.gmra.mxu0 %v5102
        %v7865 = vpop.f32.mrf.mxu0
        %v7866 = vadd.f32 %v7825, %v7865
        %v7867 = vpop.f32.mrf.mxu0
        %v7868 = vadd.f32 %v7827, %v7867
        %v7869 = vpop.f32.mrf.mxu0
        %v7870 = vpop.f32.mrf.mxu0
        %7871 = vdwg.mxu0
        %7872 = vmatprep.subr.bf16.mxu0 %v2246
        %7873 = vmatpush1.bf16.msra.mxu0 %v2245
        %7874 = vmatprep.subr.bf16.mxu0 %v2242
        %7875 = vmatpush1.bf16.msra.mxu0 %v2241
        %7876 = vmatprep.subr.bf16.mxu0 %v2238
        %7877 = vmatpush1.bf16.msra.mxu0 %v2237
        %7878 = vmatprep.subr.bf16.mxu0 %v2234
        %7879 = vmatpush1.bf16.msra.mxu0 %v2233
        %7880 = vmatprep.subr.bf16.mxu0 %v2230
        %7881 = vmatpush1.bf16.msra.mxu0 %v2229
        %7882 = vmatprep.subr.bf16.mxu0 %v2226
        %7883 = vmatpush1.bf16.msra.mxu0 %v2225
        %7884 = vmatprep.subr.bf16.mxu0 %v2222
        %7885 = vmatpush1.bf16.msra.mxu0 %v2221
        %7886 = vmatprep.subr.bf16.mxu0 %v2218
        %7887 = vmatpush1.bf16.msra.mxu0 %v2217
        %7888 = vmatprep.subr.bf16.mxu0 %v2278
        %7889 = vmatpush2.bf16.msra.mxu0 %v2277
        %7890 = vmatprep.subr.bf16.mxu0 %v2274
        %7891 = vmatpush2.bf16.msra.mxu0 %v2273
        %7892 = vmatprep.subr.bf16.mxu0 %v2270
        %7893 = vmatpush2.bf16.msra.mxu0 %v2269
        %7894 = vmatprep.subr.bf16.mxu0 %v2266
        %7895 = vmatpush2.bf16.msra.mxu0 %v2265
        %7896 = vmatprep.subr.bf16.mxu0 %v2262
        %7897 = vmatpush2.bf16.msra.mxu0 %v2261
        %7898 = vmatprep.subr.bf16.mxu0 %v2258
        %7899 = vmatpush2.bf16.msra.mxu0 %v2257
        %7900 = vmatprep.subr.bf16.mxu0 %v2254
        %7901 = vmatpush2.bf16.msra.mxu0 %v2253
        %7902 = vmatprep.subr.bf16.mxu0 %v2250
        %7903 = vmatpush2.bf16.msra.mxu0 %v2249
        %7904 = vmatprep.mubr.bf16.mxu0 %v5142
        %7905 = vmatmul.mubr.bf16.gmra.mxu0 %v5128
        %v7906 = vpop.f32.mrf.mxu0
        %v7907 = vadd.f32 %v7866, %v7906
        %v7908 = vpop.f32.mrf.mxu0
        %v7909 = vadd.f32 %v7868, %v7908
        %v7910 = vpop.f32.mrf.mxu0
        %v7911 = vpop.f32.mrf.mxu0
        %7912 = vdwg.mxu0
        %7913 = vmatprep.subr.bf16.mxu0 %v2310
        %7914 = vmatpush1.bf16.msra.mxu0 %v2309
        %7915 = vmatprep.subr.bf16.mxu0 %v2306
        %7916 = vmatpush1.bf16.msra.mxu0 %v2305
        %7917 = vmatprep.subr.bf16.mxu0 %v2302
        %7918 = vmatpush1.bf16.msra.mxu0 %v2301
        %7919 = vmatprep.subr.bf16.mxu0 %v2298
        %7920 = vmatpush1.bf16.msra.mxu0 %v2297
        %7921 = vmatprep.subr.bf16.mxu0 %v2294
        %7922 = vmatpush1.bf16.msra.mxu0 %v2293
        %7923 = vmatprep.subr.bf16.mxu0 %v2290
        %7924 = vmatpush1.bf16.msra.mxu0 %v2289
        %7925 = vmatprep.subr.bf16.mxu0 %v2286
        %7926 = vmatpush1.bf16.msra.mxu0 %v2285
        %7927 = vmatprep.subr.bf16.mxu0 %v2282
        %7928 = vmatpush1.bf16.msra.mxu0 %v2281
        %7929 = vmatprep.subr.bf16.mxu0 %v2342
        %7930 = vmatpush2.bf16.msra.mxu0 %v2341
        %7931 = vmatprep.subr.bf16.mxu0 %v2338
        %7932 = vmatpush2.bf16.msra.mxu0 %v2337
        %7933 = vmatprep.subr.bf16.mxu0 %v2334
        %7934 = vmatpush2.bf16.msra.mxu0 %v2333
        %7935 = vmatprep.subr.bf16.mxu0 %v2330
        %7936 = vmatpush2.bf16.msra.mxu0 %v2329
        %7937 = vmatprep.subr.bf16.mxu0 %v2326
        %7938 = vmatpush2.bf16.msra.mxu0 %v2325
        %7939 = vmatprep.subr.bf16.mxu0 %v2322
        %7940 = vmatpush2.bf16.msra.mxu0 %v2321
        %7941 = vmatprep.subr.bf16.mxu0 %v2318
        %7942 = vmatpush2.bf16.msra.mxu0 %v2317
        %7943 = vmatprep.subr.bf16.mxu0 %v2314
        %7944 = vmatpush2.bf16.msra.mxu0 %v2313
        %7945 = vmatprep.mubr.bf16.mxu0 %v5152
        %7946 = vmatmul.mubr.bf16.gmra.mxu0 %v5150
        %v7947 = vpop.f32.mrf.mxu0
        %v7948 = vadd.f32 %v7907, %v7947
        %v7949 = vpop.f32.mrf.mxu0
        %v7950 = vadd.f32 %v7909, %v7949
        %v7951 = vpop.f32.mrf.mxu0
        %v7952 = vpop.f32.mrf.mxu0
        %7953 = vdwg.mxu0
        %7954 = vmatprep.subr.bf16.mxu0 %v2374
        %7955 = vmatpush1.bf16.msra.mxu0 %v2373
        %7956 = vmatprep.subr.bf16.mxu0 %v2370
        %7957 = vmatpush1.bf16.msra.mxu0 %v2369
        %7958 = vmatprep.subr.bf16.mxu0 %v2366
        %7959 = vmatpush1.bf16.msra.mxu0 %v2365
        %7960 = vmatprep.subr.bf16.mxu0 %v2362
        %7961 = vmatpush1.bf16.msra.mxu0 %v2361
        %7962 = vmatprep.subr.bf16.mxu0 %v2358
        %7963 = vmatpush1.bf16.msra.mxu0 %v2357
        %7964 = vmatprep.subr.bf16.mxu0 %v2354
        %7965 = vmatpush1.bf16.msra.mxu0 %v2353
        %7966 = vmatprep.subr.bf16.mxu0 %v2350
        %7967 = vmatpush1.bf16.msra.mxu0 %v2349
        %7968 = vmatprep.subr.bf16.mxu0 %v2346
        %7969 = vmatpush1.bf16.msra.mxu0 %v2345
        %7970 = vmatprep.subr.bf16.mxu0 %v2406
        %7971 = vmatpush2.bf16.msra.mxu0 %v2405
        %7972 = vmatprep.subr.bf16.mxu0 %v2402
        %7973 = vmatpush2.bf16.msra.mxu0 %v2401
        %7974 = vmatprep.subr.bf16.mxu0 %v2398
        %7975 = vmatpush2.bf16.msra.mxu0 %v2397
        %7976 = vmatprep.subr.bf16.mxu0 %v2394
        %7977 = vmatpush2.bf16.msra.mxu0 %v2393
        %7978 = vmatprep.subr.bf16.mxu0 %v2390
        %7979 = vmatpush2.bf16.msra.mxu0 %v2389
        %7980 = vmatprep.subr.bf16.mxu0 %v2386
        %7981 = vmatpush2.bf16.msra.mxu0 %v2385
        %7982 = vmatprep.subr.bf16.mxu0 %v2382
        %7983 = vmatpush2.bf16.msra.mxu0 %v2381
        %7984 = vmatprep.subr.bf16.mxu0 %v2378
        %7985 = vmatpush2.bf16.msra.mxu0 %v2377
        %7986 = vmatprep.mubr.bf16.mxu0 %v5149
        %7987 = vmatmul.mubr.bf16.gmra.mxu0 %v5135
        %v7988 = vpop.f32.mrf.mxu0
        %v7989 = vadd.f32 %v7948, %v7988
        %v7990 = vpop.f32.mrf.mxu0
        %v7991 = vadd.f32 %v7950, %v7990
        %v7992 = vpop.f32.mrf.mxu0
        %v7993 = vpop.f32.mrf.mxu0
        %7994 = vdwg.mxu0
        %7995 = vmatprep.subr.bf16.mxu0 %v2438
        %7996 = vmatpush1.bf16.msra.mxu0 %v2437
        %7997 = vmatprep.subr.bf16.mxu0 %v2434
        %7998 = vmatpush1.bf16.msra.mxu0 %v2433
        %7999 = vmatprep.subr.bf16.mxu0 %v2430
        %8000 = vmatpush1.bf16.msra.mxu0 %v2429
        %8001 = vmatprep.subr.bf16.mxu0 %v2426
        %8002 = vmatpush1.bf16.msra.mxu0 %v2425
        %8003 = vmatprep.subr.bf16.mxu0 %v2422
        %8004 = vmatpush1.bf16.msra.mxu0 %v2421
        %8005 = vmatprep.subr.bf16.mxu0 %v2418
        %8006 = vmatpush1.bf16.msra.mxu0 %v2417
        %8007 = vmatprep.subr.bf16.mxu0 %v2414
        %8008 = vmatpush1.bf16.msra.mxu0 %v2413
        %8009 = vmatprep.subr.bf16.mxu0 %v2410
        %8010 = vmatpush1.bf16.msra.mxu0 %v2409
        %8011 = vmatprep.subr.bf16.mxu0 %v2470
        %8012 = vmatpush2.bf16.msra.mxu0 %v2469
        %8013 = vmatprep.subr.bf16.mxu0 %v2466
        %8014 = vmatpush2.bf16.msra.mxu0 %v2465
        %8015 = vmatprep.subr.bf16.mxu0 %v2462
        %8016 = vmatpush2.bf16.msra.mxu0 %v2461
        %8017 = vmatprep.subr.bf16.mxu0 %v2458
        %8018 = vmatpush2.bf16.msra.mxu0 %v2457
        %8019 = vmatprep.subr.bf16.mxu0 %v2454
        %8020 = vmatpush2.bf16.msra.mxu0 %v2453
        %8021 = vmatprep.subr.bf16.mxu0 %v2450
        %8022 = vmatpush2.bf16.msra.mxu0 %v2449
        %8023 = vmatprep.subr.bf16.mxu0 %v2446
        %8024 = vmatpush2.bf16.msra.mxu0 %v2445
        %8025 = vmatprep.subr.bf16.mxu0 %v2442
        %8026 = vmatpush2.bf16.msra.mxu0 %v2441
        %8027 = vmatprep.mubr.bf16.mxu0 %v5153
        %8028 = vmatmul.mubr.bf16.gmra.mxu0 %v5151
        %v8029 = vpop.f32.mrf.mxu0
        %v8030 = vadd.f32 %v7989, %v8029
        %v8031 = vpop.f32.mrf.mxu0
        %v8032 = vadd.f32 %v7991, %v8031
        %v8033 = vpop.f32.mrf.mxu0
        %v8034 = vpop.f32.mrf.mxu0
        %8035 = vdwg.mxu0
        %8036 = vmatprep.subr.bf16.mxu0 %v2502
        %8037 = vmatpush1.bf16.msra.mxu0 %v2501
        %8038 = vmatprep.subr.bf16.mxu0 %v2498
        %8039 = vmatpush1.bf16.msra.mxu0 %v2497
        %8040 = vmatprep.subr.bf16.mxu0 %v2494
        %8041 = vmatpush1.bf16.msra.mxu0 %v2493
        %8042 = vmatprep.subr.bf16.mxu0 %v2490
        %8043 = vmatpush1.bf16.msra.mxu0 %v2489
        %8044 = vmatprep.subr.bf16.mxu0 %v2486
        %8045 = vmatpush1.bf16.msra.mxu0 %v2485
        %8046 = vmatprep.subr.bf16.mxu0 %v2482
        %8047 = vmatpush1.bf16.msra.mxu0 %v2481
        %8048 = vmatprep.subr.bf16.mxu0 %v2478
        %8049 = vmatpush1.bf16.msra.mxu0 %v2477
        %8050 = vmatprep.subr.bf16.mxu0 %v2474
        %8051 = vmatpush1.bf16.msra.mxu0 %v2473
        %8052 = vmatprep.subr.bf16.mxu0 %v2534
        %8053 = vmatpush2.bf16.msra.mxu0 %v2533
        %8054 = vmatprep.subr.bf16.mxu0 %v2530
        %8055 = vmatpush2.bf16.msra.mxu0 %v2529
        %8056 = vmatprep.subr.bf16.mxu0 %v2526
        %8057 = vmatpush2.bf16.msra.mxu0 %v2525
        %8058 = vmatprep.subr.bf16.mxu0 %v2522
        %8059 = vmatpush2.bf16.msra.mxu0 %v2521
        %8060 = vmatprep.subr.bf16.mxu0 %v2518
        %8061 = vmatpush2.bf16.msra.mxu0 %v2517
        %8062 = vmatprep.subr.bf16.mxu0 %v2514
        %8063 = vmatpush2.bf16.msra.mxu0 %v2513
        %8064 = vmatprep.subr.bf16.mxu0 %v2510
        %8065 = vmatpush2.bf16.msra.mxu0 %v2509
        %8066 = vmatprep.subr.bf16.mxu0 %v2506
        %8067 = vmatpush2.bf16.msra.mxu0 %v2505
        %8068 = vmatprep.mubr.bf16.mxu0 %v5191
        %8069 = vmatmul.mubr.bf16.gmra.mxu0 %v5177
        %v8070 = vpop.f32.mrf.mxu0
        %v8071 = vadd.f32 %v8030, %v8070
        %v8072 = vpop.f32.mrf.mxu0
        %v8073 = vadd.f32 %v8032, %v8072
        %v8074 = vpop.f32.mrf.mxu0
        %v8075 = vpop.f32.mrf.mxu0
        %8076 = vdwg.mxu0
        %8077 = vmatprep.subr.bf16.mxu0 %v2566
        %8078 = vmatpush1.bf16.msra.mxu0 %v2565
        %8079 = vmatprep.subr.bf16.mxu0 %v2562
        %8080 = vmatpush1.bf16.msra.mxu0 %v2561
        %8081 = vmatprep.subr.bf16.mxu0 %v2558
        %8082 = vmatpush1.bf16.msra.mxu0 %v2557
        %8083 = vmatprep.subr.bf16.mxu0 %v2554
        %8084 = vmatpush1.bf16.msra.mxu0 %v2553
        %8085 = vmatprep.subr.bf16.mxu0 %v2550
        %8086 = vmatpush1.bf16.msra.mxu0 %v2549
        %8087 = vmatprep.subr.bf16.mxu0 %v2546
        %8088 = vmatpush1.bf16.msra.mxu0 %v2545
        %8089 = vmatprep.subr.bf16.mxu0 %v2542
        %8090 = vmatpush1.bf16.msra.mxu0 %v2541
        %8091 = vmatprep.subr.bf16.mxu0 %v2538
        %8092 = vmatpush1.bf16.msra.mxu0 %v2537
        %8093 = vmatprep.subr.bf16.mxu0 %v2598
        %8094 = vmatpush2.bf16.msra.mxu0 %v2597
        %8095 = vmatprep.subr.bf16.mxu0 %v2594
        %8096 = vmatpush2.bf16.msra.mxu0 %v2593
        %8097 = vmatprep.subr.bf16.mxu0 %v2590
        %8098 = vmatpush2.bf16.msra.mxu0 %v2589
        %8099 = vmatprep.subr.bf16.mxu0 %v2586
        %8100 = vmatpush2.bf16.msra.mxu0 %v2585
        %8101 = vmatprep.subr.bf16.mxu0 %v2582
        %8102 = vmatpush2.bf16.msra.mxu0 %v2581
        %8103 = vmatprep.subr.bf16.mxu0 %v2578
        %8104 = vmatpush2.bf16.msra.mxu0 %v2577
        %8105 = vmatprep.subr.bf16.mxu0 %v2574
        %8106 = vmatpush2.bf16.msra.mxu0 %v2573
        %8107 = vmatprep.subr.bf16.mxu0 %v2570
        %8108 = vmatpush2.bf16.msra.mxu0 %v2569
        %8109 = vmatprep.mubr.bf16.mxu0 %v5201
        %8110 = vmatmul.mubr.bf16.gmra.mxu0 %v5199
        %v8111 = vpop.f32.mrf.mxu0
        %v8112 = vadd.f32 %v8071, %v8111
        %v8113 = vpop.f32.mrf.mxu0
        %v8114 = vadd.f32 %v8073, %v8113
        %v8115 = vpop.f32.mrf.mxu0
        %v8116 = vpop.f32.mrf.mxu0
        %8117 = vdwg.mxu0
        %8118 = vmatprep.subr.bf16.mxu0 %v2630
        %8119 = vmatpush1.bf16.msra.mxu0 %v2629
        %8120 = vmatprep.subr.bf16.mxu0 %v2626
        %8121 = vmatpush1.bf16.msra.mxu0 %v2625
        %8122 = vmatprep.subr.bf16.mxu0 %v2622
        %8123 = vmatpush1.bf16.msra.mxu0 %v2621
        %8124 = vmatprep.subr.bf16.mxu0 %v2618
        %8125 = vmatpush1.bf16.msra.mxu0 %v2617
        %8126 = vmatprep.subr.bf16.mxu0 %v2614
        %8127 = vmatpush1.bf16.msra.mxu0 %v2613
        %8128 = vmatprep.subr.bf16.mxu0 %v2610
        %8129 = vmatpush1.bf16.msra.mxu0 %v2609
        %8130 = vmatprep.subr.bf16.mxu0 %v2606
        %8131 = vmatpush1.bf16.msra.mxu0 %v2605
        %8132 = vmatprep.subr.bf16.mxu0 %v2602
        %8133 = vmatpush1.bf16.msra.mxu0 %v2601
        %8134 = vmatprep.subr.bf16.mxu0 %v2662
        %8135 = vmatpush2.bf16.msra.mxu0 %v2661
        %8136 = vmatprep.subr.bf16.mxu0 %v2658
        %8137 = vmatpush2.bf16.msra.mxu0 %v2657
        %8138 = vmatprep.subr.bf16.mxu0 %v2654
        %8139 = vmatpush2.bf16.msra.mxu0 %v2653
        %8140 = vmatprep.subr.bf16.mxu0 %v2650
        %8141 = vmatpush2.bf16.msra.mxu0 %v2649
        %8142 = vmatprep.subr.bf16.mxu0 %v2646
        %8143 = vmatpush2.bf16.msra.mxu0 %v2645
        %8144 = vmatprep.subr.bf16.mxu0 %v2642
        %8145 = vmatpush2.bf16.msra.mxu0 %v2641
        %8146 = vmatprep.subr.bf16.mxu0 %v2638
        %8147 = vmatpush2.bf16.msra.mxu0 %v2637
        %8148 = vmatprep.subr.bf16.mxu0 %v2634
        %8149 = vmatpush2.bf16.msra.mxu0 %v2633
        %8150 = vmatprep.mubr.bf16.mxu0 %v5198
        %8151 = vmatmul.mubr.bf16.gmra.mxu0 %v5184
        %v8152 = vpop.f32.mrf.mxu0
        %v8153 = vadd.f32 %v8112, %v8152
        %v8154 = vpop.f32.mrf.mxu0
        %v8155 = vadd.f32 %v8114, %v8154
        %v8156 = vpop.f32.mrf.mxu0
        %v8157 = vpop.f32.mrf.mxu0
        %8158 = vdwg.mxu0
        %8159 = vmatprep.subr.bf16.mxu0 %v2694
        %8160 = vmatpush1.bf16.msra.mxu0 %v2693
        %8161 = vmatprep.subr.bf16.mxu0 %v2690
        %8162 = vmatpush1.bf16.msra.mxu0 %v2689
        %8163 = vmatprep.subr.bf16.mxu0 %v2686
        %8164 = vmatpush1.bf16.msra.mxu0 %v2685
        %8165 = vmatprep.subr.bf16.mxu0 %v2682
        %8166 = vmatpush1.bf16.msra.mxu0 %v2681
        %8167 = vmatprep.subr.bf16.mxu0 %v2678
        %8168 = vmatpush1.bf16.msra.mxu0 %v2677
        %8169 = vmatprep.subr.bf16.mxu0 %v2674
        %8170 = vmatpush1.bf16.msra.mxu0 %v2673
        %8171 = vmatprep.subr.bf16.mxu0 %v2670
        %8172 = vmatpush1.bf16.msra.mxu0 %v2669
        %8173 = vmatprep.subr.bf16.mxu0 %v2666
        %8174 = vmatpush1.bf16.msra.mxu0 %v2665
        %8175 = vmatprep.subr.bf16.mxu0 %v2726
        %8176 = vmatpush2.bf16.msra.mxu0 %v2725
        %8177 = vmatprep.subr.bf16.mxu0 %v2722
        %8178 = vmatpush2.bf16.msra.mxu0 %v2721
        %8179 = vmatprep.subr.bf16.mxu0 %v2718
        %8180 = vmatpush2.bf16.msra.mxu0 %v2717
        %8181 = vmatprep.subr.bf16.mxu0 %v2714
        %8182 = vmatpush2.bf16.msra.mxu0 %v2713
        %8183 = vmatprep.subr.bf16.mxu0 %v2710
        %8184 = vmatpush2.bf16.msra.mxu0 %v2709
        %8185 = vmatprep.subr.bf16.mxu0 %v2706
        %8186 = vmatpush2.bf16.msra.mxu0 %v2705
        %8187 = vmatprep.subr.bf16.mxu0 %v2702
        %8188 = vmatpush2.bf16.msra.mxu0 %v2701
        %8189 = vmatprep.subr.bf16.mxu0 %v2698
        %8190 = vmatpush2.bf16.msra.mxu0 %v2697
        %8191 = vmatprep.mubr.bf16.mxu0 %v5202
        %8192 = vmatmul.mubr.bf16.gmra.mxu0 %v5200
        %v8193 = vpop.f32.mrf.mxu0
        %v8194 = vadd.f32 %v8153, %v8193
        %v8195 = vpop.f32.mrf.mxu0
        %v8196 = vadd.f32 %v8155, %v8195
        %v8197 = vpop.f32.mrf.mxu0
        %v8198 = vpop.f32.mrf.mxu0
        %8199 = vdwg.mxu0
        %8200 = vmatprep.subr.bf16.mxu0 %v2758
        %8201 = vmatpush1.bf16.msra.mxu0 %v2757
        %8202 = vmatprep.subr.bf16.mxu0 %v2754
        %8203 = vmatpush1.bf16.msra.mxu0 %v2753
        %8204 = vmatprep.subr.bf16.mxu0 %v2750
        %8205 = vmatpush1.bf16.msra.mxu0 %v2749
        %8206 = vmatprep.subr.bf16.mxu0 %v2746
        %8207 = vmatpush1.bf16.msra.mxu0 %v2745
        %8208 = vmatprep.subr.bf16.mxu0 %v2742
        %8209 = vmatpush1.bf16.msra.mxu0 %v2741
        %8210 = vmatprep.subr.bf16.mxu0 %v2738
        %8211 = vmatpush1.bf16.msra.mxu0 %v2737
        %8212 = vmatprep.subr.bf16.mxu0 %v2734
        %8213 = vmatpush1.bf16.msra.mxu0 %v2733
        %8214 = vmatprep.subr.bf16.mxu0 %v2730
        %8215 = vmatpush1.bf16.msra.mxu0 %v2729
        %8216 = vmatprep.subr.bf16.mxu0 %v2790
        %8217 = vmatpush2.bf16.msra.mxu0 %v2789
        %8218 = vmatprep.subr.bf16.mxu0 %v2786
        %8219 = vmatpush2.bf16.msra.mxu0 %v2785
        %8220 = vmatprep.subr.bf16.mxu0 %v2782
        %8221 = vmatpush2.bf16.msra.mxu0 %v2781
        %8222 = vmatprep.subr.bf16.mxu0 %v2778
        %8223 = vmatpush2.bf16.msra.mxu0 %v2777
        %8224 = vmatprep.subr.bf16.mxu0 %v2774
        %8225 = vmatpush2.bf16.msra.mxu0 %v2773
        %8226 = vmatprep.subr.bf16.mxu0 %v2770
        %8227 = vmatpush2.bf16.msra.mxu0 %v2769
        %8228 = vmatprep.subr.bf16.mxu0 %v2766
        %8229 = vmatpush2.bf16.msra.mxu0 %v2765
        %8230 = vmatprep.subr.bf16.mxu0 %v2762
        %8231 = vmatpush2.bf16.msra.mxu0 %v2761
        %8232 = vmatprep.mubr.bf16.mxu0 %v5240
        %8233 = vmatmul.mubr.bf16.gmra.mxu0 %v5226
        %v8234 = vpop.f32.mrf.mxu0
        %v8235 = vadd.f32 %v8194, %v8234
        %v8236 = vpop.f32.mrf.mxu0
        %v8237 = vadd.f32 %v8196, %v8236
        %v8238 = vpop.f32.mrf.mxu0
        %v8239 = vpop.f32.mrf.mxu0
        %8240 = vdwg.mxu0
        %8241 = vmatprep.subr.bf16.mxu0 %v2822
        %8242 = vmatpush1.bf16.msra.mxu0 %v2821
        %8243 = vmatprep.subr.bf16.mxu0 %v2818
        %8244 = vmatpush1.bf16.msra.mxu0 %v2817
        %8245 = vmatprep.subr.bf16.mxu0 %v2814
        %8246 = vmatpush1.bf16.msra.mxu0 %v2813
        %8247 = vmatprep.subr.bf16.mxu0 %v2810
        %8248 = vmatpush1.bf16.msra.mxu0 %v2809
        %8249 = vmatprep.subr.bf16.mxu0 %v2806
        %8250 = vmatpush1.bf16.msra.mxu0 %v2805
        %8251 = vmatprep.subr.bf16.mxu0 %v2802
        %8252 = vmatpush1.bf16.msra.mxu0 %v2801
        %8253 = vmatprep.subr.bf16.mxu0 %v2798
        %8254 = vmatpush1.bf16.msra.mxu0 %v2797
        %8255 = vmatprep.subr.bf16.mxu0 %v2794
        %8256 = vmatpush1.bf16.msra.mxu0 %v2793
        %8257 = vmatprep.subr.bf16.mxu0 %v2854
        %8258 = vmatpush2.bf16.msra.mxu0 %v2853
        %8259 = vmatprep.subr.bf16.mxu0 %v2850
        %8260 = vmatpush2.bf16.msra.mxu0 %v2849
        %8261 = vmatprep.subr.bf16.mxu0 %v2846
        %8262 = vmatpush2.bf16.msra.mxu0 %v2845
        %8263 = vmatprep.subr.bf16.mxu0 %v2842
        %8264 = vmatpush2.bf16.msra.mxu0 %v2841
        %8265 = vmatprep.subr.bf16.mxu0 %v2838
        %8266 = vmatpush2.bf16.msra.mxu0 %v2837
        %8267 = vmatprep.subr.bf16.mxu0 %v2834
        %8268 = vmatpush2.bf16.msra.mxu0 %v2833
        %8269 = vmatprep.subr.bf16.mxu0 %v2830
        %8270 = vmatpush2.bf16.msra.mxu0 %v2829
        %8271 = vmatprep.subr.bf16.mxu0 %v2826
        %8272 = vmatpush2.bf16.msra.mxu0 %v2825
        %8273 = vmatprep.mubr.bf16.mxu0 %v5250
        %8274 = vmatmul.mubr.bf16.gmra.mxu0 %v5248
        %v8275 = vpop.f32.mrf.mxu0
        %v8276 = vadd.f32 %v8235, %v8275
        %v8277 = vpop.f32.mrf.mxu0
        %v8278 = vadd.f32 %v8237, %v8277
        %v8279 = vpop.f32.mrf.mxu0
        %v8280 = vpop.f32.mrf.mxu0
        %8281 = vdwg.mxu0
        %8282 = vmatprep.subr.bf16.mxu0 %v2886
        %8283 = vmatpush1.bf16.msra.mxu0 %v2885
        %8284 = vmatprep.subr.bf16.mxu0 %v2882
        %8285 = vmatpush1.bf16.msra.mxu0 %v2881
        %8286 = vmatprep.subr.bf16.mxu0 %v2878
        %8287 = vmatpush1.bf16.msra.mxu0 %v2877
        %8288 = vmatprep.subr.bf16.mxu0 %v2874
        %8289 = vmatpush1.bf16.msra.mxu0 %v2873
        %8290 = vmatprep.subr.bf16.mxu0 %v2870
        %8291 = vmatpush1.bf16.msra.mxu0 %v2869
        %8292 = vmatprep.subr.bf16.mxu0 %v2866
        %8293 = vmatpush1.bf16.msra.mxu0 %v2865
        %8294 = vmatprep.subr.bf16.mxu0 %v2862
        %8295 = vmatpush1.bf16.msra.mxu0 %v2861
        %8296 = vmatprep.subr.bf16.mxu0 %v2858
        %8297 = vmatpush1.bf16.msra.mxu0 %v2857
        %8298 = vmatprep.subr.bf16.mxu0 %v2918
        %8299 = vmatpush2.bf16.msra.mxu0 %v2917
        %8300 = vmatprep.subr.bf16.mxu0 %v2914
        %8301 = vmatpush2.bf16.msra.mxu0 %v2913
        %8302 = vmatprep.subr.bf16.mxu0 %v2910
        %8303 = vmatpush2.bf16.msra.mxu0 %v2909
        %8304 = vmatprep.subr.bf16.mxu0 %v2906
        %8305 = vmatpush2.bf16.msra.mxu0 %v2905
        %8306 = vmatprep.subr.bf16.mxu0 %v2902
        %8307 = vmatpush2.bf16.msra.mxu0 %v2901
        %8308 = vmatprep.subr.bf16.mxu0 %v2898
        %8309 = vmatpush2.bf16.msra.mxu0 %v2897
        %8310 = vmatprep.subr.bf16.mxu0 %v2894
        %8311 = vmatpush2.bf16.msra.mxu0 %v2893
        %8312 = vmatprep.subr.bf16.mxu0 %v2890
        %8313 = vmatpush2.bf16.msra.mxu0 %v2889
        %8314 = vmatprep.mubr.bf16.mxu0 %v5247
        %8315 = vmatmul.mubr.bf16.gmra.mxu0 %v5233
        %v8316 = vpop.f32.mrf.mxu0
        %v8317 = vadd.f32 %v8276, %v8316
        %v8318 = vpop.f32.mrf.mxu0
        %v8319 = vadd.f32 %v8278, %v8318
        %v8320 = vpop.f32.mrf.mxu0
        %v8321 = vpop.f32.mrf.mxu0
        %8322 = vdwg.mxu0
        %8323 = vmatprep.subr.bf16.mxu0 %v2950
        %8324 = vmatpush1.bf16.msra.mxu0 %v2949
        %8325 = vmatprep.subr.bf16.mxu0 %v2946
        %8326 = vmatpush1.bf16.msra.mxu0 %v2945
        %8327 = vmatprep.subr.bf16.mxu0 %v2942
        %8328 = vmatpush1.bf16.msra.mxu0 %v2941
        %8329 = vmatprep.subr.bf16.mxu0 %v2938
        %8330 = vmatpush1.bf16.msra.mxu0 %v2937
        %8331 = vmatprep.subr.bf16.mxu0 %v2934
        %8332 = vmatpush1.bf16.msra.mxu0 %v2933
        %8333 = vmatprep.subr.bf16.mxu0 %v2930
        %8334 = vmatpush1.bf16.msra.mxu0 %v2929
        %8335 = vmatprep.subr.bf16.mxu0 %v2926
        %8336 = vmatpush1.bf16.msra.mxu0 %v2925
        %8337 = vmatprep.subr.bf16.mxu0 %v2922
        %8338 = vmatpush1.bf16.msra.mxu0 %v2921
        %8339 = vmatprep.subr.bf16.mxu0 %v2982
        %8340 = vmatpush2.bf16.msra.mxu0 %v2981
        %8341 = vmatprep.subr.bf16.mxu0 %v2978
        %8342 = vmatpush2.bf16.msra.mxu0 %v2977
        %8343 = vmatprep.subr.bf16.mxu0 %v2974
        %8344 = vmatpush2.bf16.msra.mxu0 %v2973
        %8345 = vmatprep.subr.bf16.mxu0 %v2970
        %8346 = vmatpush2.bf16.msra.mxu0 %v2969
        %8347 = vmatprep.subr.bf16.mxu0 %v2966
        %8348 = vmatpush2.bf16.msra.mxu0 %v2965
        %8349 = vmatprep.subr.bf16.mxu0 %v2962
        %8350 = vmatpush2.bf16.msra.mxu0 %v2961
        %8351 = vmatprep.subr.bf16.mxu0 %v2958
        %8352 = vmatpush2.bf16.msra.mxu0 %v2957
        %8353 = vmatprep.subr.bf16.mxu0 %v2954
        %8354 = vmatpush2.bf16.msra.mxu0 %v2953
        %8355 = vmatprep.mubr.bf16.mxu0 %v5251
        %8356 = vmatmul.mubr.bf16.gmra.mxu0 %v5249
        %v8357 = vpop.f32.mrf.mxu0
        %v8358 = vadd.f32 %v8317, %v8357
        %v8359 = vpop.f32.mrf.mxu0
        %v8360 = vadd.f32 %v8319, %v8359
        %v8361 = vpop.f32.mrf.mxu0
        %v8362 = vpop.f32.mrf.mxu0
        %8363 = vdwg.mxu0
        %8364 = vmatprep.subr.bf16.mxu0 %v3014
        %8365 = vmatpush1.bf16.msra.mxu0 %v3013
        %8366 = vmatprep.subr.bf16.mxu0 %v3010
        %8367 = vmatpush1.bf16.msra.mxu0 %v3009
        %8368 = vmatprep.subr.bf16.mxu0 %v3006
        %8369 = vmatpush1.bf16.msra.mxu0 %v3005
        %8370 = vmatprep.subr.bf16.mxu0 %v3002
        %8371 = vmatpush1.bf16.msra.mxu0 %v3001
        %8372 = vmatprep.subr.bf16.mxu0 %v2998
        %8373 = vmatpush1.bf16.msra.mxu0 %v2997
        %8374 = vmatprep.subr.bf16.mxu0 %v2994
        %8375 = vmatpush1.bf16.msra.mxu0 %v2993
        %8376 = vmatprep.subr.bf16.mxu0 %v2990
        %8377 = vmatpush1.bf16.msra.mxu0 %v2989
        %8378 = vmatprep.subr.bf16.mxu0 %v2986
        %8379 = vmatpush1.bf16.msra.mxu0 %v2985
        %8380 = vmatprep.subr.bf16.mxu0 %v3046
        %8381 = vmatpush2.bf16.msra.mxu0 %v3045
        %8382 = vmatprep.subr.bf16.mxu0 %v3042
        %8383 = vmatpush2.bf16.msra.mxu0 %v3041
        %8384 = vmatprep.subr.bf16.mxu0 %v3038
        %8385 = vmatpush2.bf16.msra.mxu0 %v3037
        %8386 = vmatprep.subr.bf16.mxu0 %v3034
        %8387 = vmatpush2.bf16.msra.mxu0 %v3033
        %8388 = vmatprep.subr.bf16.mxu0 %v3030
        %8389 = vmatpush2.bf16.msra.mxu0 %v3029
        %8390 = vmatprep.subr.bf16.mxu0 %v3026
        %8391 = vmatpush2.bf16.msra.mxu0 %v3025
        %8392 = vmatprep.subr.bf16.mxu0 %v3022
        %8393 = vmatpush2.bf16.msra.mxu0 %v3021
        %8394 = vmatprep.subr.bf16.mxu0 %v3018
        %8395 = vmatpush2.bf16.msra.mxu0 %v3017
        %8396 = vmatprep.mubr.bf16.mxu0 %v5289
        %8397 = vmatmul.mubr.bf16.gmra.mxu0 %v5275
        %v8398 = vpop.f32.mrf.mxu0
        %v8399 = vadd.f32 %v8358, %v8398
        %v8400 = vpop.f32.mrf.mxu0
        %v8401 = vadd.f32 %v8360, %v8400
        %v8402 = vpop.f32.mrf.mxu0
        %v8403 = vpop.f32.mrf.mxu0
        %8404 = vdwg.mxu0
        %8405 = vmatprep.subr.bf16.mxu0 %v3078
        %8406 = vmatpush1.bf16.msra.mxu0 %v3077
        %8407 = vmatprep.subr.bf16.mxu0 %v3074
        %8408 = vmatpush1.bf16.msra.mxu0 %v3073
        %8409 = vmatprep.subr.bf16.mxu0 %v3070
        %8410 = vmatpush1.bf16.msra.mxu0 %v3069
        %8411 = vmatprep.subr.bf16.mxu0 %v3066
        %8412 = vmatpush1.bf16.msra.mxu0 %v3065
        %8413 = vmatprep.subr.bf16.mxu0 %v3062
        %8414 = vmatpush1.bf16.msra.mxu0 %v3061
        %8415 = vmatprep.subr.bf16.mxu0 %v3058
        %8416 = vmatpush1.bf16.msra.mxu0 %v3057
        %8417 = vmatprep.subr.bf16.mxu0 %v3054
        %8418 = vmatpush1.bf16.msra.mxu0 %v3053
        %8419 = vmatprep.subr.bf16.mxu0 %v3050
        %8420 = vmatpush1.bf16.msra.mxu0 %v3049
        %8421 = vmatprep.subr.bf16.mxu0 %v3110
        %8422 = vmatpush2.bf16.msra.mxu0 %v3109
        %8423 = vmatprep.subr.bf16.mxu0 %v3106
        %8424 = vmatpush2.bf16.msra.mxu0 %v3105
        %8425 = vmatprep.subr.bf16.mxu0 %v3102
        %8426 = vmatpush2.bf16.msra.mxu0 %v3101
        %8427 = vmatprep.subr.bf16.mxu0 %v3098
        %8428 = vmatpush2.bf16.msra.mxu0 %v3097
        %8429 = vmatprep.subr.bf16.mxu0 %v3094
        %8430 = vmatpush2.bf16.msra.mxu0 %v3093
        %8431 = vmatprep.subr.bf16.mxu0 %v3090
        %8432 = vmatpush2.bf16.msra.mxu0 %v3089
        %8433 = vmatprep.subr.bf16.mxu0 %v3086
        %8434 = vmatpush2.bf16.msra.mxu0 %v3085
        %8435 = vmatprep.subr.bf16.mxu0 %v3082
        %8436 = vmatpush2.bf16.msra.mxu0 %v3081
        %8437 = vmatprep.mubr.bf16.mxu0 %v5299
        %8438 = vmatmul.mubr.bf16.gmra.mxu0 %v5297
        %v8439 = vpop.f32.mrf.mxu0
        %v8440 = vadd.f32 %v8399, %v8439
        %v8441 = vpop.f32.mrf.mxu0
        %v8442 = vadd.f32 %v8401, %v8441
        %v8443 = vpop.f32.mrf.mxu0
        %v8444 = vpop.f32.mrf.mxu0
        %8445 = vdwg.mxu0
        %8446 = vmatprep.subr.bf16.mxu0 %v3142
        %8447 = vmatpush1.bf16.msra.mxu0 %v3141
        %8448 = vmatprep.subr.bf16.mxu0 %v3138
        %8449 = vmatpush1.bf16.msra.mxu0 %v3137
        %8450 = vmatprep.subr.bf16.mxu0 %v3134
        %8451 = vmatpush1.bf16.msra.mxu0 %v3133
        %8452 = vmatprep.subr.bf16.mxu0 %v3130
        %8453 = vmatpush1.bf16.msra.mxu0 %v3129
        %8454 = vmatprep.subr.bf16.mxu0 %v3126
        %8455 = vmatpush1.bf16.msra.mxu0 %v3125
        %8456 = vmatprep.subr.bf16.mxu0 %v3122
        %8457 = vmatpush1.bf16.msra.mxu0 %v3121
        %8458 = vmatprep.subr.bf16.mxu0 %v3118
        %8459 = vmatpush1.bf16.msra.mxu0 %v3117
        %8460 = vmatprep.subr.bf16.mxu0 %v3114
        %8461 = vmatpush1.bf16.msra.mxu0 %v3113
        %8462 = vmatprep.subr.bf16.mxu0 %v3174
        %8463 = vmatpush2.bf16.msra.mxu0 %v3173
        %8464 = vmatprep.subr.bf16.mxu0 %v3170
        %8465 = vmatpush2.bf16.msra.mxu0 %v3169
        %8466 = vmatprep.subr.bf16.mxu0 %v3166
        %8467 = vmatpush2.bf16.msra.mxu0 %v3165
        %8468 = vmatprep.subr.bf16.mxu0 %v3162
        %8469 = vmatpush2.bf16.msra.mxu0 %v3161
        %8470 = vmatprep.subr.bf16.mxu0 %v3158
        %8471 = vmatpush2.bf16.msra.mxu0 %v3157
        %8472 = vmatprep.subr.bf16.mxu0 %v3154
        %8473 = vmatpush2.bf16.msra.mxu0 %v3153
        %8474 = vmatprep.subr.bf16.mxu0 %v3150
        %8475 = vmatpush2.bf16.msra.mxu0 %v3149
        %8476 = vmatprep.subr.bf16.mxu0 %v3146
        %8477 = vmatpush2.bf16.msra.mxu0 %v3145
        %8478 = vmatprep.mubr.bf16.mxu0 %v5296
        %8479 = vmatmul.mubr.bf16.gmra.mxu0 %v5282
        %v8480 = vpop.f32.mrf.mxu0
        %v8481 = vadd.f32 %v8440, %v8480
        %v8482 = vpop.f32.mrf.mxu0
        %v8483 = vadd.f32 %v8442, %v8482
        %v8484 = vpop.f32.mrf.mxu0
        %v8485 = vpop.f32.mrf.mxu0
        %8486 = vdwg.mxu0
        %8487 = vmatprep.subr.bf16.mxu0 %v3206
        %8488 = vmatpush1.bf16.msra.mxu0 %v3205
        %8489 = vmatprep.subr.bf16.mxu0 %v3202
        %8490 = vmatpush1.bf16.msra.mxu0 %v3201
        %8491 = vmatprep.subr.bf16.mxu0 %v3198
        %8492 = vmatpush1.bf16.msra.mxu0 %v3197
        %8493 = vmatprep.subr.bf16.mxu0 %v3194
        %8494 = vmatpush1.bf16.msra.mxu0 %v3193
        %8495 = vmatprep.subr.bf16.mxu0 %v3190
        %8496 = vmatpush1.bf16.msra.mxu0 %v3189
        %8497 = vmatprep.subr.bf16.mxu0 %v3186
        %8498 = vmatpush1.bf16.msra.mxu0 %v3185
        %8499 = vmatprep.subr.bf16.mxu0 %v3182
        %8500 = vmatpush1.bf16.msra.mxu0 %v3181
        %8501 = vmatprep.subr.bf16.mxu0 %v3178
        %8502 = vmatpush1.bf16.msra.mxu0 %v3177
        %8503 = vmatprep.subr.bf16.mxu0 %v3238
        %8504 = vmatpush2.bf16.msra.mxu0 %v3237
        %8505 = vmatprep.subr.bf16.mxu0 %v3234
        %8506 = vmatpush2.bf16.msra.mxu0 %v3233
        %8507 = vmatprep.subr.bf16.mxu0 %v3230
        %8508 = vmatpush2.bf16.msra.mxu0 %v3229
        %8509 = vmatprep.subr.bf16.mxu0 %v3226
        %8510 = vmatpush2.bf16.msra.mxu0 %v3225
        %8511 = vmatprep.subr.bf16.mxu0 %v3222
        %8512 = vmatpush2.bf16.msra.mxu0 %v3221
        %8513 = vmatprep.subr.bf16.mxu0 %v3218
        %8514 = vmatpush2.bf16.msra.mxu0 %v3217
        %8515 = vmatprep.subr.bf16.mxu0 %v3214
        %8516 = vmatpush2.bf16.msra.mxu0 %v3213
        %8517 = vmatprep.subr.bf16.mxu0 %v3210
        %8518 = vmatpush2.bf16.msra.mxu0 %v3209
        %8519 = vmatprep.mubr.bf16.mxu0 %v5300
        %8520 = vmatmul.mubr.bf16.gmra.mxu0 %v5298
        %v8521 = vpop.f32.mrf.mxu0
        %v8522 = vadd.f32 %v8481, %v8521
        %v8523 = vpop.f32.mrf.mxu0
        %v8524 = vadd.f32 %v8483, %v8523
        %v8525 = vpop.f32.mrf.mxu0
        %v8526 = vpop.f32.mrf.mxu0
        %8527 = vdwg.mxu0
        %8528 = vmatprep.subr.bf16.mxu0 %v3270
        %8529 = vmatpush1.bf16.msra.mxu0 %v3269
        %8530 = vmatprep.subr.bf16.mxu0 %v3266
        %8531 = vmatpush1.bf16.msra.mxu0 %v3265
        %8532 = vmatprep.subr.bf16.mxu0 %v3262
        %8533 = vmatpush1.bf16.msra.mxu0 %v3261
        %8534 = vmatprep.subr.bf16.mxu0 %v3258
        %8535 = vmatpush1.bf16.msra.mxu0 %v3257
        %8536 = vmatprep.subr.bf16.mxu0 %v3254
        %8537 = vmatpush1.bf16.msra.mxu0 %v3253
        %8538 = vmatprep.subr.bf16.mxu0 %v3250
        %8539 = vmatpush1.bf16.msra.mxu0 %v3249
        %8540 = vmatprep.subr.bf16.mxu0 %v3246
        %8541 = vmatpush1.bf16.msra.mxu0 %v3245
        %8542 = vmatprep.subr.bf16.mxu0 %v3242
        %8543 = vmatpush1.bf16.msra.mxu0 %v3241
        %8544 = vmatprep.subr.bf16.mxu0 %v3302
        %8545 = vmatpush2.bf16.msra.mxu0 %v3301
        %8546 = vmatprep.subr.bf16.mxu0 %v3298
        %8547 = vmatpush2.bf16.msra.mxu0 %v3297
        %8548 = vmatprep.subr.bf16.mxu0 %v3294
        %8549 = vmatpush2.bf16.msra.mxu0 %v3293
        %8550 = vmatprep.subr.bf16.mxu0 %v3290
        %8551 = vmatpush2.bf16.msra.mxu0 %v3289
        %8552 = vmatprep.subr.bf16.mxu0 %v3286
        %8553 = vmatpush2.bf16.msra.mxu0 %v3285
        %8554 = vmatprep.subr.bf16.mxu0 %v3282
        %8555 = vmatpush2.bf16.msra.mxu0 %v3281
        %8556 = vmatprep.subr.bf16.mxu0 %v3278
        %8557 = vmatpush2.bf16.msra.mxu0 %v3277
        %8558 = vmatprep.subr.bf16.mxu0 %v3274
        %8559 = vmatpush2.bf16.msra.mxu0 %v3273
        %8560 = vmatprep.mubr.bf16.mxu0 %v5338
        %8561 = vmatmul.mubr.bf16.gmra.mxu0 %v5324
        %v8562 = vpop.f32.mrf.mxu0
        %v8563 = vadd.f32 %v8522, %v8562
        %v8564 = vpop.f32.mrf.mxu0
        %v8565 = vadd.f32 %v8524, %v8564
        %v8566 = vpop.f32.mrf.mxu0
        %v8567 = vpop.f32.mrf.mxu0
        %8568 = vdwg.mxu0
        %8569 = vmatprep.subr.bf16.mxu0 %v3334
        %8570 = vmatpush1.bf16.msra.mxu0 %v3333
        %8571 = vmatprep.subr.bf16.mxu0 %v3330
        %8572 = vmatpush1.bf16.msra.mxu0 %v3329
        %8573 = vmatprep.subr.bf16.mxu0 %v3326
        %8574 = vmatpush1.bf16.msra.mxu0 %v3325
        %8575 = vmatprep.subr.bf16.mxu0 %v3322
        %8576 = vmatpush1.bf16.msra.mxu0 %v3321
        %8577 = vmatprep.subr.bf16.mxu0 %v3318
        %8578 = vmatpush1.bf16.msra.mxu0 %v3317
        %8579 = vmatprep.subr.bf16.mxu0 %v3314
        %8580 = vmatpush1.bf16.msra.mxu0 %v3313
        %8581 = vmatprep.subr.bf16.mxu0 %v3310
        %8582 = vmatpush1.bf16.msra.mxu0 %v3309
        %8583 = vmatprep.subr.bf16.mxu0 %v3306
        %8584 = vmatpush1.bf16.msra.mxu0 %v3305
        %8585 = vmatprep.subr.bf16.mxu0 %v3366
        %8586 = vmatpush2.bf16.msra.mxu0 %v3365
        %8587 = vmatprep.subr.bf16.mxu0 %v3362
        %8588 = vmatpush2.bf16.msra.mxu0 %v3361
        %8589 = vmatprep.subr.bf16.mxu0 %v3358
        %8590 = vmatpush2.bf16.msra.mxu0 %v3357
        %8591 = vmatprep.subr.bf16.mxu0 %v3354
        %8592 = vmatpush2.bf16.msra.mxu0 %v3353
        %8593 = vmatprep.subr.bf16.mxu0 %v3350
        %8594 = vmatpush2.bf16.msra.mxu0 %v3349
        %8595 = vmatprep.subr.bf16.mxu0 %v3346
        %8596 = vmatpush2.bf16.msra.mxu0 %v3345
        %8597 = vmatprep.subr.bf16.mxu0 %v3342
        %8598 = vmatpush2.bf16.msra.mxu0 %v3341
        %8599 = vmatprep.subr.bf16.mxu0 %v3338
        %8600 = vmatpush2.bf16.msra.mxu0 %v3337
        %8601 = vmatprep.mubr.bf16.mxu0 %v5348
        %8602 = vmatmul.mubr.bf16.gmra.mxu0 %v5346
        %v8603 = vpop.f32.mrf.mxu0
        %v8604 = vadd.f32 %v8563, %v8603
        %v8605 = vpop.f32.mrf.mxu0
        %v8606 = vadd.f32 %v8565, %v8605
        %v8607 = vpop.f32.mrf.mxu0
        %v8608 = vpop.f32.mrf.mxu0
        %8609 = vdwg.mxu0
        %8610 = vmatprep.subr.bf16.mxu0 %v3398
        %8611 = vmatpush1.bf16.msra.mxu0 %v3397
        %8612 = vmatprep.subr.bf16.mxu0 %v3394
        %8613 = vmatpush1.bf16.msra.mxu0 %v3393
        %8614 = vmatprep.subr.bf16.mxu0 %v3390
        %8615 = vmatpush1.bf16.msra.mxu0 %v3389
        %8616 = vmatprep.subr.bf16.mxu0 %v3386
        %8617 = vmatpush1.bf16.msra.mxu0 %v3385
        %8618 = vmatprep.subr.bf16.mxu0 %v3382
        %8619 = vmatpush1.bf16.msra.mxu0 %v3381
        %8620 = vmatprep.subr.bf16.mxu0 %v3378
        %8621 = vmatpush1.bf16.msra.mxu0 %v3377
        %8622 = vmatprep.subr.bf16.mxu0 %v3374
        %8623 = vmatpush1.bf16.msra.mxu0 %v3373
        %8624 = vmatprep.subr.bf16.mxu0 %v3370
        %8625 = vmatpush1.bf16.msra.mxu0 %v3369
        %8626 = vmatprep.subr.bf16.mxu0 %v3430
        %8627 = vmatpush2.bf16.msra.mxu0 %v3429
        %8628 = vmatprep.subr.bf16.mxu0 %v3426
        %8629 = vmatpush2.bf16.msra.mxu0 %v3425
        %8630 = vmatprep.subr.bf16.mxu0 %v3422
        %8631 = vmatpush2.bf16.msra.mxu0 %v3421
        %8632 = vmatprep.subr.bf16.mxu0 %v3418
        %8633 = vmatpush2.bf16.msra.mxu0 %v3417
        %8634 = vmatprep.subr.bf16.mxu0 %v3414
        %8635 = vmatpush2.bf16.msra.mxu0 %v3413
        %8636 = vmatprep.subr.bf16.mxu0 %v3410
        %8637 = vmatpush2.bf16.msra.mxu0 %v3409
        %8638 = vmatprep.subr.bf16.mxu0 %v3406
        %8639 = vmatpush2.bf16.msra.mxu0 %v3405
        %8640 = vmatprep.subr.bf16.mxu0 %v3402
        %8641 = vmatpush2.bf16.msra.mxu0 %v3401
        %8642 = vmatprep.mubr.bf16.mxu0 %v5345
        %8643 = vmatmul.mubr.bf16.gmra.mxu0 %v5331
        %v8644 = vpop.f32.mrf.mxu0
        %v8645 = vadd.f32 %v8604, %v8644
        %v8646 = vpop.f32.mrf.mxu0
        %v8647 = vadd.f32 %v8606, %v8646
        %v8648 = vpop.f32.mrf.mxu0
        %v8649 = vpop.f32.mrf.mxu0
        %8650 = vdwg.mxu0
        %8651 = vmatprep.subr.bf16.mxu0 %v3462
        %8652 = vmatpush1.bf16.msra.mxu0 %v3461
        %8653 = vmatprep.subr.bf16.mxu0 %v3458
        %8654 = vmatpush1.bf16.msra.mxu0 %v3457
        %8655 = vmatprep.subr.bf16.mxu0 %v3454
        %8656 = vmatpush1.bf16.msra.mxu0 %v3453
        %8657 = vmatprep.subr.bf16.mxu0 %v3450
        %8658 = vmatpush1.bf16.msra.mxu0 %v3449
        %8659 = vmatprep.subr.bf16.mxu0 %v3446
        %8660 = vmatpush1.bf16.msra.mxu0 %v3445
        %8661 = vmatprep.subr.bf16.mxu0 %v3442
        %8662 = vmatpush1.bf16.msra.mxu0 %v3441
        %8663 = vmatprep.subr.bf16.mxu0 %v3438
        %8664 = vmatpush1.bf16.msra.mxu0 %v3437
        %8665 = vmatprep.subr.bf16.mxu0 %v3434
        %8666 = vmatpush1.bf16.msra.mxu0 %v3433
        %8667 = vmatprep.subr.bf16.mxu0 %v3494
        %8668 = vmatpush2.bf16.msra.mxu0 %v3493
        %8669 = vmatprep.subr.bf16.mxu0 %v3490
        %8670 = vmatpush2.bf16.msra.mxu0 %v3489
        %8671 = vmatprep.subr.bf16.mxu0 %v3486
        %8672 = vmatpush2.bf16.msra.mxu0 %v3485
        %8673 = vmatprep.subr.bf16.mxu0 %v3482
        %8674 = vmatpush2.bf16.msra.mxu0 %v3481
        %8675 = vmatprep.subr.bf16.mxu0 %v3478
        %8676 = vmatpush2.bf16.msra.mxu0 %v3477
        %8677 = vmatprep.subr.bf16.mxu0 %v3474
        %8678 = vmatpush2.bf16.msra.mxu0 %v3473
        %8679 = vmatprep.subr.bf16.mxu0 %v3470
        %8680 = vmatpush2.bf16.msra.mxu0 %v3469
        %8681 = vmatprep.subr.bf16.mxu0 %v3466
        %8682 = vmatpush2.bf16.msra.mxu0 %v3465
        %8683 = vmatprep.mubr.bf16.mxu0 %v5349
        %8684 = vmatmul.mubr.bf16.gmra.mxu0 %v5347
        %v8685 = vpop.f32.mrf.mxu0
        %v8686 = vadd.f32 %v8645, %v8685
        %v8687 = vpop.f32.mrf.mxu0
        %v8688 = vadd.f32 %v8647, %v8687
        %v8689 = vpop.f32.mrf.mxu0
        %v8690 = vpop.f32.mrf.mxu0
        %8691 = vdwg.mxu0
        %8692 = vmatprep.subr.bf16.mxu0 %v3526
        %8693 = vmatpush1.bf16.msra.mxu0 %v3525
        %8694 = vmatprep.subr.bf16.mxu0 %v3522
        %8695 = vmatpush1.bf16.msra.mxu0 %v3521
        %8696 = vmatprep.subr.bf16.mxu0 %v3518
        %8697 = vmatpush1.bf16.msra.mxu0 %v3517
        %8698 = vmatprep.subr.bf16.mxu0 %v3514
        %8699 = vmatpush1.bf16.msra.mxu0 %v3513
        %8700 = vmatprep.subr.bf16.mxu0 %v3510
        %8701 = vmatpush1.bf16.msra.mxu0 %v3509
        %8702 = vmatprep.subr.bf16.mxu0 %v3506
        %8703 = vmatpush1.bf16.msra.mxu0 %v3505
        %8704 = vmatprep.subr.bf16.mxu0 %v3502
        %8705 = vmatpush1.bf16.msra.mxu0 %v3501
        %8706 = vmatprep.subr.bf16.mxu0 %v3498
        %8707 = vmatpush1.bf16.msra.mxu0 %v3497
        %8708 = vmatprep.subr.bf16.mxu0 %v3558
        %8709 = vmatpush2.bf16.msra.mxu0 %v3557
        %8710 = vmatprep.subr.bf16.mxu0 %v3554
        %8711 = vmatpush2.bf16.msra.mxu0 %v3553
        %8712 = vmatprep.subr.bf16.mxu0 %v3550
        %8713 = vmatpush2.bf16.msra.mxu0 %v3549
        %8714 = vmatprep.subr.bf16.mxu0 %v3546
        %8715 = vmatpush2.bf16.msra.mxu0 %v3545
        %8716 = vmatprep.subr.bf16.mxu0 %v3542
        %8717 = vmatpush2.bf16.msra.mxu0 %v3541
        %8718 = vmatprep.subr.bf16.mxu0 %v3538
        %8719 = vmatpush2.bf16.msra.mxu0 %v3537
        %8720 = vmatprep.subr.bf16.mxu0 %v3534
        %8721 = vmatpush2.bf16.msra.mxu0 %v3533
        %8722 = vmatprep.subr.bf16.mxu0 %v3530
        %8723 = vmatpush2.bf16.msra.mxu0 %v3529
        %8724 = vmatprep.mubr.bf16.mxu0 %v5387
        %8725 = vmatmul.mubr.bf16.gmra.mxu0 %v5373
        %v8726 = vpop.f32.mrf.mxu0
        %v8727 = vadd.f32 %v8686, %v8726
        %v8728 = vpop.f32.mrf.mxu0
        %v8729 = vadd.f32 %v8688, %v8728
        %v8730 = vpop.f32.mrf.mxu0
        %v8731 = vpop.f32.mrf.mxu0
        %8732 = vdwg.mxu0
        %8733 = vmatprep.subr.bf16.mxu0 %v3590
        %8734 = vmatpush1.bf16.msra.mxu0 %v3589
        %8735 = vmatprep.subr.bf16.mxu0 %v3586
        %8736 = vmatpush1.bf16.msra.mxu0 %v3585
        %8737 = vmatprep.subr.bf16.mxu0 %v3582
        %8738 = vmatpush1.bf16.msra.mxu0 %v3581
        %8739 = vmatprep.subr.bf16.mxu0 %v3578
        %8740 = vmatpush1.bf16.msra.mxu0 %v3577
        %8741 = vmatprep.subr.bf16.mxu0 %v3574
        %8742 = vmatpush1.bf16.msra.mxu0 %v3573
        %8743 = vmatprep.subr.bf16.mxu0 %v3570
        %8744 = vmatpush1.bf16.msra.mxu0 %v3569
        %8745 = vmatprep.subr.bf16.mxu0 %v3566
        %8746 = vmatpush1.bf16.msra.mxu0 %v3565
        %8747 = vmatprep.subr.bf16.mxu0 %v3562
        %8748 = vmatpush1.bf16.msra.mxu0 %v3561
        %8749 = vmatprep.subr.bf16.mxu0 %v3622
        %8750 = vmatpush2.bf16.msra.mxu0 %v3621
        %8751 = vmatprep.subr.bf16.mxu0 %v3618
        %8752 = vmatpush2.bf16.msra.mxu0 %v3617
        %8753 = vmatprep.subr.bf16.mxu0 %v3614
        %8754 = vmatpush2.bf16.msra.mxu0 %v3613
        %8755 = vmatprep.subr.bf16.mxu0 %v3610
        %8756 = vmatpush2.bf16.msra.mxu0 %v3609
        %8757 = vmatprep.subr.bf16.mxu0 %v3606
        %8758 = vmatpush2.bf16.msra.mxu0 %v3605
        %8759 = vmatprep.subr.bf16.mxu0 %v3602
        %8760 = vmatpush2.bf16.msra.mxu0 %v3601
        %8761 = vmatprep.subr.bf16.mxu0 %v3598
        %8762 = vmatpush2.bf16.msra.mxu0 %v3597
        %8763 = vmatprep.subr.bf16.mxu0 %v3594
        %8764 = vmatpush2.bf16.msra.mxu0 %v3593
        %8765 = vmatprep.mubr.bf16.mxu0 %v5397
        %8766 = vmatmul.mubr.bf16.gmra.mxu0 %v5395
        %v8767 = vpop.f32.mrf.mxu0
        %v8768 = vadd.f32 %v8727, %v8767
        %v8769 = vpop.f32.mrf.mxu0
        %v8770 = vadd.f32 %v8729, %v8769
        %v8771 = vpop.f32.mrf.mxu0
        %v8772 = vpop.f32.mrf.mxu0
        %8773 = vdwg.mxu0
        %8774 = vmatprep.subr.bf16.mxu0 %v3654
        %8775 = vmatpush1.bf16.msra.mxu0 %v3653
        %8776 = vmatprep.subr.bf16.mxu0 %v3650
        %8777 = vmatpush1.bf16.msra.mxu0 %v3649
        %8778 = vmatprep.subr.bf16.mxu0 %v3646
        %8779 = vmatpush1.bf16.msra.mxu0 %v3645
        %8780 = vmatprep.subr.bf16.mxu0 %v3642
        %8781 = vmatpush1.bf16.msra.mxu0 %v3641
        %8782 = vmatprep.subr.bf16.mxu0 %v3638
        %8783 = vmatpush1.bf16.msra.mxu0 %v3637
        %8784 = vmatprep.subr.bf16.mxu0 %v3634
        %8785 = vmatpush1.bf16.msra.mxu0 %v3633
        %8786 = vmatprep.subr.bf16.mxu0 %v3630
        %8787 = vmatpush1.bf16.msra.mxu0 %v3629
        %8788 = vmatprep.subr.bf16.mxu0 %v3626
        %8789 = vmatpush1.bf16.msra.mxu0 %v3625
        %8790 = vmatprep.subr.bf16.mxu0 %v3686
        %8791 = vmatpush2.bf16.msra.mxu0 %v3685
        %8792 = vmatprep.subr.bf16.mxu0 %v3682
        %8793 = vmatpush2.bf16.msra.mxu0 %v3681
        %8794 = vmatprep.subr.bf16.mxu0 %v3678
        %8795 = vmatpush2.bf16.msra.mxu0 %v3677
        %8796 = vmatprep.subr.bf16.mxu0 %v3674
        %8797 = vmatpush2.bf16.msra.mxu0 %v3673
        %8798 = vmatprep.subr.bf16.mxu0 %v3670
        %8799 = vmatpush2.bf16.msra.mxu0 %v3669
        %8800 = vmatprep.subr.bf16.mxu0 %v3666
        %8801 = vmatpush2.bf16.msra.mxu0 %v3665
        %8802 = vmatprep.subr.bf16.mxu0 %v3662
        %8803 = vmatpush2.bf16.msra.mxu0 %v3661
        %8804 = vmatprep.subr.bf16.mxu0 %v3658
        %8805 = vmatpush2.bf16.msra.mxu0 %v3657
        %8806 = vmatprep.mubr.bf16.mxu0 %v5394
        %8807 = vmatmul.mubr.bf16.gmra.mxu0 %v5380
        %v8808 = vpop.f32.mrf.mxu0
        %v8809 = vadd.f32 %v8768, %v8808
        %v8810 = vpop.f32.mrf.mxu0
        %v8811 = vadd.f32 %v8770, %v8810
        %v8812 = vpop.f32.mrf.mxu0
        %v8813 = vpop.f32.mrf.mxu0
        %8814 = vdwg.mxu0
        %8815 = vmatprep.subr.bf16.mxu0 %v3718
        %8816 = vmatpush1.bf16.msra.mxu0 %v3717
        %8817 = vmatprep.subr.bf16.mxu0 %v3714
        %8818 = vmatpush1.bf16.msra.mxu0 %v3713
        %8819 = vmatprep.subr.bf16.mxu0 %v3710
        %8820 = vmatpush1.bf16.msra.mxu0 %v3709
        %8821 = vmatprep.subr.bf16.mxu0 %v3706
        %8822 = vmatpush1.bf16.msra.mxu0 %v3705
        %8823 = vmatprep.subr.bf16.mxu0 %v3702
        %8824 = vmatpush1.bf16.msra.mxu0 %v3701
        %8825 = vmatprep.subr.bf16.mxu0 %v3698
        %8826 = vmatpush1.bf16.msra.mxu0 %v3697
        %8827 = vmatprep.subr.bf16.mxu0 %v3694
        %8828 = vmatpush1.bf16.msra.mxu0 %v3693
        %8829 = vmatprep.subr.bf16.mxu0 %v3690
        %8830 = vmatpush1.bf16.msra.mxu0 %v3689
        %8831 = vmatprep.subr.bf16.mxu0 %v3750
        %8832 = vmatpush2.bf16.msra.mxu0 %v3749
        %8833 = vmatprep.subr.bf16.mxu0 %v3746
        %8834 = vmatpush2.bf16.msra.mxu0 %v3745
        %8835 = vmatprep.subr.bf16.mxu0 %v3742
        %8836 = vmatpush2.bf16.msra.mxu0 %v3741
        %8837 = vmatprep.subr.bf16.mxu0 %v3738
        %8838 = vmatpush2.bf16.msra.mxu0 %v3737
        %8839 = vmatprep.subr.bf16.mxu0 %v3734
        %8840 = vmatpush2.bf16.msra.mxu0 %v3733
        %8841 = vmatprep.subr.bf16.mxu0 %v3730
        %8842 = vmatpush2.bf16.msra.mxu0 %v3729
        %8843 = vmatprep.subr.bf16.mxu0 %v3726
        %8844 = vmatpush2.bf16.msra.mxu0 %v3725
        %8845 = vmatprep.subr.bf16.mxu0 %v3722
        %8846 = vmatpush2.bf16.msra.mxu0 %v3721
        %8847 = vmatprep.mubr.bf16.mxu0 %v5398
        %8848 = vmatmul.mubr.bf16.gmra.mxu0 %v5396
        %v8849 = vpop.f32.mrf.mxu0
        %v8850 = vadd.f32 %v8809, %v8849
        %v8851 = vpop.f32.mrf.mxu0
        %v8852 = vadd.f32 %v8811, %v8851
        %v8853 = vpop.f32.mrf.mxu0
        %v8854 = vpop.f32.mrf.mxu0
        %8855 = vdwg.mxu0
        %8856 = vmatprep.subr.bf16.mxu0 %v3782
        %8857 = vmatpush1.bf16.msra.mxu0 %v3781
        %8858 = vmatprep.subr.bf16.mxu0 %v3778
        %8859 = vmatpush1.bf16.msra.mxu0 %v3777
        %8860 = vmatprep.subr.bf16.mxu0 %v3774
        %8861 = vmatpush1.bf16.msra.mxu0 %v3773
        %8862 = vmatprep.subr.bf16.mxu0 %v3770
        %8863 = vmatpush1.bf16.msra.mxu0 %v3769
        %8864 = vmatprep.subr.bf16.mxu0 %v3766
        %8865 = vmatpush1.bf16.msra.mxu0 %v3765
        %8866 = vmatprep.subr.bf16.mxu0 %v3762
        %8867 = vmatpush1.bf16.msra.mxu0 %v3761
        %8868 = vmatprep.subr.bf16.mxu0 %v3758
        %8869 = vmatpush1.bf16.msra.mxu0 %v3757
        %8870 = vmatprep.subr.bf16.mxu0 %v3754
        %8871 = vmatpush1.bf16.msra.mxu0 %v3753
        %8872 = vmatprep.subr.bf16.mxu0 %v3814
        %8873 = vmatpush2.bf16.msra.mxu0 %v3813
        %8874 = vmatprep.subr.bf16.mxu0 %v3810
        %8875 = vmatpush2.bf16.msra.mxu0 %v3809
        %8876 = vmatprep.subr.bf16.mxu0 %v3806
        %8877 = vmatpush2.bf16.msra.mxu0 %v3805
        %8878 = vmatprep.subr.bf16.mxu0 %v3802
        %8879 = vmatpush2.bf16.msra.mxu0 %v3801
        %8880 = vmatprep.subr.bf16.mxu0 %v3798
        %8881 = vmatpush2.bf16.msra.mxu0 %v3797
        %8882 = vmatprep.subr.bf16.mxu0 %v3794
        %8883 = vmatpush2.bf16.msra.mxu0 %v3793
        %8884 = vmatprep.subr.bf16.mxu0 %v3790
        %8885 = vmatpush2.bf16.msra.mxu0 %v3789
        %8886 = vmatprep.subr.bf16.mxu0 %v3786
        %8887 = vmatpush2.bf16.msra.mxu0 %v3785
        %8888 = vmatprep.mubr.bf16.mxu0 %v5436
        %8889 = vmatmul.mubr.bf16.gmra.mxu0 %v5422
        %v8890 = vpop.f32.mrf.mxu0
        %v8891 = vadd.f32 %v8850, %v8890
        %v8892 = vpop.f32.mrf.mxu0
        %v8893 = vadd.f32 %v8852, %v8892
        %v8894 = vpop.f32.mrf.mxu0
        %v8895 = vpop.f32.mrf.mxu0
        %8896 = vdwg.mxu0
        %8897 = vmatprep.subr.bf16.mxu0 %v3846
        %8898 = vmatpush1.bf16.msra.mxu0 %v3845
        %8899 = vmatprep.subr.bf16.mxu0 %v3842
        %8900 = vmatpush1.bf16.msra.mxu0 %v3841
        %8901 = vmatprep.subr.bf16.mxu0 %v3838
        %8902 = vmatpush1.bf16.msra.mxu0 %v3837
        %8903 = vmatprep.subr.bf16.mxu0 %v3834
        %8904 = vmatpush1.bf16.msra.mxu0 %v3833
        %8905 = vmatprep.subr.bf16.mxu0 %v3830
        %8906 = vmatpush1.bf16.msra.mxu0 %v3829
        %8907 = vmatprep.subr.bf16.mxu0 %v3826
        %8908 = vmatpush1.bf16.msra.mxu0 %v3825
        %8909 = vmatprep.subr.bf16.mxu0 %v3822
        %8910 = vmatpush1.bf16.msra.mxu0 %v3821
        %8911 = vmatprep.subr.bf16.mxu0 %v3818
        %8912 = vmatpush1.bf16.msra.mxu0 %v3817
        %8913 = vmatprep.subr.bf16.mxu0 %v3878
        %8914 = vmatpush2.bf16.msra.mxu0 %v3877
        %8915 = vmatprep.subr.bf16.mxu0 %v3874
        %8916 = vmatpush2.bf16.msra.mxu0 %v3873
        %8917 = vmatprep.subr.bf16.mxu0 %v3870
        %8918 = vmatpush2.bf16.msra.mxu0 %v3869
        %8919 = vmatprep.subr.bf16.mxu0 %v3866
        %8920 = vmatpush2.bf16.msra.mxu0 %v3865
        %8921 = vmatprep.subr.bf16.mxu0 %v3862
        %8922 = vmatpush2.bf16.msra.mxu0 %v3861
        %8923 = vmatprep.subr.bf16.mxu0 %v3858
        %8924 = vmatpush2.bf16.msra.mxu0 %v3857
        %8925 = vmatprep.subr.bf16.mxu0 %v3854
        %8926 = vmatpush2.bf16.msra.mxu0 %v3853
        %8927 = vmatprep.subr.bf16.mxu0 %v3850
        %8928 = vmatpush2.bf16.msra.mxu0 %v3849
        %8929 = vmatprep.mubr.bf16.mxu0 %v5446
        %8930 = vmatmul.mubr.bf16.gmra.mxu0 %v5444
        %v8931 = vpop.f32.mrf.mxu0
        %v8932 = vadd.f32 %v8891, %v8931
        %v8933 = vpop.f32.mrf.mxu0
        %v8934 = vadd.f32 %v8893, %v8933
        %v8935 = vpop.f32.mrf.mxu0
        %v8936 = vpop.f32.mrf.mxu0
        %8937 = vdwg.mxu0
        %8938 = vmatprep.subr.bf16.mxu0 %v3910
        %8939 = vmatpush1.bf16.msra.mxu0 %v3909
        %8940 = vmatprep.subr.bf16.mxu0 %v3906
        %8941 = vmatpush1.bf16.msra.mxu0 %v3905
        %8942 = vmatprep.subr.bf16.mxu0 %v3902
        %8943 = vmatpush1.bf16.msra.mxu0 %v3901
        %8944 = vmatprep.subr.bf16.mxu0 %v3898
        %8945 = vmatpush1.bf16.msra.mxu0 %v3897
        %8946 = vmatprep.subr.bf16.mxu0 %v3894
        %8947 = vmatpush1.bf16.msra.mxu0 %v3893
        %8948 = vmatprep.subr.bf16.mxu0 %v3890
        %8949 = vmatpush1.bf16.msra.mxu0 %v3889
        %8950 = vmatprep.subr.bf16.mxu0 %v3886
        %8951 = vmatpush1.bf16.msra.mxu0 %v3885
        %8952 = vmatprep.subr.bf16.mxu0 %v3882
        %8953 = vmatpush1.bf16.msra.mxu0 %v3881
        %8954 = vmatprep.subr.bf16.mxu0 %v3942
        %8955 = vmatpush2.bf16.msra.mxu0 %v3941
        %8956 = vmatprep.subr.bf16.mxu0 %v3938
        %8957 = vmatpush2.bf16.msra.mxu0 %v3937
        %8958 = vmatprep.subr.bf16.mxu0 %v3934
        %8959 = vmatpush2.bf16.msra.mxu0 %v3933
        %8960 = vmatprep.subr.bf16.mxu0 %v3930
        %8961 = vmatpush2.bf16.msra.mxu0 %v3929
        %8962 = vmatprep.subr.bf16.mxu0 %v3926
        %8963 = vmatpush2.bf16.msra.mxu0 %v3925
        %8964 = vmatprep.subr.bf16.mxu0 %v3922
        %8965 = vmatpush2.bf16.msra.mxu0 %v3921
        %8966 = vmatprep.subr.bf16.mxu0 %v3918
        %8967 = vmatpush2.bf16.msra.mxu0 %v3917
        %8968 = vmatprep.subr.bf16.mxu0 %v3914
        %8969 = vmatpush2.bf16.msra.mxu0 %v3913
        %8970 = vmatprep.mubr.bf16.mxu0 %v5443
        %8971 = vmatmul.mubr.bf16.gmra.mxu0 %v5429
        %v8972 = vpop.f32.mrf.mxu0
        %v8973 = vadd.f32 %v8932, %v8972
        %v8974 = vpop.f32.mrf.mxu0
        %v8975 = vadd.f32 %v8934, %v8974
        %v8976 = vpop.f32.mrf.mxu0
        %v8977 = vpop.f32.mrf.mxu0
        %8978 = vdwg.mxu0
        %8979 = vmatprep.subr.bf16.mxu0 %v3974
        %8980 = vmatpush1.bf16.msra.mxu0 %v3973
        %8981 = vmatprep.subr.bf16.mxu0 %v3970
        %8982 = vmatpush1.bf16.msra.mxu0 %v3969
        %8983 = vmatprep.subr.bf16.mxu0 %v3966
        %8984 = vmatpush1.bf16.msra.mxu0 %v3965
        %8985 = vmatprep.subr.bf16.mxu0 %v3962
        %8986 = vmatpush1.bf16.msra.mxu0 %v3961
        %8987 = vmatprep.subr.bf16.mxu0 %v3958
        %8988 = vmatpush1.bf16.msra.mxu0 %v3957
        %8989 = vmatprep.subr.bf16.mxu0 %v3954
        %8990 = vmatpush1.bf16.msra.mxu0 %v3953
        %8991 = vmatprep.subr.bf16.mxu0 %v3950
        %8992 = vmatpush1.bf16.msra.mxu0 %v3949
        %8993 = vmatprep.subr.bf16.mxu0 %v3946
        %8994 = vmatpush1.bf16.msra.mxu0 %v3945
        %8995 = vmatprep.subr.bf16.mxu0 %v4006
        %8996 = vmatpush2.bf16.msra.mxu0 %v4005
        %8997 = vmatprep.subr.bf16.mxu0 %v4002
        %8998 = vmatpush2.bf16.msra.mxu0 %v4001
        %8999 = vmatprep.subr.bf16.mxu0 %v3998
        %9000 = vmatpush2.bf16.msra.mxu0 %v3997
        %9001 = vmatprep.subr.bf16.mxu0 %v3994
        %9002 = vmatpush2.bf16.msra.mxu0 %v3993
        %9003 = vmatprep.subr.bf16.mxu0 %v3990
        %9004 = vmatpush2.bf16.msra.mxu0 %v3989
        %9005 = vmatprep.subr.bf16.mxu0 %v3986
        %9006 = vmatpush2.bf16.msra.mxu0 %v3985
        %9007 = vmatprep.subr.bf16.mxu0 %v3982
        %9008 = vmatpush2.bf16.msra.mxu0 %v3981
        %9009 = vmatprep.subr.bf16.mxu0 %v3978
        %9010 = vmatpush2.bf16.msra.mxu0 %v3977
        %9011 = vmatprep.mubr.bf16.mxu0 %v5447
        %9012 = vmatmul.mubr.bf16.gmra.mxu0 %v5445
        %v9013 = vpop.f32.mrf.mxu0
        %v9014 = vadd.f32 %v8973, %v9013
        %v9015 = vpop.f32.mrf.mxu0
        %v9016 = vadd.f32 %v8975, %v9015
        %v9017 = vpop.f32.mrf.mxu0
        %v9018 = vpop.f32.mrf.mxu0
        %9019 = vdwg.mxu0
        %9020 = vmatprep.subr.bf16.mxu0 %v4038
        %9021 = vmatpush1.bf16.msra.mxu0 %v4037
        %9022 = vmatprep.subr.bf16.mxu0 %v4034
        %9023 = vmatpush1.bf16.msra.mxu0 %v4033
        %9024 = vmatprep.subr.bf16.mxu0 %v4030
        %9025 = vmatpush1.bf16.msra.mxu0 %v4029
        %9026 = vmatprep.subr.bf16.mxu0 %v4026
        %9027 = vmatpush1.bf16.msra.mxu0 %v4025
        %9028 = vmatprep.subr.bf16.mxu0 %v4022
        %9029 = vmatpush1.bf16.msra.mxu0 %v4021
        %9030 = vmatprep.subr.bf16.mxu0 %v4018
        %9031 = vmatpush1.bf16.msra.mxu0 %v4017
        %9032 = vmatprep.subr.bf16.mxu0 %v4014
        %9033 = vmatpush1.bf16.msra.mxu0 %v4013
        %9034 = vmatprep.subr.bf16.mxu0 %v4010
        %9035 = vmatpush1.bf16.msra.mxu0 %v4009
        %9036 = vmatprep.subr.bf16.mxu0 %v4070
        %9037 = vmatpush2.bf16.msra.mxu0 %v4069
        %9038 = vmatprep.subr.bf16.mxu0 %v4066
        %9039 = vmatpush2.bf16.msra.mxu0 %v4065
        %9040 = vmatprep.subr.bf16.mxu0 %v4062
        %9041 = vmatpush2.bf16.msra.mxu0 %v4061
        %9042 = vmatprep.subr.bf16.mxu0 %v4058
        %9043 = vmatpush2.bf16.msra.mxu0 %v4057
        %9044 = vmatprep.subr.bf16.mxu0 %v4054
        %9045 = vmatpush2.bf16.msra.mxu0 %v4053
        %9046 = vmatprep.subr.bf16.mxu0 %v4050
        %9047 = vmatpush2.bf16.msra.mxu0 %v4049
        %9048 = vmatprep.subr.bf16.mxu0 %v4046
        %9049 = vmatpush2.bf16.msra.mxu0 %v4045
        %9050 = vmatprep.subr.bf16.mxu0 %v4042
        %9051 = vmatpush2.bf16.msra.mxu0 %v4041
        %9052 = vmatprep.mubr.bf16.mxu0 %v5485
        %9053 = vmatmul.mubr.bf16.gmra.mxu0 %v5471
        %v9054 = vpop.f32.mrf.mxu0
        %v9055 = vadd.f32 %v9014, %v9054
        %v9056 = vpop.f32.mrf.mxu0
        %v9057 = vadd.f32 %v9016, %v9056
        %v9058 = vpop.f32.mrf.mxu0
        %v9059 = vpop.f32.mrf.mxu0
        %9060 = vdwg.mxu0
        %9061 = vmatprep.subr.bf16.mxu0 %v4102
        %9062 = vmatpush1.bf16.msra.mxu0 %v4101
        %9063 = vmatprep.subr.bf16.mxu0 %v4098
        %9064 = vmatpush1.bf16.msra.mxu0 %v4097
        %9065 = vmatprep.subr.bf16.mxu0 %v4094
        %9066 = vmatpush1.bf16.msra.mxu0 %v4093
        %9067 = vmatprep.subr.bf16.mxu0 %v4090
        %9068 = vmatpush1.bf16.msra.mxu0 %v4089
        %9069 = vmatprep.subr.bf16.mxu0 %v4086
        %9070 = vmatpush1.bf16.msra.mxu0 %v4085
        %9071 = vmatprep.subr.bf16.mxu0 %v4082
        %9072 = vmatpush1.bf16.msra.mxu0 %v4081
        %9073 = vmatprep.subr.bf16.mxu0 %v4078
        %9074 = vmatpush1.bf16.msra.mxu0 %v4077
        %9075 = vmatprep.subr.bf16.mxu0 %v4074
        %9076 = vmatpush1.bf16.msra.mxu0 %v4073
        %9077 = vmatprep.subr.bf16.mxu0 %v4134
        %9078 = vmatpush2.bf16.msra.mxu0 %v4133
        %9079 = vmatprep.subr.bf16.mxu0 %v4130
        %9080 = vmatpush2.bf16.msra.mxu0 %v4129
        %9081 = vmatprep.subr.bf16.mxu0 %v4126
        %9082 = vmatpush2.bf16.msra.mxu0 %v4125
        %9083 = vmatprep.subr.bf16.mxu0 %v4122
        %9084 = vmatpush2.bf16.msra.mxu0 %v4121
        %9085 = vmatprep.subr.bf16.mxu0 %v4118
        %9086 = vmatpush2.bf16.msra.mxu0 %v4117
        %9087 = vmatprep.subr.bf16.mxu0 %v4114
        %9088 = vmatpush2.bf16.msra.mxu0 %v4113
        %9089 = vmatprep.subr.bf16.mxu0 %v4110
        %9090 = vmatpush2.bf16.msra.mxu0 %v4109
        %9091 = vmatprep.subr.bf16.mxu0 %v4106
        %9092 = vmatpush2.bf16.msra.mxu0 %v4105
        %9093 = vmatprep.mubr.bf16.mxu0 %v5495
        %9094 = vmatmul.mubr.bf16.gmra.mxu0 %v5493
        %v9095 = vpop.f32.mrf.mxu0
        %v9096 = vadd.f32 %v9055, %v9095
        %v9097 = vpop.f32.mrf.mxu0
        %v9098 = vadd.f32 %v9057, %v9097
        %v9099 = vpop.f32.mrf.mxu0
        %v9100 = vpop.f32.mrf.mxu0
        %9101 = vdwg.mxu0
        %9102 = vmatprep.subr.bf16.mxu0 %v4166
        %9103 = vmatpush1.bf16.msra.mxu0 %v4165
        %9104 = vmatprep.subr.bf16.mxu0 %v4162
        %9105 = vmatpush1.bf16.msra.mxu0 %v4161
        %9106 = vmatprep.subr.bf16.mxu0 %v4158
        %9107 = vmatpush1.bf16.msra.mxu0 %v4157
        %9108 = vmatprep.subr.bf16.mxu0 %v4154
        %9109 = vmatpush1.bf16.msra.mxu0 %v4153
        %9110 = vmatprep.subr.bf16.mxu0 %v4150
        %9111 = vmatpush1.bf16.msra.mxu0 %v4149
        %9112 = vmatprep.subr.bf16.mxu0 %v4146
        %9113 = vmatpush1.bf16.msra.mxu0 %v4145
        %9114 = vmatprep.subr.bf16.mxu0 %v4142
        %9115 = vmatpush1.bf16.msra.mxu0 %v4141
        %9116 = vmatprep.subr.bf16.mxu0 %v4138
        %9117 = vmatpush1.bf16.msra.mxu0 %v4137
        %9118 = vmatprep.subr.bf16.mxu0 %v4198
        %9119 = vmatpush2.bf16.msra.mxu0 %v4197
        %9120 = vmatprep.subr.bf16.mxu0 %v4194
        %9121 = vmatpush2.bf16.msra.mxu0 %v4193
        %9122 = vmatprep.subr.bf16.mxu0 %v4190
        %9123 = vmatpush2.bf16.msra.mxu0 %v4189
        %9124 = vmatprep.subr.bf16.mxu0 %v4186
        %9125 = vmatpush2.bf16.msra.mxu0 %v4185
        %9126 = vmatprep.subr.bf16.mxu0 %v4182
        %9127 = vmatpush2.bf16.msra.mxu0 %v4181
        %9128 = vmatprep.subr.bf16.mxu0 %v4178
        %9129 = vmatpush2.bf16.msra.mxu0 %v4177
        %9130 = vmatprep.subr.bf16.mxu0 %v4174
        %9131 = vmatpush2.bf16.msra.mxu0 %v4173
        %9132 = vmatprep.subr.bf16.mxu0 %v4170
        %9133 = vmatpush2.bf16.msra.mxu0 %v4169
        %9134 = vmatprep.mubr.bf16.mxu0 %v5492
        %9135 = vmatmul.mubr.bf16.gmra.mxu0 %v5478
        %v9136 = vpop.f32.mrf.mxu0
        %v9137 = vadd.f32 %v9096, %v9136
        %v9138 = vpop.f32.mrf.mxu0
        %v9139 = vadd.f32 %v9098, %v9138
        %v9140 = vpop.f32.mrf.mxu0
        %v9141 = vpop.f32.mrf.mxu0
        %9142 = vdwg.mxu0
        %9143 = vmatprep.subr.bf16.mxu0 %v4230
        %9144 = vmatpush1.bf16.msra.mxu0 %v4229
        %9145 = vmatprep.subr.bf16.mxu0 %v4226
        %9146 = vmatpush1.bf16.msra.mxu0 %v4225
        %9147 = vmatprep.subr.bf16.mxu0 %v4222
        %9148 = vmatpush1.bf16.msra.mxu0 %v4221
        %9149 = vmatprep.subr.bf16.mxu0 %v4218
        %9150 = vmatpush1.bf16.msra.mxu0 %v4217
        %9151 = vmatprep.subr.bf16.mxu0 %v4214
        %9152 = vmatpush1.bf16.msra.mxu0 %v4213
        %9153 = vmatprep.subr.bf16.mxu0 %v4210
        %9154 = vmatpush1.bf16.msra.mxu0 %v4209
        %9155 = vmatprep.subr.bf16.mxu0 %v4206
        %9156 = vmatpush1.bf16.msra.mxu0 %v4205
        %9157 = vmatprep.subr.bf16.mxu0 %v4202
        %9158 = vmatpush1.bf16.msra.mxu0 %v4201
        %9159 = vmatprep.subr.bf16.mxu0 %v4262
        %9160 = vmatpush2.bf16.msra.mxu0 %v4261
        %9161 = vmatprep.subr.bf16.mxu0 %v4258
        %9162 = vmatpush2.bf16.msra.mxu0 %v4257
        %9163 = vmatprep.subr.bf16.mxu0 %v4254
        %9164 = vmatpush2.bf16.msra.mxu0 %v4253
        %9165 = vmatprep.subr.bf16.mxu0 %v4250
        %9166 = vmatpush2.bf16.msra.mxu0 %v4249
        %9167 = vmatprep.subr.bf16.mxu0 %v4246
        %9168 = vmatpush2.bf16.msra.mxu0 %v4245
        %9169 = vmatprep.subr.bf16.mxu0 %v4242
        %9170 = vmatpush2.bf16.msra.mxu0 %v4241
        %9171 = vmatprep.subr.bf16.mxu0 %v4238
        %9172 = vmatpush2.bf16.msra.mxu0 %v4237
        %9173 = vmatprep.subr.bf16.mxu0 %v4234
        %9174 = vmatpush2.bf16.msra.mxu0 %v4233
        %9175 = vmatprep.mubr.bf16.mxu0 %v5496
        %9176 = vmatmul.mubr.bf16.gmra.mxu0 %v5494
        %v9177 = vpop.f32.mrf.mxu0
        %v9178 = vadd.f32 %v9137, %v9177
        %v9179 = vpop.f32.mrf.mxu0
        %v9180 = vadd.f32 %v9139, %v9179
        %v9181 = vpop.f32.mrf.mxu0
        %v9182 = vpop.f32.mrf.mxu0
        %9183 = vdwg.mxu0
        %9184 = vmatprep.subr.bf16.mxu0 %v4294
        %9185 = vmatpush1.bf16.msra.mxu0 %v4293
        %9186 = vmatprep.subr.bf16.mxu0 %v4290
        %9187 = vmatpush1.bf16.msra.mxu0 %v4289
        %9188 = vmatprep.subr.bf16.mxu0 %v4286
        %9189 = vmatpush1.bf16.msra.mxu0 %v4285
        %9190 = vmatprep.subr.bf16.mxu0 %v4282
        %9191 = vmatpush1.bf16.msra.mxu0 %v4281
        %9192 = vmatprep.subr.bf16.mxu0 %v4278
        %9193 = vmatpush1.bf16.msra.mxu0 %v4277
        %9194 = vmatprep.subr.bf16.mxu0 %v4274
        %9195 = vmatpush1.bf16.msra.mxu0 %v4273
        %9196 = vmatprep.subr.bf16.mxu0 %v4270
        %9197 = vmatpush1.bf16.msra.mxu0 %v4269
        %9198 = vmatprep.subr.bf16.mxu0 %v4266
        %9199 = vmatpush1.bf16.msra.mxu0 %v4265
        %9200 = vmatprep.subr.bf16.mxu0 %v4326
        %9201 = vmatpush2.bf16.msra.mxu0 %v4325
        %9202 = vmatprep.subr.bf16.mxu0 %v4322
        %9203 = vmatpush2.bf16.msra.mxu0 %v4321
        %9204 = vmatprep.subr.bf16.mxu0 %v4318
        %9205 = vmatpush2.bf16.msra.mxu0 %v4317
        %9206 = vmatprep.subr.bf16.mxu0 %v4314
        %9207 = vmatpush2.bf16.msra.mxu0 %v4313
        %9208 = vmatprep.subr.bf16.mxu0 %v4310
        %9209 = vmatpush2.bf16.msra.mxu0 %v4309
        %9210 = vmatprep.subr.bf16.mxu0 %v4306
        %9211 = vmatpush2.bf16.msra.mxu0 %v4305
        %9212 = vmatprep.subr.bf16.mxu0 %v4302
        %9213 = vmatpush2.bf16.msra.mxu0 %v4301
        %9214 = vmatprep.subr.bf16.mxu0 %v4298
        %9215 = vmatpush2.bf16.msra.mxu0 %v4297
        %9216 = vmatprep.mubr.bf16.mxu0 %v5534
        %9217 = vmatmul.mubr.bf16.gmra.mxu0 %v5520
        %v9218 = vpop.f32.mrf.mxu0
        %v9219 = vadd.f32 %v9178, %v9218
        %v9220 = vpop.f32.mrf.mxu0
        %v9221 = vadd.f32 %v9180, %v9220
        %v9222 = vpop.f32.mrf.mxu0
        %v9223 = vpop.f32.mrf.mxu0
        %9224 = vdwg.mxu0
        %9225 = vmatprep.subr.bf16.mxu0 %v4358
        %9226 = vmatpush1.bf16.msra.mxu0 %v4357
        %9227 = vmatprep.subr.bf16.mxu0 %v4354
        %9228 = vmatpush1.bf16.msra.mxu0 %v4353
        %9229 = vmatprep.subr.bf16.mxu0 %v4350
        %9230 = vmatpush1.bf16.msra.mxu0 %v4349
        %9231 = vmatprep.subr.bf16.mxu0 %v4346
        %9232 = vmatpush1.bf16.msra.mxu0 %v4345
        %9233 = vmatprep.subr.bf16.mxu0 %v4342
        %9234 = vmatpush1.bf16.msra.mxu0 %v4341
        %9235 = vmatprep.subr.bf16.mxu0 %v4338
        %9236 = vmatpush1.bf16.msra.mxu0 %v4337
        %9237 = vmatprep.subr.bf16.mxu0 %v4334
        %9238 = vmatpush1.bf16.msra.mxu0 %v4333
        %9239 = vmatprep.subr.bf16.mxu0 %v4330
        %9240 = vmatpush1.bf16.msra.mxu0 %v4329
        %9241 = vmatprep.subr.bf16.mxu0 %v4390
        %9242 = vmatpush2.bf16.msra.mxu0 %v4389
        %9243 = vmatprep.subr.bf16.mxu0 %v4386
        %9244 = vmatpush2.bf16.msra.mxu0 %v4385
        %9245 = vmatprep.subr.bf16.mxu0 %v4382
        %9246 = vmatpush2.bf16.msra.mxu0 %v4381
        %9247 = vmatprep.subr.bf16.mxu0 %v4378
        %9248 = vmatpush2.bf16.msra.mxu0 %v4377
        %9249 = vmatprep.subr.bf16.mxu0 %v4374
        %9250 = vmatpush2.bf16.msra.mxu0 %v4373
        %9251 = vmatprep.subr.bf16.mxu0 %v4370
        %9252 = vmatpush2.bf16.msra.mxu0 %v4369
        %9253 = vmatprep.subr.bf16.mxu0 %v4366
        %9254 = vmatpush2.bf16.msra.mxu0 %v4365
        %9255 = vmatprep.subr.bf16.mxu0 %v4362
        %9256 = vmatpush2.bf16.msra.mxu0 %v4361
        %9257 = vmatprep.mubr.bf16.mxu0 %v5544
        %9258 = vmatmul.mubr.bf16.gmra.mxu0 %v5542
        %v9259 = vpop.f32.mrf.mxu0
        %v9260 = vadd.f32 %v9219, %v9259
        %v9261 = vpop.f32.mrf.mxu0
        %v9262 = vadd.f32 %v9221, %v9261
        %v9263 = vpop.f32.mrf.mxu0
        %v9264 = vpop.f32.mrf.mxu0
        %9265 = vdwg.mxu0
        %9266 = vmatprep.subr.bf16.mxu0 %v4422
        %9267 = vmatpush1.bf16.msra.mxu0 %v4421
        %9268 = vmatprep.subr.bf16.mxu0 %v4418
        %9269 = vmatpush1.bf16.msra.mxu0 %v4417
        %9270 = vmatprep.subr.bf16.mxu0 %v4414
        %9271 = vmatpush1.bf16.msra.mxu0 %v4413
        %9272 = vmatprep.subr.bf16.mxu0 %v4410
        %9273 = vmatpush1.bf16.msra.mxu0 %v4409
        %9274 = vmatprep.subr.bf16.mxu0 %v4406
        %9275 = vmatpush1.bf16.msra.mxu0 %v4405
        %9276 = vmatprep.subr.bf16.mxu0 %v4402
        %9277 = vmatpush1.bf16.msra.mxu0 %v4401
        %9278 = vmatprep.subr.bf16.mxu0 %v4398
        %9279 = vmatpush1.bf16.msra.mxu0 %v4397
        %9280 = vmatprep.subr.bf16.mxu0 %v4394
        %9281 = vmatpush1.bf16.msra.mxu0 %v4393
        %9282 = vmatprep.subr.bf16.mxu0 %v4454
        %9283 = vmatpush2.bf16.msra.mxu0 %v4453
        %9284 = vmatprep.subr.bf16.mxu0 %v4450
        %9285 = vmatpush2.bf16.msra.mxu0 %v4449
        %9286 = vmatprep.subr.bf16.mxu0 %v4446
        %9287 = vmatpush2.bf16.msra.mxu0 %v4445
        %9288 = vmatprep.subr.bf16.mxu0 %v4442
        %9289 = vmatpush2.bf16.msra.mxu0 %v4441
        %9290 = vmatprep.subr.bf16.mxu0 %v4438
        %9291 = vmatpush2.bf16.msra.mxu0 %v4437
        %9292 = vmatprep.subr.bf16.mxu0 %v4434
        %9293 = vmatpush2.bf16.msra.mxu0 %v4433
        %9294 = vmatprep.subr.bf16.mxu0 %v4430
        %9295 = vmatpush2.bf16.msra.mxu0 %v4429
        %9296 = vmatprep.subr.bf16.mxu0 %v4426
        %9297 = vmatpush2.bf16.msra.mxu0 %v4425
        %9298 = vmatprep.mubr.bf16.mxu0 %v5541
        %9299 = vmatmul.mubr.bf16.gmra.mxu0 %v5527
        %v9300 = vpop.f32.mrf.mxu0
        %v9301 = vadd.f32 %v9260, %v9300
        %v9302 = vpop.f32.mrf.mxu0
        %v9303 = vadd.f32 %v9262, %v9302
        %v9304 = vpop.f32.mrf.mxu0
        %v9305 = vpop.f32.mrf.mxu0
        %9306 = vdwg.mxu0
        %9307 = vmatprep.subr.bf16.mxu0 %v4486
        %9308 = vmatpush1.bf16.msra.mxu0 %v4485
        %9309 = vmatprep.subr.bf16.mxu0 %v4482
        %9310 = vmatpush1.bf16.msra.mxu0 %v4481
        %9311 = vmatprep.subr.bf16.mxu0 %v4478
        %9312 = vmatpush1.bf16.msra.mxu0 %v4477
        %9313 = vmatprep.subr.bf16.mxu0 %v4474
        %9314 = vmatpush1.bf16.msra.mxu0 %v4473
        %9315 = vmatprep.subr.bf16.mxu0 %v4470
        %9316 = vmatpush1.bf16.msra.mxu0 %v4469
        %9317 = vmatprep.subr.bf16.mxu0 %v4466
        %9318 = vmatpush1.bf16.msra.mxu0 %v4465
        %9319 = vmatprep.subr.bf16.mxu0 %v4462
        %9320 = vmatpush1.bf16.msra.mxu0 %v4461
        %9321 = vmatprep.subr.bf16.mxu0 %v4458
        %9322 = vmatpush1.bf16.msra.mxu0 %v4457
        %9323 = vmatprep.subr.bf16.mxu0 %v4518
        %9324 = vmatpush2.bf16.msra.mxu0 %v4517
        %9325 = vmatprep.subr.bf16.mxu0 %v4514
        %9326 = vmatpush2.bf16.msra.mxu0 %v4513
        %9327 = vmatprep.subr.bf16.mxu0 %v4510
        %9328 = vmatpush2.bf16.msra.mxu0 %v4509
        %9329 = vmatprep.subr.bf16.mxu0 %v4506
        %9330 = vmatpush2.bf16.msra.mxu0 %v4505
        %9331 = vmatprep.subr.bf16.mxu0 %v4502
        %9332 = vmatpush2.bf16.msra.mxu0 %v4501
        %9333 = vmatprep.subr.bf16.mxu0 %v4498
        %9334 = vmatpush2.bf16.msra.mxu0 %v4497
        %9335 = vmatprep.subr.bf16.mxu0 %v4494
        %9336 = vmatpush2.bf16.msra.mxu0 %v4493
        %9337 = vmatprep.subr.bf16.mxu0 %v4490
        %9338 = vmatpush2.bf16.msra.mxu0 %v4489
        %9339 = vmatprep.mubr.bf16.mxu0 %v5545
        %9340 = vmatmul.mubr.bf16.gmra.mxu0 %v5543
        %v9341 = vpop.f32.mrf.mxu0
        %v9342 = vadd.f32 %v9301, %v9341
        %v9343 = vpop.f32.mrf.mxu0
        %v9344 = vadd.f32 %v9303, %v9343
        %v9345 = vpop.f32.mrf.mxu0
        %v9346 = vpop.f32.mrf.mxu0
        %9347 = vdwg.mxu0
        %9348 = vmatprep.subr.bf16.mxu0 %v4550
        %9349 = vmatpush1.bf16.msra.mxu0 %v4549
        %9350 = vmatprep.subr.bf16.mxu0 %v4546
        %9351 = vmatpush1.bf16.msra.mxu0 %v4545
        %9352 = vmatprep.subr.bf16.mxu0 %v4542
        %9353 = vmatpush1.bf16.msra.mxu0 %v4541
        %9354 = vmatprep.subr.bf16.mxu0 %v4538
        %9355 = vmatpush1.bf16.msra.mxu0 %v4537
        %9356 = vmatprep.subr.bf16.mxu0 %v4534
        %9357 = vmatpush1.bf16.msra.mxu0 %v4533
        %9358 = vmatprep.subr.bf16.mxu0 %v4530
        %9359 = vmatpush1.bf16.msra.mxu0 %v4529
        %9360 = vmatprep.subr.bf16.mxu0 %v4526
        %9361 = vmatpush1.bf16.msra.mxu0 %v4525
        %9362 = vmatprep.subr.bf16.mxu0 %v4522
        %9363 = vmatpush1.bf16.msra.mxu0 %v4521
        %9364 = vmatprep.subr.bf16.mxu0 %v4582
        %9365 = vmatpush2.bf16.msra.mxu0 %v4581
        %9366 = vmatprep.subr.bf16.mxu0 %v4578
        %9367 = vmatpush2.bf16.msra.mxu0 %v4577
        %9368 = vmatprep.subr.bf16.mxu0 %v4574
        %9369 = vmatpush2.bf16.msra.mxu0 %v4573
        %9370 = vmatprep.subr.bf16.mxu0 %v4570
        %9371 = vmatpush2.bf16.msra.mxu0 %v4569
        %9372 = vmatprep.subr.bf16.mxu0 %v4566
        %9373 = vmatpush2.bf16.msra.mxu0 %v4565
        %9374 = vmatprep.subr.bf16.mxu0 %v4562
        %9375 = vmatpush2.bf16.msra.mxu0 %v4561
        %9376 = vmatprep.subr.bf16.mxu0 %v4558
        %9377 = vmatpush2.bf16.msra.mxu0 %v4557
        %9378 = vmatprep.subr.bf16.mxu0 %v4554
        %9379 = vmatpush2.bf16.msra.mxu0 %v4553
        %9380 = vmatprep.mubr.bf16.mxu0 %v5583
        %9381 = vmatmul.mubr.bf16.gmra.mxu0 %v5569
        %v9382 = vpop.f32.mrf.mxu0
        %v9383 = vadd.f32 %v9342, %v9382
        %v9384 = vpop.f32.mrf.mxu0
        %v9385 = vadd.f32 %v9344, %v9384
        %v9386 = vpop.f32.mrf.mxu0
        %v9387 = vpop.f32.mrf.mxu0
        %9388 = vdwg.mxu0
        %9389 = vmatprep.subr.bf16.mxu0 %v4614
        %9390 = vmatpush1.bf16.msra.mxu0 %v4613
        %9391 = vmatprep.subr.bf16.mxu0 %v4610
        %9392 = vmatpush1.bf16.msra.mxu0 %v4609
        %9393 = vmatprep.subr.bf16.mxu0 %v4606
        %9394 = vmatpush1.bf16.msra.mxu0 %v4605
        %9395 = vmatprep.subr.bf16.mxu0 %v4602
        %9396 = vmatpush1.bf16.msra.mxu0 %v4601
        %9397 = vmatprep.subr.bf16.mxu0 %v4598
        %9398 = vmatpush1.bf16.msra.mxu0 %v4597
        %9399 = vmatprep.subr.bf16.mxu0 %v4594
        %9400 = vmatpush1.bf16.msra.mxu0 %v4593
        %9401 = vmatprep.subr.bf16.mxu0 %v4590
        %9402 = vmatpush1.bf16.msra.mxu0 %v4589
        %9403 = vmatprep.subr.bf16.mxu0 %v4586
        %9404 = vmatpush1.bf16.msra.mxu0 %v4585
        %9405 = vmatprep.subr.bf16.mxu0 %v4646
        %9406 = vmatpush2.bf16.msra.mxu0 %v4645
        %9407 = vmatprep.subr.bf16.mxu0 %v4642
        %9408 = vmatpush2.bf16.msra.mxu0 %v4641
        %9409 = vmatprep.subr.bf16.mxu0 %v4638
        %9410 = vmatpush2.bf16.msra.mxu0 %v4637
        %9411 = vmatprep.subr.bf16.mxu0 %v4634
        %9412 = vmatpush2.bf16.msra.mxu0 %v4633
        %9413 = vmatprep.subr.bf16.mxu0 %v4630
        %9414 = vmatpush2.bf16.msra.mxu0 %v4629
        %9415 = vmatprep.subr.bf16.mxu0 %v4626
        %9416 = vmatpush2.bf16.msra.mxu0 %v4625
        %9417 = vmatprep.subr.bf16.mxu0 %v4622
        %9418 = vmatpush2.bf16.msra.mxu0 %v4621
        %9419 = vmatprep.subr.bf16.mxu0 %v4618
        %9420 = vmatpush2.bf16.msra.mxu0 %v4617
        %9421 = vmatprep.mubr.bf16.mxu0 %v5593
        %9422 = vmatmul.mubr.bf16.gmra.mxu0 %v5591
        %v9423 = vpop.f32.mrf.mxu0
        %v9424 = vadd.f32 %v9383, %v9423
        %v9425 = vpop.f32.mrf.mxu0
        %v9426 = vadd.f32 %v9385, %v9425
        %v9427 = vpop.f32.mrf.mxu0
        %v9428 = vpop.f32.mrf.mxu0
        %9429 = vdwg.mxu0
        %9430 = vmatprep.subr.bf16.mxu0 %v4678
        %9431 = vmatpush1.bf16.msra.mxu0 %v4677
        %9432 = vmatprep.subr.bf16.mxu0 %v4674
        %9433 = vmatpush1.bf16.msra.mxu0 %v4673
        %9434 = vmatprep.subr.bf16.mxu0 %v4670
        %9435 = vmatpush1.bf16.msra.mxu0 %v4669
        %9436 = vmatprep.subr.bf16.mxu0 %v4666
        %9437 = vmatpush1.bf16.msra.mxu0 %v4665
        %9438 = vmatprep.subr.bf16.mxu0 %v4662
        %9439 = vmatpush1.bf16.msra.mxu0 %v4661
        %9440 = vmatprep.subr.bf16.mxu0 %v4658
        %9441 = vmatpush1.bf16.msra.mxu0 %v4657
        %9442 = vmatprep.subr.bf16.mxu0 %v4654
        %9443 = vmatpush1.bf16.msra.mxu0 %v4653
        %9444 = vmatprep.subr.bf16.mxu0 %v4650
        %9445 = vmatpush1.bf16.msra.mxu0 %v4649
        %9446 = vmatprep.subr.bf16.mxu0 %v4710
        %9447 = vmatpush2.bf16.msra.mxu0 %v4709
        %9448 = vmatprep.subr.bf16.mxu0 %v4706
        %9449 = vmatpush2.bf16.msra.mxu0 %v4705
        %9450 = vmatprep.subr.bf16.mxu0 %v4702
        %9451 = vmatpush2.bf16.msra.mxu0 %v4701
        %9452 = vmatprep.subr.bf16.mxu0 %v4698
        %9453 = vmatpush2.bf16.msra.mxu0 %v4697
        %9454 = vmatprep.subr.bf16.mxu0 %v4694
        %9455 = vmatpush2.bf16.msra.mxu0 %v4693
        %9456 = vmatprep.subr.bf16.mxu0 %v4690
        %9457 = vmatpush2.bf16.msra.mxu0 %v4689
        %9458 = vmatprep.subr.bf16.mxu0 %v4686
        %9459 = vmatpush2.bf16.msra.mxu0 %v4685
        %9460 = vmatprep.subr.bf16.mxu0 %v4682
        %9461 = vmatpush2.bf16.msra.mxu0 %v4681
        %9462 = vmatprep.mubr.bf16.mxu0 %v5590
        %9463 = vmatmul.mubr.bf16.gmra.mxu0 %v5576
        %v9464 = vpop.f32.mrf.mxu0
        %v9465 = vadd.f32 %v9424, %v9464
        %v9466 = vpop.f32.mrf.mxu0
        %v9467 = vadd.f32 %v9426, %v9466
        %v9468 = vpop.f32.mrf.mxu0
        %v9469 = vpop.f32.mrf.mxu0
        %9470 = vdwg.mxu0
        %9471 = vmatprep.subr.bf16.mxu0 %v4742
        %9472 = vmatpush1.bf16.msra.mxu0 %v4741
        %9473 = vmatprep.subr.bf16.mxu0 %v4738
        %9474 = vmatpush1.bf16.msra.mxu0 %v4737
        %9475 = vmatprep.subr.bf16.mxu0 %v4734
        %9476 = vmatpush1.bf16.msra.mxu0 %v4733
        %9477 = vmatprep.subr.bf16.mxu0 %v4730
        %9478 = vmatpush1.bf16.msra.mxu0 %v4729
        %9479 = vmatprep.subr.bf16.mxu0 %v4726
        %9480 = vmatpush1.bf16.msra.mxu0 %v4725
        %9481 = vmatprep.subr.bf16.mxu0 %v4722
        %9482 = vmatpush1.bf16.msra.mxu0 %v4721
        %9483 = vmatprep.subr.bf16.mxu0 %v4718
        %9484 = vmatpush1.bf16.msra.mxu0 %v4717
        %9485 = vmatprep.subr.bf16.mxu0 %v4714
        %9486 = vmatpush1.bf16.msra.mxu0 %v4713
        %9487 = vmatprep.subr.bf16.mxu0 %v4774
        %9488 = vmatpush2.bf16.msra.mxu0 %v4773
        %9489 = vmatprep.subr.bf16.mxu0 %v4770
        %9490 = vmatpush2.bf16.msra.mxu0 %v4769
        %9491 = vmatprep.subr.bf16.mxu0 %v4766
        %9492 = vmatpush2.bf16.msra.mxu0 %v4765
        %9493 = vmatprep.subr.bf16.mxu0 %v4762
        %9494 = vmatpush2.bf16.msra.mxu0 %v4761
        %9495 = vmatprep.subr.bf16.mxu0 %v4758
        %9496 = vmatpush2.bf16.msra.mxu0 %v4757
        %9497 = vmatprep.subr.bf16.mxu0 %v4754
        %9498 = vmatpush2.bf16.msra.mxu0 %v4753
        %9499 = vmatprep.subr.bf16.mxu0 %v4750
        %9500 = vmatpush2.bf16.msra.mxu0 %v4749
        %9501 = vmatprep.subr.bf16.mxu0 %v4746
        %9502 = vmatpush2.bf16.msra.mxu0 %v4745
        %9503 = vmatprep.mubr.bf16.mxu0 %v5594
        %9504 = vmatmul.mubr.bf16.gmra.mxu0 %v5592
        %v9505 = vpop.f32.mrf.mxu0
        %v9506 = vadd.f32 %v9465, %v9505
        %v9507 = vpop.f32.mrf.mxu0
        %v9508 = vadd.f32 %v9467, %v9507
        %v9509 = vpop.f32.mrf.mxu0
        %v9510 = vpop.f32.mrf.mxu0
        %9511 = vdwg.mxu0
        %9512 = vmatprep.subr.bf16.mxu0 %v4806
        %9513 = vmatpush1.bf16.msra.mxu0 %v4805
        %9514 = vmatprep.subr.bf16.mxu0 %v4802
        %9515 = vmatpush1.bf16.msra.mxu0 %v4801
        %9516 = vmatprep.subr.bf16.mxu0 %v4798
        %9517 = vmatpush1.bf16.msra.mxu0 %v4797
        %9518 = vmatprep.subr.bf16.mxu0 %v4794
        %9519 = vmatpush1.bf16.msra.mxu0 %v4793
        %9520 = vmatprep.subr.bf16.mxu0 %v4790
        %9521 = vmatpush1.bf16.msra.mxu0 %v4789
        %9522 = vmatprep.subr.bf16.mxu0 %v4786
        %9523 = vmatpush1.bf16.msra.mxu0 %v4785
        %9524 = vmatprep.subr.bf16.mxu0 %v4782
        %9525 = vmatpush1.bf16.msra.mxu0 %v4781
        %9526 = vmatprep.subr.bf16.mxu0 %v4778
        %9527 = vmatpush1.bf16.msra.mxu0 %v4777
        %9528 = vmatprep.subr.bf16.mxu0 %v4838
        %9529 = vmatpush2.bf16.msra.mxu0 %v4837
        %9530 = vmatprep.subr.bf16.mxu0 %v4834
        %9531 = vmatpush2.bf16.msra.mxu0 %v4833
        %9532 = vmatprep.subr.bf16.mxu0 %v4830
        %9533 = vmatpush2.bf16.msra.mxu0 %v4829
        %9534 = vmatprep.subr.bf16.mxu0 %v4826
        %9535 = vmatpush2.bf16.msra.mxu0 %v4825
        %9536 = vmatprep.subr.bf16.mxu0 %v4822
        %9537 = vmatpush2.bf16.msra.mxu0 %v4821
        %9538 = vmatprep.subr.bf16.mxu0 %v4818
        %9539 = vmatpush2.bf16.msra.mxu0 %v4817
        %9540 = vmatprep.subr.bf16.mxu0 %v4814
        %9541 = vmatpush2.bf16.msra.mxu0 %v4813
        %9542 = vmatprep.subr.bf16.mxu0 %v4810
        %9543 = vmatpush2.bf16.msra.mxu0 %v4809
        %9544 = vmatprep.mubr.bf16.mxu0 %v5632
        %9545 = vmatmul.mubr.bf16.gmra.mxu0 %v5618
        %v9546 = vpop.f32.mrf.mxu0
        %v9547 = vadd.f32 %v9506, %v9546
        %v9548 = vpop.f32.mrf.mxu0
        %v9549 = vadd.f32 %v9508, %v9548
        %v9550 = vpop.f32.mrf.mxu0
        %v9551 = vpop.f32.mrf.mxu0
        %9552 = vdwg.mxu0
        %9553 = vmatprep.subr.bf16.mxu0 %v4870
        %9554 = vmatpush1.bf16.msra.mxu0 %v4869
        %9555 = vmatprep.subr.bf16.mxu0 %v4866
        %9556 = vmatpush1.bf16.msra.mxu0 %v4865
        %9557 = vmatprep.subr.bf16.mxu0 %v4862
        %9558 = vmatpush1.bf16.msra.mxu0 %v4861
        %9559 = vmatprep.subr.bf16.mxu0 %v4858
        %9560 = vmatpush1.bf16.msra.mxu0 %v4857
        %9561 = vmatprep.subr.bf16.mxu0 %v4854
        %9562 = vmatpush1.bf16.msra.mxu0 %v4853
        %9563 = vmatprep.subr.bf16.mxu0 %v4850
        %9564 = vmatpush1.bf16.msra.mxu0 %v4849
        %9565 = vmatprep.subr.bf16.mxu0 %v4846
        %9566 = vmatpush1.bf16.msra.mxu0 %v4845
        %9567 = vmatprep.subr.bf16.mxu0 %v4842
        %9568 = vmatpush1.bf16.msra.mxu0 %v4841
        %9569 = vmatprep.subr.bf16.mxu0 %v4902
        %9570 = vmatpush2.bf16.msra.mxu0 %v4901
        %9571 = vmatprep.subr.bf16.mxu0 %v4898
        %9572 = vmatpush2.bf16.msra.mxu0 %v4897
        %9573 = vmatprep.subr.bf16.mxu0 %v4894
        %9574 = vmatpush2.bf16.msra.mxu0 %v4893
        %9575 = vmatprep.subr.bf16.mxu0 %v4890
        %9576 = vmatpush2.bf16.msra.mxu0 %v4889
        %9577 = vmatprep.subr.bf16.mxu0 %v4886
        %9578 = vmatpush2.bf16.msra.mxu0 %v4885
        %9579 = vmatprep.subr.bf16.mxu0 %v4882
        %9580 = vmatpush2.bf16.msra.mxu0 %v4881
        %9581 = vmatprep.subr.bf16.mxu0 %v4878
        %9582 = vmatpush2.bf16.msra.mxu0 %v4877
        %9583 = vmatprep.subr.bf16.mxu0 %v4874
        %9584 = vmatpush2.bf16.msra.mxu0 %v4873
        %9585 = vmatprep.mubr.bf16.mxu0 %v5642
        %9586 = vmatmul.mubr.bf16.gmra.mxu0 %v5640
        %v9587 = vpop.f32.mrf.mxu0
        %v9588 = vadd.f32 %v9547, %v9587
        %v9589 = vpop.f32.mrf.mxu0
        %v9590 = vadd.f32 %v9549, %v9589
        %v9591 = vpop.f32.mrf.mxu0
        %v9592 = vpop.f32.mrf.mxu0
        %9593 = vdwg.mxu0
        %9594 = vmatprep.subr.bf16.mxu0 %v4934
        %9595 = vmatpush1.bf16.msra.mxu0 %v4933
        %9596 = vmatprep.subr.bf16.mxu0 %v4930
        %9597 = vmatpush1.bf16.msra.mxu0 %v4929
        %9598 = vmatprep.subr.bf16.mxu0 %v4926
        %9599 = vmatpush1.bf16.msra.mxu0 %v4925
        %9600 = vmatprep.subr.bf16.mxu0 %v4922
        %9601 = vmatpush1.bf16.msra.mxu0 %v4921
        %9602 = vmatprep.subr.bf16.mxu0 %v4918
        %9603 = vmatpush1.bf16.msra.mxu0 %v4917
        %9604 = vmatprep.subr.bf16.mxu0 %v4914
        %9605 = vmatpush1.bf16.msra.mxu0 %v4913
        %9606 = vmatprep.subr.bf16.mxu0 %v4910
        %9607 = vmatpush1.bf16.msra.mxu0 %v4909
        %9608 = vmatprep.subr.bf16.mxu0 %v4906
        %9609 = vmatpush1.bf16.msra.mxu0 %v4905
        %9610 = vmatprep.subr.bf16.mxu0 %v4966
        %9611 = vmatpush2.bf16.msra.mxu0 %v4965
        %9612 = vmatprep.subr.bf16.mxu0 %v4962
        %9613 = vmatpush2.bf16.msra.mxu0 %v4961
        %9614 = vmatprep.subr.bf16.mxu0 %v4958
        %9615 = vmatpush2.bf16.msra.mxu0 %v4957
        %9616 = vmatprep.subr.bf16.mxu0 %v4954
        %9617 = vmatpush2.bf16.msra.mxu0 %v4953
        %9618 = vmatprep.subr.bf16.mxu0 %v4950
        %9619 = vmatpush2.bf16.msra.mxu0 %v4949
        %9620 = vmatprep.subr.bf16.mxu0 %v4946
        %9621 = vmatpush2.bf16.msra.mxu0 %v4945
        %9622 = vmatprep.subr.bf16.mxu0 %v4942
        %9623 = vmatpush2.bf16.msra.mxu0 %v4941
        %9624 = vmatprep.subr.bf16.mxu0 %v4938
        %9625 = vmatpush2.bf16.msra.mxu0 %v4937
        %9626 = vmatprep.mubr.bf16.mxu0 %v5639
        %9627 = vmatmul.mubr.bf16.gmra.mxu0 %v5625
        %v9628 = vpop.f32.mrf.mxu0
        %v9629 = vadd.f32 %v9588, %v9628
        %v9630 = vpop.f32.mrf.mxu0
        %v9631 = vadd.f32 %v9590, %v9630
        %v9632 = vpop.f32.mrf.mxu0
        %v9633 = vpop.f32.mrf.mxu0
        %9634 = vdwg.mxu0
        %9635 = vmatprep.subr.bf16.mxu0 %v4998
        %9636 = vmatpush1.bf16.msra.mxu0 %v4997
        %9637 = vmatprep.subr.bf16.mxu0 %v4994
        %9638 = vmatpush1.bf16.msra.mxu0 %v4993
        %9639 = vmatprep.subr.bf16.mxu0 %v4990
        %9640 = vmatpush1.bf16.msra.mxu0 %v4989
        %9641 = vmatprep.subr.bf16.mxu0 %v4986
        %9642 = vmatpush1.bf16.msra.mxu0 %v4985
        %9643 = vmatprep.subr.bf16.mxu0 %v4982
        %9644 = vmatpush1.bf16.msra.mxu0 %v4981
        %9645 = vmatprep.subr.bf16.mxu0 %v4978
        %9646 = vmatpush1.bf16.msra.mxu0 %v4977
        %9647 = vmatprep.subr.bf16.mxu0 %v4974
        %9648 = vmatpush1.bf16.msra.mxu0 %v4973
        %9649 = vmatprep.subr.bf16.mxu0 %v4970
        %9650 = vmatpush1.bf16.msra.mxu0 %v4969
        %9651 = vmatprep.subr.bf16.mxu0 %v5030
        %9652 = vmatpush2.bf16.msra.mxu0 %v5029
        %9653 = vmatprep.subr.bf16.mxu0 %v5026
        %9654 = vmatpush2.bf16.msra.mxu0 %v5025
        %9655 = vmatprep.subr.bf16.mxu0 %v5022
        %9656 = vmatpush2.bf16.msra.mxu0 %v5021
        %9657 = vmatprep.subr.bf16.mxu0 %v5018
        %9658 = vmatpush2.bf16.msra.mxu0 %v5017
        %9659 = vmatprep.subr.bf16.mxu0 %v5014
        %9660 = vmatpush2.bf16.msra.mxu0 %v5013
        %9661 = vmatprep.subr.bf16.mxu0 %v5010
        %9662 = vmatpush2.bf16.msra.mxu0 %v5009
        %9663 = vmatprep.subr.bf16.mxu0 %v5006
        %9664 = vmatpush2.bf16.msra.mxu0 %v5005
        %9665 = vmatprep.subr.bf16.mxu0 %v5002
        %9666 = vmatpush2.bf16.msra.mxu0 %v5001
        %9667 = vmatprep.mubr.bf16.mxu0 %v5643
        %9668 = vmatmul.mubr.bf16.gmra.mxu0 %v5641
        %v9669 = vpop.f32.mrf.mxu0
        %v9670 = vadd.f32 %v9629, %v9669
        %v9671 = vpop.f32.mrf.mxu0
        %v9672 = vadd.f32 %v9631, %v9671
        %v9673 = vpop.f32.mrf.mxu0
        %v9674 = vpop.f32.mrf.mxu0
        %9675 = vdwg.mxu0
        %v9680 = vcombine.low %v7702, %v7704
        %v9681 = vcombine.low %v9670, %v9672
        %v9683 = vunpack.c.l.s4 1983009808
        %v9684 = vunpack.c.0.s8 %v9683
        %v9685 = vlaneseq
        %v9686 = vshrl.u32 %v9685, 7
        %v9687 = vsub.s32 %v9684, %v9686
        %v9688 = vrot.slane %v9680, %v9687
        %v9690 = vunpack.c.l.s4 1983009808
        %v9691 = vunpack.c.0.s8 %v9690
        %v9692 = vlaneseq
        %v9693 = vshrl.u32 %v9692, 7
        %v9694 = vsub.s32 %v9691, %v9693
        %v9695 = vrot.slane %v9681, %v9694
        %v9696 = vcombine.low %v9688, %v9695
        %v9698 = vadd.f32 %v5031, %v9696
        %9699 = vst [vmem:[#allocation2] sm:$0xff] %v9698
        %p9700 = scmp.eq.s32.totalorder %s28, 3
        // Predicated region
        $region85: #{tpu_custom_call.1} parent=51 // pred_check
          %p9701 = pneg %p9700
        $region86: #{tpu_custom_call.1} parent=51 // pred_check_branch
          %9703 = sbr.rel (%p9701) target = $region88
        $region87: #{tpu_custom_call.1} parent=51 // pred_region
          %v9704 = vld [vmem:[#allocation2] sm:$0xff]
          %v9705 = vld [vmem:[#allocation8] sm:$0xf]
          %v9707 = vlaneseq
          %v9708 = vshrl.u32 %v9707, 7
          %v9709 = vsub.s32 0, %v9708
          %v9710 = vrot.slane %v9705, %v9709
          %v9711 = vlaneseq
          %v9712 = vshrl.u32 %v9711, 7
          %v9713 = vsub.s32 1, %v9712
          %v9714 = vrot.slane %v9705, %v9713
          %v9715 = vlaneseq
          %v9716 = vshrl.u32 %v9715, 7
          %v9717 = vsub.s32 2, %v9716
          %v9718 = vrot.slane %v9705, %v9717
          %v9719 = vlaneseq
          %v9720 = vshrl.u32 %v9719, 7
          %v9721 = vsub.s32 3, %v9720
          %v9722 = vrot.slane %v9705, %v9721
          %v9723 = vcombine.low %v9710, %v9714
          %v9724 = vcombine.low %v9718, %v9722
          %v9726 = vunpack.c.l.s4 1983009808
          %v9727 = vunpack.c.0.s8 %v9726
          %v9728 = vlaneseq
          %v9729 = vshrl.u32 %v9728, 7
          %v9730 = vsub.s32 %v9727, %v9729
          %v9731 = vrot.slane %v9723, %v9730
          %v9733 = vunpack.c.l.s4 1983009808
          %v9734 = vunpack.c.0.s8 %v9733
          %v9735 = vlaneseq
          %v9736 = vshrl.u32 %v9735, 7
          %v9737 = vsub.s32 %v9734, %v9736
          %v9738 = vrot.slane %v9724, %v9737
          %v9739 = vcombine.low %v9731, %v9738
          %v9741 = vmul.f32 %v9704, %v9739
          %v9742 = vld [vmem:[#allocation9] sm:$0xf]
          %v9744 = vlaneseq
          %v9745 = vshrl.u32 %v9744, 7
          %v9746 = vsub.s32 0, %v9745
          %v9747 = vrot.slane %v9742, %v9746
          %v9748 = vlaneseq
          %v9749 = vshrl.u32 %v9748, 7
          %v9750 = vsub.s32 1, %v9749
          %v9751 = vrot.slane %v9742, %v9750
          %v9752 = vlaneseq
          %v9753 = vshrl.u32 %v9752, 7
          %v9754 = vsub.s32 2, %v9753
          %v9755 = vrot.slane %v9742, %v9754
          %v9756 = vlaneseq
          %v9757 = vshrl.u32 %v9756, 7
          %v9758 = vsub.s32 3, %v9757
          %v9759 = vrot.slane %v9742, %v9758
          %v9760 = vcombine.low %v9747, %v9751
          %v9761 = vcombine.low %v9755, %v9759
          %v9763 = vunpack.c.l.s4 1983009808
          %v9764 = vunpack.c.0.s8 %v9763
          %v9765 = vlaneseq
          %v9766 = vshrl.u32 %v9765, 7
          %v9767 = vsub.s32 %v9764, %v9766
          %v9768 = vrot.slane %v9760, %v9767
          %v9770 = vunpack.c.l.s4 1983009808
          %v9771 = vunpack.c.0.s8 %v9770
          %v9772 = vlaneseq
          %v9773 = vshrl.u32 %v9772, 7
          %v9774 = vsub.s32 %v9771, %v9773
          %v9775 = vrot.slane %v9761, %v9774
          %v9776 = vcombine.low %v9768, %v9775
          %v9778 = vadd.f32 %v9741, %v9776
          %v9779 = vmax.f32 %v9778, 0.0
          %v9781 = vcombine.high %v9779, %v9779
          %v9783 = vunpack.c.l.s4 1983009808
          %v9784 = vunpack.c.0.s8 %v9783
          %v9785 = vlaneseq
          %v9786 = vshrl.u32 %v9785, 7
          %v9787 = vsub.s32 %v9784, %v9786
          %v9788 = vrot.slane %v9779, %v9787
          %v9790 = vunpack.c.l.s4 1983009808
          %v9791 = vunpack.c.0.s8 %v9790
          %v9792 = vlaneseq
          %v9793 = vshrl.u32 %v9792, 7
          %v9794 = vsub.s32 %v9791, %v9793
          %v9795 = vrot.slane %v9781, %v9794
          %v9796 = vcombine.high %v9788, %v9788
          %v9797 = vcombine.high %v9795, %v9795
          %v9802 = vpack.c.bf16 %v9788, %v9788
          %v9803 = vpack.c.bf16 %v9796, %v9796
          %v9804 = vpack.c.bf16 %v9795, %v9795
          %v9805 = vpack.c.bf16 %v9797, %v9797
          %v9806 = vld [vmem:[#allocation11] sm:$0xff]
          %v9807 = vld [vmem:[#allocation11 + $0x8] sm:$0xff]
          %v9808 = vld [vmem:[#allocation11 + $0x10] sm:$0xff]
          %v9809 = vld [vmem:[#allocation11 + $0x18] sm:$0xff]
          %v9810 = vld [vmem:[#allocation11 + $0x20] sm:$0xff]
          %v9811 = vld [vmem:[#allocation11 + $0x28] sm:$0xff]
          %v9812 = vld [vmem:[#allocation11 + $0x30] sm:$0xff]
          %v9813 = vld [vmem:[#allocation11 + $0x38] sm:$0xff]
          %v9814 = vld [vmem:[#allocation11 + $0x40] sm:$0xff]
          %v9815 = vld [vmem:[#allocation11 + $0x48] sm:$0xff]
          %v9816 = vld [vmem:[#allocation11 + $0x50] sm:$0xff]
          %v9817 = vld [vmem:[#allocation11 + $0x58] sm:$0xff]
          %v9818 = vld [vmem:[#allocation11 + $0x60] sm:$0xff]
          %v9819 = vld [vmem:[#allocation11 + $0x68] sm:$0xff]
          %v9820 = vld [vmem:[#allocation11 + $0x70] sm:$0xff]
          %v9821 = vld [vmem:[#allocation11 + $0x78] sm:$0xff]
          %v9822 = vld [vmem:[#allocation11 + $0x80] sm:$0xff]
          %v9823 = vld [vmem:[#allocation11 + $0x88] sm:$0xff]
          %v9824 = vld [vmem:[#allocation11 + $0x90] sm:$0xff]
          %v9825 = vld [vmem:[#allocation11 + $0x98] sm:$0xff]
          %v9826 = vld [vmem:[#allocation11 + $0xa0] sm:$0xff]
          %v9827 = vld [vmem:[#allocation11 + $0xa8] sm:$0xff]
          %v9828 = vld [vmem:[#allocation11 + $0xb0] sm:$0xff]
          %v9829 = vld [vmem:[#allocation11 + $0xb8] sm:$0xff]
          %v9830 = vld [vmem:[#allocation11 + $0xc0] sm:$0xff]
          %v9831 = vld [vmem:[#allocation11 + $0xc8] sm:$0xff]
          %v9832 = vld [vmem:[#allocation11 + $0xd0] sm:$0xff]
          %v9833 = vld [vmem:[#allocation11 + $0xd8] sm:$0xff]
          %v9834 = vld [vmem:[#allocation11 + $0xe0] sm:$0xff]
          %v9835 = vld [vmem:[#allocation11 + $0xe8] sm:$0xff]
          %v9836 = vld [vmem:[#allocation11 + $0xf0] sm:$0xff]
          %v9837 = vld [vmem:[#allocation11 + $0xf8] sm:$0xff]
          %v9838 = vld [vmem:[#allocation11 + $0x100] sm:$0xff]
          %v9839 = vld [vmem:[#allocation11 + $0x108] sm:$0xff]
          %v9840 = vld [vmem:[#allocation11 + $0x110] sm:$0xff]
          %v9841 = vld [vmem:[#allocation11 + $0x118] sm:$0xff]
          %v9842 = vld [vmem:[#allocation11 + $0x120] sm:$0xff]
          %v9843 = vld [vmem:[#allocation11 + $0x128] sm:$0xff]
          %v9844 = vld [vmem:[#allocation11 + $0x130] sm:$0xff]
          %v9845 = vld [vmem:[#allocation11 + $0x138] sm:$0xff]
          %v9846 = vld [vmem:[#allocation11 + $0x140] sm:$0xff]
          %v9847 = vld [vmem:[#allocation11 + $0x148] sm:$0xff]
          %v9848 = vld [vmem:[#allocation11 + $0x150] sm:$0xff]
          %v9849 = vld [vmem:[#allocation11 + $0x158] sm:$0xff]
          %v9850 = vld [vmem:[#allocation11 + $0x160] sm:$0xff]
          %v9851 = vld [vmem:[#allocation11 + $0x168] sm:$0xff]
          %v9852 = vld [vmem:[#allocation11 + $0x170] sm:$0xff]
          %v9853 = vld [vmem:[#allocation11 + $0x178] sm:$0xff]
          %v9854 = vld [vmem:[#allocation11 + $0x180] sm:$0xff]
          %v9855 = vld [vmem:[#allocation11 + $0x188] sm:$0xff]
          %v9856 = vld [vmem:[#allocation11 + $0x190] sm:$0xff]
          %v9857 = vld [vmem:[#allocation11 + $0x198] sm:$0xff]
          %v9858 = vld [vmem:[#allocation11 + $0x1a0] sm:$0xff]
          %v9859 = vld [vmem:[#allocation11 + $0x1a8] sm:$0xff]
          %v9860 = vld [vmem:[#allocation11 + $0x1b0] sm:$0xff]
          %v9861 = vld [vmem:[#allocation11 + $0x1b8] sm:$0xff]
          %v9862 = vld [vmem:[#allocation11 + $0x1c0] sm:$0xff]
          %v9863 = vld [vmem:[#allocation11 + $0x1c8] sm:$0xff]
          %v9864 = vld [vmem:[#allocation11 + $0x1d0] sm:$0xff]
          %v9865 = vld [vmem:[#allocation11 + $0x1d8] sm:$0xff]
          %v9866 = vld [vmem:[#allocation11 + $0x1e0] sm:$0xff]
          %v9867 = vld [vmem:[#allocation11 + $0x1e8] sm:$0xff]
          %v9868 = vld [vmem:[#allocation11 + $0x1f0] sm:$0xff]
          %v9869 = vld [vmem:[#allocation11 + $0x1f8] sm:$0xff]
          %v9870 = vld [vmem:[#allocation12] sm:$0x3]
          %v9872 = vlaneseq
          %v9873 = vshrl.u32 %v9872, 7
          %v9874 = vsub.s32 0, %v9873
          %v9875 = vrot.slane %v9870, %v9874
          %v9876 = vlaneseq
          %v9877 = vshrl.u32 %v9876, 7
          %v9878 = vsub.s32 1, %v9877
          %v9879 = vrot.slane %v9870, %v9878
          %v9946 = vunpack.c.l.b16 %v9806
          %v9947 = vunpack.c.h.b16 %v9806
          %v9948 = vunpack.c.l.b16 %v9807
          %v9949 = vunpack.c.h.b16 %v9807
          %v9950 = vunpack.c.l.b16 %v9808
          %v9951 = vunpack.c.h.b16 %v9808
          %v9952 = vunpack.c.l.b16 %v9809
          %v9953 = vunpack.c.h.b16 %v9809
          %v9954 = vunpack.c.l.b16 %v9810
          %v9955 = vunpack.c.h.b16 %v9810
          %v9956 = vunpack.c.l.b16 %v9811
          %v9957 = vunpack.c.h.b16 %v9811
          %v9958 = vunpack.c.l.b16 %v9812
          %v9959 = vunpack.c.h.b16 %v9812
          %v9960 = vunpack.c.l.b16 %v9813
          %v9961 = vunpack.c.h.b16 %v9813
          %v9962 = vunpack.c.l.b16 %v9814
          %v9963 = vunpack.c.h.b16 %v9814
          %v9964 = vunpack.c.l.b16 %v9815
          %v9965 = vunpack.c.h.b16 %v9815
          %v9966 = vunpack.c.l.b16 %v9816
          %v9967 = vunpack.c.h.b16 %v9816
          %v9968 = vunpack.c.l.b16 %v9817
          %v9969 = vunpack.c.h.b16 %v9817
          %v9970 = vunpack.c.l.b16 %v9818
          %v9971 = vunpack.c.h.b16 %v9818
          %v9972 = vunpack.c.l.b16 %v9819
          %v9973 = vunpack.c.h.b16 %v9819
          %v9974 = vunpack.c.l.b16 %v9820
          %v9975 = vunpack.c.h.b16 %v9820
          %v9976 = vunpack.c.l.b16 %v9821
          %v9977 = vunpack.c.h.b16 %v9821
          %v9978 = vunpack.c.l.b16 %v9822
          %v9979 = vunpack.c.h.b16 %v9822
          %v9980 = vunpack.c.l.b16 %v9823
          %v9981 = vunpack.c.h.b16 %v9823
          %v9982 = vunpack.c.l.b16 %v9824
          %v9983 = vunpack.c.h.b16 %v9824
          %v9984 = vunpack.c.l.b16 %v9825
          %v9985 = vunpack.c.h.b16 %v9825
          %v9986 = vunpack.c.l.b16 %v9826
          %v9987 = vunpack.c.h.b16 %v9826
          %v9988 = vunpack.c.l.b16 %v9827
          %v9989 = vunpack.c.h.b16 %v9827
          %v9990 = vunpack.c.l.b16 %v9828
          %v9991 = vunpack.c.h.b16 %v9828
          %v9992 = vunpack.c.l.b16 %v9829
          %v9993 = vunpack.c.h.b16 %v9829
          %v9994 = vunpack.c.l.b16 %v9830
          %v9995 = vunpack.c.h.b16 %v9830
          %v9996 = vunpack.c.l.b16 %v9831
          %v9997 = vunpack.c.h.b16 %v9831
          %v9998 = vunpack.c.l.b16 %v9832
          %v9999 = vunpack.c.h.b16 %v9832
          %v10000 = vunpack.c.l.b16 %v9833
          %v10001 = vunpack.c.h.b16 %v9833
          %v10002 = vunpack.c.l.b16 %v9834
          %v10003 = vunpack.c.h.b16 %v9834
          %v10004 = vunpack.c.l.b16 %v9835
          %v10005 = vunpack.c.h.b16 %v9835
          %v10006 = vunpack.c.l.b16 %v9836
          %v10007 = vunpack.c.h.b16 %v9836
          %v10008 = vunpack.c.l.b16 %v9837
          %v10009 = vunpack.c.h.b16 %v9837
          %v10010 = vunpack.c.l.b16 %v9838
          %v10011 = vunpack.c.h.b16 %v9838
          %v10012 = vunpack.c.l.b16 %v9839
          %v10013 = vunpack.c.h.b16 %v9839
          %v10014 = vunpack.c.l.b16 %v9840
          %v10015 = vunpack.c.h.b16 %v9840
          %v10016 = vunpack.c.l.b16 %v9841
          %v10017 = vunpack.c.h.b16 %v9841
          %v10018 = vunpack.c.l.b16 %v9842
          %v10019 = vunpack.c.h.b16 %v9842
          %v10020 = vunpack.c.l.b16 %v9843
          %v10021 = vunpack.c.h.b16 %v9843
          %v10022 = vunpack.c.l.b16 %v9844
          %v10023 = vunpack.c.h.b16 %v9844
          %v10024 = vunpack.c.l.b16 %v9845
          %v10025 = vunpack.c.h.b16 %v9845
          %v10026 = vunpack.c.l.b16 %v9846
          %v10027 = vunpack.c.h.b16 %v9846
          %v10028 = vunpack.c.l.b16 %v9847
          %v10029 = vunpack.c.h.b16 %v9847
          %v10030 = vunpack.c.l.b16 %v9848
          %v10031 = vunpack.c.h.b16 %v9848
          %v10032 = vunpack.c.l.b16 %v9849
          %v10033 = vunpack.c.h.b16 %v9849
          %v10034 = vunpack.c.l.b16 %v9850
          %v10035 = vunpack.c.h.b16 %v9850
          %v10036 = vunpack.c.l.b16 %v9851
          %v10037 = vunpack.c.h.b16 %v9851
          %v10038 = vunpack.c.l.b16 %v9852
          %v10039 = vunpack.c.h.b16 %v9852
          %v10040 = vunpack.c.l.b16 %v9853
          %v10041 = vunpack.c.h.b16 %v9853
          %v10042 = vunpack.c.l.b16 %v9854
          %v10043 = vunpack.c.h.b16 %v9854
          %v10044 = vunpack.c.l.b16 %v9855
          %v10045 = vunpack.c.h.b16 %v9855
          %v10046 = vunpack.c.l.b16 %v9856
          %v10047 = vunpack.c.h.b16 %v9856
          %v10048 = vunpack.c.l.b16 %v9857
          %v10049 = vunpack.c.h.b16 %v9857
          %v10050 = vunpack.c.l.b16 %v9858
          %v10051 = vunpack.c.h.b16 %v9858
          %v10052 = vunpack.c.l.b16 %v9859
          %v10053 = vunpack.c.h.b16 %v9859
          %v10054 = vunpack.c.l.b16 %v9860
          %v10055 = vunpack.c.h.b16 %v9860
          %v10056 = vunpack.c.l.b16 %v9861
          %v10057 = vunpack.c.h.b16 %v9861
          %v10058 = vunpack.c.l.b16 %v9862
          %v10059 = vunpack.c.h.b16 %v9862
          %v10060 = vunpack.c.l.b16 %v9863
          %v10061 = vunpack.c.h.b16 %v9863
          %v10062 = vunpack.c.l.b16 %v9864
          %v10063 = vunpack.c.h.b16 %v9864
          %v10064 = vunpack.c.l.b16 %v9865
          %v10065 = vunpack.c.h.b16 %v9865
          %v10066 = vunpack.c.l.b16 %v9866
          %v10067 = vunpack.c.h.b16 %v9866
          %v10068 = vunpack.c.l.b16 %v9867
          %v10069 = vunpack.c.h.b16 %v9867
          %v10070 = vunpack.c.l.b16 %v9868
          %v10071 = vunpack.c.h.b16 %v9868
          %v10072 = vunpack.c.l.b16 %v9869
          %v10073 = vunpack.c.h.b16 %v9869
          %v10074 = vpack.c.b16 %v9948, %v9946
          %v10075 = vpack.c.b16 %v9949, %v9947
          %v10076 = vpack.c.b16 %v9952, %v9950
          %v10077 = vpack.c.b16 %v9953, %v9951
          %v10078 = vpack.c.b16 %v9956, %v9954
          %v10079 = vpack.c.b16 %v9957, %v9955
          %v10080 = vpack.c.b16 %v9960, %v9958
          %v10081 = vpack.c.b16 %v9961, %v9959
          %v10082 = vpack.c.b16 %v9964, %v9962
          %v10083 = vpack.c.b16 %v9965, %v9963
          %v10084 = vpack.c.b16 %v9968, %v9966
          %v10085 = vpack.c.b16 %v9969, %v9967
          %v10086 = vpack.c.b16 %v9972, %v9970
          %v10087 = vpack.c.b16 %v9973, %v9971
          %v10088 = vpack.c.b16 %v9976, %v9974
          %v10089 = vpack.c.b16 %v9977, %v9975
          %v10090 = vpack.c.b16 %v9980, %v9978
          %v10091 = vpack.c.b16 %v9981, %v9979
          %v10092 = vpack.c.b16 %v9984, %v9982
          %v10093 = vpack.c.b16 %v9985, %v9983
          %v10094 = vpack.c.b16 %v9988, %v9986
          %v10095 = vpack.c.b16 %v9989, %v9987
          %v10096 = vpack.c.b16 %v9992, %v9990
          %v10097 = vpack.c.b16 %v9993, %v9991
          %v10098 = vpack.c.b16 %v9996, %v9994
          %v10099 = vpack.c.b16 %v9997, %v9995
          %v10100 = vpack.c.b16 %v10000, %v9998
          %v10101 = vpack.c.b16 %v10001, %v9999
          %v10102 = vpack.c.b16 %v10004, %v10002
          %v10103 = vpack.c.b16 %v10005, %v10003
          %v10104 = vpack.c.b16 %v10008, %v10006
          %v10105 = vpack.c.b16 %v10009, %v10007
          %v10106 = vpack.c.b16 %v10012, %v10010
          %v10107 = vpack.c.b16 %v10013, %v10011
          %v10108 = vpack.c.b16 %v10016, %v10014
          %v10109 = vpack.c.b16 %v10017, %v10015
          %v10110 = vpack.c.b16 %v10020, %v10018
          %v10111 = vpack.c.b16 %v10021, %v10019
          %v10112 = vpack.c.b16 %v10024, %v10022
          %v10113 = vpack.c.b16 %v10025, %v10023
          %v10114 = vpack.c.b16 %v10028, %v10026
          %v10115 = vpack.c.b16 %v10029, %v10027
          %v10116 = vpack.c.b16 %v10032, %v10030
          %v10117 = vpack.c.b16 %v10033, %v10031
          %v10118 = vpack.c.b16 %v10036, %v10034
          %v10119 = vpack.c.b16 %v10037, %v10035
          %v10120 = vpack.c.b16 %v10040, %v10038
          %v10121 = vpack.c.b16 %v10041, %v10039
          %v10122 = vpack.c.b16 %v10044, %v10042
          %v10123 = vpack.c.b16 %v10045, %v10043
          %v10124 = vpack.c.b16 %v10048, %v10046
          %v10125 = vpack.c.b16 %v10049, %v10047
          %v10126 = vpack.c.b16 %v10052, %v10050
          %v10127 = vpack.c.b16 %v10053, %v10051
          %v10128 = vpack.c.b16 %v10056, %v10054
          %v10129 = vpack.c.b16 %v10057, %v10055
          %v10130 = vpack.c.b16 %v10060, %v10058
          %v10131 = vpack.c.b16 %v10061, %v10059
          %v10132 = vpack.c.b16 %v10064, %v10062
          %v10133 = vpack.c.b16 %v10065, %v10063
          %v10134 = vpack.c.b16 %v10068, %v10066
          %v10135 = vpack.c.b16 %v10069, %v10067
          %v10136 = vpack.c.b16 %v10072, %v10070
          %v10137 = vpack.c.b16 %v10073, %v10071
          %10202 = vmatprep.subr.bf16.mxu0 %v10089
          %10203 = vmatpush1.bf16.msra.mxu0 %v10088
          %10204 = vmatprep.subr.bf16.mxu0 %v10087
          %10205 = vmatpush1.bf16.msra.mxu0 %v10086
          %10206 = vmatprep.subr.bf16.mxu0 %v10085
          %10207 = vmatpush1.bf16.msra.mxu0 %v10084
          %10208 = vmatprep.subr.bf16.mxu0 %v10083
          %10209 = vmatpush1.bf16.msra.mxu0 %v10082
          %10210 = vmatprep.subr.bf16.mxu0 %v10081
          %10211 = vmatpush1.bf16.msra.mxu0 %v10080
          %10212 = vmatprep.subr.bf16.mxu0 %v10079
          %10213 = vmatpush1.bf16.msra.mxu0 %v10078
          %10214 = vmatprep.subr.bf16.mxu0 %v10077
          %10215 = vmatpush1.bf16.msra.mxu0 %v10076
          %10216 = vmatprep.subr.bf16.mxu0 %v10075
          %10217 = vmatpush1.bf16.msra.mxu0 %v10074
          %10218 = vmatprep.subr.bf16.mxu0 %v10105
          %10219 = vmatpush2.bf16.msra.mxu0 %v10104
          %10220 = vmatprep.subr.bf16.mxu0 %v10103
          %10221 = vmatpush2.bf16.msra.mxu0 %v10102
          %10222 = vmatprep.subr.bf16.mxu0 %v10101
          %10223 = vmatpush2.bf16.msra.mxu0 %v10100
          %10224 = vmatprep.subr.bf16.mxu0 %v10099
          %10225 = vmatpush2.bf16.msra.mxu0 %v10098
          %10226 = vmatprep.subr.bf16.mxu0 %v10097
          %10227 = vmatpush2.bf16.msra.mxu0 %v10096
          %10228 = vmatprep.subr.bf16.mxu0 %v10095
          %10229 = vmatpush2.bf16.msra.mxu0 %v10094
          %10230 = vmatprep.subr.bf16.mxu0 %v10093
          %10231 = vmatpush2.bf16.msra.mxu0 %v10092
          %10232 = vmatprep.subr.bf16.mxu0 %v10091
          %10233 = vmatpush2.bf16.msra.mxu0 %v10090
          %10234 = vmatprep.mubr.bf16.mxu0 %v9803
          %10235 = vmatmul.mubr.bf16.gmra.mxu0 %v9802
          %v10236 = vpop.f32.mrf.mxu0
          %v10237 = vadd.f32 %v9875, %v10236
          %v10238 = vpop.f32.mrf.mxu0
          %v10239 = vadd.f32 %v9879, %v10238
          %v10240 = vpop.f32.mrf.mxu0
          %v10241 = vpop.f32.mrf.mxu0
          %10242 = vdwg.mxu0
          %10243 = vmatprep.subr.bf16.mxu0 %v10121
          %10244 = vmatpush1.bf16.msra.mxu0 %v10120
          %10245 = vmatprep.subr.bf16.mxu0 %v10119
          %10246 = vmatpush1.bf16.msra.mxu0 %v10118
          %10247 = vmatprep.subr.bf16.mxu0 %v10117
          %10248 = vmatpush1.bf16.msra.mxu0 %v10116
          %10249 = vmatprep.subr.bf16.mxu0 %v10115
          %10250 = vmatpush1.bf16.msra.mxu0 %v10114
          %10251 = vmatprep.subr.bf16.mxu0 %v10113
          %10252 = vmatpush1.bf16.msra.mxu0 %v10112
          %10253 = vmatprep.subr.bf16.mxu0 %v10111
          %10254 = vmatpush1.bf16.msra.mxu0 %v10110
          %10255 = vmatprep.subr.bf16.mxu0 %v10109
          %10256 = vmatpush1.bf16.msra.mxu0 %v10108
          %10257 = vmatprep.subr.bf16.mxu0 %v10107
          %10258 = vmatpush1.bf16.msra.mxu0 %v10106
          %10259 = vmatprep.subr.bf16.mxu0 %v10137
          %10260 = vmatpush2.bf16.msra.mxu0 %v10136
          %10261 = vmatprep.subr.bf16.mxu0 %v10135
          %10262 = vmatpush2.bf16.msra.mxu0 %v10134
          %10263 = vmatprep.subr.bf16.mxu0 %v10133
          %10264 = vmatpush2.bf16.msra.mxu0 %v10132
          %10265 = vmatprep.subr.bf16.mxu0 %v10131
          %10266 = vmatpush2.bf16.msra.mxu0 %v10130
          %10267 = vmatprep.subr.bf16.mxu0 %v10129
          %10268 = vmatpush2.bf16.msra.mxu0 %v10128
          %10269 = vmatprep.subr.bf16.mxu0 %v10127
          %10270 = vmatpush2.bf16.msra.mxu0 %v10126
          %10271 = vmatprep.subr.bf16.mxu0 %v10125
          %10272 = vmatpush2.bf16.msra.mxu0 %v10124
          %10273 = vmatprep.subr.bf16.mxu0 %v10123
          %10274 = vmatpush2.bf16.msra.mxu0 %v10122
          %10275 = vmatprep.mubr.bf16.mxu0 %v9805
          %10276 = vmatmul.mubr.bf16.gmra.mxu0 %v9804
          %v10277 = vpop.f32.mrf.mxu0
          %v10278 = vadd.f32 %v10237, %v10277
          %v10279 = vpop.f32.mrf.mxu0
          %v10280 = vadd.f32 %v10239, %v10279
          %v10281 = vpop.f32.mrf.mxu0
          %v10282 = vpop.f32.mrf.mxu0
          %10283 = vdwg.mxu0
          %v10284 = vmax.f32 %v10278, 0.0
          %v10285 = vmax.f32 %v10280, 0.0
          %v10286 = vpack.c.bf16 %v10284, %v10284
          %v10287 = vpack.c.bf16 %v10285, %v10285
          %v10288 = vld [vmem:[%s6] sm:$0xf]
          %v10289 = vld [vmem:[%s6 + $0x4] sm:$0xf]
          %v10290 = vld [vmem:[%s6 + $0x8] sm:$0xf]
          %v10291 = vld [vmem:[%s6 + $0xc] sm:$0xf]
          %v10292 = vld [vmem:[%s6 + $0x10] sm:$0xf]
          %v10293 = vld [vmem:[%s6 + $0x14] sm:$0xf]
          %v10294 = vld [vmem:[%s6 + $0x18] sm:$0xf]
          %v10295 = vld [vmem:[%s6 + $0x1c] sm:$0xf]
          %v10296 = vld [vmem:[%s6 + $0x20] sm:$0xf]
          %v10297 = vld [vmem:[%s6 + $0x24] sm:$0xf]
          %v10298 = vld [vmem:[%s6 + $0x28] sm:$0xf]
          %v10299 = vld [vmem:[%s6 + $0x2c] sm:$0xf]
          %v10300 = vld [vmem:[%s6 + $0x30] sm:$0xf]
          %v10301 = vld [vmem:[%s6 + $0x34] sm:$0xf]
          %v10302 = vld [vmem:[%s6 + $0x38] sm:$0xf]
          %v10303 = vld [vmem:[%s6 + $0x3c] sm:$0xf]
          %v10304 = vld [vmem:[%s6 + $0x40] sm:$0xf]
          %v10305 = vld [vmem:[%s6 + $0x44] sm:$0xf]
          %v10306 = vld [vmem:[%s6 + $0x48] sm:$0xf]
          %v10307 = vld [vmem:[%s6 + $0x4c] sm:$0xf]
          %v10308 = vld [vmem:[%s6 + $0x50] sm:$0xf]
          %v10309 = vld [vmem:[%s6 + $0x54] sm:$0xf]
          %v10310 = vld [vmem:[%s6 + $0x58] sm:$0xf]
          %v10311 = vld [vmem:[%s6 + $0x5c] sm:$0xf]
          %v10312 = vld [vmem:[%s6 + $0x60] sm:$0xf]
          %v10313 = vld [vmem:[%s6 + $0x64] sm:$0xf]
          %v10314 = vld [vmem:[%s6 + $0x68] sm:$0xf]
          %v10315 = vld [vmem:[%s6 + $0x6c] sm:$0xf]
          %v10316 = vld [vmem:[%s6 + $0x70] sm:$0xf]
          %v10317 = vld [vmem:[%s6 + $0x74] sm:$0xf]
          %v10318 = vld [vmem:[%s6 + $0x78] sm:$0xf]
          %v10319 = vld [vmem:[%s6 + $0x7c] sm:$0xf]
          %v10320 = vld [vmem:[#allocation14] sm:$0x1]
          %v10322 = vlaneseq
          %v10323 = vshrl.u32 %v10322, 7
          %v10324 = vsub.s32 0, %v10323
          %v10325 = vrot.slane %v10320, %v10324
          %v10359 = vunpack.c.l.b16 %v10288
          %v10360 = vunpack.c.l.b16 %v10289
          %v10361 = vunpack.c.l.b16 %v10290
          %v10362 = vunpack.c.l.b16 %v10291
          %v10363 = vunpack.c.l.b16 %v10292
          %v10364 = vunpack.c.l.b16 %v10293
          %v10365 = vunpack.c.l.b16 %v10294
          %v10366 = vunpack.c.l.b16 %v10295
          %v10367 = vunpack.c.l.b16 %v10296
          %v10368 = vunpack.c.l.b16 %v10297
          %v10369 = vunpack.c.l.b16 %v10298
          %v10370 = vunpack.c.l.b16 %v10299
          %v10371 = vunpack.c.l.b16 %v10300
          %v10372 = vunpack.c.l.b16 %v10301
          %v10373 = vunpack.c.l.b16 %v10302
          %v10374 = vunpack.c.l.b16 %v10303
          %v10375 = vunpack.c.l.b16 %v10304
          %v10376 = vunpack.c.l.b16 %v10305
          %v10377 = vunpack.c.l.b16 %v10306
          %v10378 = vunpack.c.l.b16 %v10307
          %v10379 = vunpack.c.l.b16 %v10308
          %v10380 = vunpack.c.l.b16 %v10309
          %v10381 = vunpack.c.l.b16 %v10310
          %v10382 = vunpack.c.l.b16 %v10311
          %v10383 = vunpack.c.l.b16 %v10312
          %v10384 = vunpack.c.l.b16 %v10313
          %v10385 = vunpack.c.l.b16 %v10314
          %v10386 = vunpack.c.l.b16 %v10315
          %v10387 = vunpack.c.l.b16 %v10316
          %v10388 = vunpack.c.l.b16 %v10317
          %v10389 = vunpack.c.l.b16 %v10318
          %v10390 = vunpack.c.l.b16 %v10319
          %v10391 = vpack.c.b16 %v10360, %v10359
          %v10392 = vpack.c.b16 %v10362, %v10361
          %v10393 = vpack.c.b16 %v10364, %v10363
          %v10394 = vpack.c.b16 %v10366, %v10365
          %v10395 = vpack.c.b16 %v10368, %v10367
          %v10396 = vpack.c.b16 %v10370, %v10369
          %v10397 = vpack.c.b16 %v10372, %v10371
          %v10398 = vpack.c.b16 %v10374, %v10373
          %v10399 = vpack.c.b16 %v10376, %v10375
          %v10400 = vpack.c.b16 %v10378, %v10377
          %v10401 = vpack.c.b16 %v10380, %v10379
          %v10402 = vpack.c.b16 %v10382, %v10381
          %v10403 = vpack.c.b16 %v10384, %v10383
          %v10404 = vpack.c.b16 %v10386, %v10385
          %v10405 = vpack.c.b16 %v10388, %v10387
          %v10406 = vpack.c.b16 %v10390, %v10389
          %10423 = vmatprep.subr.bf16.mxu0 0
          %10424 = vmatpush1.bf16.msra.mxu0 %v10398
          %10425 = vmatprep.subr.bf16.mxu0 0
          %10426 = vmatpush1.bf16.msra.mxu0 %v10397
          %10427 = vmatprep.subr.bf16.mxu0 0
          %10428 = vmatpush1.bf16.msra.mxu0 %v10396
          %10429 = vmatprep.subr.bf16.mxu0 0
          %10430 = vmatpush1.bf16.msra.mxu0 %v10395
          %10431 = vmatprep.subr.bf16.mxu0 0
          %10432 = vmatpush1.bf16.msra.mxu0 %v10394
          %10433 = vmatprep.subr.bf16.mxu0 0
          %10434 = vmatpush1.bf16.msra.mxu0 %v10393
          %10435 = vmatprep.subr.bf16.mxu0 0
          %10436 = vmatpush1.bf16.msra.mxu0 %v10392
          %10437 = vmatprep.subr.bf16.mxu0 0
          %10438 = vmatpush1.bf16.msra.mxu0 %v10391
          %10439 = vmatprep.subr.bf16.mxu0 0
          %10440 = vmatpush2.bf16.msra.mxu0 %v10406
          %10441 = vmatprep.subr.bf16.mxu0 0
          %10442 = vmatpush2.bf16.msra.mxu0 %v10405
          %10443 = vmatprep.subr.bf16.mxu0 0
          %10444 = vmatpush2.bf16.msra.mxu0 %v10404
          %10445 = vmatprep.subr.bf16.mxu0 0
          %10446 = vmatpush2.bf16.msra.mxu0 %v10403
          %10447 = vmatprep.subr.bf16.mxu0 0
          %10448 = vmatpush2.bf16.msra.mxu0 %v10402
          %10449 = vmatprep.subr.bf16.mxu0 0
          %10450 = vmatpush2.bf16.msra.mxu0 %v10401
          %10451 = vmatprep.subr.bf16.mxu0 0
          %10452 = vmatpush2.bf16.msra.mxu0 %v10400
          %10453 = vmatprep.subr.bf16.mxu0 0
          %10454 = vmatpush2.bf16.msra.mxu0 %v10399
          %10455 = vmatprep.mubr.bf16.mxu0 %v10287
          %10456 = vmatmul.mubr.bf16.gmra.mxu0 %v10286
          %v10457 = vpop.f32.mrf.mxu0
          %v10458 = vadd.f32 %v10325, %v10457
          %v10459 = vpop.f32.mrf.mxu0
          %v10460 = vpop.f32.mrf.mxu0
          %v10461 = vpop.f32.mrf.mxu0
          %10462 = vdwg.mxu0
          %vm10463 = vcmask 74752
          %10464 = vst.msk [vmem:[#allocation15] sm:$0x3] %vm10463, %v10458
        $region88: #{tpu_custom_call.1} parent=51 // pred_fallthru
          _
        // Predicated region
        $region89: #{tpu_custom_call.1} parent=51 // pred_check
          %p10465 = pneg %p219
        $region90: #{tpu_custom_call.1} parent=51 // pred_check_branch
          %10467 = sbr.rel (%p10465) target = $region92
        $region91: #{tpu_custom_call.1} parent=51 // pred_region
          %s10469 = ssub.s32 32, 32
          %10470 = vsyncadd [#allocation5], %s10469
          %s10472 = sshll.u32 [#allocation15], 4
          %s10473 = int_to_ptr.vmem [resolvable:$true] %s10472
          %10475 = dma.vmem_to_hbm [thread:$0]  %s10473, 32, %s8, [#allocation5]
        $region92: #{tpu_custom_call.1} parent=51 // pred_fallthru
          _
        // Predicated region
        $region93: #{tpu_custom_call.1} parent=51 // pred_check
          %p10476 = pneg %p219
        $region94: #{tpu_custom_call.1} parent=51 // pred_check_branch
          %10478 = sbr.rel (%p10476) target = $region96
        $region95: #{tpu_custom_call.1} parent=51 // pred_region
          %10479 = dma.done [#allocation5], 32
        $region96: #{tpu_custom_call.1} parent=51 // pred_fallthru
          _
      $region52: #{tpu_custom_call.1} parent=5 // pred_fallthru
        _
      %p10480 = scmp.le.s32.totalorder 2, %s23
      // Predicated region
      $region97: #{tpu_custom_call.1} parent=5 // pred_check
        %p10481 = pneg %p10480
      $region98: #{tpu_custom_call.1} parent=5 // pred_check_branch
        %10483 = sbr.rel (%p10481) target = $region100
      $region99: #{tpu_custom_call.1} parent=5 // pred_region
        %s10484 = ssub.s32 %s23, 2
      $region100: #{tpu_custom_call.1} parent=5 // pred_fallthru
        _
    $region6: #{tpu_custom_call.1} parent=1 // loop_footer
      %s27 = sadd.s32 1, %s23
    $region7: #{tpu_custom_call.1} parent=1 // loop_footer_branch
      %22 = sbr.rel target = $region3
    $region8: #{tpu_custom_call.1} parent=1 // loop_exit
      _
    %10485 = vsyncpa [#allocation4], 1
    %s10486 = scalar_lea.sflag [#allocation4], 1
    %10487 = vsyncpa %s10486, 1
    %10488 = vsyncpa [#allocation7], 1
    %s10489 = scalar_lea.sflag [#allocation7], 1
    %10490 = vsyncpa %s10489, 1
    %10491 = vsyncpa [#allocation10], 1
    %10492 = vsyncpa [#allocation13], 1
    %10493 = vsyncpa [#allocation5], 1
    %s10494 = scalar_lea.sflag [#allocation5], 1
    %10495 = vsyncpa %s10494, 1

</llo_original>
